<compile_context>
chip_gen: v5e
topology: v5e:2x2
jax: 0.10.0
libtpu: 0.0.40
codegen_flags: <defaults>
</compile_context>

<pallas_src>
import jax
import jax.numpy as jnp
from jax.experimental import pallas as pl
from jax.experimental.pallas import tpu as pltpu


def _mahalanobis_kernel(feat_ref, mean_ref, cov_ref, out_ref):
    # feat_ref: (B, tn, D), mean_ref: (tn, D), cov_ref: (tn, D, D)
    # out_ref : (B, tn)  [lane-dense]  or (B, tn, 1) [large-D fallback]
    delta = feat_ref[...] - mean_ref[...][None, :, :]            # (B, tn, D)
    # left[b, n, e] = sum_d delta[b, n, d] * cov_inv[n, d, e]
    left = jnp.einsum(
        "bnd,nde->bne",
        delta,
        cov_ref[...],
        preferred_element_type=jnp.float32,
    )                                                            # (B, tn, D)
    maha = jnp.sum(left * delta, axis=-1)                        # (B, tn)
    dist = jnp.sqrt(jnp.maximum(maha, 0.0)).astype(out_ref.dtype)
    if len(out_ref.shape) == 3:                                  # lane-thin fallback
        dist = dist[..., None]
    out_ref[...] = dist


def _round_up(x, m):
    return ((x + m - 1) // m) * m


def _select_tiling(B, N, D, vmem_budget_bytes):
    """Pick (tn, N_pad, lane_dense_output) given a double-buffered VMEM budget."""
    # Bytes per patch per buffer: cov tile + feature tile + mean tile + output tile.
    bytes_per_n = 4 * (D * D + (B + 1) * D + B)
    max_tn = max(8, vmem_budget_bytes // (2 * bytes_per_n))      # 2x: double buffering

    # Small problems: one grid step over all patches (avoids per-step overhead).
    if max_tn >= N and N <= 1024:
        tn = _round_up(N, 8)
        return tn, tn, True

    # Very large D: a 128-wide tile cannot fit VMEM -> small tile, lane-thin output.
    if max_tn < 128:
        tn = (max_tn // 8) * 8
        return tn, _round_up(N, tn), False

    # General case: multiple-of-128 tile (lane-dense output), sized to trade
    # per-step overhead (~0.35 us ~= ~0.5 MB of HBM time) against padding waste.
    tn_cap = min((max_tn // 128) * 128, 512)
    step_overhead_bytes = 512 * 1024
    best_tn, best_cost = None, None
    for cand in range(128, tn_cap + 1, 128):
        n_pad = _round_up(N, cand)
        cost = n_pad * bytes_per_n + (n_pad // cand) * step_overhead_bytes
        if best_cost is None or cost < best_cost:
            best_tn, best_cost = cand, cost
    return best_tn, _round_up(N, best_tn), True


def mahalanobis_distance(features, mean, cov_inv, width, height, *,
                         tn=None, vmem_budget_bytes=40 << 20):
    """features: (B, N, D); mean: (N, D); cov_inv: (N, D, D) -> (B, width, height)."""
    B, N, D = features.shape
    assert N == width * height

    features = features.astype(jnp.float32)
    mean = mean.astype(jnp.float32)
    cov_inv = cov_inv.astype(jnp.float32)

    if tn is None:
        tn, N_pad, lane_dense = _select_tiling(B, N, D, vmem_budget_bytes)
    else:
        assert tn % 8 == 0
        N_pad = _round_up(N, tn)
        lane_dense = (tn % 128 == 0) or (tn == N_pad)

    if N_pad != N:
        pad = N_pad - N
        # Zero padding -> delta = 0, cov = 0 -> distance = 0 on padded patches.
        features = jnp.pad(features, ((0, 0), (0, pad), (0, 0)))
        mean = jnp.pad(mean, ((0, pad), (0, 0)))
        cov_inv = jnp.pad(cov_inv, ((0, pad), (0, 0), (0, 0)))

    grid = N_pad // tn

    if lane_dense:
        out_shape = jax.ShapeDtypeStruct((B, N_pad), jnp.float32)
        out_spec = pl.BlockSpec((B, tn), lambda i: (0, i))
    else:
        out_shape = jax.ShapeDtypeStruct((B, N_pad, 1), jnp.float32)
        out_spec = pl.BlockSpec((B, tn, 1), lambda i: (0, i, 0))

    # Raise the scoped VMEM limit only when the double-buffered tiles need it
    # (scoped defaults: 16 MiB v5e, 32 MiB v6e/v7x). Capped well below the
    # smallest physical VMEM once headroom is accounted for by tile selection.
    block_bytes = 4 * (B * tn * D + tn * D + tn * D * D + B * tn)
    vmem_need = 2 * block_bytes
    vmem_limit = None
    if vmem_need > (12 << 20):
        vmem_limit = int(min(vmem_need + (8 << 20), 96 << 20))

    # Advisory cost hint: memory-bound on cov_inv, tiny flop count.
    cost = pl.CostEstimate(
        flops=2 * B * N_pad * D * D + 3 * B * N_pad * D,
        transcendentals=B * N_pad,
        bytes_accessed=4 * (N_pad * D * D + N_pad * D + B * N_pad * D + B * N_pad),
    )

    out = pl.pallas_call(
        _mahalanobis_kernel,
        out_shape=out_shape,
        grid_spec=pltpu.PrefetchScalarGridSpec(
            num_scalar_prefetch=0,
            grid=(grid,),
            in_specs=[
                pl.BlockSpec((B, tn, D), lambda i: (0, i, 0)),
                pl.BlockSpec((tn, D), lambda i: (i, 0)),
                pl.BlockSpec((tn, D, D), lambda i: (i, 0, 0)),
            ],
            out_specs=out_spec,
        ),
        compiler_params=pltpu.CompilerParams(
            dimension_semantics=("parallel",),
            vmem_limit_bytes=vmem_limit,
        ),
        cost_estimate=cost,
    )(features, mean, cov_inv)

    if not lane_dense:
        out = out[..., 0]
    return out[:, :N].reshape(B, width, height)


def _reference(features, mean, cov_inv, width, height):
    B, N, D = features.shape
    delta = features - mean[None]                                 # (B, N, D)
    left = jnp.einsum("bnd,nde->bne", delta, cov_inv)
    maha = jnp.sum(left * delta, axis=-1)
    return jnp.sqrt(jnp.clip(maha, 0.0)).reshape(B, width, height)


if __name__ == "__main__":
    B, width, height, D = 2, 8, 8, 32
    N = width * height

    key = jax.random.PRNGKey(0)
    k_feat, k_mean, k_cov = jax.random.split(key, 3)

    features = jax.random.normal(k_feat, (B, N, D), dtype=jnp.float32)
    mean = jax.random.normal(k_mean, (N, D), dtype=jnp.float32)
    # Deterministic symmetric positive-definite inverse covariance per patch.
    A = 0.1 * jax.random.normal(k_cov, (N, D, D), dtype=jnp.float32)
    cov_inv = jnp.einsum("nij,nkj->nik", A, A) + jnp.eye(D, dtype=jnp.float32)[None]

    dist = mahalanobis_distance(features, mean, cov_inv, width, height)
    dist = jax.block_until_ready(dist)

    ref = _reference(features, mean, cov_inv, width, height)
    assert dist.shape == (B, width, height)
    assert jnp.allclose(dist, ref, rtol=1e-4, atol=1e-4)

    print("KERNEL_OK")
</pallas_src>

<mosaic_0001>
module attributes {stable_mosaic.version = 11 : i64} {
  func.func @_mahalanobis_kernel(%arg0: i32, %arg1: memref<2x64x32xf32, #tpu.memory_space<vmem>>, %arg2: memref<64x32xf32, #tpu.memory_space<vmem>>, %arg3: memref<64x32x32xf32, #tpu.memory_space<vmem>>, %arg4: memref<2x64xf32, #tpu.memory_space<vmem>>) attributes {dimension_semantics = [#tpu.dimension_semantics<parallel>], iteration_bounds = array<i64: 1>, scalar_prefetch = 0 : i64, scratch_operands = 0 : i64, tpu.core_type = #tpu.core_type<tc>, window_params = [{transform_indices = @transform_0, window_bounds = array<i64: 2, 64, 32>}, {transform_indices = @transform_1, window_bounds = array<i64: 64, 32>}, {transform_indices = @transform_2, window_bounds = array<i64: 64, 32, 32>}, {transform_indices = @transform_3, window_bounds = array<i64: 2, 64>}]} {
    %c0 = arith.constant 0 : index
    %c0_0 = arith.constant 0 : index
    %c0_1 = arith.constant 0 : index
    %0 = vector.load %arg1[%c0, %c0_0, %c0_1] : memref<2x64x32xf32, #tpu.memory_space<vmem>>, vector<2x64x32xf32>
    %c0_2 = arith.constant 0 : index
    %c0_3 = arith.constant 0 : index
    %1 = vector.load %arg2[%c0_2, %c0_3] : memref<64x32xf32, #tpu.memory_space<vmem>>, vector<64x32xf32>
    %2 = vector.shape_cast %1 : vector<64x32xf32> to vector<1x64x32xf32>
    %3 = vector.broadcast %2 : vector<1x64x32xf32> to vector<2x64x32xf32>
    %4 = arith.subf %0, %3 : vector<2x64x32xf32>
    %c0_4 = arith.constant 0 : index
    %c0_5 = arith.constant 0 : index
    %c0_6 = arith.constant 0 : index
    %5 = vector.load %arg3[%c0_4, %c0_5, %c0_6] : memref<64x32x32xf32, #tpu.memory_space<vmem>>, vector<64x32x32xf32>
    "tpu.trace_start"() <{level = 10 : i32, message = "bnd,nde->bne"}> : () -> ()
    %cst = arith.constant dense<0.000000e+00> : vector<64x32x2xf32>
    %6 = tpu.matmul %5, %4, %cst {dimension_numbers = #tpu.dot_dimension_numbers<[1], [2], [2], [0], [0, 0, 0, 2, 1, 0], [0], [1]>} : vector<64x32x32xf32>, vector<2x64x32xf32>, vector<64x32x2xf32> -> vector<64x32x2xf32>
    %7 = tpu.transpose %6, [2, 0, 1] : vector<64x32x2xf32> -> vector<2x64x32xf32>
    "tpu.trace_stop"() : () -> ()
    %8 = arith.mulf %7, %4 : vector<2x64x32xf32>
    %cst_7 = arith.constant dense<0.000000e+00> : vector<2x64xf32>
    %9 = vector.multi_reduction <add>, %8, %cst_7 [2] : vector<2x64x32xf32> to vector<2x64xf32>
    %cst_8 = arith.constant 0.000000e+00 : f32
    %10 = vector.broadcast %cst_8 : f32 to vector<2x64xf32>
    %11 = arith.maximumf %9, %10 : vector<2x64xf32>
    %12 = math.sqrt %11 : vector<2x64xf32>
    %c0_9 = arith.constant 0 : index
    %c0_10 = arith.constant 0 : index
    %13 = vector.load %arg4[%c0_9, %c0_10] : memref<2x64xf32, #tpu.memory_space<vmem>>, vector<2x64xf32>
    tpu.vector_store %arg4[%c0_9, %c0_10], %12 {strides = array<i32>} : memref<2x64xf32, #tpu.memory_space<vmem>>, vector<2x64xf32>,
    return
  }
  func.func @transform_0(%arg0: i32) -> (i32, i32, i32) {
    %c0_i32 = arith.constant 0 : i32
    %c0_i32_0 = arith.constant 0 : i32
    %c0_i32_1 = arith.constant 0 : i32
    return %c0_i32, %arg0, %c0_i32_0 : i32, i32, i32
  }
  func.func @transform_1(%arg0: i32) -> (i32, i32) {
    %c0_i32 = arith.constant 0 : i32
    %c0_i32_0 = arith.constant 0 : i32
    return %arg0, %c0_i32 : i32, i32
  }
  func.func @transform_2(%arg0: i32) -> (i32, i32, i32) {
    %c0_i32 = arith.constant 0 : i32
    %c0_i32_0 = arith.constant 0 : i32
    %c0_i32_1 = arith.constant 0 : i32
    return %arg0, %c0_i32, %c0_i32_0 : i32, i32, i32
  }
  func.func @transform_3(%arg0: i32) -> (i32, i32) {
    %c0_i32 = arith.constant 0 : i32
    %c0_i32_0 = arith.constant 0 : i32
    return %c0_i32, %arg0 : i32, i32
  }
}

</mosaic_0001>

<llo_original>
// kernel: tpu_custom_call.1
$region0: #{tpu_custom_call.1}
  #allocation0 [shape = 'u32[]', space=smem, size = 0x4, offset = 0x4, fixed_abs, tag = 'smem constant byte address 0x4 - core index']
  #allocation1 [shape = 'u32[72,128]{1,0:T(1,128)}', space=vmem, size = 0x9000, scoped, tag = 'internal scratch']
  %s0 = inlined_call_operand.vmem [shape: f32[2,64,32], index: 0, kind: input, shape index: {}]
  %s1 = inlined_call_operand.vmem [shape: f32[64,32], index: 1, kind: input, shape index: {}]
  %s2 = inlined_call_operand.vmem [shape: f32[64,32,32], index: 2, kind: input, shape index: {}]
  %s3 = inlined_call_operand.hbm [shape: f32[2,64], index: 3, kind: output, shape index: {}]
  %s4 = sld [smem:[#allocation0]]
  $region22: #{tpu_custom_call.1} parent=0
    _
  %s6 = ssub.s32 1, %s4
  %s7 = scalar_select 0, %s6, %s4
  $region1: #{tpu_custom_call.1} parent=0
    #allocation2 [shape = 'u8[1024]{0}', space=vmem, size = 0x400, scoped, tag = 'output window, operand 0, single buffered']
    #allocation3 [shape = 's32[1]{0}', space=sflag, size = 0x4, scoped, tag = 'scoped memory for tpu_custom_call.1']
    %8 = vsyncpa [#allocation3], 0
    // Predicated region
    $region2: #{tpu_custom_call.1} parent=1 // pred_check
      _
    $region3: #{tpu_custom_call.1} parent=1 // pred_check_branch
      %10 = sbr.rel (0) target = $region5
    $region4: #{tpu_custom_call.1} parent=1 // pred_region
      _
    $region5: #{tpu_custom_call.1} parent=1 // pred_fallthru
      _
    // Predicated region
    $region6: #{tpu_custom_call.1} parent=1 // pred_check
      _
    $region7: #{tpu_custom_call.1} parent=1 // pred_check_branch
      %12 = sbr.rel (0) target = $region9
    $region8: #{tpu_custom_call.1} parent=1 // pred_region
      _
    $region9: #{tpu_custom_call.1} parent=1 // pred_fallthru
      _
    // Predicated region
    $region10: #{tpu_custom_call.1} parent=1 // pred_check
      _
    $region11: #{tpu_custom_call.1} parent=1 // pred_check_branch
      %14 = sbr.rel (0) target = $region13
    $region12: #{tpu_custom_call.1} parent=1 // pred_region
      _
    $region13: #{tpu_custom_call.1} parent=1 // pred_fallthru
      _
    %v15 = vld [vmem:[%s0] sm:$0xff]
    %v16 = vld [vmem:[%s0 + $0x8] sm:$0xff]
    %v17 = vld [vmem:[%s0 + $0x10] sm:$0xff]
    %v18 = vld [vmem:[%s0 + $0x18] sm:$0xff]
    %v19 = vld [vmem:[%s0 + $0x20] sm:$0xff]
    %v20 = vld [vmem:[%s0 + $0x28] sm:$0xff]
    %v21 = vld [vmem:[%s0 + $0x30] sm:$0xff]
    %v22 = vld [vmem:[%s0 + $0x38] sm:$0xff]
    %v23 = vld [vmem:[%s0 + $0x40] sm:$0xff]
    %v24 = vld [vmem:[%s0 + $0x48] sm:$0xff]
    %v25 = vld [vmem:[%s0 + $0x50] sm:$0xff]
    %v26 = vld [vmem:[%s0 + $0x58] sm:$0xff]
    %v27 = vld [vmem:[%s0 + $0x60] sm:$0xff]
    %v28 = vld [vmem:[%s0 + $0x68] sm:$0xff]
    %v29 = vld [vmem:[%s0 + $0x70] sm:$0xff]
    %v30 = vld [vmem:[%s0 + $0x78] sm:$0xff]
    %v31 = vld [vmem:[%s1] sm:$0xff]
    %v32 = vld [vmem:[%s1 + $0x8] sm:$0xff]
    %v33 = vld [vmem:[%s1 + $0x10] sm:$0xff]
    %v34 = vld [vmem:[%s1 + $0x18] sm:$0xff]
    %v35 = vld [vmem:[%s1 + $0x20] sm:$0xff]
    %v36 = vld [vmem:[%s1 + $0x28] sm:$0xff]
    %v37 = vld [vmem:[%s1 + $0x30] sm:$0xff]
    %v38 = vld [vmem:[%s1 + $0x38] sm:$0xff]
    %v39 = vsub.f32 %v15, %v31
    %v40 = vsub.f32 %v16, %v32
    %v41 = vsub.f32 %v17, %v33
    %v42 = vsub.f32 %v18, %v34
    %v43 = vsub.f32 %v19, %v35
    %v44 = vsub.f32 %v20, %v36
    %v45 = vsub.f32 %v21, %v37
    %v46 = vsub.f32 %v22, %v38
    %v47 = vsub.f32 %v23, %v31
    %v48 = vsub.f32 %v24, %v32
    %v49 = vsub.f32 %v25, %v33
    %v50 = vsub.f32 %v26, %v34
    %v51 = vsub.f32 %v27, %v35
    %v52 = vsub.f32 %v28, %v36
    %v53 = vsub.f32 %v29, %v37
    %v54 = vsub.f32 %v30, %v38
    %v55 = vld [vmem:[%s2] sm:$0xff]
    %v56 = vld [vmem:[%s2 + $0x8] sm:$0xff]
    %v57 = vld [vmem:[%s2 + $0x10] sm:$0xff]
    %v58 = vld [vmem:[%s2 + $0x18] sm:$0xff]
    %v59 = vld [vmem:[%s2 + $0x20] sm:$0xff]
    %v60 = vld [vmem:[%s2 + $0x28] sm:$0xff]
    %v61 = vld [vmem:[%s2 + $0x30] sm:$0xff]
    %v62 = vld [vmem:[%s2 + $0x38] sm:$0xff]
    %v63 = vld [vmem:[%s2 + $0x40] sm:$0xff]
    %v64 = vld [vmem:[%s2 + $0x48] sm:$0xff]
    %v65 = vld [vmem:[%s2 + $0x50] sm:$0xff]
    %v66 = vld [vmem:[%s2 + $0x58] sm:$0xff]
    %v67 = vld [vmem:[%s2 + $0x60] sm:$0xff]
    %v68 = vld [vmem:[%s2 + $0x68] sm:$0xff]
    %v69 = vld [vmem:[%s2 + $0x70] sm:$0xff]
    %v70 = vld [vmem:[%s2 + $0x78] sm:$0xff]
    %v71 = vld [vmem:[%s2 + $0x80] sm:$0xff]
    %v72 = vld [vmem:[%s2 + $0x88] sm:$0xff]
    %v73 = vld [vmem:[%s2 + $0x90] sm:$0xff]
    %v74 = vld [vmem:[%s2 + $0x98] sm:$0xff]
    %v75 = vld [vmem:[%s2 + $0xa0] sm:$0xff]
    %v76 = vld [vmem:[%s2 + $0xa8] sm:$0xff]
    %v77 = vld [vmem:[%s2 + $0xb0] sm:$0xff]
    %v78 = vld [vmem:[%s2 + $0xb8] sm:$0xff]
    %v79 = vld [vmem:[%s2 + $0xc0] sm:$0xff]
    %v80 = vld [vmem:[%s2 + $0xc8] sm:$0xff]
    %v81 = vld [vmem:[%s2 + $0xd0] sm:$0xff]
    %v82 = vld [vmem:[%s2 + $0xd8] sm:$0xff]
    %v83 = vld [vmem:[%s2 + $0xe0] sm:$0xff]
    %v84 = vld [vmem:[%s2 + $0xe8] sm:$0xff]
    %v85 = vld [vmem:[%s2 + $0xf0] sm:$0xff]
    %v86 = vld [vmem:[%s2 + $0xf8] sm:$0xff]
    %v87 = vld [vmem:[%s2 + $0x100] sm:$0xff]
    %v88 = vld [vmem:[%s2 + $0x108] sm:$0xff]
    %v89 = vld [vmem:[%s2 + $0x110] sm:$0xff]
    %v90 = vld [vmem:[%s2 + $0x118] sm:$0xff]
    %v91 = vld [vmem:[%s2 + $0x120] sm:$0xff]
    %v92 = vld [vmem:[%s2 + $0x128] sm:$0xff]
    %v93 = vld [vmem:[%s2 + $0x130] sm:$0xff]
    %v94 = vld [vmem:[%s2 + $0x138] sm:$0xff]
    %v95 = vld [vmem:[%s2 + $0x140] sm:$0xff]
    %v96 = vld [vmem:[%s2 + $0x148] sm:$0xff]
    %v97 = vld [vmem:[%s2 + $0x150] sm:$0xff]
    %v98 = vld [vmem:[%s2 + $0x158] sm:$0xff]
    %v99 = vld [vmem:[%s2 + $0x160] sm:$0xff]
    %v100 = vld [vmem:[%s2 + $0x168] sm:$0xff]
    %v101 = vld [vmem:[%s2 + $0x170] sm:$0xff]
    %v102 = vld [vmem:[%s2 + $0x178] sm:$0xff]
    %v103 = vld [vmem:[%s2 + $0x180] sm:$0xff]
    %v104 = vld [vmem:[%s2 + $0x188] sm:$0xff]
    %v105 = vld [vmem:[%s2 + $0x190] sm:$0xff]
    %v106 = vld [vmem:[%s2 + $0x198] sm:$0xff]
    %v107 = vld [vmem:[%s2 + $0x1a0] sm:$0xff]
    %v108 = vld [vmem:[%s2 + $0x1a8] sm:$0xff]
    %v109 = vld [vmem:[%s2 + $0x1b0] sm:$0xff]
    %v110 = vld [vmem:[%s2 + $0x1b8] sm:$0xff]
    %v111 = vld [vmem:[%s2 + $0x1c0] sm:$0xff]
    %v112 = vld [vmem:[%s2 + $0x1c8] sm:$0xff]
    %v113 = vld [vmem:[%s2 + $0x1d0] sm:$0xff]
    %v114 = vld [vmem:[%s2 + $0x1d8] sm:$0xff]
    %v115 = vld [vmem:[%s2 + $0x1e0] sm:$0xff]
    %v116 = vld [vmem:[%s2 + $0x1e8] sm:$0xff]
    %v117 = vld [vmem:[%s2 + $0x1f0] sm:$0xff]
    %v118 = vld [vmem:[%s2 + $0x1f8] sm:$0xff]
    %v119 = vld [vmem:[%s2 + $0x200] sm:$0xff]
    %v120 = vld [vmem:[%s2 + $0x208] sm:$0xff]
    %v121 = vld [vmem:[%s2 + $0x210] sm:$0xff]
    %v122 = vld [vmem:[%s2 + $0x218] sm:$0xff]
    %v123 = vld [vmem:[%s2 + $0x220] sm:$0xff]
    %v124 = vld [vmem:[%s2 + $0x228] sm:$0xff]
    %v125 = vld [vmem:[%s2 + $0x230] sm:$0xff]
    %v126 = vld [vmem:[%s2 + $0x238] sm:$0xff]
    %v127 = vld [vmem:[%s2 + $0x240] sm:$0xff]
    %v128 = vld [vmem:[%s2 + $0x248] sm:$0xff]
    %v129 = vld [vmem:[%s2 + $0x250] sm:$0xff]
    %v130 = vld [vmem:[%s2 + $0x258] sm:$0xff]
    %v131 = vld [vmem:[%s2 + $0x260] sm:$0xff]
    %v132 = vld [vmem:[%s2 + $0x268] sm:$0xff]
    %v133 = vld [vmem:[%s2 + $0x270] sm:$0xff]
    %v134 = vld [vmem:[%s2 + $0x278] sm:$0xff]
    %v135 = vld [vmem:[%s2 + $0x280] sm:$0xff]
    %v136 = vld [vmem:[%s2 + $0x288] sm:$0xff]
    %v137 = vld [vmem:[%s2 + $0x290] sm:$0xff]
    %v138 = vld [vmem:[%s2 + $0x298] sm:$0xff]
    %v139 = vld [vmem:[%s2 + $0x2a0] sm:$0xff]
    %v140 = vld [vmem:[%s2 + $0x2a8] sm:$0xff]
    %v141 = vld [vmem:[%s2 + $0x2b0] sm:$0xff]
    %v142 = vld [vmem:[%s2 + $0x2b8] sm:$0xff]
    %v143 = vld [vmem:[%s2 + $0x2c0] sm:$0xff]
    %v144 = vld [vmem:[%s2 + $0x2c8] sm:$0xff]
    %v145 = vld [vmem:[%s2 + $0x2d0] sm:$0xff]
    %v146 = vld [vmem:[%s2 + $0x2d8] sm:$0xff]
    %v147 = vld [vmem:[%s2 + $0x2e0] sm:$0xff]
    %v148 = vld [vmem:[%s2 + $0x2e8] sm:$0xff]
    %v149 = vld [vmem:[%s2 + $0x2f0] sm:$0xff]
    %v150 = vld [vmem:[%s2 + $0x2f8] sm:$0xff]
    %v151 = vld [vmem:[%s2 + $0x300] sm:$0xff]
    %v152 = vld [vmem:[%s2 + $0x308] sm:$0xff]
    %v153 = vld [vmem:[%s2 + $0x310] sm:$0xff]
    %v154 = vld [vmem:[%s2 + $0x318] sm:$0xff]
    %v155 = vld [vmem:[%s2 + $0x320] sm:$0xff]
    %v156 = vld [vmem:[%s2 + $0x328] sm:$0xff]
    %v157 = vld [vmem:[%s2 + $0x330] sm:$0xff]
    %v158 = vld [vmem:[%s2 + $0x338] sm:$0xff]
    %v159 = vld [vmem:[%s2 + $0x340] sm:$0xff]
    %v160 = vld [vmem:[%s2 + $0x348] sm:$0xff]
    %v161 = vld [vmem:[%s2 + $0x350] sm:$0xff]
    %v162 = vld [vmem:[%s2 + $0x358] sm:$0xff]
    %v163 = vld [vmem:[%s2 + $0x360] sm:$0xff]
    %v164 = vld [vmem:[%s2 + $0x368] sm:$0xff]
    %v165 = vld [vmem:[%s2 + $0x370] sm:$0xff]
    %v166 = vld [vmem:[%s2 + $0x378] sm:$0xff]
    %v167 = vld [vmem:[%s2 + $0x380] sm:$0xff]
    %v168 = vld [vmem:[%s2 + $0x388] sm:$0xff]
    %v169 = vld [vmem:[%s2 + $0x390] sm:$0xff]
    %v170 = vld [vmem:[%s2 + $0x398] sm:$0xff]
    %v171 = vld [vmem:[%s2 + $0x3a0] sm:$0xff]
    %v172 = vld [vmem:[%s2 + $0x3a8] sm:$0xff]
    %v173 = vld [vmem:[%s2 + $0x3b0] sm:$0xff]
    %v174 = vld [vmem:[%s2 + $0x3b8] sm:$0xff]
    %v175 = vld [vmem:[%s2 + $0x3c0] sm:$0xff]
    %v176 = vld [vmem:[%s2 + $0x3c8] sm:$0xff]
    %v177 = vld [vmem:[%s2 + $0x3d0] sm:$0xff]
    %v178 = vld [vmem:[%s2 + $0x3d8] sm:$0xff]
    %v179 = vld [vmem:[%s2 + $0x3e0] sm:$0xff]
    %v180 = vld [vmem:[%s2 + $0x3e8] sm:$0xff]
    %v181 = vld [vmem:[%s2 + $0x3f0] sm:$0xff]
    %v182 = vld [vmem:[%s2 + $0x3f8] sm:$0xff]
    %v183 = vld [vmem:[%s2 + $0x400] sm:$0xff]
    %v184 = vld [vmem:[%s2 + $0x408] sm:$0xff]
    %v185 = vld [vmem:[%s2 + $0x410] sm:$0xff]
    %v186 = vld [vmem:[%s2 + $0x418] sm:$0xff]
    %v187 = vld [vmem:[%s2 + $0x420] sm:$0xff]
    %v188 = vld [vmem:[%s2 + $0x428] sm:$0xff]
    %v189 = vld [vmem:[%s2 + $0x430] sm:$0xff]
    %v190 = vld [vmem:[%s2 + $0x438] sm:$0xff]
    %v191 = vld [vmem:[%s2 + $0x440] sm:$0xff]
    %v192 = vld [vmem:[%s2 + $0x448] sm:$0xff]
    %v193 = vld [vmem:[%s2 + $0x450] sm:$0xff]
    %v194 = vld [vmem:[%s2 + $0x458] sm:$0xff]
    %v195 = vld [vmem:[%s2 + $0x460] sm:$0xff]
    %v196 = vld [vmem:[%s2 + $0x468] sm:$0xff]
    %v197 = vld [vmem:[%s2 + $0x470] sm:$0xff]
    %v198 = vld [vmem:[%s2 + $0x478] sm:$0xff]
    %v199 = vld [vmem:[%s2 + $0x480] sm:$0xff]
    %v200 = vld [vmem:[%s2 + $0x488] sm:$0xff]
    %v201 = vld [vmem:[%s2 + $0x490] sm:$0xff]
    %v202 = vld [vmem:[%s2 + $0x498] sm:$0xff]
    %v203 = vld [vmem:[%s2 + $0x4a0] sm:$0xff]
    %v204 = vld [vmem:[%s2 + $0x4a8] sm:$0xff]
    %v205 = vld [vmem:[%s2 + $0x4b0] sm:$0xff]
    %v206 = vld [vmem:[%s2 + $0x4b8] sm:$0xff]
    %v207 = vld [vmem:[%s2 + $0x4c0] sm:$0xff]
    %v208 = vld [vmem:[%s2 + $0x4c8] sm:$0xff]
    %v209 = vld [vmem:[%s2 + $0x4d0] sm:$0xff]
    %v210 = vld [vmem:[%s2 + $0x4d8] sm:$0xff]
    %v211 = vld [vmem:[%s2 + $0x4e0] sm:$0xff]
    %v212 = vld [vmem:[%s2 + $0x4e8] sm:$0xff]
    %v213 = vld [vmem:[%s2 + $0x4f0] sm:$0xff]
    %v214 = vld [vmem:[%s2 + $0x4f8] sm:$0xff]
    %v215 = vld [vmem:[%s2 + $0x500] sm:$0xff]
    %v216 = vld [vmem:[%s2 + $0x508] sm:$0xff]
    %v217 = vld [vmem:[%s2 + $0x510] sm:$0xff]
    %v218 = vld [vmem:[%s2 + $0x518] sm:$0xff]
    %v219 = vld [vmem:[%s2 + $0x520] sm:$0xff]
    %v220 = vld [vmem:[%s2 + $0x528] sm:$0xff]
    %v221 = vld [vmem:[%s2 + $0x530] sm:$0xff]
    %v222 = vld [vmem:[%s2 + $0x538] sm:$0xff]
    %v223 = vld [vmem:[%s2 + $0x540] sm:$0xff]
    %v224 = vld [vmem:[%s2 + $0x548] sm:$0xff]
    %v225 = vld [vmem:[%s2 + $0x550] sm:$0xff]
    %v226 = vld [vmem:[%s2 + $0x558] sm:$0xff]
    %v227 = vld [vmem:[%s2 + $0x560] sm:$0xff]
    %v228 = vld [vmem:[%s2 + $0x568] sm:$0xff]
    %v229 = vld [vmem:[%s2 + $0x570] sm:$0xff]
    %v230 = vld [vmem:[%s2 + $0x578] sm:$0xff]
    %v231 = vld [vmem:[%s2 + $0x580] sm:$0xff]
    %v232 = vld [vmem:[%s2 + $0x588] sm:$0xff]
    %v233 = vld [vmem:[%s2 + $0x590] sm:$0xff]
    %v234 = vld [vmem:[%s2 + $0x598] sm:$0xff]
    %v235 = vld [vmem:[%s2 + $0x5a0] sm:$0xff]
    %v236 = vld [vmem:[%s2 + $0x5a8] sm:$0xff]
    %v237 = vld [vmem:[%s2 + $0x5b0] sm:$0xff]
    %v238 = vld [vmem:[%s2 + $0x5b8] sm:$0xff]
    %v239 = vld [vmem:[%s2 + $0x5c0] sm:$0xff]
    %v240 = vld [vmem:[%s2 + $0x5c8] sm:$0xff]
    %v241 = vld [vmem:[%s2 + $0x5d0] sm:$0xff]
    %v242 = vld [vmem:[%s2 + $0x5d8] sm:$0xff]
    %v243 = vld [vmem:[%s2 + $0x5e0] sm:$0xff]
    %v244 = vld [vmem:[%s2 + $0x5e8] sm:$0xff]
    %v245 = vld [vmem:[%s2 + $0x5f0] sm:$0xff]
    %v246 = vld [vmem:[%s2 + $0x5f8] sm:$0xff]
    %v247 = vld [vmem:[%s2 + $0x600] sm:$0xff]
    %v248 = vld [vmem:[%s2 + $0x608] sm:$0xff]
    %v249 = vld [vmem:[%s2 + $0x610] sm:$0xff]
    %v250 = vld [vmem:[%s2 + $0x618] sm:$0xff]
    %v251 = vld [vmem:[%s2 + $0x620] sm:$0xff]
    %v252 = vld [vmem:[%s2 + $0x628] sm:$0xff]
    %v253 = vld [vmem:[%s2 + $0x630] sm:$0xff]
    %v254 = vld [vmem:[%s2 + $0x638] sm:$0xff]
    %v255 = vld [vmem:[%s2 + $0x640] sm:$0xff]
    %v256 = vld [vmem:[%s2 + $0x648] sm:$0xff]
    %v257 = vld [vmem:[%s2 + $0x650] sm:$0xff]
    %v258 = vld [vmem:[%s2 + $0x658] sm:$0xff]
    %v259 = vld [vmem:[%s2 + $0x660] sm:$0xff]
    %v260 = vld [vmem:[%s2 + $0x668] sm:$0xff]
    %v261 = vld [vmem:[%s2 + $0x670] sm:$0xff]
    %v262 = vld [vmem:[%s2 + $0x678] sm:$0xff]
    %v263 = vld [vmem:[%s2 + $0x680] sm:$0xff]
    %v264 = vld [vmem:[%s2 + $0x688] sm:$0xff]
    %v265 = vld [vmem:[%s2 + $0x690] sm:$0xff]
    %v266 = vld [vmem:[%s2 + $0x698] sm:$0xff]
    %v267 = vld [vmem:[%s2 + $0x6a0] sm:$0xff]
    %v268 = vld [vmem:[%s2 + $0x6a8] sm:$0xff]
    %v269 = vld [vmem:[%s2 + $0x6b0] sm:$0xff]
    %v270 = vld [vmem:[%s2 + $0x6b8] sm:$0xff]
    %v271 = vld [vmem:[%s2 + $0x6c0] sm:$0xff]
    %v272 = vld [vmem:[%s2 + $0x6c8] sm:$0xff]
    %v273 = vld [vmem:[%s2 + $0x6d0] sm:$0xff]
    %v274 = vld [vmem:[%s2 + $0x6d8] sm:$0xff]
    %v275 = vld [vmem:[%s2 + $0x6e0] sm:$0xff]
    %v276 = vld [vmem:[%s2 + $0x6e8] sm:$0xff]
    %v277 = vld [vmem:[%s2 + $0x6f0] sm:$0xff]
    %v278 = vld [vmem:[%s2 + $0x6f8] sm:$0xff]
    %v279 = vld [vmem:[%s2 + $0x700] sm:$0xff]
    %v280 = vld [vmem:[%s2 + $0x708] sm:$0xff]
    %v281 = vld [vmem:[%s2 + $0x710] sm:$0xff]
    %v282 = vld [vmem:[%s2 + $0x718] sm:$0xff]
    %v283 = vld [vmem:[%s2 + $0x720] sm:$0xff]
    %v284 = vld [vmem:[%s2 + $0x728] sm:$0xff]
    %v285 = vld [vmem:[%s2 + $0x730] sm:$0xff]
    %v286 = vld [vmem:[%s2 + $0x738] sm:$0xff]
    %v287 = vld [vmem:[%s2 + $0x740] sm:$0xff]
    %v288 = vld [vmem:[%s2 + $0x748] sm:$0xff]
    %v289 = vld [vmem:[%s2 + $0x750] sm:$0xff]
    %v290 = vld [vmem:[%s2 + $0x758] sm:$0xff]
    %v291 = vld [vmem:[%s2 + $0x760] sm:$0xff]
    %v292 = vld [vmem:[%s2 + $0x768] sm:$0xff]
    %v293 = vld [vmem:[%s2 + $0x770] sm:$0xff]
    %v294 = vld [vmem:[%s2 + $0x778] sm:$0xff]
    %v295 = vld [vmem:[%s2 + $0x780] sm:$0xff]
    %v296 = vld [vmem:[%s2 + $0x788] sm:$0xff]
    %v297 = vld [vmem:[%s2 + $0x790] sm:$0xff]
    %v298 = vld [vmem:[%s2 + $0x798] sm:$0xff]
    %v299 = vld [vmem:[%s2 + $0x7a0] sm:$0xff]
    %v300 = vld [vmem:[%s2 + $0x7a8] sm:$0xff]
    %v301 = vld [vmem:[%s2 + $0x7b0] sm:$0xff]
    %v302 = vld [vmem:[%s2 + $0x7b8] sm:$0xff]
    %v303 = vld [vmem:[%s2 + $0x7c0] sm:$0xff]
    %v304 = vld [vmem:[%s2 + $0x7c8] sm:$0xff]
    %v305 = vld [vmem:[%s2 + $0x7d0] sm:$0xff]
    %v306 = vld [vmem:[%s2 + $0x7d8] sm:$0xff]
    %v307 = vld [vmem:[%s2 + $0x7e0] sm:$0xff]
    %v308 = vld [vmem:[%s2 + $0x7e8] sm:$0xff]
    %v309 = vld [vmem:[%s2 + $0x7f0] sm:$0xff]
    %v310 = vld [vmem:[%s2 + $0x7f8] sm:$0xff]
    %311 = vxpose.xlu0.b32.start [1/16] %v39, 128
    %312 = vxpose.xlu0.b32.cont [2/16] %v40, 128
    %313 = vxpose.xlu0.b32.cont [3/16] %v41, 128
    %314 = vxpose.xlu0.b32.cont [4/16] %v42, 128
    %315 = vxpose.xlu0.b32.cont [5/16] %v43, 128
    %316 = vxpose.xlu0.b32.cont [6/16] %v44, 128
    %317 = vxpose.xlu0.b32.cont [7/16] %v45, 128
    %318 = vxpose.xlu0.b32.cont [8/16] %v46, 128
    %319 = vxpose.xlu0.b32.cont [9/16] 0.0, 128
    %320 = vxpose.xlu0.b32.cont [10/16] 0.0, 128
    %321 = vxpose.xlu0.b32.cont [11/16] 0.0, 128
    %322 = vxpose.xlu0.b32.cont [12/16] 0.0, 128
    %323 = vxpose.xlu0.b32.cont [13/16] 0.0, 128
    %324 = vxpose.xlu0.b32.cont [14/16] 0.0, 128
    %325 = vxpose.xlu0.b32.cont [15/16] 0.0, 128
    %326 = vxpose.xlu0.b32.end [16/16] 0.0, 128
    %v327 = vpop.trf.xlu0
    %v328 = vpop.trf.xlu0
    %v329 = vpop.trf.xlu0
    %v330 = vpop.trf.xlu0
    %v331 = vpop.trf.xlu0
    %v332 = vpop.trf.xlu0
    %v333 = vpop.trf.xlu0
    %v334 = vpop.trf.xlu0
    %v335 = vpop.trf.xlu0
    %v336 = vpop.trf.xlu0
    %v337 = vpop.trf.xlu0
    %v338 = vpop.trf.xlu0
    %v339 = vpop.trf.xlu0
    %v340 = vpop.trf.xlu0
    %v341 = vpop.trf.xlu0
    %v342 = vpop.trf.xlu0
    %343 = vxpose.xlu0.b32.start [1/16] %v47, 128
    %344 = vxpose.xlu0.b32.cont [2/16] %v48, 128
    %345 = vxpose.xlu0.b32.cont [3/16] %v49, 128
    %346 = vxpose.xlu0.b32.cont [4/16] %v50, 128
    %347 = vxpose.xlu0.b32.cont [5/16] %v51, 128
    %348 = vxpose.xlu0.b32.cont [6/16] %v52, 128
    %349 = vxpose.xlu0.b32.cont [7/16] %v53, 128
    %350 = vxpose.xlu0.b32.cont [8/16] %v54, 128
    %351 = vxpose.xlu0.b32.cont [9/16] 0.0, 128
    %352 = vxpose.xlu0.b32.cont [10/16] 0.0, 128
    %353 = vxpose.xlu0.b32.cont [11/16] 0.0, 128
    %354 = vxpose.xlu0.b32.cont [12/16] 0.0, 128
    %355 = vxpose.xlu0.b32.cont [13/16] 0.0, 128
    %356 = vxpose.xlu0.b32.cont [14/16] 0.0, 128
    %357 = vxpose.xlu0.b32.cont [15/16] 0.0, 128
    %358 = vxpose.xlu0.b32.end [16/16] 0.0, 128
    %v359 = vpop.trf.xlu0
    %v360 = vpop.trf.xlu0
    %v361 = vpop.trf.xlu0
    %v362 = vpop.trf.xlu0
    %v363 = vpop.trf.xlu0
    %v364 = vpop.trf.xlu0
    %v365 = vpop.trf.xlu0
    %v366 = vpop.trf.xlu0
    %v367 = vpop.trf.xlu0
    %v368 = vpop.trf.xlu0
    %v369 = vpop.trf.xlu0
    %v370 = vpop.trf.xlu0
    %v371 = vpop.trf.xlu0
    %v372 = vpop.trf.xlu0
    %v373 = vpop.trf.xlu0
    %v374 = vpop.trf.xlu0
    %v375 = vrot.slane %v327, 4
    %vm376 = vcmask 1047556
    %v377 = vsel %vm376, 0.0, %v375
    %v379 = vunpack.c.l.s4 1983009808
    %v380 = vunpack.c.0.s8 %v379
    %v381 = vperm.slane %v327, %v380
    %v383 = vunpack.c.l.s4 1983009808
    %v384 = vunpack.c.0.s8 %v383
    %v385 = vperm.slane %v377, %v384
    %v386 = vrot.slane %v359, 4
    %v387 = vsel %vm376, 0.0, %v386
    %v389 = vunpack.c.l.s4 1983009808
    %v390 = vunpack.c.0.s8 %v389
    %v391 = vperm.slane %v359, %v390
    %v393 = vunpack.c.l.s4 1983009808
    %v394 = vunpack.c.0.s8 %v393
    %v395 = vperm.slane %v387, %v394
    %v396 = vrot.slane %v391, 4
    %v397 = vsel %vm376, %v396, %v381
    %v398 = vrot.slane %v381, 4
    %v399 = vsel %vm376, %v391, %v398
    %v401 = vunpack.c.l.s4 1934713408
    %v402 = vunpack.c.0.s8 %v401
    %v403 = vperm.slane %v397, %v402
    %v405 = vunpack.c.l.s4 1934713408
    %v406 = vunpack.c.0.s8 %v405
    %v407 = vperm.slane %v399, %v406
    %v408 = vrot.slane %v395, 4
    %v409 = vsel %vm376, %v408, %v385
    %v410 = vrot.slane %v385, 4
    %v411 = vsel %vm376, %v395, %v410
    %v413 = vunpack.c.l.s4 1934713408
    %v414 = vunpack.c.0.s8 %v413
    %v415 = vperm.slane %v409, %v414
    %v417 = vunpack.c.l.s4 1934713408
    %v418 = vunpack.c.0.s8 %v417
    %v419 = vperm.slane %v411, %v418
    %v420 = vrot.slane %v403, 4
    %v421 = vsel %vm376, 0.0, %v420
    %v422 = vrot.slane %v407, 4
    %v423 = vsel %vm376, 0.0, %v422
    %v424 = vrot.slane %v415, 4
    %v425 = vsel %vm376, 0.0, %v424
    %v426 = vrot.slane %v419, 4
    %v427 = vsel %vm376, 0.0, %v426
    %v428 = vrot.slane %v328, 4
    %v429 = vsel %vm376, 0.0, %v428
    %v431 = vunpack.c.l.s4 1983009808
    %v432 = vunpack.c.0.s8 %v431
    %v433 = vperm.slane %v328, %v432
    %v435 = vunpack.c.l.s4 1983009808
    %v436 = vunpack.c.0.s8 %v435
    %v437 = vperm.slane %v429, %v436
    %v438 = vrot.slane %v360, 4
    %v439 = vsel %vm376, 0.0, %v438
    %v441 = vunpack.c.l.s4 1983009808
    %v442 = vunpack.c.0.s8 %v441
    %v443 = vperm.slane %v360, %v442
    %v445 = vunpack.c.l.s4 1983009808
    %v446 = vunpack.c.0.s8 %v445
    %v447 = vperm.slane %v439, %v446
    %v448 = vrot.slane %v443, 4
    %v449 = vsel %vm376, %v448, %v433
    %v450 = vrot.slane %v433, 4
    %v451 = vsel %vm376, %v443, %v450
    %v453 = vunpack.c.l.s4 1934713408
    %v454 = vunpack.c.0.s8 %v453
    %v455 = vperm.slane %v449, %v454
    %v457 = vunpack.c.l.s4 1934713408
    %v458 = vunpack.c.0.s8 %v457
    %v459 = vperm.slane %v451, %v458
    %v460 = vrot.slane %v447, 4
    %v461 = vsel %vm376, %v460, %v437
    %v462 = vrot.slane %v437, 4
    %v463 = vsel %vm376, %v447, %v462
    %v465 = vunpack.c.l.s4 1934713408
    %v466 = vunpack.c.0.s8 %v465
    %v467 = vperm.slane %v461, %v466
    %v469 = vunpack.c.l.s4 1934713408
    %v470 = vunpack.c.0.s8 %v469
    %v471 = vperm.slane %v463, %v470
    %v472 = vrot.slane %v455, 4
    %v473 = vsel %vm376, 0.0, %v472
    %v474 = vrot.slane %v459, 4
    %v475 = vsel %vm376, 0.0, %v474
    %v476 = vrot.slane %v467, 4
    %v477 = vsel %vm376, 0.0, %v476
    %v478 = vrot.slane %v471, 4
    %v479 = vsel %vm376, 0.0, %v478
    %v480 = vrot.slane %v329, 4
    %v481 = vsel %vm376, 0.0, %v480
    %v483 = vunpack.c.l.s4 1983009808
    %v484 = vunpack.c.0.s8 %v483
    %v485 = vperm.slane %v329, %v484
    %v487 = vunpack.c.l.s4 1983009808
    %v488 = vunpack.c.0.s8 %v487
    %v489 = vperm.slane %v481, %v488
    %v490 = vrot.slane %v361, 4
    %v491 = vsel %vm376, 0.0, %v490
    %v493 = vunpack.c.l.s4 1983009808
    %v494 = vunpack.c.0.s8 %v493
    %v495 = vperm.slane %v361, %v494
    %v497 = vunpack.c.l.s4 1983009808
    %v498 = vunpack.c.0.s8 %v497
    %v499 = vperm.slane %v491, %v498
    %v500 = vrot.slane %v495, 4
    %v501 = vsel %vm376, %v500, %v485
    %v502 = vrot.slane %v485, 4
    %v503 = vsel %vm376, %v495, %v502
    %v505 = vunpack.c.l.s4 1934713408
    %v506 = vunpack.c.0.s8 %v505
    %v507 = vperm.slane %v501, %v506
    %v509 = vunpack.c.l.s4 1934713408
    %v510 = vunpack.c.0.s8 %v509
    %v511 = vperm.slane %v503, %v510
    %v512 = vrot.slane %v499, 4
    %v513 = vsel %vm376, %v512, %v489
    %v514 = vrot.slane %v489, 4
    %v515 = vsel %vm376, %v499, %v514
    %v517 = vunpack.c.l.s4 1934713408
    %v518 = vunpack.c.0.s8 %v517
    %v519 = vperm.slane %v513, %v518
    %v521 = vunpack.c.l.s4 1934713408
    %v522 = vunpack.c.0.s8 %v521
    %v523 = vperm.slane %v515, %v522
    %v524 = vrot.slane %v507, 4
    %v525 = vsel %vm376, 0.0, %v524
    %v526 = vrot.slane %v511, 4
    %v527 = vsel %vm376, 0.0, %v526
    %v528 = vrot.slane %v519, 4
    %v529 = vsel %vm376, 0.0, %v528
    %v530 = vrot.slane %v523, 4
    %v531 = vsel %vm376, 0.0, %v530
    %v532 = vrot.slane %v330, 4
    %v533 = vsel %vm376, 0.0, %v532
    %v535 = vunpack.c.l.s4 1983009808
    %v536 = vunpack.c.0.s8 %v535
    %v537 = vperm.slane %v330, %v536
    %v539 = vunpack.c.l.s4 1983009808
    %v540 = vunpack.c.0.s8 %v539
    %v541 = vperm.slane %v533, %v540
    %v542 = vrot.slane %v362, 4
    %v543 = vsel %vm376, 0.0, %v542
    %v545 = vunpack.c.l.s4 1983009808
    %v546 = vunpack.c.0.s8 %v545
    %v547 = vperm.slane %v362, %v546
    %v549 = vunpack.c.l.s4 1983009808
    %v550 = vunpack.c.0.s8 %v549
    %v551 = vperm.slane %v543, %v550
    %v552 = vrot.slane %v547, 4
    %v553 = vsel %vm376, %v552, %v537
    %v554 = vrot.slane %v537, 4
    %v555 = vsel %vm376, %v547, %v554
    %v557 = vunpack.c.l.s4 1934713408
    %v558 = vunpack.c.0.s8 %v557
    %v559 = vperm.slane %v553, %v558
    %v561 = vunpack.c.l.s4 1934713408
    %v562 = vunpack.c.0.s8 %v561
    %v563 = vperm.slane %v555, %v562
    %v564 = vrot.slane %v551, 4
    %v565 = vsel %vm376, %v564, %v541
    %v566 = vrot.slane %v541, 4
    %v567 = vsel %vm376, %v551, %v566
    %v569 = vunpack.c.l.s4 1934713408
    %v570 = vunpack.c.0.s8 %v569
    %v571 = vperm.slane %v565, %v570
    %v573 = vunpack.c.l.s4 1934713408
    %v574 = vunpack.c.0.s8 %v573
    %v575 = vperm.slane %v567, %v574
    %v576 = vrot.slane %v559, 4
    %v577 = vsel %vm376, 0.0, %v576
    %v578 = vrot.slane %v563, 4
    %v579 = vsel %vm376, 0.0, %v578
    %v580 = vrot.slane %v571, 4
    %v581 = vsel %vm376, 0.0, %v580
    %v582 = vrot.slane %v575, 4
    %v583 = vsel %vm376, 0.0, %v582
    %584 = vxpose.xlu0.b32.start [1/16] %v403, 128
    %585 = vxpose.xlu0.b32.cont [2/16] 0.0, 128
    %586 = vxpose.xlu0.b32.cont [3/16] 0.0, 128
    %587 = vxpose.xlu0.b32.cont [4/16] 0.0, 128
    %588 = vxpose.xlu0.b32.cont [5/16] 0.0, 128
    %589 = vxpose.xlu0.b32.cont [6/16] 0.0, 128
    %590 = vxpose.xlu0.b32.cont [7/16] 0.0, 128
    %591 = vxpose.xlu0.b32.cont [8/16] 0.0, 128
    %592 = vxpose.xlu0.b32.cont [9/16] 0.0, 128
    %593 = vxpose.xlu0.b32.cont [10/16] 0.0, 128
    %594 = vxpose.xlu0.b32.cont [11/16] 0.0, 128
    %595 = vxpose.xlu0.b32.cont [12/16] 0.0, 128
    %596 = vxpose.xlu0.b32.cont [13/16] 0.0, 128
    %597 = vxpose.xlu0.b32.cont [14/16] 0.0, 128
    %598 = vxpose.xlu0.b32.cont [15/16] 0.0, 128
    %599 = vxpose.xlu0.b32.end [16/16] 0.0, 128
    %v600 = vpop.trf.xlu0
    %v601 = vpop.trf.xlu0
    %v602 = vpop.trf.xlu0
    %v603 = vpop.trf.xlu0
    %v604 = vpop.trf.xlu0
    %v605 = vpop.trf.xlu0
    %v606 = vpop.trf.xlu0
    %v607 = vpop.trf.xlu0
    %v608 = vpop.trf.xlu0
    %v609 = vpop.trf.xlu0
    %v610 = vpop.trf.xlu0
    %v611 = vpop.trf.xlu0
    %v612 = vpop.trf.xlu0
    %v613 = vpop.trf.xlu0
    %v614 = vpop.trf.xlu0
    %v615 = vpop.trf.xlu0
    %616 = vxpose.xlu0.b32.start [1/16] %v421, 128
    %617 = vxpose.xlu0.b32.cont [2/16] 0.0, 128
    %618 = vxpose.xlu0.b32.cont [3/16] 0.0, 128
    %619 = vxpose.xlu0.b32.cont [4/16] 0.0, 128
    %620 = vxpose.xlu0.b32.cont [5/16] 0.0, 128
    %621 = vxpose.xlu0.b32.cont [6/16] 0.0, 128
    %622 = vxpose.xlu0.b32.cont [7/16] 0.0, 128
    %623 = vxpose.xlu0.b32.cont [8/16] 0.0, 128
    %624 = vxpose.xlu0.b32.cont [9/16] 0.0, 128
    %625 = vxpose.xlu0.b32.cont [10/16] 0.0, 128
    %626 = vxpose.xlu0.b32.cont [11/16] 0.0, 128
    %627 = vxpose.xlu0.b32.cont [12/16] 0.0, 128
    %628 = vxpose.xlu0.b32.cont [13/16] 0.0, 128
    %629 = vxpose.xlu0.b32.cont [14/16] 0.0, 128
    %630 = vxpose.xlu0.b32.cont [15/16] 0.0, 128
    %631 = vxpose.xlu0.b32.end [16/16] 0.0, 128
    %v632 = vpop.trf.xlu0
    %v633 = vpop.trf.xlu0
    %v634 = vpop.trf.xlu0
    %v635 = vpop.trf.xlu0
    %v636 = vpop.trf.xlu0
    %v637 = vpop.trf.xlu0
    %v638 = vpop.trf.xlu0
    %v639 = vpop.trf.xlu0
    %v640 = vpop.trf.xlu0
    %v641 = vpop.trf.xlu0
    %v642 = vpop.trf.xlu0
    %v643 = vpop.trf.xlu0
    %v644 = vpop.trf.xlu0
    %v645 = vpop.trf.xlu0
    %v646 = vpop.trf.xlu0
    %v647 = vpop.trf.xlu0
    %648 = vxpose.xlu0.b32.start [1/16] %v407, 128
    %649 = vxpose.xlu0.b32.cont [2/16] 0.0, 128
    %650 = vxpose.xlu0.b32.cont [3/16] 0.0, 128
    %651 = vxpose.xlu0.b32.cont [4/16] 0.0, 128
    %652 = vxpose.xlu0.b32.cont [5/16] 0.0, 128
    %653 = vxpose.xlu0.b32.cont [6/16] 0.0, 128
    %654 = vxpose.xlu0.b32.cont [7/16] 0.0, 128
    %655 = vxpose.xlu0.b32.cont [8/16] 0.0, 128
    %656 = vxpose.xlu0.b32.cont [9/16] 0.0, 128
    %657 = vxpose.xlu0.b32.cont [10/16] 0.0, 128
    %658 = vxpose.xlu0.b32.cont [11/16] 0.0, 128
    %659 = vxpose.xlu0.b32.cont [12/16] 0.0, 128
    %660 = vxpose.xlu0.b32.cont [13/16] 0.0, 128
    %661 = vxpose.xlu0.b32.cont [14/16] 0.0, 128
    %662 = vxpose.xlu0.b32.cont [15/16] 0.0, 128
    %663 = vxpose.xlu0.b32.end [16/16] 0.0, 128
    %v664 = vpop.trf.xlu0
    %v665 = vpop.trf.xlu0
    %v666 = vpop.trf.xlu0
    %v667 = vpop.trf.xlu0
    %v668 = vpop.trf.xlu0
    %v669 = vpop.trf.xlu0
    %v670 = vpop.trf.xlu0
    %v671 = vpop.trf.xlu0
    %v672 = vpop.trf.xlu0
    %v673 = vpop.trf.xlu0
    %v674 = vpop.trf.xlu0
    %v675 = vpop.trf.xlu0
    %v676 = vpop.trf.xlu0
    %v677 = vpop.trf.xlu0
    %v678 = vpop.trf.xlu0
    %v679 = vpop.trf.xlu0
    %680 = vxpose.xlu0.b32.start [1/16] %v423, 128
    %681 = vxpose.xlu0.b32.cont [2/16] 0.0, 128
    %682 = vxpose.xlu0.b32.cont [3/16] 0.0, 128
    %683 = vxpose.xlu0.b32.cont [4/16] 0.0, 128
    %684 = vxpose.xlu0.b32.cont [5/16] 0.0, 128
    %685 = vxpose.xlu0.b32.cont [6/16] 0.0, 128
    %686 = vxpose.xlu0.b32.cont [7/16] 0.0, 128
    %687 = vxpose.xlu0.b32.cont [8/16] 0.0, 128
    %688 = vxpose.xlu0.b32.cont [9/16] 0.0, 128
    %689 = vxpose.xlu0.b32.cont [10/16] 0.0, 128
    %690 = vxpose.xlu0.b32.cont [11/16] 0.0, 128
    %691 = vxpose.xlu0.b32.cont [12/16] 0.0, 128
    %692 = vxpose.xlu0.b32.cont [13/16] 0.0, 128
    %693 = vxpose.xlu0.b32.cont [14/16] 0.0, 128
    %694 = vxpose.xlu0.b32.cont [15/16] 0.0, 128
    %695 = vxpose.xlu0.b32.end [16/16] 0.0, 128
    %v696 = vpop.trf.xlu0
    %v697 = vpop.trf.xlu0
    %v698 = vpop.trf.xlu0
    %v699 = vpop.trf.xlu0
    %v700 = vpop.trf.xlu0
    %v701 = vpop.trf.xlu0
    %v702 = vpop.trf.xlu0
    %v703 = vpop.trf.xlu0
    %v704 = vpop.trf.xlu0
    %v705 = vpop.trf.xlu0
    %v706 = vpop.trf.xlu0
    %v707 = vpop.trf.xlu0
    %v708 = vpop.trf.xlu0
    %v709 = vpop.trf.xlu0
    %v710 = vpop.trf.xlu0
    %v711 = vpop.trf.xlu0
    %712 = vxpose.xlu0.b32.start [1/16] %v415, 128
    %713 = vxpose.xlu0.b32.cont [2/16] 0.0, 128
    %714 = vxpose.xlu0.b32.cont [3/16] 0.0, 128
    %715 = vxpose.xlu0.b32.cont [4/16] 0.0, 128
    %716 = vxpose.xlu0.b32.cont [5/16] 0.0, 128
    %717 = vxpose.xlu0.b32.cont [6/16] 0.0, 128
    %718 = vxpose.xlu0.b32.cont [7/16] 0.0, 128
    %719 = vxpose.xlu0.b32.cont [8/16] 0.0, 128
    %720 = vxpose.xlu0.b32.cont [9/16] 0.0, 128
    %721 = vxpose.xlu0.b32.cont [10/16] 0.0, 128
    %722 = vxpose.xlu0.b32.cont [11/16] 0.0, 128
    %723 = vxpose.xlu0.b32.cont [12/16] 0.0, 128
    %724 = vxpose.xlu0.b32.cont [13/16] 0.0, 128
    %725 = vxpose.xlu0.b32.cont [14/16] 0.0, 128
    %726 = vxpose.xlu0.b32.cont [15/16] 0.0, 128
    %727 = vxpose.xlu0.b32.end [16/16] 0.0, 128
    %v728 = vpop.trf.xlu0
    %v729 = vpop.trf.xlu0
    %v730 = vpop.trf.xlu0
    %v731 = vpop.trf.xlu0
    %v732 = vpop.trf.xlu0
    %v733 = vpop.trf.xlu0
    %v734 = vpop.trf.xlu0
    %v735 = vpop.trf.xlu0
    %v736 = vpop.trf.xlu0
    %v737 = vpop.trf.xlu0
    %v738 = vpop.trf.xlu0
    %v739 = vpop.trf.xlu0
    %v740 = vpop.trf.xlu0
    %v741 = vpop.trf.xlu0
    %v742 = vpop.trf.xlu0
    %v743 = vpop.trf.xlu0
    %744 = vxpose.xlu0.b32.start [1/16] %v425, 128
    %745 = vxpose.xlu0.b32.cont [2/16] 0.0, 128
    %746 = vxpose.xlu0.b32.cont [3/16] 0.0, 128
    %747 = vxpose.xlu0.b32.cont [4/16] 0.0, 128
    %748 = vxpose.xlu0.b32.cont [5/16] 0.0, 128
    %749 = vxpose.xlu0.b32.cont [6/16] 0.0, 128
    %750 = vxpose.xlu0.b32.cont [7/16] 0.0, 128
    %751 = vxpose.xlu0.b32.cont [8/16] 0.0, 128
    %752 = vxpose.xlu0.b32.cont [9/16] 0.0, 128
    %753 = vxpose.xlu0.b32.cont [10/16] 0.0, 128
    %754 = vxpose.xlu0.b32.cont [11/16] 0.0, 128
    %755 = vxpose.xlu0.b32.cont [12/16] 0.0, 128
    %756 = vxpose.xlu0.b32.cont [13/16] 0.0, 128
    %757 = vxpose.xlu0.b32.cont [14/16] 0.0, 128
    %758 = vxpose.xlu0.b32.cont [15/16] 0.0, 128
    %759 = vxpose.xlu0.b32.end [16/16] 0.0, 128
    %v760 = vpop.trf.xlu0
    %v761 = vpop.trf.xlu0
    %v762 = vpop.trf.xlu0
    %v763 = vpop.trf.xlu0
    %v764 = vpop.trf.xlu0
    %v765 = vpop.trf.xlu0
    %v766 = vpop.trf.xlu0
    %v767 = vpop.trf.xlu0
    %v768 = vpop.trf.xlu0
    %v769 = vpop.trf.xlu0
    %v770 = vpop.trf.xlu0
    %v771 = vpop.trf.xlu0
    %v772 = vpop.trf.xlu0
    %v773 = vpop.trf.xlu0
    %v774 = vpop.trf.xlu0
    %v775 = vpop.trf.xlu0
    %776 = vxpose.xlu0.b32.start [1/16] %v419, 128
    %777 = vxpose.xlu0.b32.cont [2/16] 0.0, 128
    %778 = vxpose.xlu0.b32.cont [3/16] 0.0, 128
    %779 = vxpose.xlu0.b32.cont [4/16] 0.0, 128
    %780 = vxpose.xlu0.b32.cont [5/16] 0.0, 128
    %781 = vxpose.xlu0.b32.cont [6/16] 0.0, 128
    %782 = vxpose.xlu0.b32.cont [7/16] 0.0, 128
    %783 = vxpose.xlu0.b32.cont [8/16] 0.0, 128
    %784 = vxpose.xlu0.b32.cont [9/16] 0.0, 128
    %785 = vxpose.xlu0.b32.cont [10/16] 0.0, 128
    %786 = vxpose.xlu0.b32.cont [11/16] 0.0, 128
    %787 = vxpose.xlu0.b32.cont [12/16] 0.0, 128
    %788 = vxpose.xlu0.b32.cont [13/16] 0.0, 128
    %789 = vxpose.xlu0.b32.cont [14/16] 0.0, 128
    %790 = vxpose.xlu0.b32.cont [15/16] 0.0, 128
    %791 = vxpose.xlu0.b32.end [16/16] 0.0, 128
    %v792 = vpop.trf.xlu0
    %v793 = vpop.trf.xlu0
    %v794 = vpop.trf.xlu0
    %v795 = vpop.trf.xlu0
    %v796 = vpop.trf.xlu0
    %v797 = vpop.trf.xlu0
    %v798 = vpop.trf.xlu0
    %v799 = vpop.trf.xlu0
    %v800 = vpop.trf.xlu0
    %v801 = vpop.trf.xlu0
    %v802 = vpop.trf.xlu0
    %v803 = vpop.trf.xlu0
    %v804 = vpop.trf.xlu0
    %v805 = vpop.trf.xlu0
    %v806 = vpop.trf.xlu0
    %v807 = vpop.trf.xlu0
    %808 = vxpose.xlu0.b32.start [1/16] %v427, 128
    %809 = vxpose.xlu0.b32.cont [2/16] 0.0, 128
    %810 = vxpose.xlu0.b32.cont [3/16] 0.0, 128
    %811 = vxpose.xlu0.b32.cont [4/16] 0.0, 128
    %812 = vxpose.xlu0.b32.cont [5/16] 0.0, 128
    %813 = vxpose.xlu0.b32.cont [6/16] 0.0, 128
    %814 = vxpose.xlu0.b32.cont [7/16] 0.0, 128
    %815 = vxpose.xlu0.b32.cont [8/16] 0.0, 128
    %816 = vxpose.xlu0.b32.cont [9/16] 0.0, 128
    %817 = vxpose.xlu0.b32.cont [10/16] 0.0, 128
    %818 = vxpose.xlu0.b32.cont [11/16] 0.0, 128
    %819 = vxpose.xlu0.b32.cont [12/16] 0.0, 128
    %820 = vxpose.xlu0.b32.cont [13/16] 0.0, 128
    %821 = vxpose.xlu0.b32.cont [14/16] 0.0, 128
    %822 = vxpose.xlu0.b32.cont [15/16] 0.0, 128
    %823 = vxpose.xlu0.b32.end [16/16] 0.0, 128
    %v824 = vpop.trf.xlu0
    %v825 = vpop.trf.xlu0
    %v826 = vpop.trf.xlu0
    %v827 = vpop.trf.xlu0
    %v828 = vpop.trf.xlu0
    %v829 = vpop.trf.xlu0
    %v830 = vpop.trf.xlu0
    %v831 = vpop.trf.xlu0
    %v832 = vpop.trf.xlu0
    %v833 = vpop.trf.xlu0
    %v834 = vpop.trf.xlu0
    %v835 = vpop.trf.xlu0
    %v836 = vpop.trf.xlu0
    %v837 = vpop.trf.xlu0
    %v838 = vpop.trf.xlu0
    %v839 = vpop.trf.xlu0
    %840 = vxpose.xlu0.b32.start [1/16] %v455, 128
    %841 = vxpose.xlu0.b32.cont [2/16] 0.0, 128
    %842 = vxpose.xlu0.b32.cont [3/16] 0.0, 128
    %843 = vxpose.xlu0.b32.cont [4/16] 0.0, 128
    %844 = vxpose.xlu0.b32.cont [5/16] 0.0, 128
    %845 = vxpose.xlu0.b32.cont [6/16] 0.0, 128
    %846 = vxpose.xlu0.b32.cont [7/16] 0.0, 128
    %847 = vxpose.xlu0.b32.cont [8/16] 0.0, 128
    %848 = vxpose.xlu0.b32.cont [9/16] 0.0, 128
    %849 = vxpose.xlu0.b32.cont [10/16] 0.0, 128
    %850 = vxpose.xlu0.b32.cont [11/16] 0.0, 128
    %851 = vxpose.xlu0.b32.cont [12/16] 0.0, 128
    %852 = vxpose.xlu0.b32.cont [13/16] 0.0, 128
    %853 = vxpose.xlu0.b32.cont [14/16] 0.0, 128
    %854 = vxpose.xlu0.b32.cont [15/16] 0.0, 128
    %855 = vxpose.xlu0.b32.end [16/16] 0.0, 128
    %v856 = vpop.trf.xlu0
    %v857 = vpop.trf.xlu0
    %v858 = vpop.trf.xlu0
    %v859 = vpop.trf.xlu0
    %v860 = vpop.trf.xlu0
    %v861 = vpop.trf.xlu0
    %v862 = vpop.trf.xlu0
    %v863 = vpop.trf.xlu0
    %v864 = vpop.trf.xlu0
    %v865 = vpop.trf.xlu0
    %v866 = vpop.trf.xlu0
    %v867 = vpop.trf.xlu0
    %v868 = vpop.trf.xlu0
    %v869 = vpop.trf.xlu0
    %v870 = vpop.trf.xlu0
    %v871 = vpop.trf.xlu0
    %872 = vxpose.xlu0.b32.start [1/16] %v473, 128
    %873 = vxpose.xlu0.b32.cont [2/16] 0.0, 128
    %874 = vxpose.xlu0.b32.cont [3/16] 0.0, 128
    %875 = vxpose.xlu0.b32.cont [4/16] 0.0, 128
    %876 = vxpose.xlu0.b32.cont [5/16] 0.0, 128
    %877 = vxpose.xlu0.b32.cont [6/16] 0.0, 128
    %878 = vxpose.xlu0.b32.cont [7/16] 0.0, 128
    %879 = vxpose.xlu0.b32.cont [8/16] 0.0, 128
    %880 = vxpose.xlu0.b32.cont [9/16] 0.0, 128
    %881 = vxpose.xlu0.b32.cont [10/16] 0.0, 128
    %882 = vxpose.xlu0.b32.cont [11/16] 0.0, 128
    %883 = vxpose.xlu0.b32.cont [12/16] 0.0, 128
    %884 = vxpose.xlu0.b32.cont [13/16] 0.0, 128
    %885 = vxpose.xlu0.b32.cont [14/16] 0.0, 128
    %886 = vxpose.xlu0.b32.cont [15/16] 0.0, 128
    %887 = vxpose.xlu0.b32.end [16/16] 0.0, 128
    %v888 = vpop.trf.xlu0
    %v889 = vpop.trf.xlu0
    %v890 = vpop.trf.xlu0
    %v891 = vpop.trf.xlu0
    %v892 = vpop.trf.xlu0
    %v893 = vpop.trf.xlu0
    %v894 = vpop.trf.xlu0
    %v895 = vpop.trf.xlu0
    %v896 = vpop.trf.xlu0
    %v897 = vpop.trf.xlu0
    %v898 = vpop.trf.xlu0
    %v899 = vpop.trf.xlu0
    %v900 = vpop.trf.xlu0
    %v901 = vpop.trf.xlu0
    %v902 = vpop.trf.xlu0
    %v903 = vpop.trf.xlu0
    %904 = vxpose.xlu0.b32.start [1/16] %v459, 128
    %905 = vxpose.xlu0.b32.cont [2/16] 0.0, 128
    %906 = vxpose.xlu0.b32.cont [3/16] 0.0, 128
    %907 = vxpose.xlu0.b32.cont [4/16] 0.0, 128
    %908 = vxpose.xlu0.b32.cont [5/16] 0.0, 128
    %909 = vxpose.xlu0.b32.cont [6/16] 0.0, 128
    %910 = vxpose.xlu0.b32.cont [7/16] 0.0, 128
    %911 = vxpose.xlu0.b32.cont [8/16] 0.0, 128
    %912 = vxpose.xlu0.b32.cont [9/16] 0.0, 128
    %913 = vxpose.xlu0.b32.cont [10/16] 0.0, 128
    %914 = vxpose.xlu0.b32.cont [11/16] 0.0, 128
    %915 = vxpose.xlu0.b32.cont [12/16] 0.0, 128
    %916 = vxpose.xlu0.b32.cont [13/16] 0.0, 128
    %917 = vxpose.xlu0.b32.cont [14/16] 0.0, 128
    %918 = vxpose.xlu0.b32.cont [15/16] 0.0, 128
    %919 = vxpose.xlu0.b32.end [16/16] 0.0, 128
    %v920 = vpop.trf.xlu0
    %v921 = vpop.trf.xlu0
    %v922 = vpop.trf.xlu0
    %v923 = vpop.trf.xlu0
    %v924 = vpop.trf.xlu0
    %v925 = vpop.trf.xlu0
    %v926 = vpop.trf.xlu0
    %v927 = vpop.trf.xlu0
    %v928 = vpop.trf.xlu0
    %v929 = vpop.trf.xlu0
    %v930 = vpop.trf.xlu0
    %v931 = vpop.trf.xlu0
    %v932 = vpop.trf.xlu0
    %v933 = vpop.trf.xlu0
    %v934 = vpop.trf.xlu0
    %v935 = vpop.trf.xlu0
    %936 = vxpose.xlu0.b32.start [1/16] %v475, 128
    %937 = vxpose.xlu0.b32.cont [2/16] 0.0, 128
    %938 = vxpose.xlu0.b32.cont [3/16] 0.0, 128
    %939 = vxpose.xlu0.b32.cont [4/16] 0.0, 128
    %940 = vxpose.xlu0.b32.cont [5/16] 0.0, 128
    %941 = vxpose.xlu0.b32.cont [6/16] 0.0, 128
    %942 = vxpose.xlu0.b32.cont [7/16] 0.0, 128
    %943 = vxpose.xlu0.b32.cont [8/16] 0.0, 128
    %944 = vxpose.xlu0.b32.cont [9/16] 0.0, 128
    %945 = vxpose.xlu0.b32.cont [10/16] 0.0, 128
    %946 = vxpose.xlu0.b32.cont [11/16] 0.0, 128
    %947 = vxpose.xlu0.b32.cont [12/16] 0.0, 128
    %948 = vxpose.xlu0.b32.cont [13/16] 0.0, 128
    %949 = vxpose.xlu0.b32.cont [14/16] 0.0, 128
    %950 = vxpose.xlu0.b32.cont [15/16] 0.0, 128
    %951 = vxpose.xlu0.b32.end [16/16] 0.0, 128
    %v952 = vpop.trf.xlu0
    %v953 = vpop.trf.xlu0
    %v954 = vpop.trf.xlu0
    %v955 = vpop.trf.xlu0
    %v956 = vpop.trf.xlu0
    %v957 = vpop.trf.xlu0
    %v958 = vpop.trf.xlu0
    %v959 = vpop.trf.xlu0
    %v960 = vpop.trf.xlu0
    %v961 = vpop.trf.xlu0
    %v962 = vpop.trf.xlu0
    %v963 = vpop.trf.xlu0
    %v964 = vpop.trf.xlu0
    %v965 = vpop.trf.xlu0
    %v966 = vpop.trf.xlu0
    %v967 = vpop.trf.xlu0
    %968 = vxpose.xlu0.b32.start [1/16] %v467, 128
    %969 = vxpose.xlu0.b32.cont [2/16] 0.0, 128
    %970 = vxpose.xlu0.b32.cont [3/16] 0.0, 128
    %971 = vxpose.xlu0.b32.cont [4/16] 0.0, 128
    %972 = vxpose.xlu0.b32.cont [5/16] 0.0, 128
    %973 = vxpose.xlu0.b32.cont [6/16] 0.0, 128
    %974 = vxpose.xlu0.b32.cont [7/16] 0.0, 128
    %975 = vxpose.xlu0.b32.cont [8/16] 0.0, 128
    %976 = vxpose.xlu0.b32.cont [9/16] 0.0, 128
    %977 = vxpose.xlu0.b32.cont [10/16] 0.0, 128
    %978 = vxpose.xlu0.b32.cont [11/16] 0.0, 128
    %979 = vxpose.xlu0.b32.cont [12/16] 0.0, 128
    %980 = vxpose.xlu0.b32.cont [13/16] 0.0, 128
    %981 = vxpose.xlu0.b32.cont [14/16] 0.0, 128
    %982 = vxpose.xlu0.b32.cont [15/16] 0.0, 128
    %983 = vxpose.xlu0.b32.end [16/16] 0.0, 128
    %v984 = vpop.trf.xlu0
    %v985 = vpop.trf.xlu0
    %v986 = vpop.trf.xlu0
    %v987 = vpop.trf.xlu0
    %v988 = vpop.trf.xlu0
    %v989 = vpop.trf.xlu0
    %v990 = vpop.trf.xlu0
    %v991 = vpop.trf.xlu0
    %v992 = vpop.trf.xlu0
    %v993 = vpop.trf.xlu0
    %v994 = vpop.trf.xlu0
    %v995 = vpop.trf.xlu0
    %v996 = vpop.trf.xlu0
    %v997 = vpop.trf.xlu0
    %v998 = vpop.trf.xlu0
    %v999 = vpop.trf.xlu0
    %1000 = vxpose.xlu0.b32.start [1/16] %v477, 128
    %1001 = vxpose.xlu0.b32.cont [2/16] 0.0, 128
    %1002 = vxpose.xlu0.b32.cont [3/16] 0.0, 128
    %1003 = vxpose.xlu0.b32.cont [4/16] 0.0, 128
    %1004 = vxpose.xlu0.b32.cont [5/16] 0.0, 128
    %1005 = vxpose.xlu0.b32.cont [6/16] 0.0, 128
    %1006 = vxpose.xlu0.b32.cont [7/16] 0.0, 128
    %1007 = vxpose.xlu0.b32.cont [8/16] 0.0, 128
    %1008 = vxpose.xlu0.b32.cont [9/16] 0.0, 128
    %1009 = vxpose.xlu0.b32.cont [10/16] 0.0, 128
    %1010 = vxpose.xlu0.b32.cont [11/16] 0.0, 128
    %1011 = vxpose.xlu0.b32.cont [12/16] 0.0, 128
    %1012 = vxpose.xlu0.b32.cont [13/16] 0.0, 128
    %1013 = vxpose.xlu0.b32.cont [14/16] 0.0, 128
    %1014 = vxpose.xlu0.b32.cont [15/16] 0.0, 128
    %1015 = vxpose.xlu0.b32.end [16/16] 0.0, 128
    %v1016 = vpop.trf.xlu0
    %v1017 = vpop.trf.xlu0
    %v1018 = vpop.trf.xlu0
    %v1019 = vpop.trf.xlu0
    %v1020 = vpop.trf.xlu0
    %v1021 = vpop.trf.xlu0
    %v1022 = vpop.trf.xlu0
    %v1023 = vpop.trf.xlu0
    %v1024 = vpop.trf.xlu0
    %v1025 = vpop.trf.xlu0
    %v1026 = vpop.trf.xlu0
    %v1027 = vpop.trf.xlu0
    %v1028 = vpop.trf.xlu0
    %v1029 = vpop.trf.xlu0
    %v1030 = vpop.trf.xlu0
    %v1031 = vpop.trf.xlu0
    %1032 = vxpose.xlu0.b32.start [1/16] %v471, 128
    %1033 = vxpose.xlu0.b32.cont [2/16] 0.0, 128
    %1034 = vxpose.xlu0.b32.cont [3/16] 0.0, 128
    %1035 = vxpose.xlu0.b32.cont [4/16] 0.0, 128
    %1036 = vxpose.xlu0.b32.cont [5/16] 0.0, 128
    %1037 = vxpose.xlu0.b32.cont [6/16] 0.0, 128
    %1038 = vxpose.xlu0.b32.cont [7/16] 0.0, 128
    %1039 = vxpose.xlu0.b32.cont [8/16] 0.0, 128
    %1040 = vxpose.xlu0.b32.cont [9/16] 0.0, 128
    %1041 = vxpose.xlu0.b32.cont [10/16] 0.0, 128
    %1042 = vxpose.xlu0.b32.cont [11/16] 0.0, 128
    %1043 = vxpose.xlu0.b32.cont [12/16] 0.0, 128
    %1044 = vxpose.xlu0.b32.cont [13/16] 0.0, 128
    %1045 = vxpose.xlu0.b32.cont [14/16] 0.0, 128
    %1046 = vxpose.xlu0.b32.cont [15/16] 0.0, 128
    %1047 = vxpose.xlu0.b32.end [16/16] 0.0, 128
    %v1048 = vpop.trf.xlu0
    %v1049 = vpop.trf.xlu0
    %v1050 = vpop.trf.xlu0
    %v1051 = vpop.trf.xlu0
    %v1052 = vpop.trf.xlu0
    %v1053 = vpop.trf.xlu0
    %v1054 = vpop.trf.xlu0
    %v1055 = vpop.trf.xlu0
    %v1056 = vpop.trf.xlu0
    %v1057 = vpop.trf.xlu0
    %v1058 = vpop.trf.xlu0
    %v1059 = vpop.trf.xlu0
    %v1060 = vpop.trf.xlu0
    %v1061 = vpop.trf.xlu0
    %v1062 = vpop.trf.xlu0
    %v1063 = vpop.trf.xlu0
    %1064 = vxpose.xlu0.b32.start [1/16] %v479, 128
    %1065 = vxpose.xlu0.b32.cont [2/16] 0.0, 128
    %1066 = vxpose.xlu0.b32.cont [3/16] 0.0, 128
    %1067 = vxpose.xlu0.b32.cont [4/16] 0.0, 128
    %1068 = vxpose.xlu0.b32.cont [5/16] 0.0, 128
    %1069 = vxpose.xlu0.b32.cont [6/16] 0.0, 128
    %1070 = vxpose.xlu0.b32.cont [7/16] 0.0, 128
    %1071 = vxpose.xlu0.b32.cont [8/16] 0.0, 128
    %1072 = vxpose.xlu0.b32.cont [9/16] 0.0, 128
    %1073 = vxpose.xlu0.b32.cont [10/16] 0.0, 128
    %1074 = vxpose.xlu0.b32.cont [11/16] 0.0, 128
    %1075 = vxpose.xlu0.b32.cont [12/16] 0.0, 128
    %1076 = vxpose.xlu0.b32.cont [13/16] 0.0, 128
    %1077 = vxpose.xlu0.b32.cont [14/16] 0.0, 128
    %1078 = vxpose.xlu0.b32.cont [15/16] 0.0, 128
    %1079 = vxpose.xlu0.b32.end [16/16] 0.0, 128
    %v1080 = vpop.trf.xlu0
    %v1081 = vpop.trf.xlu0
    %v1082 = vpop.trf.xlu0
    %v1083 = vpop.trf.xlu0
    %v1084 = vpop.trf.xlu0
    %v1085 = vpop.trf.xlu0
    %v1086 = vpop.trf.xlu0
    %v1087 = vpop.trf.xlu0
    %v1088 = vpop.trf.xlu0
    %v1089 = vpop.trf.xlu0
    %v1090 = vpop.trf.xlu0
    %v1091 = vpop.trf.xlu0
    %v1092 = vpop.trf.xlu0
    %v1093 = vpop.trf.xlu0
    %v1094 = vpop.trf.xlu0
    %v1095 = vpop.trf.xlu0
    %1096 = vxpose.xlu0.b32.start [1/16] %v507, 128
    %1097 = vxpose.xlu0.b32.cont [2/16] 0.0, 128
    %1098 = vxpose.xlu0.b32.cont [3/16] 0.0, 128
    %1099 = vxpose.xlu0.b32.cont [4/16] 0.0, 128
    %1100 = vxpose.xlu0.b32.cont [5/16] 0.0, 128
    %1101 = vxpose.xlu0.b32.cont [6/16] 0.0, 128
    %1102 = vxpose.xlu0.b32.cont [7/16] 0.0, 128
    %1103 = vxpose.xlu0.b32.cont [8/16] 0.0, 128
    %1104 = vxpose.xlu0.b32.cont [9/16] 0.0, 128
    %1105 = vxpose.xlu0.b32.cont [10/16] 0.0, 128
    %1106 = vxpose.xlu0.b32.cont [11/16] 0.0, 128
    %1107 = vxpose.xlu0.b32.cont [12/16] 0.0, 128
    %1108 = vxpose.xlu0.b32.cont [13/16] 0.0, 128
    %1109 = vxpose.xlu0.b32.cont [14/16] 0.0, 128
    %1110 = vxpose.xlu0.b32.cont [15/16] 0.0, 128
    %1111 = vxpose.xlu0.b32.end [16/16] 0.0, 128
    %v1112 = vpop.trf.xlu0
    %v1113 = vpop.trf.xlu0
    %v1114 = vpop.trf.xlu0
    %v1115 = vpop.trf.xlu0
    %v1116 = vpop.trf.xlu0
    %v1117 = vpop.trf.xlu0
    %v1118 = vpop.trf.xlu0
    %v1119 = vpop.trf.xlu0
    %v1120 = vpop.trf.xlu0
    %v1121 = vpop.trf.xlu0
    %v1122 = vpop.trf.xlu0
    %v1123 = vpop.trf.xlu0
    %v1124 = vpop.trf.xlu0
    %v1125 = vpop.trf.xlu0
    %v1126 = vpop.trf.xlu0
    %v1127 = vpop.trf.xlu0
    %1128 = vxpose.xlu0.b32.start [1/16] %v525, 128
    %1129 = vxpose.xlu0.b32.cont [2/16] 0.0, 128
    %1130 = vxpose.xlu0.b32.cont [3/16] 0.0, 128
    %1131 = vxpose.xlu0.b32.cont [4/16] 0.0, 128
    %1132 = vxpose.xlu0.b32.cont [5/16] 0.0, 128
    %1133 = vxpose.xlu0.b32.cont [6/16] 0.0, 128
    %1134 = vxpose.xlu0.b32.cont [7/16] 0.0, 128
    %1135 = vxpose.xlu0.b32.cont [8/16] 0.0, 128
    %1136 = vxpose.xlu0.b32.cont [9/16] 0.0, 128
    %1137 = vxpose.xlu0.b32.cont [10/16] 0.0, 128
    %1138 = vxpose.xlu0.b32.cont [11/16] 0.0, 128
    %1139 = vxpose.xlu0.b32.cont [12/16] 0.0, 128
    %1140 = vxpose.xlu0.b32.cont [13/16] 0.0, 128
    %1141 = vxpose.xlu0.b32.cont [14/16] 0.0, 128
    %1142 = vxpose.xlu0.b32.cont [15/16] 0.0, 128
    %1143 = vxpose.xlu0.b32.end [16/16] 0.0, 128
    %v1144 = vpop.trf.xlu0
    %v1145 = vpop.trf.xlu0
    %v1146 = vpop.trf.xlu0
    %v1147 = vpop.trf.xlu0
    %v1148 = vpop.trf.xlu0
    %v1149 = vpop.trf.xlu0
    %v1150 = vpop.trf.xlu0
    %v1151 = vpop.trf.xlu0
    %v1152 = vpop.trf.xlu0
    %v1153 = vpop.trf.xlu0
    %v1154 = vpop.trf.xlu0
    %v1155 = vpop.trf.xlu0
    %v1156 = vpop.trf.xlu0
    %v1157 = vpop.trf.xlu0
    %v1158 = vpop.trf.xlu0
    %v1159 = vpop.trf.xlu0
    %1160 = vxpose.xlu0.b32.start [1/16] %v511, 128
    %1161 = vxpose.xlu0.b32.cont [2/16] 0.0, 128
    %1162 = vxpose.xlu0.b32.cont [3/16] 0.0, 128
    %1163 = vxpose.xlu0.b32.cont [4/16] 0.0, 128
    %1164 = vxpose.xlu0.b32.cont [5/16] 0.0, 128
    %1165 = vxpose.xlu0.b32.cont [6/16] 0.0, 128
    %1166 = vxpose.xlu0.b32.cont [7/16] 0.0, 128
    %1167 = vxpose.xlu0.b32.cont [8/16] 0.0, 128
    %1168 = vxpose.xlu0.b32.cont [9/16] 0.0, 128
    %1169 = vxpose.xlu0.b32.cont [10/16] 0.0, 128
    %1170 = vxpose.xlu0.b32.cont [11/16] 0.0, 128
    %1171 = vxpose.xlu0.b32.cont [12/16] 0.0, 128
    %1172 = vxpose.xlu0.b32.cont [13/16] 0.0, 128
    %1173 = vxpose.xlu0.b32.cont [14/16] 0.0, 128
    %1174 = vxpose.xlu0.b32.cont [15/16] 0.0, 128
    %1175 = vxpose.xlu0.b32.end [16/16] 0.0, 128
    %v1176 = vpop.trf.xlu0
    %v1177 = vpop.trf.xlu0
    %v1178 = vpop.trf.xlu0
    %v1179 = vpop.trf.xlu0
    %v1180 = vpop.trf.xlu0
    %v1181 = vpop.trf.xlu0
    %v1182 = vpop.trf.xlu0
    %v1183 = vpop.trf.xlu0
    %v1184 = vpop.trf.xlu0
    %v1185 = vpop.trf.xlu0
    %v1186 = vpop.trf.xlu0
    %v1187 = vpop.trf.xlu0
    %v1188 = vpop.trf.xlu0
    %v1189 = vpop.trf.xlu0
    %v1190 = vpop.trf.xlu0
    %v1191 = vpop.trf.xlu0
    %1192 = vxpose.xlu0.b32.start [1/16] %v527, 128
    %1193 = vxpose.xlu0.b32.cont [2/16] 0.0, 128
    %1194 = vxpose.xlu0.b32.cont [3/16] 0.0, 128
    %1195 = vxpose.xlu0.b32.cont [4/16] 0.0, 128
    %1196 = vxpose.xlu0.b32.cont [5/16] 0.0, 128
    %1197 = vxpose.xlu0.b32.cont [6/16] 0.0, 128
    %1198 = vxpose.xlu0.b32.cont [7/16] 0.0, 128
    %1199 = vxpose.xlu0.b32.cont [8/16] 0.0, 128
    %1200 = vxpose.xlu0.b32.cont [9/16] 0.0, 128
    %1201 = vxpose.xlu0.b32.cont [10/16] 0.0, 128
    %1202 = vxpose.xlu0.b32.cont [11/16] 0.0, 128
    %1203 = vxpose.xlu0.b32.cont [12/16] 0.0, 128
    %1204 = vxpose.xlu0.b32.cont [13/16] 0.0, 128
    %1205 = vxpose.xlu0.b32.cont [14/16] 0.0, 128
    %1206 = vxpose.xlu0.b32.cont [15/16] 0.0, 128
    %1207 = vxpose.xlu0.b32.end [16/16] 0.0, 128
    %v1208 = vpop.trf.xlu0
    %v1209 = vpop.trf.xlu0
    %v1210 = vpop.trf.xlu0
    %v1211 = vpop.trf.xlu0
    %v1212 = vpop.trf.xlu0
    %v1213 = vpop.trf.xlu0
    %v1214 = vpop.trf.xlu0
    %v1215 = vpop.trf.xlu0
    %v1216 = vpop.trf.xlu0
    %v1217 = vpop.trf.xlu0
    %v1218 = vpop.trf.xlu0
    %v1219 = vpop.trf.xlu0
    %v1220 = vpop.trf.xlu0
    %v1221 = vpop.trf.xlu0
    %v1222 = vpop.trf.xlu0
    %v1223 = vpop.trf.xlu0
    %1224 = vxpose.xlu0.b32.start [1/16] %v519, 128
    %1225 = vxpose.xlu0.b32.cont [2/16] 0.0, 128
    %1226 = vxpose.xlu0.b32.cont [3/16] 0.0, 128
    %1227 = vxpose.xlu0.b32.cont [4/16] 0.0, 128
    %1228 = vxpose.xlu0.b32.cont [5/16] 0.0, 128
    %1229 = vxpose.xlu0.b32.cont [6/16] 0.0, 128
    %1230 = vxpose.xlu0.b32.cont [7/16] 0.0, 128
    %1231 = vxpose.xlu0.b32.cont [8/16] 0.0, 128
    %1232 = vxpose.xlu0.b32.cont [9/16] 0.0, 128
    %1233 = vxpose.xlu0.b32.cont [10/16] 0.0, 128
    %1234 = vxpose.xlu0.b32.cont [11/16] 0.0, 128
    %1235 = vxpose.xlu0.b32.cont [12/16] 0.0, 128
    %1236 = vxpose.xlu0.b32.cont [13/16] 0.0, 128
    %1237 = vxpose.xlu0.b32.cont [14/16] 0.0, 128
    %1238 = vxpose.xlu0.b32.cont [15/16] 0.0, 128
    %1239 = vxpose.xlu0.b32.end [16/16] 0.0, 128
    %v1240 = vpop.trf.xlu0
    %v1241 = vpop.trf.xlu0
    %v1242 = vpop.trf.xlu0
    %v1243 = vpop.trf.xlu0
    %v1244 = vpop.trf.xlu0
    %v1245 = vpop.trf.xlu0
    %v1246 = vpop.trf.xlu0
    %v1247 = vpop.trf.xlu0
    %v1248 = vpop.trf.xlu0
    %v1249 = vpop.trf.xlu0
    %v1250 = vpop.trf.xlu0
    %v1251 = vpop.trf.xlu0
    %v1252 = vpop.trf.xlu0
    %v1253 = vpop.trf.xlu0
    %v1254 = vpop.trf.xlu0
    %v1255 = vpop.trf.xlu0
    %1256 = vxpose.xlu0.b32.start [1/16] %v529, 128
    %1257 = vxpose.xlu0.b32.cont [2/16] 0.0, 128
    %1258 = vxpose.xlu0.b32.cont [3/16] 0.0, 128
    %1259 = vxpose.xlu0.b32.cont [4/16] 0.0, 128
    %1260 = vxpose.xlu0.b32.cont [5/16] 0.0, 128
    %1261 = vxpose.xlu0.b32.cont [6/16] 0.0, 128
    %1262 = vxpose.xlu0.b32.cont [7/16] 0.0, 128
    %1263 = vxpose.xlu0.b32.cont [8/16] 0.0, 128
    %1264 = vxpose.xlu0.b32.cont [9/16] 0.0, 128
    %1265 = vxpose.xlu0.b32.cont [10/16] 0.0, 128
    %1266 = vxpose.xlu0.b32.cont [11/16] 0.0, 128
    %1267 = vxpose.xlu0.b32.cont [12/16] 0.0, 128
    %1268 = vxpose.xlu0.b32.cont [13/16] 0.0, 128
    %1269 = vxpose.xlu0.b32.cont [14/16] 0.0, 128
    %1270 = vxpose.xlu0.b32.cont [15/16] 0.0, 128
    %1271 = vxpose.xlu0.b32.end [16/16] 0.0, 128
    %v1272 = vpop.trf.xlu0
    %v1273 = vpop.trf.xlu0
    %v1274 = vpop.trf.xlu0
    %v1275 = vpop.trf.xlu0
    %v1276 = vpop.trf.xlu0
    %v1277 = vpop.trf.xlu0
    %v1278 = vpop.trf.xlu0
    %v1279 = vpop.trf.xlu0
    %v1280 = vpop.trf.xlu0
    %v1281 = vpop.trf.xlu0
    %v1282 = vpop.trf.xlu0
    %v1283 = vpop.trf.xlu0
    %v1284 = vpop.trf.xlu0
    %v1285 = vpop.trf.xlu0
    %v1286 = vpop.trf.xlu0
    %v1287 = vpop.trf.xlu0
    %1288 = vxpose.xlu0.b32.start [1/16] %v523, 128
    %1289 = vxpose.xlu0.b32.cont [2/16] 0.0, 128
    %1290 = vxpose.xlu0.b32.cont [3/16] 0.0, 128
    %1291 = vxpose.xlu0.b32.cont [4/16] 0.0, 128
    %1292 = vxpose.xlu0.b32.cont [5/16] 0.0, 128
    %1293 = vxpose.xlu0.b32.cont [6/16] 0.0, 128
    %1294 = vxpose.xlu0.b32.cont [7/16] 0.0, 128
    %1295 = vxpose.xlu0.b32.cont [8/16] 0.0, 128
    %1296 = vxpose.xlu0.b32.cont [9/16] 0.0, 128
    %1297 = vxpose.xlu0.b32.cont [10/16] 0.0, 128
    %1298 = vxpose.xlu0.b32.cont [11/16] 0.0, 128
    %1299 = vxpose.xlu0.b32.cont [12/16] 0.0, 128
    %1300 = vxpose.xlu0.b32.cont [13/16] 0.0, 128
    %1301 = vxpose.xlu0.b32.cont [14/16] 0.0, 128
    %1302 = vxpose.xlu0.b32.cont [15/16] 0.0, 128
    %1303 = vxpose.xlu0.b32.end [16/16] 0.0, 128
    %v1304 = vpop.trf.xlu0
    %v1305 = vpop.trf.xlu0
    %v1306 = vpop.trf.xlu0
    %v1307 = vpop.trf.xlu0
    %v1308 = vpop.trf.xlu0
    %v1309 = vpop.trf.xlu0
    %v1310 = vpop.trf.xlu0
    %v1311 = vpop.trf.xlu0
    %v1312 = vpop.trf.xlu0
    %v1313 = vpop.trf.xlu0
    %v1314 = vpop.trf.xlu0
    %v1315 = vpop.trf.xlu0
    %v1316 = vpop.trf.xlu0
    %v1317 = vpop.trf.xlu0
    %v1318 = vpop.trf.xlu0
    %v1319 = vpop.trf.xlu0
    %1320 = vxpose.xlu0.b32.start [1/16] %v531, 128
    %1321 = vxpose.xlu0.b32.cont [2/16] 0.0, 128
    %1322 = vxpose.xlu0.b32.cont [3/16] 0.0, 128
    %1323 = vxpose.xlu0.b32.cont [4/16] 0.0, 128
    %1324 = vxpose.xlu0.b32.cont [5/16] 0.0, 128
    %1325 = vxpose.xlu0.b32.cont [6/16] 0.0, 128
    %1326 = vxpose.xlu0.b32.cont [7/16] 0.0, 128
    %1327 = vxpose.xlu0.b32.cont [8/16] 0.0, 128
    %1328 = vxpose.xlu0.b32.cont [9/16] 0.0, 128
    %1329 = vxpose.xlu0.b32.cont [10/16] 0.0, 128
    %1330 = vxpose.xlu0.b32.cont [11/16] 0.0, 128
    %1331 = vxpose.xlu0.b32.cont [12/16] 0.0, 128
    %1332 = vxpose.xlu0.b32.cont [13/16] 0.0, 128
    %1333 = vxpose.xlu0.b32.cont [14/16] 0.0, 128
    %1334 = vxpose.xlu0.b32.cont [15/16] 0.0, 128
    %1335 = vxpose.xlu0.b32.end [16/16] 0.0, 128
    %v1336 = vpop.trf.xlu0
    %v1337 = vpop.trf.xlu0
    %v1338 = vpop.trf.xlu0
    %v1339 = vpop.trf.xlu0
    %v1340 = vpop.trf.xlu0
    %v1341 = vpop.trf.xlu0
    %v1342 = vpop.trf.xlu0
    %v1343 = vpop.trf.xlu0
    %v1344 = vpop.trf.xlu0
    %v1345 = vpop.trf.xlu0
    %v1346 = vpop.trf.xlu0
    %v1347 = vpop.trf.xlu0
    %v1348 = vpop.trf.xlu0
    %v1349 = vpop.trf.xlu0
    %v1350 = vpop.trf.xlu0
    %v1351 = vpop.trf.xlu0
    %1352 = vxpose.xlu0.b32.start [1/16] %v559, 128
    %1353 = vxpose.xlu0.b32.cont [2/16] 0.0, 128
    %1354 = vxpose.xlu0.b32.cont [3/16] 0.0, 128
    %1355 = vxpose.xlu0.b32.cont [4/16] 0.0, 128
    %1356 = vxpose.xlu0.b32.cont [5/16] 0.0, 128
    %1357 = vxpose.xlu0.b32.cont [6/16] 0.0, 128
    %1358 = vxpose.xlu0.b32.cont [7/16] 0.0, 128
    %1359 = vxpose.xlu0.b32.cont [8/16] 0.0, 128
    %1360 = vxpose.xlu0.b32.cont [9/16] 0.0, 128
    %1361 = vxpose.xlu0.b32.cont [10/16] 0.0, 128
    %1362 = vxpose.xlu0.b32.cont [11/16] 0.0, 128
    %1363 = vxpose.xlu0.b32.cont [12/16] 0.0, 128
    %1364 = vxpose.xlu0.b32.cont [13/16] 0.0, 128
    %1365 = vxpose.xlu0.b32.cont [14/16] 0.0, 128
    %1366 = vxpose.xlu0.b32.cont [15/16] 0.0, 128
    %1367 = vxpose.xlu0.b32.end [16/16] 0.0, 128
    %v1368 = vpop.trf.xlu0
    %v1369 = vpop.trf.xlu0
    %v1370 = vpop.trf.xlu0
    %v1371 = vpop.trf.xlu0
    %v1372 = vpop.trf.xlu0
    %v1373 = vpop.trf.xlu0
    %v1374 = vpop.trf.xlu0
    %v1375 = vpop.trf.xlu0
    %v1376 = vpop.trf.xlu0
    %v1377 = vpop.trf.xlu0
    %v1378 = vpop.trf.xlu0
    %v1379 = vpop.trf.xlu0
    %v1380 = vpop.trf.xlu0
    %v1381 = vpop.trf.xlu0
    %v1382 = vpop.trf.xlu0
    %v1383 = vpop.trf.xlu0
    %1384 = vxpose.xlu0.b32.start [1/16] %v577, 128
    %1385 = vxpose.xlu0.b32.cont [2/16] 0.0, 128
    %1386 = vxpose.xlu0.b32.cont [3/16] 0.0, 128
    %1387 = vxpose.xlu0.b32.cont [4/16] 0.0, 128
    %1388 = vxpose.xlu0.b32.cont [5/16] 0.0, 128
    %1389 = vxpose.xlu0.b32.cont [6/16] 0.0, 128
    %1390 = vxpose.xlu0.b32.cont [7/16] 0.0, 128
    %1391 = vxpose.xlu0.b32.cont [8/16] 0.0, 128
    %1392 = vxpose.xlu0.b32.cont [9/16] 0.0, 128
    %1393 = vxpose.xlu0.b32.cont [10/16] 0.0, 128
    %1394 = vxpose.xlu0.b32.cont [11/16] 0.0, 128
    %1395 = vxpose.xlu0.b32.cont [12/16] 0.0, 128
    %1396 = vxpose.xlu0.b32.cont [13/16] 0.0, 128
    %1397 = vxpose.xlu0.b32.cont [14/16] 0.0, 128
    %1398 = vxpose.xlu0.b32.cont [15/16] 0.0, 128
    %1399 = vxpose.xlu0.b32.end [16/16] 0.0, 128
    %v1400 = vpop.trf.xlu0
    %v1401 = vpop.trf.xlu0
    %v1402 = vpop.trf.xlu0
    %v1403 = vpop.trf.xlu0
    %v1404 = vpop.trf.xlu0
    %v1405 = vpop.trf.xlu0
    %v1406 = vpop.trf.xlu0
    %v1407 = vpop.trf.xlu0
    %v1408 = vpop.trf.xlu0
    %v1409 = vpop.trf.xlu0
    %v1410 = vpop.trf.xlu0
    %v1411 = vpop.trf.xlu0
    %v1412 = vpop.trf.xlu0
    %v1413 = vpop.trf.xlu0
    %v1414 = vpop.trf.xlu0
    %v1415 = vpop.trf.xlu0
    %1416 = vxpose.xlu0.b32.start [1/16] %v563, 128
    %1417 = vxpose.xlu0.b32.cont [2/16] 0.0, 128
    %1418 = vxpose.xlu0.b32.cont [3/16] 0.0, 128
    %1419 = vxpose.xlu0.b32.cont [4/16] 0.0, 128
    %1420 = vxpose.xlu0.b32.cont [5/16] 0.0, 128
    %1421 = vxpose.xlu0.b32.cont [6/16] 0.0, 128
    %1422 = vxpose.xlu0.b32.cont [7/16] 0.0, 128
    %1423 = vxpose.xlu0.b32.cont [8/16] 0.0, 128
    %1424 = vxpose.xlu0.b32.cont [9/16] 0.0, 128
    %1425 = vxpose.xlu0.b32.cont [10/16] 0.0, 128
    %1426 = vxpose.xlu0.b32.cont [11/16] 0.0, 128
    %1427 = vxpose.xlu0.b32.cont [12/16] 0.0, 128
    %1428 = vxpose.xlu0.b32.cont [13/16] 0.0, 128
    %1429 = vxpose.xlu0.b32.cont [14/16] 0.0, 128
    %1430 = vxpose.xlu0.b32.cont [15/16] 0.0, 128
    %1431 = vxpose.xlu0.b32.end [16/16] 0.0, 128
    %v1432 = vpop.trf.xlu0
    %v1433 = vpop.trf.xlu0
    %v1434 = vpop.trf.xlu0
    %v1435 = vpop.trf.xlu0
    %v1436 = vpop.trf.xlu0
    %v1437 = vpop.trf.xlu0
    %v1438 = vpop.trf.xlu0
    %v1439 = vpop.trf.xlu0
    %v1440 = vpop.trf.xlu0
    %v1441 = vpop.trf.xlu0
    %v1442 = vpop.trf.xlu0
    %v1443 = vpop.trf.xlu0
    %v1444 = vpop.trf.xlu0
    %v1445 = vpop.trf.xlu0
    %v1446 = vpop.trf.xlu0
    %v1447 = vpop.trf.xlu0
    %1448 = vxpose.xlu0.b32.start [1/16] %v579, 128
    %1449 = vxpose.xlu0.b32.cont [2/16] 0.0, 128
    %1450 = vxpose.xlu0.b32.cont [3/16] 0.0, 128
    %1451 = vxpose.xlu0.b32.cont [4/16] 0.0, 128
    %1452 = vxpose.xlu0.b32.cont [5/16] 0.0, 128
    %1453 = vxpose.xlu0.b32.cont [6/16] 0.0, 128
    %1454 = vxpose.xlu0.b32.cont [7/16] 0.0, 128
    %1455 = vxpose.xlu0.b32.cont [8/16] 0.0, 128
    %1456 = vxpose.xlu0.b32.cont [9/16] 0.0, 128
    %1457 = vxpose.xlu0.b32.cont [10/16] 0.0, 128
    %1458 = vxpose.xlu0.b32.cont [11/16] 0.0, 128
    %1459 = vxpose.xlu0.b32.cont [12/16] 0.0, 128
    %1460 = vxpose.xlu0.b32.cont [13/16] 0.0, 128
    %1461 = vxpose.xlu0.b32.cont [14/16] 0.0, 128
    %1462 = vxpose.xlu0.b32.cont [15/16] 0.0, 128
    %1463 = vxpose.xlu0.b32.end [16/16] 0.0, 128
    %v1464 = vpop.trf.xlu0
    %v1465 = vpop.trf.xlu0
    %v1466 = vpop.trf.xlu0
    %v1467 = vpop.trf.xlu0
    %v1468 = vpop.trf.xlu0
    %v1469 = vpop.trf.xlu0
    %v1470 = vpop.trf.xlu0
    %v1471 = vpop.trf.xlu0
    %v1472 = vpop.trf.xlu0
    %v1473 = vpop.trf.xlu0
    %v1474 = vpop.trf.xlu0
    %v1475 = vpop.trf.xlu0
    %v1476 = vpop.trf.xlu0
    %v1477 = vpop.trf.xlu0
    %v1478 = vpop.trf.xlu0
    %v1479 = vpop.trf.xlu0
    %1480 = vxpose.xlu0.b32.start [1/16] %v571, 128
    %1481 = vxpose.xlu0.b32.cont [2/16] 0.0, 128
    %1482 = vxpose.xlu0.b32.cont [3/16] 0.0, 128
    %1483 = vxpose.xlu0.b32.cont [4/16] 0.0, 128
    %1484 = vxpose.xlu0.b32.cont [5/16] 0.0, 128
    %1485 = vxpose.xlu0.b32.cont [6/16] 0.0, 128
    %1486 = vxpose.xlu0.b32.cont [7/16] 0.0, 128
    %1487 = vxpose.xlu0.b32.cont [8/16] 0.0, 128
    %1488 = vxpose.xlu0.b32.cont [9/16] 0.0, 128
    %1489 = vxpose.xlu0.b32.cont [10/16] 0.0, 128
    %1490 = vxpose.xlu0.b32.cont [11/16] 0.0, 128
    %1491 = vxpose.xlu0.b32.cont [12/16] 0.0, 128
    %1492 = vxpose.xlu0.b32.cont [13/16] 0.0, 128
    %1493 = vxpose.xlu0.b32.cont [14/16] 0.0, 128
    %1494 = vxpose.xlu0.b32.cont [15/16] 0.0, 128
    %1495 = vxpose.xlu0.b32.end [16/16] 0.0, 128
    %v1496 = vpop.trf.xlu0
    %v1497 = vpop.trf.xlu0
    %v1498 = vpop.trf.xlu0
    %v1499 = vpop.trf.xlu0
    %v1500 = vpop.trf.xlu0
    %v1501 = vpop.trf.xlu0
    %v1502 = vpop.trf.xlu0
    %v1503 = vpop.trf.xlu0
    %v1504 = vpop.trf.xlu0
    %v1505 = vpop.trf.xlu0
    %v1506 = vpop.trf.xlu0
    %v1507 = vpop.trf.xlu0
    %v1508 = vpop.trf.xlu0
    %v1509 = vpop.trf.xlu0
    %v1510 = vpop.trf.xlu0
    %v1511 = vpop.trf.xlu0
    %1512 = vxpose.xlu0.b32.start [1/16] %v581, 128
    %1513 = vxpose.xlu0.b32.cont [2/16] 0.0, 128
    %1514 = vxpose.xlu0.b32.cont [3/16] 0.0, 128
    %1515 = vxpose.xlu0.b32.cont [4/16] 0.0, 128
    %1516 = vxpose.xlu0.b32.cont [5/16] 0.0, 128
    %1517 = vxpose.xlu0.b32.cont [6/16] 0.0, 128
    %1518 = vxpose.xlu0.b32.cont [7/16] 0.0, 128
    %1519 = vxpose.xlu0.b32.cont [8/16] 0.0, 128
    %1520 = vxpose.xlu0.b32.cont [9/16] 0.0, 128
    %1521 = vxpose.xlu0.b32.cont [10/16] 0.0, 128
    %1522 = vxpose.xlu0.b32.cont [11/16] 0.0, 128
    %1523 = vxpose.xlu0.b32.cont [12/16] 0.0, 128
    %1524 = vxpose.xlu0.b32.cont [13/16] 0.0, 128
    %1525 = vxpose.xlu0.b32.cont [14/16] 0.0, 128
    %1526 = vxpose.xlu0.b32.cont [15/16] 0.0, 128
    %1527 = vxpose.xlu0.b32.end [16/16] 0.0, 128
    %v1528 = vpop.trf.xlu0
    %v1529 = vpop.trf.xlu0
    %v1530 = vpop.trf.xlu0
    %v1531 = vpop.trf.xlu0
    %v1532 = vpop.trf.xlu0
    %v1533 = vpop.trf.xlu0
    %v1534 = vpop.trf.xlu0
    %v1535 = vpop.trf.xlu0
    %v1536 = vpop.trf.xlu0
    %v1537 = vpop.trf.xlu0
    %v1538 = vpop.trf.xlu0
    %v1539 = vpop.trf.xlu0
    %v1540 = vpop.trf.xlu0
    %v1541 = vpop.trf.xlu0
    %v1542 = vpop.trf.xlu0
    %v1543 = vpop.trf.xlu0
    %1544 = vxpose.xlu0.b32.start [1/16] %v575, 128
    %1545 = vxpose.xlu0.b32.cont [2/16] 0.0, 128
    %1546 = vxpose.xlu0.b32.cont [3/16] 0.0, 128
    %1547 = vxpose.xlu0.b32.cont [4/16] 0.0, 128
    %1548 = vxpose.xlu0.b32.cont [5/16] 0.0, 128
    %1549 = vxpose.xlu0.b32.cont [6/16] 0.0, 128
    %1550 = vxpose.xlu0.b32.cont [7/16] 0.0, 128
    %1551 = vxpose.xlu0.b32.cont [8/16] 0.0, 128
    %1552 = vxpose.xlu0.b32.cont [9/16] 0.0, 128
    %1553 = vxpose.xlu0.b32.cont [10/16] 0.0, 128
    %1554 = vxpose.xlu0.b32.cont [11/16] 0.0, 128
    %1555 = vxpose.xlu0.b32.cont [12/16] 0.0, 128
    %1556 = vxpose.xlu0.b32.cont [13/16] 0.0, 128
    %1557 = vxpose.xlu0.b32.cont [14/16] 0.0, 128
    %1558 = vxpose.xlu0.b32.cont [15/16] 0.0, 128
    %1559 = vxpose.xlu0.b32.end [16/16] 0.0, 128
    %v1560 = vpop.trf.xlu0
    %v1561 = vpop.trf.xlu0
    %v1562 = vpop.trf.xlu0
    %v1563 = vpop.trf.xlu0
    %v1564 = vpop.trf.xlu0
    %v1565 = vpop.trf.xlu0
    %v1566 = vpop.trf.xlu0
    %v1567 = vpop.trf.xlu0
    %v1568 = vpop.trf.xlu0
    %v1569 = vpop.trf.xlu0
    %v1570 = vpop.trf.xlu0
    %v1571 = vpop.trf.xlu0
    %v1572 = vpop.trf.xlu0
    %v1573 = vpop.trf.xlu0
    %v1574 = vpop.trf.xlu0
    %v1575 = vpop.trf.xlu0
    %1576 = vxpose.xlu0.b32.start [1/16] %v583, 128
    %1577 = vxpose.xlu0.b32.cont [2/16] 0.0, 128
    %1578 = vxpose.xlu0.b32.cont [3/16] 0.0, 128
    %1579 = vxpose.xlu0.b32.cont [4/16] 0.0, 128
    %1580 = vxpose.xlu0.b32.cont [5/16] 0.0, 128
    %1581 = vxpose.xlu0.b32.cont [6/16] 0.0, 128
    %1582 = vxpose.xlu0.b32.cont [7/16] 0.0, 128
    %1583 = vxpose.xlu0.b32.cont [8/16] 0.0, 128
    %1584 = vxpose.xlu0.b32.cont [9/16] 0.0, 128
    %1585 = vxpose.xlu0.b32.cont [10/16] 0.0, 128
    %1586 = vxpose.xlu0.b32.cont [11/16] 0.0, 128
    %1587 = vxpose.xlu0.b32.cont [12/16] 0.0, 128
    %1588 = vxpose.xlu0.b32.cont [13/16] 0.0, 128
    %1589 = vxpose.xlu0.b32.cont [14/16] 0.0, 128
    %1590 = vxpose.xlu0.b32.cont [15/16] 0.0, 128
    %1591 = vxpose.xlu0.b32.end [16/16] 0.0, 128
    %v1592 = vpop.trf.xlu0
    %v1593 = vpop.trf.xlu0
    %v1594 = vpop.trf.xlu0
    %v1595 = vpop.trf.xlu0
    %v1596 = vpop.trf.xlu0
    %v1597 = vpop.trf.xlu0
    %v1598 = vpop.trf.xlu0
    %v1599 = vpop.trf.xlu0
    %v1600 = vpop.trf.xlu0
    %v1601 = vpop.trf.xlu0
    %v1602 = vpop.trf.xlu0
    %v1603 = vpop.trf.xlu0
    %v1604 = vpop.trf.xlu0
    %v1605 = vpop.trf.xlu0
    %v1606 = vpop.trf.xlu0
    %v1607 = vpop.trf.xlu0
    %v1608 = vrot.slane %v664, 4
    %v1609 = vsel %vm376, %v1608, %v600
    %v1610 = vrot.slane %v600, 4
    %v1611 = vsel %vm376, %v664, %v1610
    %v1613 = vunpack.c.l.s4 1983009808
    %v1614 = vunpack.c.0.s8 %v1613
    %v1615 = vperm.slane %v1609, %v1614
    %v1617 = vunpack.c.l.s4 1983009808
    %v1618 = vunpack.c.0.s8 %v1617
    %v1619 = vperm.slane %v1611, %v1618
    %v1620 = vrot.slane %v696, 4
    %v1621 = vsel %vm376, %v1620, %v632
    %v1622 = vrot.slane %v632, 4
    %v1623 = vsel %vm376, %v696, %v1622
    %v1625 = vunpack.c.l.s4 1983009808
    %v1626 = vunpack.c.0.s8 %v1625
    %v1627 = vperm.slane %v1621, %v1626
    %v1629 = vunpack.c.l.s4 1983009808
    %v1630 = vunpack.c.0.s8 %v1629
    %v1631 = vperm.slane %v1623, %v1630
    %v1632 = vrot.slane %v792, 4
    %v1633 = vsel %vm376, %v1632, %v728
    %v1634 = vrot.slane %v728, 4
    %v1635 = vsel %vm376, %v792, %v1634
    %v1637 = vunpack.c.l.s4 1983009808
    %v1638 = vunpack.c.0.s8 %v1637
    %v1639 = vperm.slane %v1633, %v1638
    %v1641 = vunpack.c.l.s4 1983009808
    %v1642 = vunpack.c.0.s8 %v1641
    %v1643 = vperm.slane %v1635, %v1642
    %v1644 = vrot.slane %v824, 4
    %v1645 = vsel %vm376, %v1644, %v760
    %v1646 = vrot.slane %v760, 4
    %v1647 = vsel %vm376, %v824, %v1646
    %v1649 = vunpack.c.l.s4 1983009808
    %v1650 = vunpack.c.0.s8 %v1649
    %v1651 = vperm.slane %v1645, %v1650
    %v1653 = vunpack.c.l.s4 1983009808
    %v1654 = vunpack.c.0.s8 %v1653
    %v1655 = vperm.slane %v1647, %v1654
    %v1656 = vrot.slane %v1627, 4
    %v1657 = vsel %vm376, %v1656, %v1615
    %v1658 = vrot.slane %v1615, 4
    %v1659 = vsel %vm376, %v1627, %v1658
    %v1661 = vunpack.c.l.s4 1934713408
    %v1662 = vunpack.c.0.s8 %v1661
    %v1663 = vperm.slane %v1657, %v1662
    %v1665 = vunpack.c.l.s4 1934713408
    %v1666 = vunpack.c.0.s8 %v1665
    %v1667 = vperm.slane %v1659, %v1666
    %v1668 = vrot.slane %v1631, 4
    %v1669 = vsel %vm376, %v1668, %v1619
    %v1670 = vrot.slane %v1619, 4
    %v1671 = vsel %vm376, %v1631, %v1670
    %v1673 = vunpack.c.l.s4 1934713408
    %v1674 = vunpack.c.0.s8 %v1673
    %v1675 = vperm.slane %v1669, %v1674
    %v1677 = vunpack.c.l.s4 1934713408
    %v1678 = vunpack.c.0.s8 %v1677
    %v1679 = vperm.slane %v1671, %v1678
    %v1680 = vrot.slane %v1651, 4
    %v1681 = vsel %vm376, %v1680, %v1639
    %v1682 = vrot.slane %v1639, 4
    %v1683 = vsel %vm376, %v1651, %v1682
    %v1685 = vunpack.c.l.s4 1934713408
    %v1686 = vunpack.c.0.s8 %v1685
    %v1687 = vperm.slane %v1681, %v1686
    %v1689 = vunpack.c.l.s4 1934713408
    %v1690 = vunpack.c.0.s8 %v1689
    %v1691 = vperm.slane %v1683, %v1690
    %v1692 = vrot.slane %v1655, 4
    %v1693 = vsel %vm376, %v1692, %v1643
    %v1694 = vrot.slane %v1643, 4
    %v1695 = vsel %vm376, %v1655, %v1694
    %v1697 = vunpack.c.l.s4 1934713408
    %v1698 = vunpack.c.0.s8 %v1697
    %v1699 = vperm.slane %v1693, %v1698
    %v1701 = vunpack.c.l.s4 1934713408
    %v1702 = vunpack.c.0.s8 %v1701
    %v1703 = vperm.slane %v1695, %v1702
    %v1704 = vrot.slane %v1687, 4
    %v1705 = vsel %vm376, %v1704, %v1663
    %v1706 = vrot.slane %v1663, 4
    %v1707 = vsel %vm376, %v1687, %v1706
    %v1708 = vrot.slane %v1691, 4
    %v1709 = vsel %vm376, %v1708, %v1667
    %v1710 = vrot.slane %v1667, 4
    %v1711 = vsel %vm376, %v1691, %v1710
    %v1712 = vrot.slane %v1699, 4
    %v1713 = vsel %vm376, %v1712, %v1675
    %v1714 = vrot.slane %v1675, 4
    %v1715 = vsel %vm376, %v1699, %v1714
    %v1716 = vrot.slane %v1703, 4
    %v1717 = vsel %vm376, %v1716, %v1679
    %v1718 = vrot.slane %v1679, 4
    %v1719 = vsel %vm376, %v1703, %v1718
    %v1720 = vrot.slane %v920, 4
    %v1721 = vsel %vm376, %v1720, %v856
    %v1722 = vrot.slane %v856, 4
    %v1723 = vsel %vm376, %v920, %v1722
    %v1725 = vunpack.c.l.s4 1983009808
    %v1726 = vunpack.c.0.s8 %v1725
    %v1727 = vperm.slane %v1721, %v1726
    %v1729 = vunpack.c.l.s4 1983009808
    %v1730 = vunpack.c.0.s8 %v1729
    %v1731 = vperm.slane %v1723, %v1730
    %v1732 = vrot.slane %v952, 4
    %v1733 = vsel %vm376, %v1732, %v888
    %v1734 = vrot.slane %v888, 4
    %v1735 = vsel %vm376, %v952, %v1734
    %v1737 = vunpack.c.l.s4 1983009808
    %v1738 = vunpack.c.0.s8 %v1737
    %v1739 = vperm.slane %v1733, %v1738
    %v1741 = vunpack.c.l.s4 1983009808
    %v1742 = vunpack.c.0.s8 %v1741
    %v1743 = vperm.slane %v1735, %v1742
    %v1744 = vrot.slane %v1048, 4
    %v1745 = vsel %vm376, %v1744, %v984
    %v1746 = vrot.slane %v984, 4
    %v1747 = vsel %vm376, %v1048, %v1746
    %v1749 = vunpack.c.l.s4 1983009808
    %v1750 = vunpack.c.0.s8 %v1749
    %v1751 = vperm.slane %v1745, %v1750
    %v1753 = vunpack.c.l.s4 1983009808
    %v1754 = vunpack.c.0.s8 %v1753
    %v1755 = vperm.slane %v1747, %v1754
    %v1756 = vrot.slane %v1080, 4
    %v1757 = vsel %vm376, %v1756, %v1016
    %v1758 = vrot.slane %v1016, 4
    %v1759 = vsel %vm376, %v1080, %v1758
    %v1761 = vunpack.c.l.s4 1983009808
    %v1762 = vunpack.c.0.s8 %v1761
    %v1763 = vperm.slane %v1757, %v1762
    %v1765 = vunpack.c.l.s4 1983009808
    %v1766 = vunpack.c.0.s8 %v1765
    %v1767 = vperm.slane %v1759, %v1766
    %v1768 = vrot.slane %v1739, 4
    %v1769 = vsel %vm376, %v1768, %v1727
    %v1770 = vrot.slane %v1727, 4
    %v1771 = vsel %vm376, %v1739, %v1770
    %v1773 = vunpack.c.l.s4 1934713408
    %v1774 = vunpack.c.0.s8 %v1773
    %v1775 = vperm.slane %v1769, %v1774
    %v1777 = vunpack.c.l.s4 1934713408
    %v1778 = vunpack.c.0.s8 %v1777
    %v1779 = vperm.slane %v1771, %v1778
    %v1780 = vrot.slane %v1743, 4
    %v1781 = vsel %vm376, %v1780, %v1731
    %v1782 = vrot.slane %v1731, 4
    %v1783 = vsel %vm376, %v1743, %v1782
    %v1785 = vunpack.c.l.s4 1934713408
    %v1786 = vunpack.c.0.s8 %v1785
    %v1787 = vperm.slane %v1781, %v1786
    %v1789 = vunpack.c.l.s4 1934713408
    %v1790 = vunpack.c.0.s8 %v1789
    %v1791 = vperm.slane %v1783, %v1790
    %v1792 = vrot.slane %v1763, 4
    %v1793 = vsel %vm376, %v1792, %v1751
    %v1794 = vrot.slane %v1751, 4
    %v1795 = vsel %vm376, %v1763, %v1794
    %v1797 = vunpack.c.l.s4 1934713408
    %v1798 = vunpack.c.0.s8 %v1797
    %v1799 = vperm.slane %v1793, %v1798
    %v1801 = vunpack.c.l.s4 1934713408
    %v1802 = vunpack.c.0.s8 %v1801
    %v1803 = vperm.slane %v1795, %v1802
    %v1804 = vrot.slane %v1767, 4
    %v1805 = vsel %vm376, %v1804, %v1755
    %v1806 = vrot.slane %v1755, 4
    %v1807 = vsel %vm376, %v1767, %v1806
    %v1809 = vunpack.c.l.s4 1934713408
    %v1810 = vunpack.c.0.s8 %v1809
    %v1811 = vperm.slane %v1805, %v1810
    %v1813 = vunpack.c.l.s4 1934713408
    %v1814 = vunpack.c.0.s8 %v1813
    %v1815 = vperm.slane %v1807, %v1814
    %v1816 = vrot.slane %v1799, 4
    %v1817 = vsel %vm376, %v1816, %v1775
    %v1818 = vrot.slane %v1775, 4
    %v1819 = vsel %vm376, %v1799, %v1818
    %v1820 = vrot.slane %v1803, 4
    %v1821 = vsel %vm376, %v1820, %v1779
    %v1822 = vrot.slane %v1779, 4
    %v1823 = vsel %vm376, %v1803, %v1822
    %v1824 = vrot.slane %v1811, 4
    %v1825 = vsel %vm376, %v1824, %v1787
    %v1826 = vrot.slane %v1787, 4
    %v1827 = vsel %vm376, %v1811, %v1826
    %v1828 = vrot.slane %v1815, 4
    %v1829 = vsel %vm376, %v1828, %v1791
    %v1830 = vrot.slane %v1791, 4
    %v1831 = vsel %vm376, %v1815, %v1830
    %v1832 = vrot.slane %v1176, 4
    %v1833 = vsel %vm376, %v1832, %v1112
    %v1834 = vrot.slane %v1112, 4
    %v1835 = vsel %vm376, %v1176, %v1834
    %v1837 = vunpack.c.l.s4 1983009808
    %v1838 = vunpack.c.0.s8 %v1837
    %v1839 = vperm.slane %v1833, %v1838
    %v1841 = vunpack.c.l.s4 1983009808
    %v1842 = vunpack.c.0.s8 %v1841
    %v1843 = vperm.slane %v1835, %v1842
    %v1844 = vrot.slane %v1208, 4
    %v1845 = vsel %vm376, %v1844, %v1144
    %v1846 = vrot.slane %v1144, 4
    %v1847 = vsel %vm376, %v1208, %v1846
    %v1849 = vunpack.c.l.s4 1983009808
    %v1850 = vunpack.c.0.s8 %v1849
    %v1851 = vperm.slane %v1845, %v1850
    %v1853 = vunpack.c.l.s4 1983009808
    %v1854 = vunpack.c.0.s8 %v1853
    %v1855 = vperm.slane %v1847, %v1854
    %v1856 = vrot.slane %v1304, 4
    %v1857 = vsel %vm376, %v1856, %v1240
    %v1858 = vrot.slane %v1240, 4
    %v1859 = vsel %vm376, %v1304, %v1858
    %v1861 = vunpack.c.l.s4 1983009808
    %v1862 = vunpack.c.0.s8 %v1861
    %v1863 = vperm.slane %v1857, %v1862
    %v1865 = vunpack.c.l.s4 1983009808
    %v1866 = vunpack.c.0.s8 %v1865
    %v1867 = vperm.slane %v1859, %v1866
    %v1868 = vrot.slane %v1336, 4
    %v1869 = vsel %vm376, %v1868, %v1272
    %v1870 = vrot.slane %v1272, 4
    %v1871 = vsel %vm376, %v1336, %v1870
    %v1873 = vunpack.c.l.s4 1983009808
    %v1874 = vunpack.c.0.s8 %v1873
    %v1875 = vperm.slane %v1869, %v1874
    %v1877 = vunpack.c.l.s4 1983009808
    %v1878 = vunpack.c.0.s8 %v1877
    %v1879 = vperm.slane %v1871, %v1878
    %v1880 = vrot.slane %v1851, 4
    %v1881 = vsel %vm376, %v1880, %v1839
    %v1882 = vrot.slane %v1839, 4
    %v1883 = vsel %vm376, %v1851, %v1882
    %v1885 = vunpack.c.l.s4 1934713408
    %v1886 = vunpack.c.0.s8 %v1885
    %v1887 = vperm.slane %v1881, %v1886
    %v1889 = vunpack.c.l.s4 1934713408
    %v1890 = vunpack.c.0.s8 %v1889
    %v1891 = vperm.slane %v1883, %v1890
    %v1892 = vrot.slane %v1855, 4
    %v1893 = vsel %vm376, %v1892, %v1843
    %v1894 = vrot.slane %v1843, 4
    %v1895 = vsel %vm376, %v1855, %v1894
    %v1897 = vunpack.c.l.s4 1934713408
    %v1898 = vunpack.c.0.s8 %v1897
    %v1899 = vperm.slane %v1893, %v1898
    %v1901 = vunpack.c.l.s4 1934713408
    %v1902 = vunpack.c.0.s8 %v1901
    %v1903 = vperm.slane %v1895, %v1902
    %v1904 = vrot.slane %v1875, 4
    %v1905 = vsel %vm376, %v1904, %v1863
    %v1906 = vrot.slane %v1863, 4
    %v1907 = vsel %vm376, %v1875, %v1906
    %v1909 = vunpack.c.l.s4 1934713408
    %v1910 = vunpack.c.0.s8 %v1909
    %v1911 = vperm.slane %v1905, %v1910
    %v1913 = vunpack.c.l.s4 1934713408
    %v1914 = vunpack.c.0.s8 %v1913
    %v1915 = vperm.slane %v1907, %v1914
    %v1916 = vrot.slane %v1879, 4
    %v1917 = vsel %vm376, %v1916, %v1867
    %v1918 = vrot.slane %v1867, 4
    %v1919 = vsel %vm376, %v1879, %v1918
    %v1921 = vunpack.c.l.s4 1934713408
    %v1922 = vunpack.c.0.s8 %v1921
    %v1923 = vperm.slane %v1917, %v1922
    %v1925 = vunpack.c.l.s4 1934713408
    %v1926 = vunpack.c.0.s8 %v1925
    %v1927 = vperm.slane %v1919, %v1926
    %v1928 = vrot.slane %v1911, 4
    %v1929 = vsel %vm376, %v1928, %v1887
    %v1930 = vrot.slane %v1887, 4
    %v1931 = vsel %vm376, %v1911, %v1930
    %v1932 = vrot.slane %v1915, 4
    %v1933 = vsel %vm376, %v1932, %v1891
    %v1934 = vrot.slane %v1891, 4
    %v1935 = vsel %vm376, %v1915, %v1934
    %v1936 = vrot.slane %v1923, 4
    %v1937 = vsel %vm376, %v1936, %v1899
    %v1938 = vrot.slane %v1899, 4
    %v1939 = vsel %vm376, %v1923, %v1938
    %v1940 = vrot.slane %v1927, 4
    %v1941 = vsel %vm376, %v1940, %v1903
    %v1942 = vrot.slane %v1903, 4
    %v1943 = vsel %vm376, %v1927, %v1942
    %v1944 = vrot.slane %v1432, 4
    %v1945 = vsel %vm376, %v1944, %v1368
    %v1946 = vrot.slane %v1368, 4
    %v1947 = vsel %vm376, %v1432, %v1946
    %v1949 = vunpack.c.l.s4 1983009808
    %v1950 = vunpack.c.0.s8 %v1949
    %v1951 = vperm.slane %v1945, %v1950
    %v1953 = vunpack.c.l.s4 1983009808
    %v1954 = vunpack.c.0.s8 %v1953
    %v1955 = vperm.slane %v1947, %v1954
    %v1956 = vrot.slane %v1464, 4
    %v1957 = vsel %vm376, %v1956, %v1400
    %v1958 = vrot.slane %v1400, 4
    %v1959 = vsel %vm376, %v1464, %v1958
    %v1961 = vunpack.c.l.s4 1983009808
    %v1962 = vunpack.c.0.s8 %v1961
    %v1963 = vperm.slane %v1957, %v1962
    %v1965 = vunpack.c.l.s4 1983009808
    %v1966 = vunpack.c.0.s8 %v1965
    %v1967 = vperm.slane %v1959, %v1966
    %v1968 = vrot.slane %v1560, 4
    %v1969 = vsel %vm376, %v1968, %v1496
    %v1970 = vrot.slane %v1496, 4
    %v1971 = vsel %vm376, %v1560, %v1970
    %v1973 = vunpack.c.l.s4 1983009808
    %v1974 = vunpack.c.0.s8 %v1973
    %v1975 = vperm.slane %v1969, %v1974
    %v1977 = vunpack.c.l.s4 1983009808
    %v1978 = vunpack.c.0.s8 %v1977
    %v1979 = vperm.slane %v1971, %v1978
    %v1980 = vrot.slane %v1592, 4
    %v1981 = vsel %vm376, %v1980, %v1528
    %v1982 = vrot.slane %v1528, 4
    %v1983 = vsel %vm376, %v1592, %v1982
    %v1985 = vunpack.c.l.s4 1983009808
    %v1986 = vunpack.c.0.s8 %v1985
    %v1987 = vperm.slane %v1981, %v1986
    %v1989 = vunpack.c.l.s4 1983009808
    %v1990 = vunpack.c.0.s8 %v1989
    %v1991 = vperm.slane %v1983, %v1990
    %v1992 = vrot.slane %v1963, 4
    %v1993 = vsel %vm376, %v1992, %v1951
    %v1994 = vrot.slane %v1951, 4
    %v1995 = vsel %vm376, %v1963, %v1994
    %v1997 = vunpack.c.l.s4 1934713408
    %v1998 = vunpack.c.0.s8 %v1997
    %v1999 = vperm.slane %v1993, %v1998
    %v2001 = vunpack.c.l.s4 1934713408
    %v2002 = vunpack.c.0.s8 %v2001
    %v2003 = vperm.slane %v1995, %v2002
    %v2004 = vrot.slane %v1967, 4
    %v2005 = vsel %vm376, %v2004, %v1955
    %v2006 = vrot.slane %v1955, 4
    %v2007 = vsel %vm376, %v1967, %v2006
    %v2009 = vunpack.c.l.s4 1934713408
    %v2010 = vunpack.c.0.s8 %v2009
    %v2011 = vperm.slane %v2005, %v2010
    %v2013 = vunpack.c.l.s4 1934713408
    %v2014 = vunpack.c.0.s8 %v2013
    %v2015 = vperm.slane %v2007, %v2014
    %v2016 = vrot.slane %v1987, 4
    %v2017 = vsel %vm376, %v2016, %v1975
    %v2018 = vrot.slane %v1975, 4
    %v2019 = vsel %vm376, %v1987, %v2018
    %v2021 = vunpack.c.l.s4 1934713408
    %v2022 = vunpack.c.0.s8 %v2021
    %v2023 = vperm.slane %v2017, %v2022
    %v2025 = vunpack.c.l.s4 1934713408
    %v2026 = vunpack.c.0.s8 %v2025
    %v2027 = vperm.slane %v2019, %v2026
    %v2028 = vrot.slane %v1991, 4
    %v2029 = vsel %vm376, %v2028, %v1979
    %v2030 = vrot.slane %v1979, 4
    %v2031 = vsel %vm376, %v1991, %v2030
    %v2033 = vunpack.c.l.s4 1934713408
    %v2034 = vunpack.c.0.s8 %v2033
    %v2035 = vperm.slane %v2029, %v2034
    %v2037 = vunpack.c.l.s4 1934713408
    %v2038 = vunpack.c.0.s8 %v2037
    %v2039 = vperm.slane %v2031, %v2038
    %v2040 = vrot.slane %v2023, 4
    %v2041 = vsel %vm376, %v2040, %v1999
    %v2042 = vrot.slane %v1999, 4
    %v2043 = vsel %vm376, %v2023, %v2042
    %v2044 = vrot.slane %v2027, 4
    %v2045 = vsel %vm376, %v2044, %v2003
    %v2046 = vrot.slane %v2003, 4
    %v2047 = vsel %vm376, %v2027, %v2046
    %v2048 = vrot.slane %v2035, 4
    %v2049 = vsel %vm376, %v2048, %v2011
    %v2050 = vrot.slane %v2011, 4
    %v2051 = vsel %vm376, %v2035, %v2050
    %v2052 = vrot.slane %v2039, 4
    %v2053 = vsel %vm376, %v2052, %v2015
    %v2054 = vrot.slane %v2015, 4
    %v2055 = vsel %vm376, %v2039, %v2054
    %v2056 = vrot.slane %v665, 4
    %v2057 = vsel %vm376, %v2056, %v601
    %v2058 = vrot.slane %v601, 4
    %v2059 = vsel %vm376, %v665, %v2058
    %v2061 = vunpack.c.l.s4 1983009808
    %v2062 = vunpack.c.0.s8 %v2061
    %v2063 = vperm.slane %v2057, %v2062
    %v2065 = vunpack.c.l.s4 1983009808
    %v2066 = vunpack.c.0.s8 %v2065
    %v2067 = vperm.slane %v2059, %v2066
    %v2068 = vrot.slane %v697, 4
    %v2069 = vsel %vm376, %v2068, %v633
    %v2070 = vrot.slane %v633, 4
    %v2071 = vsel %vm376, %v697, %v2070
    %v2073 = vunpack.c.l.s4 1983009808
    %v2074 = vunpack.c.0.s8 %v2073
    %v2075 = vperm.slane %v2069, %v2074
    %v2077 = vunpack.c.l.s4 1983009808
    %v2078 = vunpack.c.0.s8 %v2077
    %v2079 = vperm.slane %v2071, %v2078
    %v2080 = vrot.slane %v793, 4
    %v2081 = vsel %vm376, %v2080, %v729
    %v2082 = vrot.slane %v729, 4
    %v2083 = vsel %vm376, %v793, %v2082
    %v2085 = vunpack.c.l.s4 1983009808
    %v2086 = vunpack.c.0.s8 %v2085
    %v2087 = vperm.slane %v2081, %v2086
    %v2089 = vunpack.c.l.s4 1983009808
    %v2090 = vunpack.c.0.s8 %v2089
    %v2091 = vperm.slane %v2083, %v2090
    %v2092 = vrot.slane %v825, 4
    %v2093 = vsel %vm376, %v2092, %v761
    %v2094 = vrot.slane %v761, 4
    %v2095 = vsel %vm376, %v825, %v2094
    %v2097 = vunpack.c.l.s4 1983009808
    %v2098 = vunpack.c.0.s8 %v2097
    %v2099 = vperm.slane %v2093, %v2098
    %v2101 = vunpack.c.l.s4 1983009808
    %v2102 = vunpack.c.0.s8 %v2101
    %v2103 = vperm.slane %v2095, %v2102
    %v2104 = vrot.slane %v2075, 4
    %v2105 = vsel %vm376, %v2104, %v2063
    %v2106 = vrot.slane %v2063, 4
    %v2107 = vsel %vm376, %v2075, %v2106
    %v2109 = vunpack.c.l.s4 1934713408
    %v2110 = vunpack.c.0.s8 %v2109
    %v2111 = vperm.slane %v2105, %v2110
    %v2113 = vunpack.c.l.s4 1934713408
    %v2114 = vunpack.c.0.s8 %v2113
    %v2115 = vperm.slane %v2107, %v2114
    %v2116 = vrot.slane %v2079, 4
    %v2117 = vsel %vm376, %v2116, %v2067
    %v2118 = vrot.slane %v2067, 4
    %v2119 = vsel %vm376, %v2079, %v2118
    %v2121 = vunpack.c.l.s4 1934713408
    %v2122 = vunpack.c.0.s8 %v2121
    %v2123 = vperm.slane %v2117, %v2122
    %v2125 = vunpack.c.l.s4 1934713408
    %v2126 = vunpack.c.0.s8 %v2125
    %v2127 = vperm.slane %v2119, %v2126
    %v2128 = vrot.slane %v2099, 4
    %v2129 = vsel %vm376, %v2128, %v2087
    %v2130 = vrot.slane %v2087, 4
    %v2131 = vsel %vm376, %v2099, %v2130
    %v2133 = vunpack.c.l.s4 1934713408
    %v2134 = vunpack.c.0.s8 %v2133
    %v2135 = vperm.slane %v2129, %v2134
    %v2137 = vunpack.c.l.s4 1934713408
    %v2138 = vunpack.c.0.s8 %v2137
    %v2139 = vperm.slane %v2131, %v2138
    %v2140 = vrot.slane %v2103, 4
    %v2141 = vsel %vm376, %v2140, %v2091
    %v2142 = vrot.slane %v2091, 4
    %v2143 = vsel %vm376, %v2103, %v2142
    %v2145 = vunpack.c.l.s4 1934713408
    %v2146 = vunpack.c.0.s8 %v2145
    %v2147 = vperm.slane %v2141, %v2146
    %v2149 = vunpack.c.l.s4 1934713408
    %v2150 = vunpack.c.0.s8 %v2149
    %v2151 = vperm.slane %v2143, %v2150
    %v2152 = vrot.slane %v2135, 4
    %v2153 = vsel %vm376, %v2152, %v2111
    %v2154 = vrot.slane %v2111, 4
    %v2155 = vsel %vm376, %v2135, %v2154
    %v2156 = vrot.slane %v2139, 4
    %v2157 = vsel %vm376, %v2156, %v2115
    %v2158 = vrot.slane %v2115, 4
    %v2159 = vsel %vm376, %v2139, %v2158
    %v2160 = vrot.slane %v2147, 4
    %v2161 = vsel %vm376, %v2160, %v2123
    %v2162 = vrot.slane %v2123, 4
    %v2163 = vsel %vm376, %v2147, %v2162
    %v2164 = vrot.slane %v2151, 4
    %v2165 = vsel %vm376, %v2164, %v2127
    %v2166 = vrot.slane %v2127, 4
    %v2167 = vsel %vm376, %v2151, %v2166
    %v2168 = vrot.slane %v921, 4
    %v2169 = vsel %vm376, %v2168, %v857
    %v2170 = vrot.slane %v857, 4
    %v2171 = vsel %vm376, %v921, %v2170
    %v2173 = vunpack.c.l.s4 1983009808
    %v2174 = vunpack.c.0.s8 %v2173
    %v2175 = vperm.slane %v2169, %v2174
    %v2177 = vunpack.c.l.s4 1983009808
    %v2178 = vunpack.c.0.s8 %v2177
    %v2179 = vperm.slane %v2171, %v2178
    %v2180 = vrot.slane %v953, 4
    %v2181 = vsel %vm376, %v2180, %v889
    %v2182 = vrot.slane %v889, 4
    %v2183 = vsel %vm376, %v953, %v2182
    %v2185 = vunpack.c.l.s4 1983009808
    %v2186 = vunpack.c.0.s8 %v2185
    %v2187 = vperm.slane %v2181, %v2186
    %v2189 = vunpack.c.l.s4 1983009808
    %v2190 = vunpack.c.0.s8 %v2189
    %v2191 = vperm.slane %v2183, %v2190
    %v2192 = vrot.slane %v1049, 4
    %v2193 = vsel %vm376, %v2192, %v985
    %v2194 = vrot.slane %v985, 4
    %v2195 = vsel %vm376, %v1049, %v2194
    %v2197 = vunpack.c.l.s4 1983009808
    %v2198 = vunpack.c.0.s8 %v2197
    %v2199 = vperm.slane %v2193, %v2198
    %v2201 = vunpack.c.l.s4 1983009808
    %v2202 = vunpack.c.0.s8 %v2201
    %v2203 = vperm.slane %v2195, %v2202
    %v2204 = vrot.slane %v1081, 4
    %v2205 = vsel %vm376, %v2204, %v1017
    %v2206 = vrot.slane %v1017, 4
    %v2207 = vsel %vm376, %v1081, %v2206
    %v2209 = vunpack.c.l.s4 1983009808
    %v2210 = vunpack.c.0.s8 %v2209
    %v2211 = vperm.slane %v2205, %v2210
    %v2213 = vunpack.c.l.s4 1983009808
    %v2214 = vunpack.c.0.s8 %v2213
    %v2215 = vperm.slane %v2207, %v2214
    %v2216 = vrot.slane %v2187, 4
    %v2217 = vsel %vm376, %v2216, %v2175
    %v2218 = vrot.slane %v2175, 4
    %v2219 = vsel %vm376, %v2187, %v2218
    %v2221 = vunpack.c.l.s4 1934713408
    %v2222 = vunpack.c.0.s8 %v2221
    %v2223 = vperm.slane %v2217, %v2222
    %v2225 = vunpack.c.l.s4 1934713408
    %v2226 = vunpack.c.0.s8 %v2225
    %v2227 = vperm.slane %v2219, %v2226
    %v2228 = vrot.slane %v2191, 4
    %v2229 = vsel %vm376, %v2228, %v2179
    %v2230 = vrot.slane %v2179, 4
    %v2231 = vsel %vm376, %v2191, %v2230
    %v2233 = vunpack.c.l.s4 1934713408
    %v2234 = vunpack.c.0.s8 %v2233
    %v2235 = vperm.slane %v2229, %v2234
    %v2237 = vunpack.c.l.s4 1934713408
    %v2238 = vunpack.c.0.s8 %v2237
    %v2239 = vperm.slane %v2231, %v2238
    %v2240 = vrot.slane %v2211, 4
    %v2241 = vsel %vm376, %v2240, %v2199
    %v2242 = vrot.slane %v2199, 4
    %v2243 = vsel %vm376, %v2211, %v2242
    %v2245 = vunpack.c.l.s4 1934713408
    %v2246 = vunpack.c.0.s8 %v2245
    %v2247 = vperm.slane %v2241, %v2246
    %v2249 = vunpack.c.l.s4 1934713408
    %v2250 = vunpack.c.0.s8 %v2249
    %v2251 = vperm.slane %v2243, %v2250
    %v2252 = vrot.slane %v2215, 4
    %v2253 = vsel %vm376, %v2252, %v2203
    %v2254 = vrot.slane %v2203, 4
    %v2255 = vsel %vm376, %v2215, %v2254
    %v2257 = vunpack.c.l.s4 1934713408
    %v2258 = vunpack.c.0.s8 %v2257
    %v2259 = vperm.slane %v2253, %v2258
    %v2261 = vunpack.c.l.s4 1934713408
    %v2262 = vunpack.c.0.s8 %v2261
    %v2263 = vperm.slane %v2255, %v2262
    %v2264 = vrot.slane %v2247, 4
    %v2265 = vsel %vm376, %v2264, %v2223
    %v2266 = vrot.slane %v2223, 4
    %v2267 = vsel %vm376, %v2247, %v2266
    %v2268 = vrot.slane %v2251, 4
    %v2269 = vsel %vm376, %v2268, %v2227
    %v2270 = vrot.slane %v2227, 4
    %v2271 = vsel %vm376, %v2251, %v2270
    %v2272 = vrot.slane %v2259, 4
    %v2273 = vsel %vm376, %v2272, %v2235
    %v2274 = vrot.slane %v2235, 4
    %v2275 = vsel %vm376, %v2259, %v2274
    %v2276 = vrot.slane %v2263, 4
    %v2277 = vsel %vm376, %v2276, %v2239
    %v2278 = vrot.slane %v2239, 4
    %v2279 = vsel %vm376, %v2263, %v2278
    %v2280 = vrot.slane %v1177, 4
    %v2281 = vsel %vm376, %v2280, %v1113
    %v2282 = vrot.slane %v1113, 4
    %v2283 = vsel %vm376, %v1177, %v2282
    %v2285 = vunpack.c.l.s4 1983009808
    %v2286 = vunpack.c.0.s8 %v2285
    %v2287 = vperm.slane %v2281, %v2286
    %v2289 = vunpack.c.l.s4 1983009808
    %v2290 = vunpack.c.0.s8 %v2289
    %v2291 = vperm.slane %v2283, %v2290
    %v2292 = vrot.slane %v1209, 4
    %v2293 = vsel %vm376, %v2292, %v1145
    %v2294 = vrot.slane %v1145, 4
    %v2295 = vsel %vm376, %v1209, %v2294
    %v2297 = vunpack.c.l.s4 1983009808
    %v2298 = vunpack.c.0.s8 %v2297
    %v2299 = vperm.slane %v2293, %v2298
    %v2301 = vunpack.c.l.s4 1983009808
    %v2302 = vunpack.c.0.s8 %v2301
    %v2303 = vperm.slane %v2295, %v2302
    %v2304 = vrot.slane %v1305, 4
    %v2305 = vsel %vm376, %v2304, %v1241
    %v2306 = vrot.slane %v1241, 4
    %v2307 = vsel %vm376, %v1305, %v2306
    %v2309 = vunpack.c.l.s4 1983009808
    %v2310 = vunpack.c.0.s8 %v2309
    %v2311 = vperm.slane %v2305, %v2310
    %v2313 = vunpack.c.l.s4 1983009808
    %v2314 = vunpack.c.0.s8 %v2313
    %v2315 = vperm.slane %v2307, %v2314
    %v2316 = vrot.slane %v1337, 4
    %v2317 = vsel %vm376, %v2316, %v1273
    %v2318 = vrot.slane %v1273, 4
    %v2319 = vsel %vm376, %v1337, %v2318
    %v2321 = vunpack.c.l.s4 1983009808
    %v2322 = vunpack.c.0.s8 %v2321
    %v2323 = vperm.slane %v2317, %v2322
    %v2325 = vunpack.c.l.s4 1983009808
    %v2326 = vunpack.c.0.s8 %v2325
    %v2327 = vperm.slane %v2319, %v2326
    %v2328 = vrot.slane %v2299, 4
    %v2329 = vsel %vm376, %v2328, %v2287
    %v2330 = vrot.slane %v2287, 4
    %v2331 = vsel %vm376, %v2299, %v2330
    %v2333 = vunpack.c.l.s4 1934713408
    %v2334 = vunpack.c.0.s8 %v2333
    %v2335 = vperm.slane %v2329, %v2334
    %v2337 = vunpack.c.l.s4 1934713408
    %v2338 = vunpack.c.0.s8 %v2337
    %v2339 = vperm.slane %v2331, %v2338
    %v2340 = vrot.slane %v2303, 4
    %v2341 = vsel %vm376, %v2340, %v2291
    %v2342 = vrot.slane %v2291, 4
    %v2343 = vsel %vm376, %v2303, %v2342
    %v2345 = vunpack.c.l.s4 1934713408
    %v2346 = vunpack.c.0.s8 %v2345
    %v2347 = vperm.slane %v2341, %v2346
    %v2349 = vunpack.c.l.s4 1934713408
    %v2350 = vunpack.c.0.s8 %v2349
    %v2351 = vperm.slane %v2343, %v2350
    %v2352 = vrot.slane %v2323, 4
    %v2353 = vsel %vm376, %v2352, %v2311
    %v2354 = vrot.slane %v2311, 4
    %v2355 = vsel %vm376, %v2323, %v2354
    %v2357 = vunpack.c.l.s4 1934713408
    %v2358 = vunpack.c.0.s8 %v2357
    %v2359 = vperm.slane %v2353, %v2358
    %v2361 = vunpack.c.l.s4 1934713408
    %v2362 = vunpack.c.0.s8 %v2361
    %v2363 = vperm.slane %v2355, %v2362
    %v2364 = vrot.slane %v2327, 4
    %v2365 = vsel %vm376, %v2364, %v2315
    %v2366 = vrot.slane %v2315, 4
    %v2367 = vsel %vm376, %v2327, %v2366
    %v2369 = vunpack.c.l.s4 1934713408
    %v2370 = vunpack.c.0.s8 %v2369
    %v2371 = vperm.slane %v2365, %v2370
    %v2373 = vunpack.c.l.s4 1934713408
    %v2374 = vunpack.c.0.s8 %v2373
    %v2375 = vperm.slane %v2367, %v2374
    %v2376 = vrot.slane %v2359, 4
    %v2377 = vsel %vm376, %v2376, %v2335
    %v2378 = vrot.slane %v2335, 4
    %v2379 = vsel %vm376, %v2359, %v2378
    %v2380 = vrot.slane %v2363, 4
    %v2381 = vsel %vm376, %v2380, %v2339
    %v2382 = vrot.slane %v2339, 4
    %v2383 = vsel %vm376, %v2363, %v2382
    %v2384 = vrot.slane %v2371, 4
    %v2385 = vsel %vm376, %v2384, %v2347
    %v2386 = vrot.slane %v2347, 4
    %v2387 = vsel %vm376, %v2371, %v2386
    %v2388 = vrot.slane %v2375, 4
    %v2389 = vsel %vm376, %v2388, %v2351
    %v2390 = vrot.slane %v2351, 4
    %v2391 = vsel %vm376, %v2375, %v2390
    %v2392 = vrot.slane %v1433, 4
    %v2393 = vsel %vm376, %v2392, %v1369
    %v2394 = vrot.slane %v1369, 4
    %v2395 = vsel %vm376, %v1433, %v2394
    %v2397 = vunpack.c.l.s4 1983009808
    %v2398 = vunpack.c.0.s8 %v2397
    %v2399 = vperm.slane %v2393, %v2398
    %v2401 = vunpack.c.l.s4 1983009808
    %v2402 = vunpack.c.0.s8 %v2401
    %v2403 = vperm.slane %v2395, %v2402
    %v2404 = vrot.slane %v1465, 4
    %v2405 = vsel %vm376, %v2404, %v1401
    %v2406 = vrot.slane %v1401, 4
    %v2407 = vsel %vm376, %v1465, %v2406
    %v2409 = vunpack.c.l.s4 1983009808
    %v2410 = vunpack.c.0.s8 %v2409
    %v2411 = vperm.slane %v2405, %v2410
    %v2413 = vunpack.c.l.s4 1983009808
    %v2414 = vunpack.c.0.s8 %v2413
    %v2415 = vperm.slane %v2407, %v2414
    %v2416 = vrot.slane %v1561, 4
    %v2417 = vsel %vm376, %v2416, %v1497
    %v2418 = vrot.slane %v1497, 4
    %v2419 = vsel %vm376, %v1561, %v2418
    %v2421 = vunpack.c.l.s4 1983009808
    %v2422 = vunpack.c.0.s8 %v2421
    %v2423 = vperm.slane %v2417, %v2422
    %v2425 = vunpack.c.l.s4 1983009808
    %v2426 = vunpack.c.0.s8 %v2425
    %v2427 = vperm.slane %v2419, %v2426
    %v2428 = vrot.slane %v1593, 4
    %v2429 = vsel %vm376, %v2428, %v1529
    %v2430 = vrot.slane %v1529, 4
    %v2431 = vsel %vm376, %v1593, %v2430
    %v2433 = vunpack.c.l.s4 1983009808
    %v2434 = vunpack.c.0.s8 %v2433
    %v2435 = vperm.slane %v2429, %v2434
    %v2437 = vunpack.c.l.s4 1983009808
    %v2438 = vunpack.c.0.s8 %v2437
    %v2439 = vperm.slane %v2431, %v2438
    %v2440 = vrot.slane %v2411, 4
    %v2441 = vsel %vm376, %v2440, %v2399
    %v2442 = vrot.slane %v2399, 4
    %v2443 = vsel %vm376, %v2411, %v2442
    %v2445 = vunpack.c.l.s4 1934713408
    %v2446 = vunpack.c.0.s8 %v2445
    %v2447 = vperm.slane %v2441, %v2446
    %v2449 = vunpack.c.l.s4 1934713408
    %v2450 = vunpack.c.0.s8 %v2449
    %v2451 = vperm.slane %v2443, %v2450
    %v2452 = vrot.slane %v2415, 4
    %v2453 = vsel %vm376, %v2452, %v2403
    %v2454 = vrot.slane %v2403, 4
    %v2455 = vsel %vm376, %v2415, %v2454
    %v2457 = vunpack.c.l.s4 1934713408
    %v2458 = vunpack.c.0.s8 %v2457
    %v2459 = vperm.slane %v2453, %v2458
    %v2461 = vunpack.c.l.s4 1934713408
    %v2462 = vunpack.c.0.s8 %v2461
    %v2463 = vperm.slane %v2455, %v2462
    %v2464 = vrot.slane %v2435, 4
    %v2465 = vsel %vm376, %v2464, %v2423
    %v2466 = vrot.slane %v2423, 4
    %v2467 = vsel %vm376, %v2435, %v2466
    %v2469 = vunpack.c.l.s4 1934713408
    %v2470 = vunpack.c.0.s8 %v2469
    %v2471 = vperm.slane %v2465, %v2470
    %v2473 = vunpack.c.l.s4 1934713408
    %v2474 = vunpack.c.0.s8 %v2473
    %v2475 = vperm.slane %v2467, %v2474
    %v2476 = vrot.slane %v2439, 4
    %v2477 = vsel %vm376, %v2476, %v2427
    %v2478 = vrot.slane %v2427, 4
    %v2479 = vsel %vm376, %v2439, %v2478
    %v2481 = vunpack.c.l.s4 1934713408
    %v2482 = vunpack.c.0.s8 %v2481
    %v2483 = vperm.slane %v2477, %v2482
    %v2485 = vunpack.c.l.s4 1934713408
    %v2486 = vunpack.c.0.s8 %v2485
    %v2487 = vperm.slane %v2479, %v2486
    %v2488 = vrot.slane %v2471, 4
    %v2489 = vsel %vm376, %v2488, %v2447
    %v2490 = vrot.slane %v2447, 4
    %v2491 = vsel %vm376, %v2471, %v2490
    %v2492 = vrot.slane %v2475, 4
    %v2493 = vsel %vm376, %v2492, %v2451
    %v2494 = vrot.slane %v2451, 4
    %v2495 = vsel %vm376, %v2475, %v2494
    %v2496 = vrot.slane %v2483, 4
    %v2497 = vsel %vm376, %v2496, %v2459
    %v2498 = vrot.slane %v2459, 4
    %v2499 = vsel %vm376, %v2483, %v2498
    %v2500 = vrot.slane %v2487, 4
    %v2501 = vsel %vm376, %v2500, %v2463
    %v2502 = vrot.slane %v2463, 4
    %v2503 = vsel %vm376, %v2487, %v2502
    %v2504 = vrot.slane %v666, 4
    %v2505 = vsel %vm376, %v2504, %v602
    %v2506 = vrot.slane %v602, 4
    %v2507 = vsel %vm376, %v666, %v2506
    %v2509 = vunpack.c.l.s4 1983009808
    %v2510 = vunpack.c.0.s8 %v2509
    %v2511 = vperm.slane %v2505, %v2510
    %v2513 = vunpack.c.l.s4 1983009808
    %v2514 = vunpack.c.0.s8 %v2513
    %v2515 = vperm.slane %v2507, %v2514
    %v2516 = vrot.slane %v698, 4
    %v2517 = vsel %vm376, %v2516, %v634
    %v2518 = vrot.slane %v634, 4
    %v2519 = vsel %vm376, %v698, %v2518
    %v2521 = vunpack.c.l.s4 1983009808
    %v2522 = vunpack.c.0.s8 %v2521
    %v2523 = vperm.slane %v2517, %v2522
    %v2525 = vunpack.c.l.s4 1983009808
    %v2526 = vunpack.c.0.s8 %v2525
    %v2527 = vperm.slane %v2519, %v2526
    %v2528 = vrot.slane %v794, 4
    %v2529 = vsel %vm376, %v2528, %v730
    %v2530 = vrot.slane %v730, 4
    %v2531 = vsel %vm376, %v794, %v2530
    %v2533 = vunpack.c.l.s4 1983009808
    %v2534 = vunpack.c.0.s8 %v2533
    %v2535 = vperm.slane %v2529, %v2534
    %v2537 = vunpack.c.l.s4 1983009808
    %v2538 = vunpack.c.0.s8 %v2537
    %v2539 = vperm.slane %v2531, %v2538
    %v2540 = vrot.slane %v826, 4
    %v2541 = vsel %vm376, %v2540, %v762
    %v2542 = vrot.slane %v762, 4
    %v2543 = vsel %vm376, %v826, %v2542
    %v2545 = vunpack.c.l.s4 1983009808
    %v2546 = vunpack.c.0.s8 %v2545
    %v2547 = vperm.slane %v2541, %v2546
    %v2549 = vunpack.c.l.s4 1983009808
    %v2550 = vunpack.c.0.s8 %v2549
    %v2551 = vperm.slane %v2543, %v2550
    %v2552 = vrot.slane %v2523, 4
    %v2553 = vsel %vm376, %v2552, %v2511
    %v2554 = vrot.slane %v2511, 4
    %v2555 = vsel %vm376, %v2523, %v2554
    %v2557 = vunpack.c.l.s4 1934713408
    %v2558 = vunpack.c.0.s8 %v2557
    %v2559 = vperm.slane %v2553, %v2558
    %v2561 = vunpack.c.l.s4 1934713408
    %v2562 = vunpack.c.0.s8 %v2561
    %v2563 = vperm.slane %v2555, %v2562
    %v2564 = vrot.slane %v2527, 4
    %v2565 = vsel %vm376, %v2564, %v2515
    %v2566 = vrot.slane %v2515, 4
    %v2567 = vsel %vm376, %v2527, %v2566
    %v2569 = vunpack.c.l.s4 1934713408
    %v2570 = vunpack.c.0.s8 %v2569
    %v2571 = vperm.slane %v2565, %v2570
    %v2573 = vunpack.c.l.s4 1934713408
    %v2574 = vunpack.c.0.s8 %v2573
    %v2575 = vperm.slane %v2567, %v2574
    %v2576 = vrot.slane %v2547, 4
    %v2577 = vsel %vm376, %v2576, %v2535
    %v2578 = vrot.slane %v2535, 4
    %v2579 = vsel %vm376, %v2547, %v2578
    %v2581 = vunpack.c.l.s4 1934713408
    %v2582 = vunpack.c.0.s8 %v2581
    %v2583 = vperm.slane %v2577, %v2582
    %v2585 = vunpack.c.l.s4 1934713408
    %v2586 = vunpack.c.0.s8 %v2585
    %v2587 = vperm.slane %v2579, %v2586
    %v2588 = vrot.slane %v2551, 4
    %v2589 = vsel %vm376, %v2588, %v2539
    %v2590 = vrot.slane %v2539, 4
    %v2591 = vsel %vm376, %v2551, %v2590
    %v2593 = vunpack.c.l.s4 1934713408
    %v2594 = vunpack.c.0.s8 %v2593
    %v2595 = vperm.slane %v2589, %v2594
    %v2597 = vunpack.c.l.s4 1934713408
    %v2598 = vunpack.c.0.s8 %v2597
    %v2599 = vperm.slane %v2591, %v2598
    %v2600 = vrot.slane %v2583, 4
    %v2601 = vsel %vm376, %v2600, %v2559
    %v2602 = vrot.slane %v2559, 4
    %v2603 = vsel %vm376, %v2583, %v2602
    %v2604 = vrot.slane %v2587, 4
    %v2605 = vsel %vm376, %v2604, %v2563
    %v2606 = vrot.slane %v2563, 4
    %v2607 = vsel %vm376, %v2587, %v2606
    %v2608 = vrot.slane %v2595, 4
    %v2609 = vsel %vm376, %v2608, %v2571
    %v2610 = vrot.slane %v2571, 4
    %v2611 = vsel %vm376, %v2595, %v2610
    %v2612 = vrot.slane %v2599, 4
    %v2613 = vsel %vm376, %v2612, %v2575
    %v2614 = vrot.slane %v2575, 4
    %v2615 = vsel %vm376, %v2599, %v2614
    %v2616 = vrot.slane %v922, 4
    %v2617 = vsel %vm376, %v2616, %v858
    %v2618 = vrot.slane %v858, 4
    %v2619 = vsel %vm376, %v922, %v2618
    %v2621 = vunpack.c.l.s4 1983009808
    %v2622 = vunpack.c.0.s8 %v2621
    %v2623 = vperm.slane %v2617, %v2622
    %v2625 = vunpack.c.l.s4 1983009808
    %v2626 = vunpack.c.0.s8 %v2625
    %v2627 = vperm.slane %v2619, %v2626
    %v2628 = vrot.slane %v954, 4
    %v2629 = vsel %vm376, %v2628, %v890
    %v2630 = vrot.slane %v890, 4
    %v2631 = vsel %vm376, %v954, %v2630
    %v2633 = vunpack.c.l.s4 1983009808
    %v2634 = vunpack.c.0.s8 %v2633
    %v2635 = vperm.slane %v2629, %v2634
    %v2637 = vunpack.c.l.s4 1983009808
    %v2638 = vunpack.c.0.s8 %v2637
    %v2639 = vperm.slane %v2631, %v2638
    %v2640 = vrot.slane %v1050, 4
    %v2641 = vsel %vm376, %v2640, %v986
    %v2642 = vrot.slane %v986, 4
    %v2643 = vsel %vm376, %v1050, %v2642
    %v2645 = vunpack.c.l.s4 1983009808
    %v2646 = vunpack.c.0.s8 %v2645
    %v2647 = vperm.slane %v2641, %v2646
    %v2649 = vunpack.c.l.s4 1983009808
    %v2650 = vunpack.c.0.s8 %v2649
    %v2651 = vperm.slane %v2643, %v2650
    %v2652 = vrot.slane %v1082, 4
    %v2653 = vsel %vm376, %v2652, %v1018
    %v2654 = vrot.slane %v1018, 4
    %v2655 = vsel %vm376, %v1082, %v2654
    %v2657 = vunpack.c.l.s4 1983009808
    %v2658 = vunpack.c.0.s8 %v2657
    %v2659 = vperm.slane %v2653, %v2658
    %v2661 = vunpack.c.l.s4 1983009808
    %v2662 = vunpack.c.0.s8 %v2661
    %v2663 = vperm.slane %v2655, %v2662
    %v2664 = vrot.slane %v2635, 4
    %v2665 = vsel %vm376, %v2664, %v2623
    %v2666 = vrot.slane %v2623, 4
    %v2667 = vsel %vm376, %v2635, %v2666
    %v2669 = vunpack.c.l.s4 1934713408
    %v2670 = vunpack.c.0.s8 %v2669
    %v2671 = vperm.slane %v2665, %v2670
    %v2673 = vunpack.c.l.s4 1934713408
    %v2674 = vunpack.c.0.s8 %v2673
    %v2675 = vperm.slane %v2667, %v2674
    %v2676 = vrot.slane %v2639, 4
    %v2677 = vsel %vm376, %v2676, %v2627
    %v2678 = vrot.slane %v2627, 4
    %v2679 = vsel %vm376, %v2639, %v2678
    %v2681 = vunpack.c.l.s4 1934713408
    %v2682 = vunpack.c.0.s8 %v2681
    %v2683 = vperm.slane %v2677, %v2682
    %v2685 = vunpack.c.l.s4 1934713408
    %v2686 = vunpack.c.0.s8 %v2685
    %v2687 = vperm.slane %v2679, %v2686
    %v2688 = vrot.slane %v2659, 4
    %v2689 = vsel %vm376, %v2688, %v2647
    %v2690 = vrot.slane %v2647, 4
    %v2691 = vsel %vm376, %v2659, %v2690
    %v2693 = vunpack.c.l.s4 1934713408
    %v2694 = vunpack.c.0.s8 %v2693
    %v2695 = vperm.slane %v2689, %v2694
    %v2697 = vunpack.c.l.s4 1934713408
    %v2698 = vunpack.c.0.s8 %v2697
    %v2699 = vperm.slane %v2691, %v2698
    %v2700 = vrot.slane %v2663, 4
    %v2701 = vsel %vm376, %v2700, %v2651
    %v2702 = vrot.slane %v2651, 4
    %v2703 = vsel %vm376, %v2663, %v2702
    %v2705 = vunpack.c.l.s4 1934713408
    %v2706 = vunpack.c.0.s8 %v2705
    %v2707 = vperm.slane %v2701, %v2706
    %v2709 = vunpack.c.l.s4 1934713408
    %v2710 = vunpack.c.0.s8 %v2709
    %v2711 = vperm.slane %v2703, %v2710
    %v2712 = vrot.slane %v2695, 4
    %v2713 = vsel %vm376, %v2712, %v2671
    %v2714 = vrot.slane %v2671, 4
    %v2715 = vsel %vm376, %v2695, %v2714
    %v2716 = vrot.slane %v2699, 4
    %v2717 = vsel %vm376, %v2716, %v2675
    %v2718 = vrot.slane %v2675, 4
    %v2719 = vsel %vm376, %v2699, %v2718
    %v2720 = vrot.slane %v2707, 4
    %v2721 = vsel %vm376, %v2720, %v2683
    %v2722 = vrot.slane %v2683, 4
    %v2723 = vsel %vm376, %v2707, %v2722
    %v2724 = vrot.slane %v2711, 4
    %v2725 = vsel %vm376, %v2724, %v2687
    %v2726 = vrot.slane %v2687, 4
    %v2727 = vsel %vm376, %v2711, %v2726
    %v2728 = vrot.slane %v1178, 4
    %v2729 = vsel %vm376, %v2728, %v1114
    %v2730 = vrot.slane %v1114, 4
    %v2731 = vsel %vm376, %v1178, %v2730
    %v2733 = vunpack.c.l.s4 1983009808
    %v2734 = vunpack.c.0.s8 %v2733
    %v2735 = vperm.slane %v2729, %v2734
    %v2737 = vunpack.c.l.s4 1983009808
    %v2738 = vunpack.c.0.s8 %v2737
    %v2739 = vperm.slane %v2731, %v2738
    %v2740 = vrot.slane %v1210, 4
    %v2741 = vsel %vm376, %v2740, %v1146
    %v2742 = vrot.slane %v1146, 4
    %v2743 = vsel %vm376, %v1210, %v2742
    %v2745 = vunpack.c.l.s4 1983009808
    %v2746 = vunpack.c.0.s8 %v2745
    %v2747 = vperm.slane %v2741, %v2746
    %v2749 = vunpack.c.l.s4 1983009808
    %v2750 = vunpack.c.0.s8 %v2749
    %v2751 = vperm.slane %v2743, %v2750
    %v2752 = vrot.slane %v1306, 4
    %v2753 = vsel %vm376, %v2752, %v1242
    %v2754 = vrot.slane %v1242, 4
    %v2755 = vsel %vm376, %v1306, %v2754
    %v2757 = vunpack.c.l.s4 1983009808
    %v2758 = vunpack.c.0.s8 %v2757
    %v2759 = vperm.slane %v2753, %v2758
    %v2761 = vunpack.c.l.s4 1983009808
    %v2762 = vunpack.c.0.s8 %v2761
    %v2763 = vperm.slane %v2755, %v2762
    %v2764 = vrot.slane %v1338, 4
    %v2765 = vsel %vm376, %v2764, %v1274
    %v2766 = vrot.slane %v1274, 4
    %v2767 = vsel %vm376, %v1338, %v2766
    %v2769 = vunpack.c.l.s4 1983009808
    %v2770 = vunpack.c.0.s8 %v2769
    %v2771 = vperm.slane %v2765, %v2770
    %v2773 = vunpack.c.l.s4 1983009808
    %v2774 = vunpack.c.0.s8 %v2773
    %v2775 = vperm.slane %v2767, %v2774
    %v2776 = vrot.slane %v2747, 4
    %v2777 = vsel %vm376, %v2776, %v2735
    %v2778 = vrot.slane %v2735, 4
    %v2779 = vsel %vm376, %v2747, %v2778
    %v2781 = vunpack.c.l.s4 1934713408
    %v2782 = vunpack.c.0.s8 %v2781
    %v2783 = vperm.slane %v2777, %v2782
    %v2785 = vunpack.c.l.s4 1934713408
    %v2786 = vunpack.c.0.s8 %v2785
    %v2787 = vperm.slane %v2779, %v2786
    %v2788 = vrot.slane %v2751, 4
    %v2789 = vsel %vm376, %v2788, %v2739
    %v2790 = vrot.slane %v2739, 4
    %v2791 = vsel %vm376, %v2751, %v2790
    %v2793 = vunpack.c.l.s4 1934713408
    %v2794 = vunpack.c.0.s8 %v2793
    %v2795 = vperm.slane %v2789, %v2794
    %v2797 = vunpack.c.l.s4 1934713408
    %v2798 = vunpack.c.0.s8 %v2797
    %v2799 = vperm.slane %v2791, %v2798
    %v2800 = vrot.slane %v2771, 4
    %v2801 = vsel %vm376, %v2800, %v2759
    %v2802 = vrot.slane %v2759, 4
    %v2803 = vsel %vm376, %v2771, %v2802
    %v2805 = vunpack.c.l.s4 1934713408
    %v2806 = vunpack.c.0.s8 %v2805
    %v2807 = vperm.slane %v2801, %v2806
    %v2809 = vunpack.c.l.s4 1934713408
    %v2810 = vunpack.c.0.s8 %v2809
    %v2811 = vperm.slane %v2803, %v2810
    %v2812 = vrot.slane %v2775, 4
    %v2813 = vsel %vm376, %v2812, %v2763
    %v2814 = vrot.slane %v2763, 4
    %v2815 = vsel %vm376, %v2775, %v2814
    %v2817 = vunpack.c.l.s4 1934713408
    %v2818 = vunpack.c.0.s8 %v2817
    %v2819 = vperm.slane %v2813, %v2818
    %v2821 = vunpack.c.l.s4 1934713408
    %v2822 = vunpack.c.0.s8 %v2821
    %v2823 = vperm.slane %v2815, %v2822
    %v2824 = vrot.slane %v2807, 4
    %v2825 = vsel %vm376, %v2824, %v2783
    %v2826 = vrot.slane %v2783, 4
    %v2827 = vsel %vm376, %v2807, %v2826
    %v2828 = vrot.slane %v2811, 4
    %v2829 = vsel %vm376, %v2828, %v2787
    %v2830 = vrot.slane %v2787, 4
    %v2831 = vsel %vm376, %v2811, %v2830
    %v2832 = vrot.slane %v2819, 4
    %v2833 = vsel %vm376, %v2832, %v2795
    %v2834 = vrot.slane %v2795, 4
    %v2835 = vsel %vm376, %v2819, %v2834
    %v2836 = vrot.slane %v2823, 4
    %v2837 = vsel %vm376, %v2836, %v2799
    %v2838 = vrot.slane %v2799, 4
    %v2839 = vsel %vm376, %v2823, %v2838
    %v2840 = vrot.slane %v1434, 4
    %v2841 = vsel %vm376, %v2840, %v1370
    %v2842 = vrot.slane %v1370, 4
    %v2843 = vsel %vm376, %v1434, %v2842
    %v2845 = vunpack.c.l.s4 1983009808
    %v2846 = vunpack.c.0.s8 %v2845
    %v2847 = vperm.slane %v2841, %v2846
    %v2849 = vunpack.c.l.s4 1983009808
    %v2850 = vunpack.c.0.s8 %v2849
    %v2851 = vperm.slane %v2843, %v2850
    %v2852 = vrot.slane %v1466, 4
    %v2853 = vsel %vm376, %v2852, %v1402
    %v2854 = vrot.slane %v1402, 4
    %v2855 = vsel %vm376, %v1466, %v2854
    %v2857 = vunpack.c.l.s4 1983009808
    %v2858 = vunpack.c.0.s8 %v2857
    %v2859 = vperm.slane %v2853, %v2858
    %v2861 = vunpack.c.l.s4 1983009808
    %v2862 = vunpack.c.0.s8 %v2861
    %v2863 = vperm.slane %v2855, %v2862
    %v2864 = vrot.slane %v1562, 4
    %v2865 = vsel %vm376, %v2864, %v1498
    %v2866 = vrot.slane %v1498, 4
    %v2867 = vsel %vm376, %v1562, %v2866
    %v2869 = vunpack.c.l.s4 1983009808
    %v2870 = vunpack.c.0.s8 %v2869
    %v2871 = vperm.slane %v2865, %v2870
    %v2873 = vunpack.c.l.s4 1983009808
    %v2874 = vunpack.c.0.s8 %v2873
    %v2875 = vperm.slane %v2867, %v2874
    %v2876 = vrot.slane %v1594, 4
    %v2877 = vsel %vm376, %v2876, %v1530
    %v2878 = vrot.slane %v1530, 4
    %v2879 = vsel %vm376, %v1594, %v2878
    %v2881 = vunpack.c.l.s4 1983009808
    %v2882 = vunpack.c.0.s8 %v2881
    %v2883 = vperm.slane %v2877, %v2882
    %v2885 = vunpack.c.l.s4 1983009808
    %v2886 = vunpack.c.0.s8 %v2885
    %v2887 = vperm.slane %v2879, %v2886
    %v2888 = vrot.slane %v2859, 4
    %v2889 = vsel %vm376, %v2888, %v2847
    %v2890 = vrot.slane %v2847, 4
    %v2891 = vsel %vm376, %v2859, %v2890
    %v2893 = vunpack.c.l.s4 1934713408
    %v2894 = vunpack.c.0.s8 %v2893
    %v2895 = vperm.slane %v2889, %v2894
    %v2897 = vunpack.c.l.s4 1934713408
    %v2898 = vunpack.c.0.s8 %v2897
    %v2899 = vperm.slane %v2891, %v2898
    %v2900 = vrot.slane %v2863, 4
    %v2901 = vsel %vm376, %v2900, %v2851
    %v2902 = vrot.slane %v2851, 4
    %v2903 = vsel %vm376, %v2863, %v2902
    %v2905 = vunpack.c.l.s4 1934713408
    %v2906 = vunpack.c.0.s8 %v2905
    %v2907 = vperm.slane %v2901, %v2906
    %v2909 = vunpack.c.l.s4 1934713408
    %v2910 = vunpack.c.0.s8 %v2909
    %v2911 = vperm.slane %v2903, %v2910
    %v2912 = vrot.slane %v2883, 4
    %v2913 = vsel %vm376, %v2912, %v2871
    %v2914 = vrot.slane %v2871, 4
    %v2915 = vsel %vm376, %v2883, %v2914
    %v2917 = vunpack.c.l.s4 1934713408
    %v2918 = vunpack.c.0.s8 %v2917
    %v2919 = vperm.slane %v2913, %v2918
    %v2921 = vunpack.c.l.s4 1934713408
    %v2922 = vunpack.c.0.s8 %v2921
    %v2923 = vperm.slane %v2915, %v2922
    %v2924 = vrot.slane %v2887, 4
    %v2925 = vsel %vm376, %v2924, %v2875
    %v2926 = vrot.slane %v2875, 4
    %v2927 = vsel %vm376, %v2887, %v2926
    %v2929 = vunpack.c.l.s4 1934713408
    %v2930 = vunpack.c.0.s8 %v2929
    %v2931 = vperm.slane %v2925, %v2930
    %v2933 = vunpack.c.l.s4 1934713408
    %v2934 = vunpack.c.0.s8 %v2933
    %v2935 = vperm.slane %v2927, %v2934
    %v2936 = vrot.slane %v2919, 4
    %v2937 = vsel %vm376, %v2936, %v2895
    %v2938 = vrot.slane %v2895, 4
    %v2939 = vsel %vm376, %v2919, %v2938
    %v2940 = vrot.slane %v2923, 4
    %v2941 = vsel %vm376, %v2940, %v2899
    %v2942 = vrot.slane %v2899, 4
    %v2943 = vsel %vm376, %v2923, %v2942
    %v2944 = vrot.slane %v2931, 4
    %v2945 = vsel %vm376, %v2944, %v2907
    %v2946 = vrot.slane %v2907, 4
    %v2947 = vsel %vm376, %v2931, %v2946
    %v2948 = vrot.slane %v2935, 4
    %v2949 = vsel %vm376, %v2948, %v2911
    %v2950 = vrot.slane %v2911, 4
    %v2951 = vsel %vm376, %v2935, %v2950
    %v2952 = vrot.slane %v667, 4
    %v2953 = vsel %vm376, %v2952, %v603
    %v2954 = vrot.slane %v603, 4
    %v2955 = vsel %vm376, %v667, %v2954
    %v2957 = vunpack.c.l.s4 1983009808
    %v2958 = vunpack.c.0.s8 %v2957
    %v2959 = vperm.slane %v2953, %v2958
    %v2961 = vunpack.c.l.s4 1983009808
    %v2962 = vunpack.c.0.s8 %v2961
    %v2963 = vperm.slane %v2955, %v2962
    %v2964 = vrot.slane %v699, 4
    %v2965 = vsel %vm376, %v2964, %v635
    %v2966 = vrot.slane %v635, 4
    %v2967 = vsel %vm376, %v699, %v2966
    %v2969 = vunpack.c.l.s4 1983009808
    %v2970 = vunpack.c.0.s8 %v2969
    %v2971 = vperm.slane %v2965, %v2970
    %v2973 = vunpack.c.l.s4 1983009808
    %v2974 = vunpack.c.0.s8 %v2973
    %v2975 = vperm.slane %v2967, %v2974
    %v2976 = vrot.slane %v795, 4
    %v2977 = vsel %vm376, %v2976, %v731
    %v2978 = vrot.slane %v731, 4
    %v2979 = vsel %vm376, %v795, %v2978
    %v2981 = vunpack.c.l.s4 1983009808
    %v2982 = vunpack.c.0.s8 %v2981
    %v2983 = vperm.slane %v2977, %v2982
    %v2985 = vunpack.c.l.s4 1983009808
    %v2986 = vunpack.c.0.s8 %v2985
    %v2987 = vperm.slane %v2979, %v2986
    %v2988 = vrot.slane %v827, 4
    %v2989 = vsel %vm376, %v2988, %v763
    %v2990 = vrot.slane %v763, 4
    %v2991 = vsel %vm376, %v827, %v2990
    %v2993 = vunpack.c.l.s4 1983009808
    %v2994 = vunpack.c.0.s8 %v2993
    %v2995 = vperm.slane %v2989, %v2994
    %v2997 = vunpack.c.l.s4 1983009808
    %v2998 = vunpack.c.0.s8 %v2997
    %v2999 = vperm.slane %v2991, %v2998
    %v3000 = vrot.slane %v2971, 4
    %v3001 = vsel %vm376, %v3000, %v2959
    %v3002 = vrot.slane %v2959, 4
    %v3003 = vsel %vm376, %v2971, %v3002
    %v3005 = vunpack.c.l.s4 1934713408
    %v3006 = vunpack.c.0.s8 %v3005
    %v3007 = vperm.slane %v3001, %v3006
    %v3009 = vunpack.c.l.s4 1934713408
    %v3010 = vunpack.c.0.s8 %v3009
    %v3011 = vperm.slane %v3003, %v3010
    %v3012 = vrot.slane %v2975, 4
    %v3013 = vsel %vm376, %v3012, %v2963
    %v3014 = vrot.slane %v2963, 4
    %v3015 = vsel %vm376, %v2975, %v3014
    %v3017 = vunpack.c.l.s4 1934713408
    %v3018 = vunpack.c.0.s8 %v3017
    %v3019 = vperm.slane %v3013, %v3018
    %v3021 = vunpack.c.l.s4 1934713408
    %v3022 = vunpack.c.0.s8 %v3021
    %v3023 = vperm.slane %v3015, %v3022
    %v3024 = vrot.slane %v2995, 4
    %v3025 = vsel %vm376, %v3024, %v2983
    %v3026 = vrot.slane %v2983, 4
    %v3027 = vsel %vm376, %v2995, %v3026
    %v3029 = vunpack.c.l.s4 1934713408
    %v3030 = vunpack.c.0.s8 %v3029
    %v3031 = vperm.slane %v3025, %v3030
    %v3033 = vunpack.c.l.s4 1934713408
    %v3034 = vunpack.c.0.s8 %v3033
    %v3035 = vperm.slane %v3027, %v3034
    %v3036 = vrot.slane %v2999, 4
    %v3037 = vsel %vm376, %v3036, %v2987
    %v3038 = vrot.slane %v2987, 4
    %v3039 = vsel %vm376, %v2999, %v3038
    %v3041 = vunpack.c.l.s4 1934713408
    %v3042 = vunpack.c.0.s8 %v3041
    %v3043 = vperm.slane %v3037, %v3042
    %v3045 = vunpack.c.l.s4 1934713408
    %v3046 = vunpack.c.0.s8 %v3045
    %v3047 = vperm.slane %v3039, %v3046
    %v3048 = vrot.slane %v3031, 4
    %v3049 = vsel %vm376, %v3048, %v3007
    %v3050 = vrot.slane %v3007, 4
    %v3051 = vsel %vm376, %v3031, %v3050
    %v3052 = vrot.slane %v3035, 4
    %v3053 = vsel %vm376, %v3052, %v3011
    %v3054 = vrot.slane %v3011, 4
    %v3055 = vsel %vm376, %v3035, %v3054
    %v3056 = vrot.slane %v3043, 4
    %v3057 = vsel %vm376, %v3056, %v3019
    %v3058 = vrot.slane %v3019, 4
    %v3059 = vsel %vm376, %v3043, %v3058
    %v3060 = vrot.slane %v3047, 4
    %v3061 = vsel %vm376, %v3060, %v3023
    %v3062 = vrot.slane %v3023, 4
    %v3063 = vsel %vm376, %v3047, %v3062
    %v3064 = vrot.slane %v923, 4
    %v3065 = vsel %vm376, %v3064, %v859
    %v3066 = vrot.slane %v859, 4
    %v3067 = vsel %vm376, %v923, %v3066
    %v3069 = vunpack.c.l.s4 1983009808
    %v3070 = vunpack.c.0.s8 %v3069
    %v3071 = vperm.slane %v3065, %v3070
    %v3073 = vunpack.c.l.s4 1983009808
    %v3074 = vunpack.c.0.s8 %v3073
    %v3075 = vperm.slane %v3067, %v3074
    %v3076 = vrot.slane %v955, 4
    %v3077 = vsel %vm376, %v3076, %v891
    %v3078 = vrot.slane %v891, 4
    %v3079 = vsel %vm376, %v955, %v3078
    %v3081 = vunpack.c.l.s4 1983009808
    %v3082 = vunpack.c.0.s8 %v3081
    %v3083 = vperm.slane %v3077, %v3082
    %v3085 = vunpack.c.l.s4 1983009808
    %v3086 = vunpack.c.0.s8 %v3085
    %v3087 = vperm.slane %v3079, %v3086
    %v3088 = vrot.slane %v1051, 4
    %v3089 = vsel %vm376, %v3088, %v987
    %v3090 = vrot.slane %v987, 4
    %v3091 = vsel %vm376, %v1051, %v3090
    %v3093 = vunpack.c.l.s4 1983009808
    %v3094 = vunpack.c.0.s8 %v3093
    %v3095 = vperm.slane %v3089, %v3094
    %v3097 = vunpack.c.l.s4 1983009808
    %v3098 = vunpack.c.0.s8 %v3097
    %v3099 = vperm.slane %v3091, %v3098
    %v3100 = vrot.slane %v1083, 4
    %v3101 = vsel %vm376, %v3100, %v1019
    %v3102 = vrot.slane %v1019, 4
    %v3103 = vsel %vm376, %v1083, %v3102
    %v3105 = vunpack.c.l.s4 1983009808
    %v3106 = vunpack.c.0.s8 %v3105
    %v3107 = vperm.slane %v3101, %v3106
    %v3109 = vunpack.c.l.s4 1983009808
    %v3110 = vunpack.c.0.s8 %v3109
    %v3111 = vperm.slane %v3103, %v3110
    %v3112 = vrot.slane %v3083, 4
    %v3113 = vsel %vm376, %v3112, %v3071
    %v3114 = vrot.slane %v3071, 4
    %v3115 = vsel %vm376, %v3083, %v3114
    %v3117 = vunpack.c.l.s4 1934713408
    %v3118 = vunpack.c.0.s8 %v3117
    %v3119 = vperm.slane %v3113, %v3118
    %v3121 = vunpack.c.l.s4 1934713408
    %v3122 = vunpack.c.0.s8 %v3121
    %v3123 = vperm.slane %v3115, %v3122
    %v3124 = vrot.slane %v3087, 4
    %v3125 = vsel %vm376, %v3124, %v3075
    %v3126 = vrot.slane %v3075, 4
    %v3127 = vsel %vm376, %v3087, %v3126
    %v3129 = vunpack.c.l.s4 1934713408
    %v3130 = vunpack.c.0.s8 %v3129
    %v3131 = vperm.slane %v3125, %v3130
    %v3133 = vunpack.c.l.s4 1934713408
    %v3134 = vunpack.c.0.s8 %v3133
    %v3135 = vperm.slane %v3127, %v3134
    %v3136 = vrot.slane %v3107, 4
    %v3137 = vsel %vm376, %v3136, %v3095
    %v3138 = vrot.slane %v3095, 4
    %v3139 = vsel %vm376, %v3107, %v3138
    %v3141 = vunpack.c.l.s4 1934713408
    %v3142 = vunpack.c.0.s8 %v3141
    %v3143 = vperm.slane %v3137, %v3142
    %v3145 = vunpack.c.l.s4 1934713408
    %v3146 = vunpack.c.0.s8 %v3145
    %v3147 = vperm.slane %v3139, %v3146
    %v3148 = vrot.slane %v3111, 4
    %v3149 = vsel %vm376, %v3148, %v3099
    %v3150 = vrot.slane %v3099, 4
    %v3151 = vsel %vm376, %v3111, %v3150
    %v3153 = vunpack.c.l.s4 1934713408
    %v3154 = vunpack.c.0.s8 %v3153
    %v3155 = vperm.slane %v3149, %v3154
    %v3157 = vunpack.c.l.s4 1934713408
    %v3158 = vunpack.c.0.s8 %v3157
    %v3159 = vperm.slane %v3151, %v3158
    %v3160 = vrot.slane %v3143, 4
    %v3161 = vsel %vm376, %v3160, %v3119
    %v3162 = vrot.slane %v3119, 4
    %v3163 = vsel %vm376, %v3143, %v3162
    %v3164 = vrot.slane %v3147, 4
    %v3165 = vsel %vm376, %v3164, %v3123
    %v3166 = vrot.slane %v3123, 4
    %v3167 = vsel %vm376, %v3147, %v3166
    %v3168 = vrot.slane %v3155, 4
    %v3169 = vsel %vm376, %v3168, %v3131
    %v3170 = vrot.slane %v3131, 4
    %v3171 = vsel %vm376, %v3155, %v3170
    %v3172 = vrot.slane %v3159, 4
    %v3173 = vsel %vm376, %v3172, %v3135
    %v3174 = vrot.slane %v3135, 4
    %v3175 = vsel %vm376, %v3159, %v3174
    %v3176 = vrot.slane %v1179, 4
    %v3177 = vsel %vm376, %v3176, %v1115
    %v3178 = vrot.slane %v1115, 4
    %v3179 = vsel %vm376, %v1179, %v3178
    %v3181 = vunpack.c.l.s4 1983009808
    %v3182 = vunpack.c.0.s8 %v3181
    %v3183 = vperm.slane %v3177, %v3182
    %v3185 = vunpack.c.l.s4 1983009808
    %v3186 = vunpack.c.0.s8 %v3185
    %v3187 = vperm.slane %v3179, %v3186
    %v3188 = vrot.slane %v1211, 4
    %v3189 = vsel %vm376, %v3188, %v1147
    %v3190 = vrot.slane %v1147, 4
    %v3191 = vsel %vm376, %v1211, %v3190
    %v3193 = vunpack.c.l.s4 1983009808
    %v3194 = vunpack.c.0.s8 %v3193
    %v3195 = vperm.slane %v3189, %v3194
    %v3197 = vunpack.c.l.s4 1983009808
    %v3198 = vunpack.c.0.s8 %v3197
    %v3199 = vperm.slane %v3191, %v3198
    %v3200 = vrot.slane %v1307, 4
    %v3201 = vsel %vm376, %v3200, %v1243
    %v3202 = vrot.slane %v1243, 4
    %v3203 = vsel %vm376, %v1307, %v3202
    %v3205 = vunpack.c.l.s4 1983009808
    %v3206 = vunpack.c.0.s8 %v3205
    %v3207 = vperm.slane %v3201, %v3206
    %v3209 = vunpack.c.l.s4 1983009808
    %v3210 = vunpack.c.0.s8 %v3209
    %v3211 = vperm.slane %v3203, %v3210
    %v3212 = vrot.slane %v1339, 4
    %v3213 = vsel %vm376, %v3212, %v1275
    %v3214 = vrot.slane %v1275, 4
    %v3215 = vsel %vm376, %v1339, %v3214
    %v3217 = vunpack.c.l.s4 1983009808
    %v3218 = vunpack.c.0.s8 %v3217
    %v3219 = vperm.slane %v3213, %v3218
    %v3221 = vunpack.c.l.s4 1983009808
    %v3222 = vunpack.c.0.s8 %v3221
    %v3223 = vperm.slane %v3215, %v3222
    %v3224 = vrot.slane %v3195, 4
    %v3225 = vsel %vm376, %v3224, %v3183
    %v3226 = vrot.slane %v3183, 4
    %v3227 = vsel %vm376, %v3195, %v3226
    %v3229 = vunpack.c.l.s4 1934713408
    %v3230 = vunpack.c.0.s8 %v3229
    %v3231 = vperm.slane %v3225, %v3230
    %v3233 = vunpack.c.l.s4 1934713408
    %v3234 = vunpack.c.0.s8 %v3233
    %v3235 = vperm.slane %v3227, %v3234
    %v3236 = vrot.slane %v3199, 4
    %v3237 = vsel %vm376, %v3236, %v3187
    %v3238 = vrot.slane %v3187, 4
    %v3239 = vsel %vm376, %v3199, %v3238
    %v3241 = vunpack.c.l.s4 1934713408
    %v3242 = vunpack.c.0.s8 %v3241
    %v3243 = vperm.slane %v3237, %v3242
    %v3245 = vunpack.c.l.s4 1934713408
    %v3246 = vunpack.c.0.s8 %v3245
    %v3247 = vperm.slane %v3239, %v3246
    %v3248 = vrot.slane %v3219, 4
    %v3249 = vsel %vm376, %v3248, %v3207
    %v3250 = vrot.slane %v3207, 4
    %v3251 = vsel %vm376, %v3219, %v3250
    %v3253 = vunpack.c.l.s4 1934713408
    %v3254 = vunpack.c.0.s8 %v3253
    %v3255 = vperm.slane %v3249, %v3254
    %v3257 = vunpack.c.l.s4 1934713408
    %v3258 = vunpack.c.0.s8 %v3257
    %v3259 = vperm.slane %v3251, %v3258
    %v3260 = vrot.slane %v3223, 4
    %v3261 = vsel %vm376, %v3260, %v3211
    %v3262 = vrot.slane %v3211, 4
    %v3263 = vsel %vm376, %v3223, %v3262
    %v3265 = vunpack.c.l.s4 1934713408
    %v3266 = vunpack.c.0.s8 %v3265
    %v3267 = vperm.slane %v3261, %v3266
    %v3269 = vunpack.c.l.s4 1934713408
    %v3270 = vunpack.c.0.s8 %v3269
    %v3271 = vperm.slane %v3263, %v3270
    %v3272 = vrot.slane %v3255, 4
    %v3273 = vsel %vm376, %v3272, %v3231
    %v3274 = vrot.slane %v3231, 4
    %v3275 = vsel %vm376, %v3255, %v3274
    %v3276 = vrot.slane %v3259, 4
    %v3277 = vsel %vm376, %v3276, %v3235
    %v3278 = vrot.slane %v3235, 4
    %v3279 = vsel %vm376, %v3259, %v3278
    %v3280 = vrot.slane %v3267, 4
    %v3281 = vsel %vm376, %v3280, %v3243
    %v3282 = vrot.slane %v3243, 4
    %v3283 = vsel %vm376, %v3267, %v3282
    %v3284 = vrot.slane %v3271, 4
    %v3285 = vsel %vm376, %v3284, %v3247
    %v3286 = vrot.slane %v3247, 4
    %v3287 = vsel %vm376, %v3271, %v3286
    %v3288 = vrot.slane %v1435, 4
    %v3289 = vsel %vm376, %v3288, %v1371
    %v3290 = vrot.slane %v1371, 4
    %v3291 = vsel %vm376, %v1435, %v3290
    %v3293 = vunpack.c.l.s4 1983009808
    %v3294 = vunpack.c.0.s8 %v3293
    %v3295 = vperm.slane %v3289, %v3294
    %v3297 = vunpack.c.l.s4 1983009808
    %v3298 = vunpack.c.0.s8 %v3297
    %v3299 = vperm.slane %v3291, %v3298
    %v3300 = vrot.slane %v1467, 4
    %v3301 = vsel %vm376, %v3300, %v1403
    %v3302 = vrot.slane %v1403, 4
    %v3303 = vsel %vm376, %v1467, %v3302
    %v3305 = vunpack.c.l.s4 1983009808
    %v3306 = vunpack.c.0.s8 %v3305
    %v3307 = vperm.slane %v3301, %v3306
    %v3309 = vunpack.c.l.s4 1983009808
    %v3310 = vunpack.c.0.s8 %v3309
    %v3311 = vperm.slane %v3303, %v3310
    %v3312 = vrot.slane %v1563, 4
    %v3313 = vsel %vm376, %v3312, %v1499
    %v3314 = vrot.slane %v1499, 4
    %v3315 = vsel %vm376, %v1563, %v3314
    %v3317 = vunpack.c.l.s4 1983009808
    %v3318 = vunpack.c.0.s8 %v3317
    %v3319 = vperm.slane %v3313, %v3318
    %v3321 = vunpack.c.l.s4 1983009808
    %v3322 = vunpack.c.0.s8 %v3321
    %v3323 = vperm.slane %v3315, %v3322
    %v3324 = vrot.slane %v1595, 4
    %v3325 = vsel %vm376, %v3324, %v1531
    %v3326 = vrot.slane %v1531, 4
    %v3327 = vsel %vm376, %v1595, %v3326
    %v3329 = vunpack.c.l.s4 1983009808
    %v3330 = vunpack.c.0.s8 %v3329
    %v3331 = vperm.slane %v3325, %v3330
    %v3333 = vunpack.c.l.s4 1983009808
    %v3334 = vunpack.c.0.s8 %v3333
    %v3335 = vperm.slane %v3327, %v3334
    %v3336 = vrot.slane %v3307, 4
    %v3337 = vsel %vm376, %v3336, %v3295
    %v3338 = vrot.slane %v3295, 4
    %v3339 = vsel %vm376, %v3307, %v3338
    %v3341 = vunpack.c.l.s4 1934713408
    %v3342 = vunpack.c.0.s8 %v3341
    %v3343 = vperm.slane %v3337, %v3342
    %v3345 = vunpack.c.l.s4 1934713408
    %v3346 = vunpack.c.0.s8 %v3345
    %v3347 = vperm.slane %v3339, %v3346
    %v3348 = vrot.slane %v3311, 4
    %v3349 = vsel %vm376, %v3348, %v3299
    %v3350 = vrot.slane %v3299, 4
    %v3351 = vsel %vm376, %v3311, %v3350
    %v3353 = vunpack.c.l.s4 1934713408
    %v3354 = vunpack.c.0.s8 %v3353
    %v3355 = vperm.slane %v3349, %v3354
    %v3357 = vunpack.c.l.s4 1934713408
    %v3358 = vunpack.c.0.s8 %v3357
    %v3359 = vperm.slane %v3351, %v3358
    %v3360 = vrot.slane %v3331, 4
    %v3361 = vsel %vm376, %v3360, %v3319
    %v3362 = vrot.slane %v3319, 4
    %v3363 = vsel %vm376, %v3331, %v3362
    %v3365 = vunpack.c.l.s4 1934713408
    %v3366 = vunpack.c.0.s8 %v3365
    %v3367 = vperm.slane %v3361, %v3366
    %v3369 = vunpack.c.l.s4 1934713408
    %v3370 = vunpack.c.0.s8 %v3369
    %v3371 = vperm.slane %v3363, %v3370
    %v3372 = vrot.slane %v3335, 4
    %v3373 = vsel %vm376, %v3372, %v3323
    %v3374 = vrot.slane %v3323, 4
    %v3375 = vsel %vm376, %v3335, %v3374
    %v3377 = vunpack.c.l.s4 1934713408
    %v3378 = vunpack.c.0.s8 %v3377
    %v3379 = vperm.slane %v3373, %v3378
    %v3381 = vunpack.c.l.s4 1934713408
    %v3382 = vunpack.c.0.s8 %v3381
    %v3383 = vperm.slane %v3375, %v3382
    %v3384 = vrot.slane %v3367, 4
    %v3385 = vsel %vm376, %v3384, %v3343
    %v3386 = vrot.slane %v3343, 4
    %v3387 = vsel %vm376, %v3367, %v3386
    %v3388 = vrot.slane %v3371, 4
    %v3389 = vsel %vm376, %v3388, %v3347
    %v3390 = vrot.slane %v3347, 4
    %v3391 = vsel %vm376, %v3371, %v3390
    %v3392 = vrot.slane %v3379, 4
    %v3393 = vsel %vm376, %v3392, %v3355
    %v3394 = vrot.slane %v3355, 4
    %v3395 = vsel %vm376, %v3379, %v3394
    %v3396 = vrot.slane %v3383, 4
    %v3397 = vsel %vm376, %v3396, %v3359
    %v3398 = vrot.slane %v3359, 4
    %v3399 = vsel %vm376, %v3383, %v3398
    %v3400 = vrot.slane %v668, 4
    %v3401 = vsel %vm376, %v3400, %v604
    %v3402 = vrot.slane %v604, 4
    %v3403 = vsel %vm376, %v668, %v3402
    %v3405 = vunpack.c.l.s4 1983009808
    %v3406 = vunpack.c.0.s8 %v3405
    %v3407 = vperm.slane %v3401, %v3406
    %v3409 = vunpack.c.l.s4 1983009808
    %v3410 = vunpack.c.0.s8 %v3409
    %v3411 = vperm.slane %v3403, %v3410
    %v3412 = vrot.slane %v700, 4
    %v3413 = vsel %vm376, %v3412, %v636
    %v3414 = vrot.slane %v636, 4
    %v3415 = vsel %vm376, %v700, %v3414
    %v3417 = vunpack.c.l.s4 1983009808
    %v3418 = vunpack.c.0.s8 %v3417
    %v3419 = vperm.slane %v3413, %v3418
    %v3421 = vunpack.c.l.s4 1983009808
    %v3422 = vunpack.c.0.s8 %v3421
    %v3423 = vperm.slane %v3415, %v3422
    %v3424 = vrot.slane %v796, 4
    %v3425 = vsel %vm376, %v3424, %v732
    %v3426 = vrot.slane %v732, 4
    %v3427 = vsel %vm376, %v796, %v3426
    %v3429 = vunpack.c.l.s4 1983009808
    %v3430 = vunpack.c.0.s8 %v3429
    %v3431 = vperm.slane %v3425, %v3430
    %v3433 = vunpack.c.l.s4 1983009808
    %v3434 = vunpack.c.0.s8 %v3433
    %v3435 = vperm.slane %v3427, %v3434
    %v3436 = vrot.slane %v828, 4
    %v3437 = vsel %vm376, %v3436, %v764
    %v3438 = vrot.slane %v764, 4
    %v3439 = vsel %vm376, %v828, %v3438
    %v3441 = vunpack.c.l.s4 1983009808
    %v3442 = vunpack.c.0.s8 %v3441
    %v3443 = vperm.slane %v3437, %v3442
    %v3445 = vunpack.c.l.s4 1983009808
    %v3446 = vunpack.c.0.s8 %v3445
    %v3447 = vperm.slane %v3439, %v3446
    %v3448 = vrot.slane %v3419, 4
    %v3449 = vsel %vm376, %v3448, %v3407
    %v3450 = vrot.slane %v3407, 4
    %v3451 = vsel %vm376, %v3419, %v3450
    %v3453 = vunpack.c.l.s4 1934713408
    %v3454 = vunpack.c.0.s8 %v3453
    %v3455 = vperm.slane %v3449, %v3454
    %v3457 = vunpack.c.l.s4 1934713408
    %v3458 = vunpack.c.0.s8 %v3457
    %v3459 = vperm.slane %v3451, %v3458
    %v3460 = vrot.slane %v3423, 4
    %v3461 = vsel %vm376, %v3460, %v3411
    %v3462 = vrot.slane %v3411, 4
    %v3463 = vsel %vm376, %v3423, %v3462
    %v3465 = vunpack.c.l.s4 1934713408
    %v3466 = vunpack.c.0.s8 %v3465
    %v3467 = vperm.slane %v3461, %v3466
    %v3469 = vunpack.c.l.s4 1934713408
    %v3470 = vunpack.c.0.s8 %v3469
    %v3471 = vperm.slane %v3463, %v3470
    %v3472 = vrot.slane %v3443, 4
    %v3473 = vsel %vm376, %v3472, %v3431
    %v3474 = vrot.slane %v3431, 4
    %v3475 = vsel %vm376, %v3443, %v3474
    %v3477 = vunpack.c.l.s4 1934713408
    %v3478 = vunpack.c.0.s8 %v3477
    %v3479 = vperm.slane %v3473, %v3478
    %v3481 = vunpack.c.l.s4 1934713408
    %v3482 = vunpack.c.0.s8 %v3481
    %v3483 = vperm.slane %v3475, %v3482
    %v3484 = vrot.slane %v3447, 4
    %v3485 = vsel %vm376, %v3484, %v3435
    %v3486 = vrot.slane %v3435, 4
    %v3487 = vsel %vm376, %v3447, %v3486
    %v3489 = vunpack.c.l.s4 1934713408
    %v3490 = vunpack.c.0.s8 %v3489
    %v3491 = vperm.slane %v3485, %v3490
    %v3493 = vunpack.c.l.s4 1934713408
    %v3494 = vunpack.c.0.s8 %v3493
    %v3495 = vperm.slane %v3487, %v3494
    %v3496 = vrot.slane %v3479, 4
    %v3497 = vsel %vm376, %v3496, %v3455
    %v3498 = vrot.slane %v3455, 4
    %v3499 = vsel %vm376, %v3479, %v3498
    %v3500 = vrot.slane %v3483, 4
    %v3501 = vsel %vm376, %v3500, %v3459
    %v3502 = vrot.slane %v3459, 4
    %v3503 = vsel %vm376, %v3483, %v3502
    %v3504 = vrot.slane %v3491, 4
    %v3505 = vsel %vm376, %v3504, %v3467
    %v3506 = vrot.slane %v3467, 4
    %v3507 = vsel %vm376, %v3491, %v3506
    %v3508 = vrot.slane %v3495, 4
    %v3509 = vsel %vm376, %v3508, %v3471
    %v3510 = vrot.slane %v3471, 4
    %v3511 = vsel %vm376, %v3495, %v3510
    %v3512 = vrot.slane %v924, 4
    %v3513 = vsel %vm376, %v3512, %v860
    %v3514 = vrot.slane %v860, 4
    %v3515 = vsel %vm376, %v924, %v3514
    %v3517 = vunpack.c.l.s4 1983009808
    %v3518 = vunpack.c.0.s8 %v3517
    %v3519 = vperm.slane %v3513, %v3518
    %v3521 = vunpack.c.l.s4 1983009808
    %v3522 = vunpack.c.0.s8 %v3521
    %v3523 = vperm.slane %v3515, %v3522
    %v3524 = vrot.slane %v956, 4
    %v3525 = vsel %vm376, %v3524, %v892
    %v3526 = vrot.slane %v892, 4
    %v3527 = vsel %vm376, %v956, %v3526
    %v3529 = vunpack.c.l.s4 1983009808
    %v3530 = vunpack.c.0.s8 %v3529
    %v3531 = vperm.slane %v3525, %v3530
    %v3533 = vunpack.c.l.s4 1983009808
    %v3534 = vunpack.c.0.s8 %v3533
    %v3535 = vperm.slane %v3527, %v3534
    %v3536 = vrot.slane %v1052, 4
    %v3537 = vsel %vm376, %v3536, %v988
    %v3538 = vrot.slane %v988, 4
    %v3539 = vsel %vm376, %v1052, %v3538
    %v3541 = vunpack.c.l.s4 1983009808
    %v3542 = vunpack.c.0.s8 %v3541
    %v3543 = vperm.slane %v3537, %v3542
    %v3545 = vunpack.c.l.s4 1983009808
    %v3546 = vunpack.c.0.s8 %v3545
    %v3547 = vperm.slane %v3539, %v3546
    %v3548 = vrot.slane %v1084, 4
    %v3549 = vsel %vm376, %v3548, %v1020
    %v3550 = vrot.slane %v1020, 4
    %v3551 = vsel %vm376, %v1084, %v3550
    %v3553 = vunpack.c.l.s4 1983009808
    %v3554 = vunpack.c.0.s8 %v3553
    %v3555 = vperm.slane %v3549, %v3554
    %v3557 = vunpack.c.l.s4 1983009808
    %v3558 = vunpack.c.0.s8 %v3557
    %v3559 = vperm.slane %v3551, %v3558
    %v3560 = vrot.slane %v3531, 4
    %v3561 = vsel %vm376, %v3560, %v3519
    %v3562 = vrot.slane %v3519, 4
    %v3563 = vsel %vm376, %v3531, %v3562
    %v3565 = vunpack.c.l.s4 1934713408
    %v3566 = vunpack.c.0.s8 %v3565
    %v3567 = vperm.slane %v3561, %v3566
    %v3569 = vunpack.c.l.s4 1934713408
    %v3570 = vunpack.c.0.s8 %v3569
    %v3571 = vperm.slane %v3563, %v3570
    %v3572 = vrot.slane %v3535, 4
    %v3573 = vsel %vm376, %v3572, %v3523
    %v3574 = vrot.slane %v3523, 4
    %v3575 = vsel %vm376, %v3535, %v3574
    %v3577 = vunpack.c.l.s4 1934713408
    %v3578 = vunpack.c.0.s8 %v3577
    %v3579 = vperm.slane %v3573, %v3578
    %v3581 = vunpack.c.l.s4 1934713408
    %v3582 = vunpack.c.0.s8 %v3581
    %v3583 = vperm.slane %v3575, %v3582
    %v3584 = vrot.slane %v3555, 4
    %v3585 = vsel %vm376, %v3584, %v3543
    %v3586 = vrot.slane %v3543, 4
    %v3587 = vsel %vm376, %v3555, %v3586
    %v3589 = vunpack.c.l.s4 1934713408
    %v3590 = vunpack.c.0.s8 %v3589
    %v3591 = vperm.slane %v3585, %v3590
    %v3593 = vunpack.c.l.s4 1934713408
    %v3594 = vunpack.c.0.s8 %v3593
    %v3595 = vperm.slane %v3587, %v3594
    %v3596 = vrot.slane %v3559, 4
    %v3597 = vsel %vm376, %v3596, %v3547
    %v3598 = vrot.slane %v3547, 4
    %v3599 = vsel %vm376, %v3559, %v3598
    %v3601 = vunpack.c.l.s4 1934713408
    %v3602 = vunpack.c.0.s8 %v3601
    %v3603 = vperm.slane %v3597, %v3602
    %v3605 = vunpack.c.l.s4 1934713408
    %v3606 = vunpack.c.0.s8 %v3605
    %v3607 = vperm.slane %v3599, %v3606
    %v3608 = vrot.slane %v3591, 4
    %v3609 = vsel %vm376, %v3608, %v3567
    %v3610 = vrot.slane %v3567, 4
    %v3611 = vsel %vm376, %v3591, %v3610
    %v3612 = vrot.slane %v3595, 4
    %v3613 = vsel %vm376, %v3612, %v3571
    %v3614 = vrot.slane %v3571, 4
    %v3615 = vsel %vm376, %v3595, %v3614
    %v3616 = vrot.slane %v3603, 4
    %v3617 = vsel %vm376, %v3616, %v3579
    %v3618 = vrot.slane %v3579, 4
    %v3619 = vsel %vm376, %v3603, %v3618
    %v3620 = vrot.slane %v3607, 4
    %v3621 = vsel %vm376, %v3620, %v3583
    %v3622 = vrot.slane %v3583, 4
    %v3623 = vsel %vm376, %v3607, %v3622
    %v3624 = vrot.slane %v1180, 4
    %v3625 = vsel %vm376, %v3624, %v1116
    %v3626 = vrot.slane %v1116, 4
    %v3627 = vsel %vm376, %v1180, %v3626
    %v3629 = vunpack.c.l.s4 1983009808
    %v3630 = vunpack.c.0.s8 %v3629
    %v3631 = vperm.slane %v3625, %v3630
    %v3633 = vunpack.c.l.s4 1983009808
    %v3634 = vunpack.c.0.s8 %v3633
    %v3635 = vperm.slane %v3627, %v3634
    %v3636 = vrot.slane %v1212, 4
    %v3637 = vsel %vm376, %v3636, %v1148
    %v3638 = vrot.slane %v1148, 4
    %v3639 = vsel %vm376, %v1212, %v3638
    %v3641 = vunpack.c.l.s4 1983009808
    %v3642 = vunpack.c.0.s8 %v3641
    %v3643 = vperm.slane %v3637, %v3642
    %v3645 = vunpack.c.l.s4 1983009808
    %v3646 = vunpack.c.0.s8 %v3645
    %v3647 = vperm.slane %v3639, %v3646
    %v3648 = vrot.slane %v1308, 4
    %v3649 = vsel %vm376, %v3648, %v1244
    %v3650 = vrot.slane %v1244, 4
    %v3651 = vsel %vm376, %v1308, %v3650
    %v3653 = vunpack.c.l.s4 1983009808
    %v3654 = vunpack.c.0.s8 %v3653
    %v3655 = vperm.slane %v3649, %v3654
    %v3657 = vunpack.c.l.s4 1983009808
    %v3658 = vunpack.c.0.s8 %v3657
    %v3659 = vperm.slane %v3651, %v3658
    %v3660 = vrot.slane %v1340, 4
    %v3661 = vsel %vm376, %v3660, %v1276
    %v3662 = vrot.slane %v1276, 4
    %v3663 = vsel %vm376, %v1340, %v3662
    %v3665 = vunpack.c.l.s4 1983009808
    %v3666 = vunpack.c.0.s8 %v3665
    %v3667 = vperm.slane %v3661, %v3666
    %v3669 = vunpack.c.l.s4 1983009808
    %v3670 = vunpack.c.0.s8 %v3669
    %v3671 = vperm.slane %v3663, %v3670
    %v3672 = vrot.slane %v3643, 4
    %v3673 = vsel %vm376, %v3672, %v3631
    %v3674 = vrot.slane %v3631, 4
    %v3675 = vsel %vm376, %v3643, %v3674
    %v3677 = vunpack.c.l.s4 1934713408
    %v3678 = vunpack.c.0.s8 %v3677
    %v3679 = vperm.slane %v3673, %v3678
    %v3681 = vunpack.c.l.s4 1934713408
    %v3682 = vunpack.c.0.s8 %v3681
    %v3683 = vperm.slane %v3675, %v3682
    %v3684 = vrot.slane %v3647, 4
    %v3685 = vsel %vm376, %v3684, %v3635
    %v3686 = vrot.slane %v3635, 4
    %v3687 = vsel %vm376, %v3647, %v3686
    %v3689 = vunpack.c.l.s4 1934713408
    %v3690 = vunpack.c.0.s8 %v3689
    %v3691 = vperm.slane %v3685, %v3690
    %v3693 = vunpack.c.l.s4 1934713408
    %v3694 = vunpack.c.0.s8 %v3693
    %v3695 = vperm.slane %v3687, %v3694
    %v3696 = vrot.slane %v3667, 4
    %v3697 = vsel %vm376, %v3696, %v3655
    %v3698 = vrot.slane %v3655, 4
    %v3699 = vsel %vm376, %v3667, %v3698
    %v3701 = vunpack.c.l.s4 1934713408
    %v3702 = vunpack.c.0.s8 %v3701
    %v3703 = vperm.slane %v3697, %v3702
    %v3705 = vunpack.c.l.s4 1934713408
    %v3706 = vunpack.c.0.s8 %v3705
    %v3707 = vperm.slane %v3699, %v3706
    %v3708 = vrot.slane %v3671, 4
    %v3709 = vsel %vm376, %v3708, %v3659
    %v3710 = vrot.slane %v3659, 4
    %v3711 = vsel %vm376, %v3671, %v3710
    %v3713 = vunpack.c.l.s4 1934713408
    %v3714 = vunpack.c.0.s8 %v3713
    %v3715 = vperm.slane %v3709, %v3714
    %v3717 = vunpack.c.l.s4 1934713408
    %v3718 = vunpack.c.0.s8 %v3717
    %v3719 = vperm.slane %v3711, %v3718
    %v3720 = vrot.slane %v3703, 4
    %v3721 = vsel %vm376, %v3720, %v3679
    %v3722 = vrot.slane %v3679, 4
    %v3723 = vsel %vm376, %v3703, %v3722
    %v3724 = vrot.slane %v3707, 4
    %v3725 = vsel %vm376, %v3724, %v3683
    %v3726 = vrot.slane %v3683, 4
    %v3727 = vsel %vm376, %v3707, %v3726
    %v3728 = vrot.slane %v3715, 4
    %v3729 = vsel %vm376, %v3728, %v3691
    %v3730 = vrot.slane %v3691, 4
    %v3731 = vsel %vm376, %v3715, %v3730
    %v3732 = vrot.slane %v3719, 4
    %v3733 = vsel %vm376, %v3732, %v3695
    %v3734 = vrot.slane %v3695, 4
    %v3735 = vsel %vm376, %v3719, %v3734
    %v3736 = vrot.slane %v1436, 4
    %v3737 = vsel %vm376, %v3736, %v1372
    %v3738 = vrot.slane %v1372, 4
    %v3739 = vsel %vm376, %v1436, %v3738
    %v3741 = vunpack.c.l.s4 1983009808
    %v3742 = vunpack.c.0.s8 %v3741
    %v3743 = vperm.slane %v3737, %v3742
    %v3745 = vunpack.c.l.s4 1983009808
    %v3746 = vunpack.c.0.s8 %v3745
    %v3747 = vperm.slane %v3739, %v3746
    %v3748 = vrot.slane %v1468, 4
    %v3749 = vsel %vm376, %v3748, %v1404
    %v3750 = vrot.slane %v1404, 4
    %v3751 = vsel %vm376, %v1468, %v3750
    %v3753 = vunpack.c.l.s4 1983009808
    %v3754 = vunpack.c.0.s8 %v3753
    %v3755 = vperm.slane %v3749, %v3754
    %v3757 = vunpack.c.l.s4 1983009808
    %v3758 = vunpack.c.0.s8 %v3757
    %v3759 = vperm.slane %v3751, %v3758
    %v3760 = vrot.slane %v1564, 4
    %v3761 = vsel %vm376, %v3760, %v1500
    %v3762 = vrot.slane %v1500, 4
    %v3763 = vsel %vm376, %v1564, %v3762
    %v3765 = vunpack.c.l.s4 1983009808
    %v3766 = vunpack.c.0.s8 %v3765
    %v3767 = vperm.slane %v3761, %v3766
    %v3769 = vunpack.c.l.s4 1983009808
    %v3770 = vunpack.c.0.s8 %v3769
    %v3771 = vperm.slane %v3763, %v3770
    %v3772 = vrot.slane %v1596, 4
    %v3773 = vsel %vm376, %v3772, %v1532
    %v3774 = vrot.slane %v1532, 4
    %v3775 = vsel %vm376, %v1596, %v3774
    %v3777 = vunpack.c.l.s4 1983009808
    %v3778 = vunpack.c.0.s8 %v3777
    %v3779 = vperm.slane %v3773, %v3778
    %v3781 = vunpack.c.l.s4 1983009808
    %v3782 = vunpack.c.0.s8 %v3781
    %v3783 = vperm.slane %v3775, %v3782
    %v3784 = vrot.slane %v3755, 4
    %v3785 = vsel %vm376, %v3784, %v3743
    %v3786 = vrot.slane %v3743, 4
    %v3787 = vsel %vm376, %v3755, %v3786
    %v3789 = vunpack.c.l.s4 1934713408
    %v3790 = vunpack.c.0.s8 %v3789
    %v3791 = vperm.slane %v3785, %v3790
    %v3793 = vunpack.c.l.s4 1934713408
    %v3794 = vunpack.c.0.s8 %v3793
    %v3795 = vperm.slane %v3787, %v3794
    %v3796 = vrot.slane %v3759, 4
    %v3797 = vsel %vm376, %v3796, %v3747
    %v3798 = vrot.slane %v3747, 4
    %v3799 = vsel %vm376, %v3759, %v3798
    %v3801 = vunpack.c.l.s4 1934713408
    %v3802 = vunpack.c.0.s8 %v3801
    %v3803 = vperm.slane %v3797, %v3802
    %v3805 = vunpack.c.l.s4 1934713408
    %v3806 = vunpack.c.0.s8 %v3805
    %v3807 = vperm.slane %v3799, %v3806
    %v3808 = vrot.slane %v3779, 4
    %v3809 = vsel %vm376, %v3808, %v3767
    %v3810 = vrot.slane %v3767, 4
    %v3811 = vsel %vm376, %v3779, %v3810
    %v3813 = vunpack.c.l.s4 1934713408
    %v3814 = vunpack.c.0.s8 %v3813
    %v3815 = vperm.slane %v3809, %v3814
    %v3817 = vunpack.c.l.s4 1934713408
    %v3818 = vunpack.c.0.s8 %v3817
    %v3819 = vperm.slane %v3811, %v3818
    %v3820 = vrot.slane %v3783, 4
    %v3821 = vsel %vm376, %v3820, %v3771
    %v3822 = vrot.slane %v3771, 4
    %v3823 = vsel %vm376, %v3783, %v3822
    %v3825 = vunpack.c.l.s4 1934713408
    %v3826 = vunpack.c.0.s8 %v3825
    %v3827 = vperm.slane %v3821, %v3826
    %v3829 = vunpack.c.l.s4 1934713408
    %v3830 = vunpack.c.0.s8 %v3829
    %v3831 = vperm.slane %v3823, %v3830
    %v3832 = vrot.slane %v3815, 4
    %v3833 = vsel %vm376, %v3832, %v3791
    %v3834 = vrot.slane %v3791, 4
    %v3835 = vsel %vm376, %v3815, %v3834
    %v3836 = vrot.slane %v3819, 4
    %v3837 = vsel %vm376, %v3836, %v3795
    %v3838 = vrot.slane %v3795, 4
    %v3839 = vsel %vm376, %v3819, %v3838
    %v3840 = vrot.slane %v3827, 4
    %v3841 = vsel %vm376, %v3840, %v3803
    %v3842 = vrot.slane %v3803, 4
    %v3843 = vsel %vm376, %v3827, %v3842
    %v3844 = vrot.slane %v3831, 4
    %v3845 = vsel %vm376, %v3844, %v3807
    %v3846 = vrot.slane %v3807, 4
    %v3847 = vsel %vm376, %v3831, %v3846
    %v3848 = vrot.slane %v669, 4
    %v3849 = vsel %vm376, %v3848, %v605
    %v3850 = vrot.slane %v605, 4
    %v3851 = vsel %vm376, %v669, %v3850
    %v3853 = vunpack.c.l.s4 1983009808
    %v3854 = vunpack.c.0.s8 %v3853
    %v3855 = vperm.slane %v3849, %v3854
    %v3857 = vunpack.c.l.s4 1983009808
    %v3858 = vunpack.c.0.s8 %v3857
    %v3859 = vperm.slane %v3851, %v3858
    %v3860 = vrot.slane %v701, 4
    %v3861 = vsel %vm376, %v3860, %v637
    %v3862 = vrot.slane %v637, 4
    %v3863 = vsel %vm376, %v701, %v3862
    %v3865 = vunpack.c.l.s4 1983009808
    %v3866 = vunpack.c.0.s8 %v3865
    %v3867 = vperm.slane %v3861, %v3866
    %v3869 = vunpack.c.l.s4 1983009808
    %v3870 = vunpack.c.0.s8 %v3869
    %v3871 = vperm.slane %v3863, %v3870
    %v3872 = vrot.slane %v797, 4
    %v3873 = vsel %vm376, %v3872, %v733
    %v3874 = vrot.slane %v733, 4
    %v3875 = vsel %vm376, %v797, %v3874
    %v3877 = vunpack.c.l.s4 1983009808
    %v3878 = vunpack.c.0.s8 %v3877
    %v3879 = vperm.slane %v3873, %v3878
    %v3881 = vunpack.c.l.s4 1983009808
    %v3882 = vunpack.c.0.s8 %v3881
    %v3883 = vperm.slane %v3875, %v3882
    %v3884 = vrot.slane %v829, 4
    %v3885 = vsel %vm376, %v3884, %v765
    %v3886 = vrot.slane %v765, 4
    %v3887 = vsel %vm376, %v829, %v3886
    %v3889 = vunpack.c.l.s4 1983009808
    %v3890 = vunpack.c.0.s8 %v3889
    %v3891 = vperm.slane %v3885, %v3890
    %v3893 = vunpack.c.l.s4 1983009808
    %v3894 = vunpack.c.0.s8 %v3893
    %v3895 = vperm.slane %v3887, %v3894
    %v3896 = vrot.slane %v3867, 4
    %v3897 = vsel %vm376, %v3896, %v3855
    %v3898 = vrot.slane %v3855, 4
    %v3899 = vsel %vm376, %v3867, %v3898
    %v3901 = vunpack.c.l.s4 1934713408
    %v3902 = vunpack.c.0.s8 %v3901
    %v3903 = vperm.slane %v3897, %v3902
    %v3905 = vunpack.c.l.s4 1934713408
    %v3906 = vunpack.c.0.s8 %v3905
    %v3907 = vperm.slane %v3899, %v3906
    %v3908 = vrot.slane %v3871, 4
    %v3909 = vsel %vm376, %v3908, %v3859
    %v3910 = vrot.slane %v3859, 4
    %v3911 = vsel %vm376, %v3871, %v3910
    %v3913 = vunpack.c.l.s4 1934713408
    %v3914 = vunpack.c.0.s8 %v3913
    %v3915 = vperm.slane %v3909, %v3914
    %v3917 = vunpack.c.l.s4 1934713408
    %v3918 = vunpack.c.0.s8 %v3917
    %v3919 = vperm.slane %v3911, %v3918
    %v3920 = vrot.slane %v3891, 4
    %v3921 = vsel %vm376, %v3920, %v3879
    %v3922 = vrot.slane %v3879, 4
    %v3923 = vsel %vm376, %v3891, %v3922
    %v3925 = vunpack.c.l.s4 1934713408
    %v3926 = vunpack.c.0.s8 %v3925
    %v3927 = vperm.slane %v3921, %v3926
    %v3929 = vunpack.c.l.s4 1934713408
    %v3930 = vunpack.c.0.s8 %v3929
    %v3931 = vperm.slane %v3923, %v3930
    %v3932 = vrot.slane %v3895, 4
    %v3933 = vsel %vm376, %v3932, %v3883
    %v3934 = vrot.slane %v3883, 4
    %v3935 = vsel %vm376, %v3895, %v3934
    %v3937 = vunpack.c.l.s4 1934713408
    %v3938 = vunpack.c.0.s8 %v3937
    %v3939 = vperm.slane %v3933, %v3938
    %v3941 = vunpack.c.l.s4 1934713408
    %v3942 = vunpack.c.0.s8 %v3941
    %v3943 = vperm.slane %v3935, %v3942
    %v3944 = vrot.slane %v3927, 4
    %v3945 = vsel %vm376, %v3944, %v3903
    %v3946 = vrot.slane %v3903, 4
    %v3947 = vsel %vm376, %v3927, %v3946
    %v3948 = vrot.slane %v3931, 4
    %v3949 = vsel %vm376, %v3948, %v3907
    %v3950 = vrot.slane %v3907, 4
    %v3951 = vsel %vm376, %v3931, %v3950
    %v3952 = vrot.slane %v3939, 4
    %v3953 = vsel %vm376, %v3952, %v3915
    %v3954 = vrot.slane %v3915, 4
    %v3955 = vsel %vm376, %v3939, %v3954
    %v3956 = vrot.slane %v3943, 4
    %v3957 = vsel %vm376, %v3956, %v3919
    %v3958 = vrot.slane %v3919, 4
    %v3959 = vsel %vm376, %v3943, %v3958
    %v3960 = vrot.slane %v925, 4
    %v3961 = vsel %vm376, %v3960, %v861
    %v3962 = vrot.slane %v861, 4
    %v3963 = vsel %vm376, %v925, %v3962
    %v3965 = vunpack.c.l.s4 1983009808
    %v3966 = vunpack.c.0.s8 %v3965
    %v3967 = vperm.slane %v3961, %v3966
    %v3969 = vunpack.c.l.s4 1983009808
    %v3970 = vunpack.c.0.s8 %v3969
    %v3971 = vperm.slane %v3963, %v3970
    %v3972 = vrot.slane %v957, 4
    %v3973 = vsel %vm376, %v3972, %v893
    %v3974 = vrot.slane %v893, 4
    %v3975 = vsel %vm376, %v957, %v3974
    %v3977 = vunpack.c.l.s4 1983009808
    %v3978 = vunpack.c.0.s8 %v3977
    %v3979 = vperm.slane %v3973, %v3978
    %v3981 = vunpack.c.l.s4 1983009808
    %v3982 = vunpack.c.0.s8 %v3981
    %v3983 = vperm.slane %v3975, %v3982
    %v3984 = vrot.slane %v1053, 4
    %v3985 = vsel %vm376, %v3984, %v989
    %v3986 = vrot.slane %v989, 4
    %v3987 = vsel %vm376, %v1053, %v3986
    %v3989 = vunpack.c.l.s4 1983009808
    %v3990 = vunpack.c.0.s8 %v3989
    %v3991 = vperm.slane %v3985, %v3990
    %v3993 = vunpack.c.l.s4 1983009808
    %v3994 = vunpack.c.0.s8 %v3993
    %v3995 = vperm.slane %v3987, %v3994
    %v3996 = vrot.slane %v1085, 4
    %v3997 = vsel %vm376, %v3996, %v1021
    %v3998 = vrot.slane %v1021, 4
    %v3999 = vsel %vm376, %v1085, %v3998
    %v4001 = vunpack.c.l.s4 1983009808
    %v4002 = vunpack.c.0.s8 %v4001
    %v4003 = vperm.slane %v3997, %v4002
    %v4005 = vunpack.c.l.s4 1983009808
    %v4006 = vunpack.c.0.s8 %v4005
    %v4007 = vperm.slane %v3999, %v4006
    %v4008 = vrot.slane %v3979, 4
    %v4009 = vsel %vm376, %v4008, %v3967
    %v4010 = vrot.slane %v3967, 4
    %v4011 = vsel %vm376, %v3979, %v4010
    %v4013 = vunpack.c.l.s4 1934713408
    %v4014 = vunpack.c.0.s8 %v4013
    %v4015 = vperm.slane %v4009, %v4014
    %v4017 = vunpack.c.l.s4 1934713408
    %v4018 = vunpack.c.0.s8 %v4017
    %v4019 = vperm.slane %v4011, %v4018
    %v4020 = vrot.slane %v3983, 4
    %v4021 = vsel %vm376, %v4020, %v3971
    %v4022 = vrot.slane %v3971, 4
    %v4023 = vsel %vm376, %v3983, %v4022
    %v4025 = vunpack.c.l.s4 1934713408
    %v4026 = vunpack.c.0.s8 %v4025
    %v4027 = vperm.slane %v4021, %v4026
    %v4029 = vunpack.c.l.s4 1934713408
    %v4030 = vunpack.c.0.s8 %v4029
    %v4031 = vperm.slane %v4023, %v4030
    %v4032 = vrot.slane %v4003, 4
    %v4033 = vsel %vm376, %v4032, %v3991
    %v4034 = vrot.slane %v3991, 4
    %v4035 = vsel %vm376, %v4003, %v4034
    %v4037 = vunpack.c.l.s4 1934713408
    %v4038 = vunpack.c.0.s8 %v4037
    %v4039 = vperm.slane %v4033, %v4038
    %v4041 = vunpack.c.l.s4 1934713408
    %v4042 = vunpack.c.0.s8 %v4041
    %v4043 = vperm.slane %v4035, %v4042
    %v4044 = vrot.slane %v4007, 4
    %v4045 = vsel %vm376, %v4044, %v3995
    %v4046 = vrot.slane %v3995, 4
    %v4047 = vsel %vm376, %v4007, %v4046
    %v4049 = vunpack.c.l.s4 1934713408
    %v4050 = vunpack.c.0.s8 %v4049
    %v4051 = vperm.slane %v4045, %v4050
    %v4053 = vunpack.c.l.s4 1934713408
    %v4054 = vunpack.c.0.s8 %v4053
    %v4055 = vperm.slane %v4047, %v4054
    %v4056 = vrot.slane %v4039, 4
    %v4057 = vsel %vm376, %v4056, %v4015
    %v4058 = vrot.slane %v4015, 4
    %v4059 = vsel %vm376, %v4039, %v4058
    %v4060 = vrot.slane %v4043, 4
    %v4061 = vsel %vm376, %v4060, %v4019
    %v4062 = vrot.slane %v4019, 4
    %v4063 = vsel %vm376, %v4043, %v4062
    %v4064 = vrot.slane %v4051, 4
    %v4065 = vsel %vm376, %v4064, %v4027
    %v4066 = vrot.slane %v4027, 4
    %v4067 = vsel %vm376, %v4051, %v4066
    %v4068 = vrot.slane %v4055, 4
    %v4069 = vsel %vm376, %v4068, %v4031
    %v4070 = vrot.slane %v4031, 4
    %v4071 = vsel %vm376, %v4055, %v4070
    %v4072 = vrot.slane %v1181, 4
    %v4073 = vsel %vm376, %v4072, %v1117
    %v4074 = vrot.slane %v1117, 4
    %v4075 = vsel %vm376, %v1181, %v4074
    %v4077 = vunpack.c.l.s4 1983009808
    %v4078 = vunpack.c.0.s8 %v4077
    %v4079 = vperm.slane %v4073, %v4078
    %v4081 = vunpack.c.l.s4 1983009808
    %v4082 = vunpack.c.0.s8 %v4081
    %v4083 = vperm.slane %v4075, %v4082
    %v4084 = vrot.slane %v1213, 4
    %v4085 = vsel %vm376, %v4084, %v1149
    %v4086 = vrot.slane %v1149, 4
    %v4087 = vsel %vm376, %v1213, %v4086
    %v4089 = vunpack.c.l.s4 1983009808
    %v4090 = vunpack.c.0.s8 %v4089
    %v4091 = vperm.slane %v4085, %v4090
    %v4093 = vunpack.c.l.s4 1983009808
    %v4094 = vunpack.c.0.s8 %v4093
    %v4095 = vperm.slane %v4087, %v4094
    %v4096 = vrot.slane %v1309, 4
    %v4097 = vsel %vm376, %v4096, %v1245
    %v4098 = vrot.slane %v1245, 4
    %v4099 = vsel %vm376, %v1309, %v4098
    %v4101 = vunpack.c.l.s4 1983009808
    %v4102 = vunpack.c.0.s8 %v4101
    %v4103 = vperm.slane %v4097, %v4102
    %v4105 = vunpack.c.l.s4 1983009808
    %v4106 = vunpack.c.0.s8 %v4105
    %v4107 = vperm.slane %v4099, %v4106
    %v4108 = vrot.slane %v1341, 4
    %v4109 = vsel %vm376, %v4108, %v1277
    %v4110 = vrot.slane %v1277, 4
    %v4111 = vsel %vm376, %v1341, %v4110
    %v4113 = vunpack.c.l.s4 1983009808
    %v4114 = vunpack.c.0.s8 %v4113
    %v4115 = vperm.slane %v4109, %v4114
    %v4117 = vunpack.c.l.s4 1983009808
    %v4118 = vunpack.c.0.s8 %v4117
    %v4119 = vperm.slane %v4111, %v4118
    %v4120 = vrot.slane %v4091, 4
    %v4121 = vsel %vm376, %v4120, %v4079
    %v4122 = vrot.slane %v4079, 4
    %v4123 = vsel %vm376, %v4091, %v4122
    %v4125 = vunpack.c.l.s4 1934713408
    %v4126 = vunpack.c.0.s8 %v4125
    %v4127 = vperm.slane %v4121, %v4126
    %v4129 = vunpack.c.l.s4 1934713408
    %v4130 = vunpack.c.0.s8 %v4129
    %v4131 = vperm.slane %v4123, %v4130
    %v4132 = vrot.slane %v4095, 4
    %v4133 = vsel %vm376, %v4132, %v4083
    %v4134 = vrot.slane %v4083, 4
    %v4135 = vsel %vm376, %v4095, %v4134
    %v4137 = vunpack.c.l.s4 1934713408
    %v4138 = vunpack.c.0.s8 %v4137
    %v4139 = vperm.slane %v4133, %v4138
    %v4141 = vunpack.c.l.s4 1934713408
    %v4142 = vunpack.c.0.s8 %v4141
    %v4143 = vperm.slane %v4135, %v4142
    %v4144 = vrot.slane %v4115, 4
    %v4145 = vsel %vm376, %v4144, %v4103
    %v4146 = vrot.slane %v4103, 4
    %v4147 = vsel %vm376, %v4115, %v4146
    %v4149 = vunpack.c.l.s4 1934713408
    %v4150 = vunpack.c.0.s8 %v4149
    %v4151 = vperm.slane %v4145, %v4150
    %v4153 = vunpack.c.l.s4 1934713408
    %v4154 = vunpack.c.0.s8 %v4153
    %v4155 = vperm.slane %v4147, %v4154
    %v4156 = vrot.slane %v4119, 4
    %v4157 = vsel %vm376, %v4156, %v4107
    %v4158 = vrot.slane %v4107, 4
    %v4159 = vsel %vm376, %v4119, %v4158
    %v4161 = vunpack.c.l.s4 1934713408
    %v4162 = vunpack.c.0.s8 %v4161
    %v4163 = vperm.slane %v4157, %v4162
    %v4165 = vunpack.c.l.s4 1934713408
    %v4166 = vunpack.c.0.s8 %v4165
    %v4167 = vperm.slane %v4159, %v4166
    %v4168 = vrot.slane %v4151, 4
    %v4169 = vsel %vm376, %v4168, %v4127
    %v4170 = vrot.slane %v4127, 4
    %v4171 = vsel %vm376, %v4151, %v4170
    %v4172 = vrot.slane %v4155, 4
    %v4173 = vsel %vm376, %v4172, %v4131
    %v4174 = vrot.slane %v4131, 4
    %v4175 = vsel %vm376, %v4155, %v4174
    %v4176 = vrot.slane %v4163, 4
    %v4177 = vsel %vm376, %v4176, %v4139
    %v4178 = vrot.slane %v4139, 4
    %v4179 = vsel %vm376, %v4163, %v4178
    %v4180 = vrot.slane %v4167, 4
    %v4181 = vsel %vm376, %v4180, %v4143
    %v4182 = vrot.slane %v4143, 4
    %v4183 = vsel %vm376, %v4167, %v4182
    %v4184 = vrot.slane %v1437, 4
    %v4185 = vsel %vm376, %v4184, %v1373
    %v4186 = vrot.slane %v1373, 4
    %v4187 = vsel %vm376, %v1437, %v4186
    %v4189 = vunpack.c.l.s4 1983009808
    %v4190 = vunpack.c.0.s8 %v4189
    %v4191 = vperm.slane %v4185, %v4190
    %v4193 = vunpack.c.l.s4 1983009808
    %v4194 = vunpack.c.0.s8 %v4193
    %v4195 = vperm.slane %v4187, %v4194
    %v4196 = vrot.slane %v1469, 4
    %v4197 = vsel %vm376, %v4196, %v1405
    %v4198 = vrot.slane %v1405, 4
    %v4199 = vsel %vm376, %v1469, %v4198
    %v4201 = vunpack.c.l.s4 1983009808
    %v4202 = vunpack.c.0.s8 %v4201
    %v4203 = vperm.slane %v4197, %v4202
    %v4205 = vunpack.c.l.s4 1983009808
    %v4206 = vunpack.c.0.s8 %v4205
    %v4207 = vperm.slane %v4199, %v4206
    %v4208 = vrot.slane %v1565, 4
    %v4209 = vsel %vm376, %v4208, %v1501
    %v4210 = vrot.slane %v1501, 4
    %v4211 = vsel %vm376, %v1565, %v4210
    %v4213 = vunpack.c.l.s4 1983009808
    %v4214 = vunpack.c.0.s8 %v4213
    %v4215 = vperm.slane %v4209, %v4214
    %v4217 = vunpack.c.l.s4 1983009808
    %v4218 = vunpack.c.0.s8 %v4217
    %v4219 = vperm.slane %v4211, %v4218
    %v4220 = vrot.slane %v1597, 4
    %v4221 = vsel %vm376, %v4220, %v1533
    %v4222 = vrot.slane %v1533, 4
    %v4223 = vsel %vm376, %v1597, %v4222
    %v4225 = vunpack.c.l.s4 1983009808
    %v4226 = vunpack.c.0.s8 %v4225
    %v4227 = vperm.slane %v4221, %v4226
    %v4229 = vunpack.c.l.s4 1983009808
    %v4230 = vunpack.c.0.s8 %v4229
    %v4231 = vperm.slane %v4223, %v4230
    %v4232 = vrot.slane %v4203, 4
    %v4233 = vsel %vm376, %v4232, %v4191
    %v4234 = vrot.slane %v4191, 4
    %v4235 = vsel %vm376, %v4203, %v4234
    %v4237 = vunpack.c.l.s4 1934713408
    %v4238 = vunpack.c.0.s8 %v4237
    %v4239 = vperm.slane %v4233, %v4238
    %v4241 = vunpack.c.l.s4 1934713408
    %v4242 = vunpack.c.0.s8 %v4241
    %v4243 = vperm.slane %v4235, %v4242
    %v4244 = vrot.slane %v4207, 4
    %v4245 = vsel %vm376, %v4244, %v4195
    %v4246 = vrot.slane %v4195, 4
    %v4247 = vsel %vm376, %v4207, %v4246
    %v4249 = vunpack.c.l.s4 1934713408
    %v4250 = vunpack.c.0.s8 %v4249
    %v4251 = vperm.slane %v4245, %v4250
    %v4253 = vunpack.c.l.s4 1934713408
    %v4254 = vunpack.c.0.s8 %v4253
    %v4255 = vperm.slane %v4247, %v4254
    %v4256 = vrot.slane %v4227, 4
    %v4257 = vsel %vm376, %v4256, %v4215
    %v4258 = vrot.slane %v4215, 4
    %v4259 = vsel %vm376, %v4227, %v4258
    %v4261 = vunpack.c.l.s4 1934713408
    %v4262 = vunpack.c.0.s8 %v4261
    %v4263 = vperm.slane %v4257, %v4262
    %v4265 = vunpack.c.l.s4 1934713408
    %v4266 = vunpack.c.0.s8 %v4265
    %v4267 = vperm.slane %v4259, %v4266
    %v4268 = vrot.slane %v4231, 4
    %v4269 = vsel %vm376, %v4268, %v4219
    %v4270 = vrot.slane %v4219, 4
    %v4271 = vsel %vm376, %v4231, %v4270
    %v4273 = vunpack.c.l.s4 1934713408
    %v4274 = vunpack.c.0.s8 %v4273
    %v4275 = vperm.slane %v4269, %v4274
    %v4277 = vunpack.c.l.s4 1934713408
    %v4278 = vunpack.c.0.s8 %v4277
    %v4279 = vperm.slane %v4271, %v4278
    %v4280 = vrot.slane %v4263, 4
    %v4281 = vsel %vm376, %v4280, %v4239
    %v4282 = vrot.slane %v4239, 4
    %v4283 = vsel %vm376, %v4263, %v4282
    %v4284 = vrot.slane %v4267, 4
    %v4285 = vsel %vm376, %v4284, %v4243
    %v4286 = vrot.slane %v4243, 4
    %v4287 = vsel %vm376, %v4267, %v4286
    %v4288 = vrot.slane %v4275, 4
    %v4289 = vsel %vm376, %v4288, %v4251
    %v4290 = vrot.slane %v4251, 4
    %v4291 = vsel %vm376, %v4275, %v4290
    %v4292 = vrot.slane %v4279, 4
    %v4293 = vsel %vm376, %v4292, %v4255
    %v4294 = vrot.slane %v4255, 4
    %v4295 = vsel %vm376, %v4279, %v4294
    %v4296 = vrot.slane %v670, 4
    %v4297 = vsel %vm376, %v4296, %v606
    %v4298 = vrot.slane %v606, 4
    %v4299 = vsel %vm376, %v670, %v4298
    %v4301 = vunpack.c.l.s4 1983009808
    %v4302 = vunpack.c.0.s8 %v4301
    %v4303 = vperm.slane %v4297, %v4302
    %v4305 = vunpack.c.l.s4 1983009808
    %v4306 = vunpack.c.0.s8 %v4305
    %v4307 = vperm.slane %v4299, %v4306
    %v4308 = vrot.slane %v702, 4
    %v4309 = vsel %vm376, %v4308, %v638
    %v4310 = vrot.slane %v638, 4
    %v4311 = vsel %vm376, %v702, %v4310
    %v4313 = vunpack.c.l.s4 1983009808
    %v4314 = vunpack.c.0.s8 %v4313
    %v4315 = vperm.slane %v4309, %v4314
    %v4317 = vunpack.c.l.s4 1983009808
    %v4318 = vunpack.c.0.s8 %v4317
    %v4319 = vperm.slane %v4311, %v4318
    %v4320 = vrot.slane %v798, 4
    %v4321 = vsel %vm376, %v4320, %v734
    %v4322 = vrot.slane %v734, 4
    %v4323 = vsel %vm376, %v798, %v4322
    %v4325 = vunpack.c.l.s4 1983009808
    %v4326 = vunpack.c.0.s8 %v4325
    %v4327 = vperm.slane %v4321, %v4326
    %v4329 = vunpack.c.l.s4 1983009808
    %v4330 = vunpack.c.0.s8 %v4329
    %v4331 = vperm.slane %v4323, %v4330
    %v4332 = vrot.slane %v830, 4
    %v4333 = vsel %vm376, %v4332, %v766
    %v4334 = vrot.slane %v766, 4
    %v4335 = vsel %vm376, %v830, %v4334
    %v4337 = vunpack.c.l.s4 1983009808
    %v4338 = vunpack.c.0.s8 %v4337
    %v4339 = vperm.slane %v4333, %v4338
    %v4341 = vunpack.c.l.s4 1983009808
    %v4342 = vunpack.c.0.s8 %v4341
    %v4343 = vperm.slane %v4335, %v4342
    %v4344 = vrot.slane %v4315, 4
    %v4345 = vsel %vm376, %v4344, %v4303
    %v4346 = vrot.slane %v4303, 4
    %v4347 = vsel %vm376, %v4315, %v4346
    %v4349 = vunpack.c.l.s4 1934713408
    %v4350 = vunpack.c.0.s8 %v4349
    %v4351 = vperm.slane %v4345, %v4350
    %v4353 = vunpack.c.l.s4 1934713408
    %v4354 = vunpack.c.0.s8 %v4353
    %v4355 = vperm.slane %v4347, %v4354
    %v4356 = vrot.slane %v4319, 4
    %v4357 = vsel %vm376, %v4356, %v4307
    %v4358 = vrot.slane %v4307, 4
    %v4359 = vsel %vm376, %v4319, %v4358
    %v4361 = vunpack.c.l.s4 1934713408
    %v4362 = vunpack.c.0.s8 %v4361
    %v4363 = vperm.slane %v4357, %v4362
    %v4365 = vunpack.c.l.s4 1934713408
    %v4366 = vunpack.c.0.s8 %v4365
    %v4367 = vperm.slane %v4359, %v4366
    %v4368 = vrot.slane %v4339, 4
    %v4369 = vsel %vm376, %v4368, %v4327
    %v4370 = vrot.slane %v4327, 4
    %v4371 = vsel %vm376, %v4339, %v4370
    %v4373 = vunpack.c.l.s4 1934713408
    %v4374 = vunpack.c.0.s8 %v4373
    %v4375 = vperm.slane %v4369, %v4374
    %v4377 = vunpack.c.l.s4 1934713408
    %v4378 = vunpack.c.0.s8 %v4377
    %v4379 = vperm.slane %v4371, %v4378
    %v4380 = vrot.slane %v4343, 4
    %v4381 = vsel %vm376, %v4380, %v4331
    %v4382 = vrot.slane %v4331, 4
    %v4383 = vsel %vm376, %v4343, %v4382
    %v4385 = vunpack.c.l.s4 1934713408
    %v4386 = vunpack.c.0.s8 %v4385
    %v4387 = vperm.slane %v4381, %v4386
    %v4389 = vunpack.c.l.s4 1934713408
    %v4390 = vunpack.c.0.s8 %v4389
    %v4391 = vperm.slane %v4383, %v4390
    %v4392 = vrot.slane %v4375, 4
    %v4393 = vsel %vm376, %v4392, %v4351
    %v4394 = vrot.slane %v4351, 4
    %v4395 = vsel %vm376, %v4375, %v4394
    %v4396 = vrot.slane %v4379, 4
    %v4397 = vsel %vm376, %v4396, %v4355
    %v4398 = vrot.slane %v4355, 4
    %v4399 = vsel %vm376, %v4379, %v4398
    %v4400 = vrot.slane %v4387, 4
    %v4401 = vsel %vm376, %v4400, %v4363
    %v4402 = vrot.slane %v4363, 4
    %v4403 = vsel %vm376, %v4387, %v4402
    %v4404 = vrot.slane %v4391, 4
    %v4405 = vsel %vm376, %v4404, %v4367
    %v4406 = vrot.slane %v4367, 4
    %v4407 = vsel %vm376, %v4391, %v4406
    %v4408 = vrot.slane %v926, 4
    %v4409 = vsel %vm376, %v4408, %v862
    %v4410 = vrot.slane %v862, 4
    %v4411 = vsel %vm376, %v926, %v4410
    %v4413 = vunpack.c.l.s4 1983009808
    %v4414 = vunpack.c.0.s8 %v4413
    %v4415 = vperm.slane %v4409, %v4414
    %v4417 = vunpack.c.l.s4 1983009808
    %v4418 = vunpack.c.0.s8 %v4417
    %v4419 = vperm.slane %v4411, %v4418
    %v4420 = vrot.slane %v958, 4
    %v4421 = vsel %vm376, %v4420, %v894
    %v4422 = vrot.slane %v894, 4
    %v4423 = vsel %vm376, %v958, %v4422
    %v4425 = vunpack.c.l.s4 1983009808
    %v4426 = vunpack.c.0.s8 %v4425
    %v4427 = vperm.slane %v4421, %v4426
    %v4429 = vunpack.c.l.s4 1983009808
    %v4430 = vunpack.c.0.s8 %v4429
    %v4431 = vperm.slane %v4423, %v4430
    %v4432 = vrot.slane %v1054, 4
    %v4433 = vsel %vm376, %v4432, %v990
    %v4434 = vrot.slane %v990, 4
    %v4435 = vsel %vm376, %v1054, %v4434
    %v4437 = vunpack.c.l.s4 1983009808
    %v4438 = vunpack.c.0.s8 %v4437
    %v4439 = vperm.slane %v4433, %v4438
    %v4441 = vunpack.c.l.s4 1983009808
    %v4442 = vunpack.c.0.s8 %v4441
    %v4443 = vperm.slane %v4435, %v4442
    %v4444 = vrot.slane %v1086, 4
    %v4445 = vsel %vm376, %v4444, %v1022
    %v4446 = vrot.slane %v1022, 4
    %v4447 = vsel %vm376, %v1086, %v4446
    %v4449 = vunpack.c.l.s4 1983009808
    %v4450 = vunpack.c.0.s8 %v4449
    %v4451 = vperm.slane %v4445, %v4450
    %v4453 = vunpack.c.l.s4 1983009808
    %v4454 = vunpack.c.0.s8 %v4453
    %v4455 = vperm.slane %v4447, %v4454
    %v4456 = vrot.slane %v4427, 4
    %v4457 = vsel %vm376, %v4456, %v4415
    %v4458 = vrot.slane %v4415, 4
    %v4459 = vsel %vm376, %v4427, %v4458
    %v4461 = vunpack.c.l.s4 1934713408
    %v4462 = vunpack.c.0.s8 %v4461
    %v4463 = vperm.slane %v4457, %v4462
    %v4465 = vunpack.c.l.s4 1934713408
    %v4466 = vunpack.c.0.s8 %v4465
    %v4467 = vperm.slane %v4459, %v4466
    %v4468 = vrot.slane %v4431, 4
    %v4469 = vsel %vm376, %v4468, %v4419
    %v4470 = vrot.slane %v4419, 4
    %v4471 = vsel %vm376, %v4431, %v4470
    %v4473 = vunpack.c.l.s4 1934713408
    %v4474 = vunpack.c.0.s8 %v4473
    %v4475 = vperm.slane %v4469, %v4474
    %v4477 = vunpack.c.l.s4 1934713408
    %v4478 = vunpack.c.0.s8 %v4477
    %v4479 = vperm.slane %v4471, %v4478
    %v4480 = vrot.slane %v4451, 4
    %v4481 = vsel %vm376, %v4480, %v4439
    %v4482 = vrot.slane %v4439, 4
    %v4483 = vsel %vm376, %v4451, %v4482
    %v4485 = vunpack.c.l.s4 1934713408
    %v4486 = vunpack.c.0.s8 %v4485
    %v4487 = vperm.slane %v4481, %v4486
    %v4489 = vunpack.c.l.s4 1934713408
    %v4490 = vunpack.c.0.s8 %v4489
    %v4491 = vperm.slane %v4483, %v4490
    %v4492 = vrot.slane %v4455, 4
    %v4493 = vsel %vm376, %v4492, %v4443
    %v4494 = vrot.slane %v4443, 4
    %v4495 = vsel %vm376, %v4455, %v4494
    %v4497 = vunpack.c.l.s4 1934713408
    %v4498 = vunpack.c.0.s8 %v4497
    %v4499 = vperm.slane %v4493, %v4498
    %v4501 = vunpack.c.l.s4 1934713408
    %v4502 = vunpack.c.0.s8 %v4501
    %v4503 = vperm.slane %v4495, %v4502
    %v4504 = vrot.slane %v4487, 4
    %v4505 = vsel %vm376, %v4504, %v4463
    %v4506 = vrot.slane %v4463, 4
    %v4507 = vsel %vm376, %v4487, %v4506
    %v4508 = vrot.slane %v4491, 4
    %v4509 = vsel %vm376, %v4508, %v4467
    %v4510 = vrot.slane %v4467, 4
    %v4511 = vsel %vm376, %v4491, %v4510
    %v4512 = vrot.slane %v4499, 4
    %v4513 = vsel %vm376, %v4512, %v4475
    %v4514 = vrot.slane %v4475, 4
    %v4515 = vsel %vm376, %v4499, %v4514
    %v4516 = vrot.slane %v4503, 4
    %v4517 = vsel %vm376, %v4516, %v4479
    %v4518 = vrot.slane %v4479, 4
    %v4519 = vsel %vm376, %v4503, %v4518
    %v4520 = vrot.slane %v1182, 4
    %v4521 = vsel %vm376, %v4520, %v1118
    %v4522 = vrot.slane %v1118, 4
    %v4523 = vsel %vm376, %v1182, %v4522
    %v4525 = vunpack.c.l.s4 1983009808
    %v4526 = vunpack.c.0.s8 %v4525
    %v4527 = vperm.slane %v4521, %v4526
    %v4529 = vunpack.c.l.s4 1983009808
    %v4530 = vunpack.c.0.s8 %v4529
    %v4531 = vperm.slane %v4523, %v4530
    %v4532 = vrot.slane %v1214, 4
    %v4533 = vsel %vm376, %v4532, %v1150
    %v4534 = vrot.slane %v1150, 4
    %v4535 = vsel %vm376, %v1214, %v4534
    %v4537 = vunpack.c.l.s4 1983009808
    %v4538 = vunpack.c.0.s8 %v4537
    %v4539 = vperm.slane %v4533, %v4538
    %v4541 = vunpack.c.l.s4 1983009808
    %v4542 = vunpack.c.0.s8 %v4541
    %v4543 = vperm.slane %v4535, %v4542
    %v4544 = vrot.slane %v1310, 4
    %v4545 = vsel %vm376, %v4544, %v1246
    %v4546 = vrot.slane %v1246, 4
    %v4547 = vsel %vm376, %v1310, %v4546
    %v4549 = vunpack.c.l.s4 1983009808
    %v4550 = vunpack.c.0.s8 %v4549
    %v4551 = vperm.slane %v4545, %v4550
    %v4553 = vunpack.c.l.s4 1983009808
    %v4554 = vunpack.c.0.s8 %v4553
    %v4555 = vperm.slane %v4547, %v4554
    %v4556 = vrot.slane %v1342, 4
    %v4557 = vsel %vm376, %v4556, %v1278
    %v4558 = vrot.slane %v1278, 4
    %v4559 = vsel %vm376, %v1342, %v4558
    %v4561 = vunpack.c.l.s4 1983009808
    %v4562 = vunpack.c.0.s8 %v4561
    %v4563 = vperm.slane %v4557, %v4562
    %v4565 = vunpack.c.l.s4 1983009808
    %v4566 = vunpack.c.0.s8 %v4565
    %v4567 = vperm.slane %v4559, %v4566
    %v4568 = vrot.slane %v4539, 4
    %v4569 = vsel %vm376, %v4568, %v4527
    %v4570 = vrot.slane %v4527, 4
    %v4571 = vsel %vm376, %v4539, %v4570
    %v4573 = vunpack.c.l.s4 1934713408
    %v4574 = vunpack.c.0.s8 %v4573
    %v4575 = vperm.slane %v4569, %v4574
    %v4577 = vunpack.c.l.s4 1934713408
    %v4578 = vunpack.c.0.s8 %v4577
    %v4579 = vperm.slane %v4571, %v4578
    %v4580 = vrot.slane %v4543, 4
    %v4581 = vsel %vm376, %v4580, %v4531
    %v4582 = vrot.slane %v4531, 4
    %v4583 = vsel %vm376, %v4543, %v4582
    %v4585 = vunpack.c.l.s4 1934713408
    %v4586 = vunpack.c.0.s8 %v4585
    %v4587 = vperm.slane %v4581, %v4586
    %v4589 = vunpack.c.l.s4 1934713408
    %v4590 = vunpack.c.0.s8 %v4589
    %v4591 = vperm.slane %v4583, %v4590
    %v4592 = vrot.slane %v4563, 4
    %v4593 = vsel %vm376, %v4592, %v4551
    %v4594 = vrot.slane %v4551, 4
    %v4595 = vsel %vm376, %v4563, %v4594
    %v4597 = vunpack.c.l.s4 1934713408
    %v4598 = vunpack.c.0.s8 %v4597
    %v4599 = vperm.slane %v4593, %v4598
    %v4601 = vunpack.c.l.s4 1934713408
    %v4602 = vunpack.c.0.s8 %v4601
    %v4603 = vperm.slane %v4595, %v4602
    %v4604 = vrot.slane %v4567, 4
    %v4605 = vsel %vm376, %v4604, %v4555
    %v4606 = vrot.slane %v4555, 4
    %v4607 = vsel %vm376, %v4567, %v4606
    %v4609 = vunpack.c.l.s4 1934713408
    %v4610 = vunpack.c.0.s8 %v4609
    %v4611 = vperm.slane %v4605, %v4610
    %v4613 = vunpack.c.l.s4 1934713408
    %v4614 = vunpack.c.0.s8 %v4613
    %v4615 = vperm.slane %v4607, %v4614
    %v4616 = vrot.slane %v4599, 4
    %v4617 = vsel %vm376, %v4616, %v4575
    %v4618 = vrot.slane %v4575, 4
    %v4619 = vsel %vm376, %v4599, %v4618
    %v4620 = vrot.slane %v4603, 4
    %v4621 = vsel %vm376, %v4620, %v4579
    %v4622 = vrot.slane %v4579, 4
    %v4623 = vsel %vm376, %v4603, %v4622
    %v4624 = vrot.slane %v4611, 4
    %v4625 = vsel %vm376, %v4624, %v4587
    %v4626 = vrot.slane %v4587, 4
    %v4627 = vsel %vm376, %v4611, %v4626
    %v4628 = vrot.slane %v4615, 4
    %v4629 = vsel %vm376, %v4628, %v4591
    %v4630 = vrot.slane %v4591, 4
    %v4631 = vsel %vm376, %v4615, %v4630
    %v4632 = vrot.slane %v1438, 4
    %v4633 = vsel %vm376, %v4632, %v1374
    %v4634 = vrot.slane %v1374, 4
    %v4635 = vsel %vm376, %v1438, %v4634
    %v4637 = vunpack.c.l.s4 1983009808
    %v4638 = vunpack.c.0.s8 %v4637
    %v4639 = vperm.slane %v4633, %v4638
    %v4641 = vunpack.c.l.s4 1983009808
    %v4642 = vunpack.c.0.s8 %v4641
    %v4643 = vperm.slane %v4635, %v4642
    %v4644 = vrot.slane %v1470, 4
    %v4645 = vsel %vm376, %v4644, %v1406
    %v4646 = vrot.slane %v1406, 4
    %v4647 = vsel %vm376, %v1470, %v4646
    %v4649 = vunpack.c.l.s4 1983009808
    %v4650 = vunpack.c.0.s8 %v4649
    %v4651 = vperm.slane %v4645, %v4650
    %v4653 = vunpack.c.l.s4 1983009808
    %v4654 = vunpack.c.0.s8 %v4653
    %v4655 = vperm.slane %v4647, %v4654
    %v4656 = vrot.slane %v1566, 4
    %v4657 = vsel %vm376, %v4656, %v1502
    %v4658 = vrot.slane %v1502, 4
    %v4659 = vsel %vm376, %v1566, %v4658
    %v4661 = vunpack.c.l.s4 1983009808
    %v4662 = vunpack.c.0.s8 %v4661
    %v4663 = vperm.slane %v4657, %v4662
    %v4665 = vunpack.c.l.s4 1983009808
    %v4666 = vunpack.c.0.s8 %v4665
    %v4667 = vperm.slane %v4659, %v4666
    %v4668 = vrot.slane %v1598, 4
    %v4669 = vsel %vm376, %v4668, %v1534
    %v4670 = vrot.slane %v1534, 4
    %v4671 = vsel %vm376, %v1598, %v4670
    %v4673 = vunpack.c.l.s4 1983009808
    %v4674 = vunpack.c.0.s8 %v4673
    %v4675 = vperm.slane %v4669, %v4674
    %v4677 = vunpack.c.l.s4 1983009808
    %v4678 = vunpack.c.0.s8 %v4677
    %v4679 = vperm.slane %v4671, %v4678
    %v4680 = vrot.slane %v4651, 4
    %v4681 = vsel %vm376, %v4680, %v4639
    %v4682 = vrot.slane %v4639, 4
    %v4683 = vsel %vm376, %v4651, %v4682
    %v4685 = vunpack.c.l.s4 1934713408
    %v4686 = vunpack.c.0.s8 %v4685
    %v4687 = vperm.slane %v4681, %v4686
    %v4689 = vunpack.c.l.s4 1934713408
    %v4690 = vunpack.c.0.s8 %v4689
    %v4691 = vperm.slane %v4683, %v4690
    %v4692 = vrot.slane %v4655, 4
    %v4693 = vsel %vm376, %v4692, %v4643
    %v4694 = vrot.slane %v4643, 4
    %v4695 = vsel %vm376, %v4655, %v4694
    %v4697 = vunpack.c.l.s4 1934713408
    %v4698 = vunpack.c.0.s8 %v4697
    %v4699 = vperm.slane %v4693, %v4698
    %v4701 = vunpack.c.l.s4 1934713408
    %v4702 = vunpack.c.0.s8 %v4701
    %v4703 = vperm.slane %v4695, %v4702
    %v4704 = vrot.slane %v4675, 4
    %v4705 = vsel %vm376, %v4704, %v4663
    %v4706 = vrot.slane %v4663, 4
    %v4707 = vsel %vm376, %v4675, %v4706
    %v4709 = vunpack.c.l.s4 1934713408
    %v4710 = vunpack.c.0.s8 %v4709
    %v4711 = vperm.slane %v4705, %v4710
    %v4713 = vunpack.c.l.s4 1934713408
    %v4714 = vunpack.c.0.s8 %v4713
    %v4715 = vperm.slane %v4707, %v4714
    %v4716 = vrot.slane %v4679, 4
    %v4717 = vsel %vm376, %v4716, %v4667
    %v4718 = vrot.slane %v4667, 4
    %v4719 = vsel %vm376, %v4679, %v4718
    %v4721 = vunpack.c.l.s4 1934713408
    %v4722 = vunpack.c.0.s8 %v4721
    %v4723 = vperm.slane %v4717, %v4722
    %v4725 = vunpack.c.l.s4 1934713408
    %v4726 = vunpack.c.0.s8 %v4725
    %v4727 = vperm.slane %v4719, %v4726
    %v4728 = vrot.slane %v4711, 4
    %v4729 = vsel %vm376, %v4728, %v4687
    %v4730 = vrot.slane %v4687, 4
    %v4731 = vsel %vm376, %v4711, %v4730
    %v4732 = vrot.slane %v4715, 4
    %v4733 = vsel %vm376, %v4732, %v4691
    %v4734 = vrot.slane %v4691, 4
    %v4735 = vsel %vm376, %v4715, %v4734
    %v4736 = vrot.slane %v4723, 4
    %v4737 = vsel %vm376, %v4736, %v4699
    %v4738 = vrot.slane %v4699, 4
    %v4739 = vsel %vm376, %v4723, %v4738
    %v4740 = vrot.slane %v4727, 4
    %v4741 = vsel %vm376, %v4740, %v4703
    %v4742 = vrot.slane %v4703, 4
    %v4743 = vsel %vm376, %v4727, %v4742
    %v4744 = vrot.slane %v671, 4
    %v4745 = vsel %vm376, %v4744, %v607
    %v4746 = vrot.slane %v607, 4
    %v4747 = vsel %vm376, %v671, %v4746
    %v4749 = vunpack.c.l.s4 1983009808
    %v4750 = vunpack.c.0.s8 %v4749
    %v4751 = vperm.slane %v4745, %v4750
    %v4753 = vunpack.c.l.s4 1983009808
    %v4754 = vunpack.c.0.s8 %v4753
    %v4755 = vperm.slane %v4747, %v4754
    %v4756 = vrot.slane %v703, 4
    %v4757 = vsel %vm376, %v4756, %v639
    %v4758 = vrot.slane %v639, 4
    %v4759 = vsel %vm376, %v703, %v4758
    %v4761 = vunpack.c.l.s4 1983009808
    %v4762 = vunpack.c.0.s8 %v4761
    %v4763 = vperm.slane %v4757, %v4762
    %v4765 = vunpack.c.l.s4 1983009808
    %v4766 = vunpack.c.0.s8 %v4765
    %v4767 = vperm.slane %v4759, %v4766
    %v4768 = vrot.slane %v799, 4
    %v4769 = vsel %vm376, %v4768, %v735
    %v4770 = vrot.slane %v735, 4
    %v4771 = vsel %vm376, %v799, %v4770
    %v4773 = vunpack.c.l.s4 1983009808
    %v4774 = vunpack.c.0.s8 %v4773
    %v4775 = vperm.slane %v4769, %v4774
    %v4777 = vunpack.c.l.s4 1983009808
    %v4778 = vunpack.c.0.s8 %v4777
    %v4779 = vperm.slane %v4771, %v4778
    %v4780 = vrot.slane %v831, 4
    %v4781 = vsel %vm376, %v4780, %v767
    %v4782 = vrot.slane %v767, 4
    %v4783 = vsel %vm376, %v831, %v4782
    %v4785 = vunpack.c.l.s4 1983009808
    %v4786 = vunpack.c.0.s8 %v4785
    %v4787 = vperm.slane %v4781, %v4786
    %v4789 = vunpack.c.l.s4 1983009808
    %v4790 = vunpack.c.0.s8 %v4789
    %v4791 = vperm.slane %v4783, %v4790
    %v4792 = vrot.slane %v4763, 4
    %v4793 = vsel %vm376, %v4792, %v4751
    %v4794 = vrot.slane %v4751, 4
    %v4795 = vsel %vm376, %v4763, %v4794
    %v4797 = vunpack.c.l.s4 1934713408
    %v4798 = vunpack.c.0.s8 %v4797
    %v4799 = vperm.slane %v4793, %v4798
    %v4801 = vunpack.c.l.s4 1934713408
    %v4802 = vunpack.c.0.s8 %v4801
    %v4803 = vperm.slane %v4795, %v4802
    %v4804 = vrot.slane %v4767, 4
    %v4805 = vsel %vm376, %v4804, %v4755
    %v4806 = vrot.slane %v4755, 4
    %v4807 = vsel %vm376, %v4767, %v4806
    %v4809 = vunpack.c.l.s4 1934713408
    %v4810 = vunpack.c.0.s8 %v4809
    %v4811 = vperm.slane %v4805, %v4810
    %v4813 = vunpack.c.l.s4 1934713408
    %v4814 = vunpack.c.0.s8 %v4813
    %v4815 = vperm.slane %v4807, %v4814
    %v4816 = vrot.slane %v4787, 4
    %v4817 = vsel %vm376, %v4816, %v4775
    %v4818 = vrot.slane %v4775, 4
    %v4819 = vsel %vm376, %v4787, %v4818
    %v4821 = vunpack.c.l.s4 1934713408
    %v4822 = vunpack.c.0.s8 %v4821
    %v4823 = vperm.slane %v4817, %v4822
    %v4825 = vunpack.c.l.s4 1934713408
    %v4826 = vunpack.c.0.s8 %v4825
    %v4827 = vperm.slane %v4819, %v4826
    %v4828 = vrot.slane %v4791, 4
    %v4829 = vsel %vm376, %v4828, %v4779
    %v4830 = vrot.slane %v4779, 4
    %v4831 = vsel %vm376, %v4791, %v4830
    %v4833 = vunpack.c.l.s4 1934713408
    %v4834 = vunpack.c.0.s8 %v4833
    %v4835 = vperm.slane %v4829, %v4834
    %v4837 = vunpack.c.l.s4 1934713408
    %v4838 = vunpack.c.0.s8 %v4837
    %v4839 = vperm.slane %v4831, %v4838
    %v4840 = vrot.slane %v4823, 4
    %v4841 = vsel %vm376, %v4840, %v4799
    %v4842 = vrot.slane %v4799, 4
    %v4843 = vsel %vm376, %v4823, %v4842
    %v4844 = vrot.slane %v4827, 4
    %v4845 = vsel %vm376, %v4844, %v4803
    %v4846 = vrot.slane %v4803, 4
    %v4847 = vsel %vm376, %v4827, %v4846
    %v4848 = vrot.slane %v4835, 4
    %v4849 = vsel %vm376, %v4848, %v4811
    %v4850 = vrot.slane %v4811, 4
    %v4851 = vsel %vm376, %v4835, %v4850
    %v4852 = vrot.slane %v4839, 4
    %v4853 = vsel %vm376, %v4852, %v4815
    %v4854 = vrot.slane %v4815, 4
    %v4855 = vsel %vm376, %v4839, %v4854
    %v4856 = vrot.slane %v927, 4
    %v4857 = vsel %vm376, %v4856, %v863
    %v4858 = vrot.slane %v863, 4
    %v4859 = vsel %vm376, %v927, %v4858
    %v4861 = vunpack.c.l.s4 1983009808
    %v4862 = vunpack.c.0.s8 %v4861
    %v4863 = vperm.slane %v4857, %v4862
    %v4865 = vunpack.c.l.s4 1983009808
    %v4866 = vunpack.c.0.s8 %v4865
    %v4867 = vperm.slane %v4859, %v4866
    %v4868 = vrot.slane %v959, 4
    %v4869 = vsel %vm376, %v4868, %v895
    %v4870 = vrot.slane %v895, 4
    %v4871 = vsel %vm376, %v959, %v4870
    %v4873 = vunpack.c.l.s4 1983009808
    %v4874 = vunpack.c.0.s8 %v4873
    %v4875 = vperm.slane %v4869, %v4874
    %v4877 = vunpack.c.l.s4 1983009808
    %v4878 = vunpack.c.0.s8 %v4877
    %v4879 = vperm.slane %v4871, %v4878
    %v4880 = vrot.slane %v1055, 4
    %v4881 = vsel %vm376, %v4880, %v991
    %v4882 = vrot.slane %v991, 4
    %v4883 = vsel %vm376, %v1055, %v4882
    %v4885 = vunpack.c.l.s4 1983009808
    %v4886 = vunpack.c.0.s8 %v4885
    %v4887 = vperm.slane %v4881, %v4886
    %v4889 = vunpack.c.l.s4 1983009808
    %v4890 = vunpack.c.0.s8 %v4889
    %v4891 = vperm.slane %v4883, %v4890
    %v4892 = vrot.slane %v1087, 4
    %v4893 = vsel %vm376, %v4892, %v1023
    %v4894 = vrot.slane %v1023, 4
    %v4895 = vsel %vm376, %v1087, %v4894
    %v4897 = vunpack.c.l.s4 1983009808
    %v4898 = vunpack.c.0.s8 %v4897
    %v4899 = vperm.slane %v4893, %v4898
    %v4901 = vunpack.c.l.s4 1983009808
    %v4902 = vunpack.c.0.s8 %v4901
    %v4903 = vperm.slane %v4895, %v4902
    %v4904 = vrot.slane %v4875, 4
    %v4905 = vsel %vm376, %v4904, %v4863
    %v4906 = vrot.slane %v4863, 4
    %v4907 = vsel %vm376, %v4875, %v4906
    %v4909 = vunpack.c.l.s4 1934713408
    %v4910 = vunpack.c.0.s8 %v4909
    %v4911 = vperm.slane %v4905, %v4910
    %v4913 = vunpack.c.l.s4 1934713408
    %v4914 = vunpack.c.0.s8 %v4913
    %v4915 = vperm.slane %v4907, %v4914
    %v4916 = vrot.slane %v4879, 4
    %v4917 = vsel %vm376, %v4916, %v4867
    %v4918 = vrot.slane %v4867, 4
    %v4919 = vsel %vm376, %v4879, %v4918
    %v4921 = vunpack.c.l.s4 1934713408
    %v4922 = vunpack.c.0.s8 %v4921
    %v4923 = vperm.slane %v4917, %v4922
    %v4925 = vunpack.c.l.s4 1934713408
    %v4926 = vunpack.c.0.s8 %v4925
    %v4927 = vperm.slane %v4919, %v4926
    %v4928 = vrot.slane %v4899, 4
    %v4929 = vsel %vm376, %v4928, %v4887
    %v4930 = vrot.slane %v4887, 4
    %v4931 = vsel %vm376, %v4899, %v4930
    %v4933 = vunpack.c.l.s4 1934713408
    %v4934 = vunpack.c.0.s8 %v4933
    %v4935 = vperm.slane %v4929, %v4934
    %v4937 = vunpack.c.l.s4 1934713408
    %v4938 = vunpack.c.0.s8 %v4937
    %v4939 = vperm.slane %v4931, %v4938
    %v4940 = vrot.slane %v4903, 4
    %v4941 = vsel %vm376, %v4940, %v4891
    %v4942 = vrot.slane %v4891, 4
    %v4943 = vsel %vm376, %v4903, %v4942
    %v4945 = vunpack.c.l.s4 1934713408
    %v4946 = vunpack.c.0.s8 %v4945
    %v4947 = vperm.slane %v4941, %v4946
    %v4949 = vunpack.c.l.s4 1934713408
    %v4950 = vunpack.c.0.s8 %v4949
    %v4951 = vperm.slane %v4943, %v4950
    %v4952 = vrot.slane %v4935, 4
    %v4953 = vsel %vm376, %v4952, %v4911
    %v4954 = vrot.slane %v4911, 4
    %v4955 = vsel %vm376, %v4935, %v4954
    %v4956 = vrot.slane %v4939, 4
    %v4957 = vsel %vm376, %v4956, %v4915
    %v4958 = vrot.slane %v4915, 4
    %v4959 = vsel %vm376, %v4939, %v4958
    %v4960 = vrot.slane %v4947, 4
    %v4961 = vsel %vm376, %v4960, %v4923
    %v4962 = vrot.slane %v4923, 4
    %v4963 = vsel %vm376, %v4947, %v4962
    %v4964 = vrot.slane %v4951, 4
    %v4965 = vsel %vm376, %v4964, %v4927
    %v4966 = vrot.slane %v4927, 4
    %v4967 = vsel %vm376, %v4951, %v4966
    %v4968 = vrot.slane %v1183, 4
    %v4969 = vsel %vm376, %v4968, %v1119
    %v4970 = vrot.slane %v1119, 4
    %v4971 = vsel %vm376, %v1183, %v4970
    %v4973 = vunpack.c.l.s4 1983009808
    %v4974 = vunpack.c.0.s8 %v4973
    %v4975 = vperm.slane %v4969, %v4974
    %v4977 = vunpack.c.l.s4 1983009808
    %v4978 = vunpack.c.0.s8 %v4977
    %v4979 = vperm.slane %v4971, %v4978
    %v4980 = vrot.slane %v1215, 4
    %v4981 = vsel %vm376, %v4980, %v1151
    %v4982 = vrot.slane %v1151, 4
    %v4983 = vsel %vm376, %v1215, %v4982
    %v4985 = vunpack.c.l.s4 1983009808
    %v4986 = vunpack.c.0.s8 %v4985
    %v4987 = vperm.slane %v4981, %v4986
    %v4989 = vunpack.c.l.s4 1983009808
    %v4990 = vunpack.c.0.s8 %v4989
    %v4991 = vperm.slane %v4983, %v4990
    %v4992 = vrot.slane %v1311, 4
    %v4993 = vsel %vm376, %v4992, %v1247
    %v4994 = vrot.slane %v1247, 4
    %v4995 = vsel %vm376, %v1311, %v4994
    %v4997 = vunpack.c.l.s4 1983009808
    %v4998 = vunpack.c.0.s8 %v4997
    %v4999 = vperm.slane %v4993, %v4998
    %v5001 = vunpack.c.l.s4 1983009808
    %v5002 = vunpack.c.0.s8 %v5001
    %v5003 = vperm.slane %v4995, %v5002
    %v5004 = vrot.slane %v1343, 4
    %v5005 = vsel %vm376, %v5004, %v1279
    %v5006 = vrot.slane %v1279, 4
    %v5007 = vsel %vm376, %v1343, %v5006
    %v5009 = vunpack.c.l.s4 1983009808
    %v5010 = vunpack.c.0.s8 %v5009
    %v5011 = vperm.slane %v5005, %v5010
    %v5013 = vunpack.c.l.s4 1983009808
    %v5014 = vunpack.c.0.s8 %v5013
    %v5015 = vperm.slane %v5007, %v5014
    %v5016 = vrot.slane %v4987, 4
    %v5017 = vsel %vm376, %v5016, %v4975
    %v5018 = vrot.slane %v4975, 4
    %v5019 = vsel %vm376, %v4987, %v5018
    %v5021 = vunpack.c.l.s4 1934713408
    %v5022 = vunpack.c.0.s8 %v5021
    %v5023 = vperm.slane %v5017, %v5022
    %v5025 = vunpack.c.l.s4 1934713408
    %v5026 = vunpack.c.0.s8 %v5025
    %v5027 = vperm.slane %v5019, %v5026
    %v5028 = vrot.slane %v4991, 4
    %v5029 = vsel %vm376, %v5028, %v4979
    %v5030 = vrot.slane %v4979, 4
    %v5031 = vsel %vm376, %v4991, %v5030
    %v5033 = vunpack.c.l.s4 1934713408
    %v5034 = vunpack.c.0.s8 %v5033
    %v5035 = vperm.slane %v5029, %v5034
    %v5037 = vunpack.c.l.s4 1934713408
    %v5038 = vunpack.c.0.s8 %v5037
    %v5039 = vperm.slane %v5031, %v5038
    %v5040 = vrot.slane %v5011, 4
    %v5041 = vsel %vm376, %v5040, %v4999
    %v5042 = vrot.slane %v4999, 4
    %v5043 = vsel %vm376, %v5011, %v5042
    %v5045 = vunpack.c.l.s4 1934713408
    %v5046 = vunpack.c.0.s8 %v5045
    %v5047 = vperm.slane %v5041, %v5046
    %v5049 = vunpack.c.l.s4 1934713408
    %v5050 = vunpack.c.0.s8 %v5049
    %v5051 = vperm.slane %v5043, %v5050
    %v5052 = vrot.slane %v5015, 4
    %v5053 = vsel %vm376, %v5052, %v5003
    %v5054 = vrot.slane %v5003, 4
    %v5055 = vsel %vm376, %v5015, %v5054
    %v5057 = vunpack.c.l.s4 1934713408
    %v5058 = vunpack.c.0.s8 %v5057
    %v5059 = vperm.slane %v5053, %v5058
    %v5061 = vunpack.c.l.s4 1934713408
    %v5062 = vunpack.c.0.s8 %v5061
    %v5063 = vperm.slane %v5055, %v5062
    %v5064 = vrot.slane %v5047, 4
    %v5065 = vsel %vm376, %v5064, %v5023
    %v5066 = vrot.slane %v5023, 4
    %v5067 = vsel %vm376, %v5047, %v5066
    %v5068 = vrot.slane %v5051, 4
    %v5069 = vsel %vm376, %v5068, %v5027
    %v5070 = vrot.slane %v5027, 4
    %v5071 = vsel %vm376, %v5051, %v5070
    %v5072 = vrot.slane %v5059, 4
    %v5073 = vsel %vm376, %v5072, %v5035
    %v5074 = vrot.slane %v5035, 4
    %v5075 = vsel %vm376, %v5059, %v5074
    %v5076 = vrot.slane %v5063, 4
    %v5077 = vsel %vm376, %v5076, %v5039
    %v5078 = vrot.slane %v5039, 4
    %v5079 = vsel %vm376, %v5063, %v5078
    %v5080 = vrot.slane %v1439, 4
    %v5081 = vsel %vm376, %v5080, %v1375
    %v5082 = vrot.slane %v1375, 4
    %v5083 = vsel %vm376, %v1439, %v5082
    %v5085 = vunpack.c.l.s4 1983009808
    %v5086 = vunpack.c.0.s8 %v5085
    %v5087 = vperm.slane %v5081, %v5086
    %v5089 = vunpack.c.l.s4 1983009808
    %v5090 = vunpack.c.0.s8 %v5089
    %v5091 = vperm.slane %v5083, %v5090
    %v5092 = vrot.slane %v1471, 4
    %v5093 = vsel %vm376, %v5092, %v1407
    %v5094 = vrot.slane %v1407, 4
    %v5095 = vsel %vm376, %v1471, %v5094
    %v5097 = vunpack.c.l.s4 1983009808
    %v5098 = vunpack.c.0.s8 %v5097
    %v5099 = vperm.slane %v5093, %v5098
    %v5101 = vunpack.c.l.s4 1983009808
    %v5102 = vunpack.c.0.s8 %v5101
    %v5103 = vperm.slane %v5095, %v5102
    %v5104 = vrot.slane %v1567, 4
    %v5105 = vsel %vm376, %v5104, %v1503
    %v5106 = vrot.slane %v1503, 4
    %v5107 = vsel %vm376, %v1567, %v5106
    %v5109 = vunpack.c.l.s4 1983009808
    %v5110 = vunpack.c.0.s8 %v5109
    %v5111 = vperm.slane %v5105, %v5110
    %v5113 = vunpack.c.l.s4 1983009808
    %v5114 = vunpack.c.0.s8 %v5113
    %v5115 = vperm.slane %v5107, %v5114
    %v5116 = vrot.slane %v1599, 4
    %v5117 = vsel %vm376, %v5116, %v1535
    %v5118 = vrot.slane %v1535, 4
    %v5119 = vsel %vm376, %v1599, %v5118
    %v5121 = vunpack.c.l.s4 1983009808
    %v5122 = vunpack.c.0.s8 %v5121
    %v5123 = vperm.slane %v5117, %v5122
    %v5125 = vunpack.c.l.s4 1983009808
    %v5126 = vunpack.c.0.s8 %v5125
    %v5127 = vperm.slane %v5119, %v5126
    %v5128 = vrot.slane %v5099, 4
    %v5129 = vsel %vm376, %v5128, %v5087
    %v5130 = vrot.slane %v5087, 4
    %v5131 = vsel %vm376, %v5099, %v5130
    %v5133 = vunpack.c.l.s4 1934713408
    %v5134 = vunpack.c.0.s8 %v5133
    %v5135 = vperm.slane %v5129, %v5134
    %v5137 = vunpack.c.l.s4 1934713408
    %v5138 = vunpack.c.0.s8 %v5137
    %v5139 = vperm.slane %v5131, %v5138
    %v5140 = vrot.slane %v5103, 4
    %v5141 = vsel %vm376, %v5140, %v5091
    %v5142 = vrot.slane %v5091, 4
    %v5143 = vsel %vm376, %v5103, %v5142
    %v5145 = vunpack.c.l.s4 1934713408
    %v5146 = vunpack.c.0.s8 %v5145
    %v5147 = vperm.slane %v5141, %v5146
    %v5149 = vunpack.c.l.s4 1934713408
    %v5150 = vunpack.c.0.s8 %v5149
    %v5151 = vperm.slane %v5143, %v5150
    %v5152 = vrot.slane %v5123, 4
    %v5153 = vsel %vm376, %v5152, %v5111
    %v5154 = vrot.slane %v5111, 4
    %v5155 = vsel %vm376, %v5123, %v5154
    %v5157 = vunpack.c.l.s4 1934713408
    %v5158 = vunpack.c.0.s8 %v5157
    %v5159 = vperm.slane %v5153, %v5158
    %v5161 = vunpack.c.l.s4 1934713408
    %v5162 = vunpack.c.0.s8 %v5161
    %v5163 = vperm.slane %v5155, %v5162
    %v5164 = vrot.slane %v5127, 4
    %v5165 = vsel %vm376, %v5164, %v5115
    %v5166 = vrot.slane %v5115, 4
    %v5167 = vsel %vm376, %v5127, %v5166
    %v5169 = vunpack.c.l.s4 1934713408
    %v5170 = vunpack.c.0.s8 %v5169
    %v5171 = vperm.slane %v5165, %v5170
    %v5173 = vunpack.c.l.s4 1934713408
    %v5174 = vunpack.c.0.s8 %v5173
    %v5175 = vperm.slane %v5167, %v5174
    %v5176 = vrot.slane %v5159, 4
    %v5177 = vsel %vm376, %v5176, %v5135
    %v5178 = vrot.slane %v5135, 4
    %v5179 = vsel %vm376, %v5159, %v5178
    %v5180 = vrot.slane %v5163, 4
    %v5181 = vsel %vm376, %v5180, %v5139
    %v5182 = vrot.slane %v5139, 4
    %v5183 = vsel %vm376, %v5163, %v5182
    %v5184 = vrot.slane %v5171, 4
    %v5185 = vsel %vm376, %v5184, %v5147
    %v5186 = vrot.slane %v5147, 4
    %v5187 = vsel %vm376, %v5171, %v5186
    %v5188 = vrot.slane %v5175, 4
    %v5189 = vsel %vm376, %v5188, %v5151
    %v5190 = vrot.slane %v5151, 4
    %v5191 = vsel %vm376, %v5175, %v5190
    %5192 = vxpose.xlu0.b32.start [1/16] %v55, 128
    %5193 = vxpose.xlu0.b32.cont [2/16] %v56, 128
    %5194 = vxpose.xlu0.b32.cont [3/16] %v57, 128
    %5195 = vxpose.xlu0.b32.cont [4/16] %v58, 128
    %5196 = vxpose.xlu0.b32.cont [5/16] 0.0, 128
    %5197 = vxpose.xlu0.b32.cont [6/16] 0.0, 128
    %5198 = vxpose.xlu0.b32.cont [7/16] 0.0, 128
    %5199 = vxpose.xlu0.b32.cont [8/16] 0.0, 128
    %5200 = vxpose.xlu0.b32.cont [9/16] 0.0, 128
    %5201 = vxpose.xlu0.b32.cont [10/16] 0.0, 128
    %5202 = vxpose.xlu0.b32.cont [11/16] 0.0, 128
    %5203 = vxpose.xlu0.b32.cont [12/16] 0.0, 128
    %5204 = vxpose.xlu0.b32.cont [13/16] 0.0, 128
    %5205 = vxpose.xlu0.b32.cont [14/16] 0.0, 128
    %5206 = vxpose.xlu0.b32.cont [15/16] 0.0, 128
    %5207 = vxpose.xlu0.b32.end [16/16] 0.0, 128
    %v5208 = vpop.trf.xlu0
    %v5209 = vpop.trf.xlu0
    %v5210 = vpop.trf.xlu0
    %v5211 = vpop.trf.xlu0
    %v5212 = vpop.trf.xlu0
    %v5213 = vpop.trf.xlu0
    %v5214 = vpop.trf.xlu0
    %v5215 = vpop.trf.xlu0
    %v5216 = vpop.trf.xlu0
    %v5217 = vpop.trf.xlu0
    %v5218 = vpop.trf.xlu0
    %v5219 = vpop.trf.xlu0
    %v5220 = vpop.trf.xlu0
    %v5221 = vpop.trf.xlu0
    %v5222 = vpop.trf.xlu0
    %v5223 = vpop.trf.xlu0
    %vm5224 = vcmask 261120
    %v5226 = vsel %vm5224, %v5208, 0
    %v5229 = vsel %vm5224, %v5209, 0
    %v5232 = vsel %vm5224, %v5210, 0
    %v5235 = vsel %vm5224, %v5211, 0
    %5237 = vmatpush.msra.mxu0 0.0
    %5238 = vmatpush.msra.mxu0 0.0
    %5239 = vmatpush.msra.mxu0 0.0
    %5240 = vmatpush.msra.mxu0 0.0
    %5241 = vmatpush.msra.mxu0 0.0
    %5242 = vmatpush.msra.mxu0 0.0
    %5243 = vmatpush.msra.mxu0 0.0
    %5244 = vmatpush.msra.mxu0 0.0
    %5245 = vmatpush.msra.mxu0 0.0
    %5246 = vmatpush.msra.mxu0 0.0
    %5247 = vmatpush.msra.mxu0 0.0
    %5248 = vmatpush.msra.mxu0 0.0
    %5249 = vmatpush.msra.mxu0 %v2041
    %5250 = vmatpush.msra.mxu0 %v1929
    %5251 = vmatpush.msra.mxu0 %v1817
    %5252 = vmatpush.msra.mxu0 %v1705
    %5253 = vmatmul.f32.gmra.mxu0 %v5226
    %v5254 = vpop.f32.mrf.mxu0
    %v5255 = vadd.f32 0.0, %v5254
    %5256 = vmatmul.f32.gmra.mxu0 %v5229
    %v5257 = vpop.f32.mrf.mxu0
    %v5258 = vadd.f32 0.0, %v5257
    %5259 = vmatmul.f32.gmra.mxu0 %v5232
    %v5260 = vpop.f32.mrf.mxu0
    %v5261 = vadd.f32 0.0, %v5260
    %5262 = vmatmul.f32.gmra.mxu0 %v5235
    %v5263 = vpop.f32.mrf.mxu0
    %v5264 = vadd.f32 0.0, %v5263
    %5265 = vdwg.mxu0
    %5266 = vxpose.xlu0.b32.start [1/16] %v59, 128
    %5267 = vxpose.xlu0.b32.cont [2/16] %v60, 128
    %5268 = vxpose.xlu0.b32.cont [3/16] %v61, 128
    %5269 = vxpose.xlu0.b32.cont [4/16] %v62, 128
    %5270 = vxpose.xlu0.b32.cont [5/16] 0.0, 128
    %5271 = vxpose.xlu0.b32.cont [6/16] 0.0, 128
    %5272 = vxpose.xlu0.b32.cont [7/16] 0.0, 128
    %5273 = vxpose.xlu0.b32.cont [8/16] 0.0, 128
    %5274 = vxpose.xlu0.b32.cont [9/16] 0.0, 128
    %5275 = vxpose.xlu0.b32.cont [10/16] 0.0, 128
    %5276 = vxpose.xlu0.b32.cont [11/16] 0.0, 128
    %5277 = vxpose.xlu0.b32.cont [12/16] 0.0, 128
    %5278 = vxpose.xlu0.b32.cont [13/16] 0.0, 128
    %5279 = vxpose.xlu0.b32.cont [14/16] 0.0, 128
    %5280 = vxpose.xlu0.b32.cont [15/16] 0.0, 128
    %5281 = vxpose.xlu0.b32.end [16/16] 0.0, 128
    %v5282 = vpop.trf.xlu0
    %v5283 = vpop.trf.xlu0
    %v5284 = vpop.trf.xlu0
    %v5285 = vpop.trf.xlu0
    %v5286 = vpop.trf.xlu0
    %v5287 = vpop.trf.xlu0
    %v5288 = vpop.trf.xlu0
    %v5289 = vpop.trf.xlu0
    %v5290 = vpop.trf.xlu0
    %v5291 = vpop.trf.xlu0
    %v5292 = vpop.trf.xlu0
    %v5293 = vpop.trf.xlu0
    %v5294 = vpop.trf.xlu0
    %v5295 = vpop.trf.xlu0
    %v5296 = vpop.trf.xlu0
    %v5297 = vpop.trf.xlu0
    %v5299 = vsel %vm5224, %v5282, 0
    %v5302 = vsel %vm5224, %v5283, 0
    %v5305 = vsel %vm5224, %v5284, 0
    %v5308 = vsel %vm5224, %v5285, 0
    %5310 = vmatpush.msra.mxu0 0.0
    %5311 = vmatpush.msra.mxu0 0.0
    %5312 = vmatpush.msra.mxu0 0.0
    %5313 = vmatpush.msra.mxu0 0.0
    %5314 = vmatpush.msra.mxu0 0.0
    %5315 = vmatpush.msra.mxu0 0.0
    %5316 = vmatpush.msra.mxu0 0.0
    %5317 = vmatpush.msra.mxu0 0.0
    %5318 = vmatpush.msra.mxu0 0.0
    %5319 = vmatpush.msra.mxu0 0.0
    %5320 = vmatpush.msra.mxu0 0.0
    %5321 = vmatpush.msra.mxu0 0.0
    %5322 = vmatpush.msra.mxu0 %v2043
    %5323 = vmatpush.msra.mxu0 %v1931
    %5324 = vmatpush.msra.mxu0 %v1819
    %5325 = vmatpush.msra.mxu0 %v1707
    %5326 = vmatmul.f32.gmra.mxu0 %v5299
    %v5327 = vpop.f32.mrf.mxu0
    %v5328 = vadd.f32 0.0, %v5327
    %5329 = vmatmul.f32.gmra.mxu0 %v5302
    %v5330 = vpop.f32.mrf.mxu0
    %v5331 = vadd.f32 0.0, %v5330
    %5332 = vmatmul.f32.gmra.mxu0 %v5305
    %v5333 = vpop.f32.mrf.mxu0
    %v5334 = vadd.f32 0.0, %v5333
    %5335 = vmatmul.f32.gmra.mxu0 %v5308
    %v5336 = vpop.f32.mrf.mxu0
    %v5337 = vadd.f32 0.0, %v5336
    %5338 = vdwg.mxu0
    %5339 = vxpose.xlu0.b32.start [1/16] %v63, 128
    %5340 = vxpose.xlu0.b32.cont [2/16] %v64, 128
    %5341 = vxpose.xlu0.b32.cont [3/16] %v65, 128
    %5342 = vxpose.xlu0.b32.cont [4/16] %v66, 128
    %5343 = vxpose.xlu0.b32.cont [5/16] 0.0, 128
    %5344 = vxpose.xlu0.b32.cont [6/16] 0.0, 128
    %5345 = vxpose.xlu0.b32.cont [7/16] 0.0, 128
    %5346 = vxpose.xlu0.b32.cont [8/16] 0.0, 128
    %5347 = vxpose.xlu0.b32.cont [9/16] 0.0, 128
    %5348 = vxpose.xlu0.b32.cont [10/16] 0.0, 128
    %5349 = vxpose.xlu0.b32.cont [11/16] 0.0, 128
    %5350 = vxpose.xlu0.b32.cont [12/16] 0.0, 128
    %5351 = vxpose.xlu0.b32.cont [13/16] 0.0, 128
    %5352 = vxpose.xlu0.b32.cont [14/16] 0.0, 128
    %5353 = vxpose.xlu0.b32.cont [15/16] 0.0, 128
    %5354 = vxpose.xlu0.b32.end [16/16] 0.0, 128
    %v5355 = vpop.trf.xlu0
    %v5356 = vpop.trf.xlu0
    %v5357 = vpop.trf.xlu0
    %v5358 = vpop.trf.xlu0
    %v5359 = vpop.trf.xlu0
    %v5360 = vpop.trf.xlu0
    %v5361 = vpop.trf.xlu0
    %v5362 = vpop.trf.xlu0
    %v5363 = vpop.trf.xlu0
    %v5364 = vpop.trf.xlu0
    %v5365 = vpop.trf.xlu0
    %v5366 = vpop.trf.xlu0
    %v5367 = vpop.trf.xlu0
    %v5368 = vpop.trf.xlu0
    %v5369 = vpop.trf.xlu0
    %v5370 = vpop.trf.xlu0
    %v5372 = vsel %vm5224, %v5355, 0
    %v5375 = vsel %vm5224, %v5356, 0
    %v5378 = vsel %vm5224, %v5357, 0
    %v5381 = vsel %vm5224, %v5358, 0
    %5383 = vmatpush.msra.mxu0 0.0
    %5384 = vmatpush.msra.mxu0 0.0
    %5385 = vmatpush.msra.mxu0 0.0
    %5386 = vmatpush.msra.mxu0 0.0
    %5387 = vmatpush.msra.mxu0 0.0
    %5388 = vmatpush.msra.mxu0 0.0
    %5389 = vmatpush.msra.mxu0 0.0
    %5390 = vmatpush.msra.mxu0 0.0
    %5391 = vmatpush.msra.mxu0 0.0
    %5392 = vmatpush.msra.mxu0 0.0
    %5393 = vmatpush.msra.mxu0 0.0
    %5394 = vmatpush.msra.mxu0 0.0
    %5395 = vmatpush.msra.mxu0 %v2045
    %5396 = vmatpush.msra.mxu0 %v1933
    %5397 = vmatpush.msra.mxu0 %v1821
    %5398 = vmatpush.msra.mxu0 %v1709
    %5399 = vmatmul.f32.gmra.mxu0 %v5372
    %v5400 = vpop.f32.mrf.mxu0
    %v5401 = vadd.f32 0.0, %v5400
    %5402 = vmatmul.f32.gmra.mxu0 %v5375
    %v5403 = vpop.f32.mrf.mxu0
    %v5404 = vadd.f32 0.0, %v5403
    %5405 = vmatmul.f32.gmra.mxu0 %v5378
    %v5406 = vpop.f32.mrf.mxu0
    %v5407 = vadd.f32 0.0, %v5406
    %5408 = vmatmul.f32.gmra.mxu0 %v5381
    %v5409 = vpop.f32.mrf.mxu0
    %v5410 = vadd.f32 0.0, %v5409
    %5411 = vdwg.mxu0
    %5412 = vxpose.xlu0.b32.start [1/16] %v67, 128
    %5413 = vxpose.xlu0.b32.cont [2/16] %v68, 128
    %5414 = vxpose.xlu0.b32.cont [3/16] %v69, 128
    %5415 = vxpose.xlu0.b32.cont [4/16] %v70, 128
    %5416 = vxpose.xlu0.b32.cont [5/16] 0.0, 128
    %5417 = vxpose.xlu0.b32.cont [6/16] 0.0, 128
    %5418 = vxpose.xlu0.b32.cont [7/16] 0.0, 128
    %5419 = vxpose.xlu0.b32.cont [8/16] 0.0, 128
    %5420 = vxpose.xlu0.b32.cont [9/16] 0.0, 128
    %5421 = vxpose.xlu0.b32.cont [10/16] 0.0, 128
    %5422 = vxpose.xlu0.b32.cont [11/16] 0.0, 128
    %5423 = vxpose.xlu0.b32.cont [12/16] 0.0, 128
    %5424 = vxpose.xlu0.b32.cont [13/16] 0.0, 128
    %5425 = vxpose.xlu0.b32.cont [14/16] 0.0, 128
    %5426 = vxpose.xlu0.b32.cont [15/16] 0.0, 128
    %5427 = vxpose.xlu0.b32.end [16/16] 0.0, 128
    %v5428 = vpop.trf.xlu0
    %v5429 = vpop.trf.xlu0
    %v5430 = vpop.trf.xlu0
    %v5431 = vpop.trf.xlu0
    %v5432 = vpop.trf.xlu0
    %v5433 = vpop.trf.xlu0
    %v5434 = vpop.trf.xlu0
    %v5435 = vpop.trf.xlu0
    %v5436 = vpop.trf.xlu0
    %v5437 = vpop.trf.xlu0
    %v5438 = vpop.trf.xlu0
    %v5439 = vpop.trf.xlu0
    %v5440 = vpop.trf.xlu0
    %v5441 = vpop.trf.xlu0
    %v5442 = vpop.trf.xlu0
    %v5443 = vpop.trf.xlu0
    %v5445 = vsel %vm5224, %v5428, 0
    %v5448 = vsel %vm5224, %v5429, 0
    %v5451 = vsel %vm5224, %v5430, 0
    %v5454 = vsel %vm5224, %v5431, 0
    %5456 = vmatpush.msra.mxu0 0.0
    %5457 = vmatpush.msra.mxu0 0.0
    %5458 = vmatpush.msra.mxu0 0.0
    %5459 = vmatpush.msra.mxu0 0.0
    %5460 = vmatpush.msra.mxu0 0.0
    %5461 = vmatpush.msra.mxu0 0.0
    %5462 = vmatpush.msra.mxu0 0.0
    %5463 = vmatpush.msra.mxu0 0.0
    %5464 = vmatpush.msra.mxu0 0.0
    %5465 = vmatpush.msra.mxu0 0.0
    %5466 = vmatpush.msra.mxu0 0.0
    %5467 = vmatpush.msra.mxu0 0.0
    %5468 = vmatpush.msra.mxu0 %v2047
    %5469 = vmatpush.msra.mxu0 %v1935
    %5470 = vmatpush.msra.mxu0 %v1823
    %5471 = vmatpush.msra.mxu0 %v1711
    %5472 = vmatmul.f32.gmra.mxu0 %v5445
    %v5473 = vpop.f32.mrf.mxu0
    %v5474 = vadd.f32 0.0, %v5473
    %5475 = vmatmul.f32.gmra.mxu0 %v5448
    %v5476 = vpop.f32.mrf.mxu0
    %v5477 = vadd.f32 0.0, %v5476
    %5478 = vmatmul.f32.gmra.mxu0 %v5451
    %v5479 = vpop.f32.mrf.mxu0
    %v5480 = vadd.f32 0.0, %v5479
    %5481 = vmatmul.f32.gmra.mxu0 %v5454
    %v5482 = vpop.f32.mrf.mxu0
    %v5483 = vadd.f32 0.0, %v5482
    %5484 = vdwg.mxu0
    %5485 = vxpose.xlu0.b32.start [1/16] %v71, 128
    %5486 = vxpose.xlu0.b32.cont [2/16] %v72, 128
    %5487 = vxpose.xlu0.b32.cont [3/16] %v73, 128
    %5488 = vxpose.xlu0.b32.cont [4/16] %v74, 128
    %5489 = vxpose.xlu0.b32.cont [5/16] 0.0, 128
    %5490 = vxpose.xlu0.b32.cont [6/16] 0.0, 128
    %5491 = vxpose.xlu0.b32.cont [7/16] 0.0, 128
    %5492 = vxpose.xlu0.b32.cont [8/16] 0.0, 128
    %5493 = vxpose.xlu0.b32.cont [9/16] 0.0, 128
    %5494 = vxpose.xlu0.b32.cont [10/16] 0.0, 128
    %5495 = vxpose.xlu0.b32.cont [11/16] 0.0, 128
    %5496 = vxpose.xlu0.b32.cont [12/16] 0.0, 128
    %5497 = vxpose.xlu0.b32.cont [13/16] 0.0, 128
    %5498 = vxpose.xlu0.b32.cont [14/16] 0.0, 128
    %5499 = vxpose.xlu0.b32.cont [15/16] 0.0, 128
    %5500 = vxpose.xlu0.b32.end [16/16] 0.0, 128
    %v5501 = vpop.trf.xlu0
    %v5502 = vpop.trf.xlu0
    %v5503 = vpop.trf.xlu0
    %v5504 = vpop.trf.xlu0
    %v5505 = vpop.trf.xlu0
    %v5506 = vpop.trf.xlu0
    %v5507 = vpop.trf.xlu0
    %v5508 = vpop.trf.xlu0
    %v5509 = vpop.trf.xlu0
    %v5510 = vpop.trf.xlu0
    %v5511 = vpop.trf.xlu0
    %v5512 = vpop.trf.xlu0
    %v5513 = vpop.trf.xlu0
    %v5514 = vpop.trf.xlu0
    %v5515 = vpop.trf.xlu0
    %v5516 = vpop.trf.xlu0
    %v5518 = vsel %vm5224, %v5501, 0
    %v5521 = vsel %vm5224, %v5502, 0
    %v5524 = vsel %vm5224, %v5503, 0
    %v5527 = vsel %vm5224, %v5504, 0
    %5529 = vmatpush.msra.mxu0 0.0
    %5530 = vmatpush.msra.mxu0 0.0
    %5531 = vmatpush.msra.mxu0 0.0
    %5532 = vmatpush.msra.mxu0 0.0
    %5533 = vmatpush.msra.mxu0 0.0
    %5534 = vmatpush.msra.mxu0 0.0
    %5535 = vmatpush.msra.mxu0 0.0
    %5536 = vmatpush.msra.mxu0 0.0
    %5537 = vmatpush.msra.mxu0 0.0
    %5538 = vmatpush.msra.mxu0 0.0
    %5539 = vmatpush.msra.mxu0 0.0
    %5540 = vmatpush.msra.mxu0 0.0
    %5541 = vmatpush.msra.mxu0 %v2049
    %5542 = vmatpush.msra.mxu0 %v1937
    %5543 = vmatpush.msra.mxu0 %v1825
    %5544 = vmatpush.msra.mxu0 %v1713
    %5545 = vmatmul.f32.gmra.mxu0 %v5518
    %v5546 = vpop.f32.mrf.mxu0
    %v5547 = vadd.f32 0.0, %v5546
    %5548 = vmatmul.f32.gmra.mxu0 %v5521
    %v5549 = vpop.f32.mrf.mxu0
    %v5550 = vadd.f32 0.0, %v5549
    %5551 = vmatmul.f32.gmra.mxu0 %v5524
    %v5552 = vpop.f32.mrf.mxu0
    %v5553 = vadd.f32 0.0, %v5552
    %5554 = vmatmul.f32.gmra.mxu0 %v5527
    %v5555 = vpop.f32.mrf.mxu0
    %v5556 = vadd.f32 0.0, %v5555
    %5557 = vdwg.mxu0
    %5558 = vxpose.xlu0.b32.start [1/16] %v75, 128
    %5559 = vxpose.xlu0.b32.cont [2/16] %v76, 128
    %5560 = vxpose.xlu0.b32.cont [3/16] %v77, 128
    %5561 = vxpose.xlu0.b32.cont [4/16] %v78, 128
    %5562 = vxpose.xlu0.b32.cont [5/16] 0.0, 128
    %5563 = vxpose.xlu0.b32.cont [6/16] 0.0, 128
    %5564 = vxpose.xlu0.b32.cont [7/16] 0.0, 128
    %5565 = vxpose.xlu0.b32.cont [8/16] 0.0, 128
    %5566 = vxpose.xlu0.b32.cont [9/16] 0.0, 128
    %5567 = vxpose.xlu0.b32.cont [10/16] 0.0, 128
    %5568 = vxpose.xlu0.b32.cont [11/16] 0.0, 128
    %5569 = vxpose.xlu0.b32.cont [12/16] 0.0, 128
    %5570 = vxpose.xlu0.b32.cont [13/16] 0.0, 128
    %5571 = vxpose.xlu0.b32.cont [14/16] 0.0, 128
    %5572 = vxpose.xlu0.b32.cont [15/16] 0.0, 128
    %5573 = vxpose.xlu0.b32.end [16/16] 0.0, 128
    %v5574 = vpop.trf.xlu0
    %v5575 = vpop.trf.xlu0
    %v5576 = vpop.trf.xlu0
    %v5577 = vpop.trf.xlu0
    %v5578 = vpop.trf.xlu0
    %v5579 = vpop.trf.xlu0
    %v5580 = vpop.trf.xlu0
    %v5581 = vpop.trf.xlu0
    %v5582 = vpop.trf.xlu0
    %v5583 = vpop.trf.xlu0
    %v5584 = vpop.trf.xlu0
    %v5585 = vpop.trf.xlu0
    %v5586 = vpop.trf.xlu0
    %v5587 = vpop.trf.xlu0
    %v5588 = vpop.trf.xlu0
    %v5589 = vpop.trf.xlu0
    %v5591 = vsel %vm5224, %v5574, 0
    %v5594 = vsel %vm5224, %v5575, 0
    %v5597 = vsel %vm5224, %v5576, 0
    %v5600 = vsel %vm5224, %v5577, 0
    %5602 = vmatpush.msra.mxu0 0.0
    %5603 = vmatpush.msra.mxu0 0.0
    %5604 = vmatpush.msra.mxu0 0.0
    %5605 = vmatpush.msra.mxu0 0.0
    %5606 = vmatpush.msra.mxu0 0.0
    %5607 = vmatpush.msra.mxu0 0.0
    %5608 = vmatpush.msra.mxu0 0.0
    %5609 = vmatpush.msra.mxu0 0.0
    %5610 = vmatpush.msra.mxu0 0.0
    %5611 = vmatpush.msra.mxu0 0.0
    %5612 = vmatpush.msra.mxu0 0.0
    %5613 = vmatpush.msra.mxu0 0.0
    %5614 = vmatpush.msra.mxu0 %v2051
    %5615 = vmatpush.msra.mxu0 %v1939
    %5616 = vmatpush.msra.mxu0 %v1827
    %5617 = vmatpush.msra.mxu0 %v1715
    %5618 = vmatmul.f32.gmra.mxu0 %v5591
    %v5619 = vpop.f32.mrf.mxu0
    %v5620 = vadd.f32 0.0, %v5619
    %5621 = vmatmul.f32.gmra.mxu0 %v5594
    %v5622 = vpop.f32.mrf.mxu0
    %v5623 = vadd.f32 0.0, %v5622
    %5624 = vmatmul.f32.gmra.mxu0 %v5597
    %v5625 = vpop.f32.mrf.mxu0
    %v5626 = vadd.f32 0.0, %v5625
    %5627 = vmatmul.f32.gmra.mxu0 %v5600
    %v5628 = vpop.f32.mrf.mxu0
    %v5629 = vadd.f32 0.0, %v5628
    %5630 = vdwg.mxu0
    %5631 = vxpose.xlu0.b32.start [1/16] %v79, 128
    %5632 = vxpose.xlu0.b32.cont [2/16] %v80, 128
    %5633 = vxpose.xlu0.b32.cont [3/16] %v81, 128
    %5634 = vxpose.xlu0.b32.cont [4/16] %v82, 128
    %5635 = vxpose.xlu0.b32.cont [5/16] 0.0, 128
    %5636 = vxpose.xlu0.b32.cont [6/16] 0.0, 128
    %5637 = vxpose.xlu0.b32.cont [7/16] 0.0, 128
    %5638 = vxpose.xlu0.b32.cont [8/16] 0.0, 128
    %5639 = vxpose.xlu0.b32.cont [9/16] 0.0, 128
    %5640 = vxpose.xlu0.b32.cont [10/16] 0.0, 128
    %5641 = vxpose.xlu0.b32.cont [11/16] 0.0, 128
    %5642 = vxpose.xlu0.b32.cont [12/16] 0.0, 128
    %5643 = vxpose.xlu0.b32.cont [13/16] 0.0, 128
    %5644 = vxpose.xlu0.b32.cont [14/16] 0.0, 128
    %5645 = vxpose.xlu0.b32.cont [15/16] 0.0, 128
    %5646 = vxpose.xlu0.b32.end [16/16] 0.0, 128
    %v5647 = vpop.trf.xlu0
    %v5648 = vpop.trf.xlu0
    %v5649 = vpop.trf.xlu0
    %v5650 = vpop.trf.xlu0
    %v5651 = vpop.trf.xlu0
    %v5652 = vpop.trf.xlu0
    %v5653 = vpop.trf.xlu0
    %v5654 = vpop.trf.xlu0
    %v5655 = vpop.trf.xlu0
    %v5656 = vpop.trf.xlu0
    %v5657 = vpop.trf.xlu0
    %v5658 = vpop.trf.xlu0
    %v5659 = vpop.trf.xlu0
    %v5660 = vpop.trf.xlu0
    %v5661 = vpop.trf.xlu0
    %v5662 = vpop.trf.xlu0
    %v5664 = vsel %vm5224, %v5647, 0
    %v5667 = vsel %vm5224, %v5648, 0
    %v5670 = vsel %vm5224, %v5649, 0
    %v5673 = vsel %vm5224, %v5650, 0
    %5675 = vmatpush.msra.mxu0 0.0
    %5676 = vmatpush.msra.mxu0 0.0
    %5677 = vmatpush.msra.mxu0 0.0
    %5678 = vmatpush.msra.mxu0 0.0
    %5679 = vmatpush.msra.mxu0 0.0
    %5680 = vmatpush.msra.mxu0 0.0
    %5681 = vmatpush.msra.mxu0 0.0
    %5682 = vmatpush.msra.mxu0 0.0
    %5683 = vmatpush.msra.mxu0 0.0
    %5684 = vmatpush.msra.mxu0 0.0
    %5685 = vmatpush.msra.mxu0 0.0
    %5686 = vmatpush.msra.mxu0 0.0
    %5687 = vmatpush.msra.mxu0 %v2053
    %5688 = vmatpush.msra.mxu0 %v1941
    %5689 = vmatpush.msra.mxu0 %v1829
    %5690 = vmatpush.msra.mxu0 %v1717
    %5691 = vmatmul.f32.gmra.mxu0 %v5664
    %v5692 = vpop.f32.mrf.mxu0
    %v5693 = vadd.f32 0.0, %v5692
    %5694 = vmatmul.f32.gmra.mxu0 %v5667
    %v5695 = vpop.f32.mrf.mxu0
    %v5696 = vadd.f32 0.0, %v5695
    %5697 = vmatmul.f32.gmra.mxu0 %v5670
    %v5698 = vpop.f32.mrf.mxu0
    %v5699 = vadd.f32 0.0, %v5698
    %5700 = vmatmul.f32.gmra.mxu0 %v5673
    %v5701 = vpop.f32.mrf.mxu0
    %v5702 = vadd.f32 0.0, %v5701
    %5703 = vdwg.mxu0
    %5704 = vxpose.xlu0.b32.start [1/16] %v83, 128
    %5705 = vxpose.xlu0.b32.cont [2/16] %v84, 128
    %5706 = vxpose.xlu0.b32.cont [3/16] %v85, 128
    %5707 = vxpose.xlu0.b32.cont [4/16] %v86, 128
    %5708 = vxpose.xlu0.b32.cont [5/16] 0.0, 128
    %5709 = vxpose.xlu0.b32.cont [6/16] 0.0, 128
    %5710 = vxpose.xlu0.b32.cont [7/16] 0.0, 128
    %5711 = vxpose.xlu0.b32.cont [8/16] 0.0, 128
    %5712 = vxpose.xlu0.b32.cont [9/16] 0.0, 128
    %5713 = vxpose.xlu0.b32.cont [10/16] 0.0, 128
    %5714 = vxpose.xlu0.b32.cont [11/16] 0.0, 128
    %5715 = vxpose.xlu0.b32.cont [12/16] 0.0, 128
    %5716 = vxpose.xlu0.b32.cont [13/16] 0.0, 128
    %5717 = vxpose.xlu0.b32.cont [14/16] 0.0, 128
    %5718 = vxpose.xlu0.b32.cont [15/16] 0.0, 128
    %5719 = vxpose.xlu0.b32.end [16/16] 0.0, 128
    %v5720 = vpop.trf.xlu0
    %v5721 = vpop.trf.xlu0
    %v5722 = vpop.trf.xlu0
    %v5723 = vpop.trf.xlu0
    %v5724 = vpop.trf.xlu0
    %v5725 = vpop.trf.xlu0
    %v5726 = vpop.trf.xlu0
    %v5727 = vpop.trf.xlu0
    %v5728 = vpop.trf.xlu0
    %v5729 = vpop.trf.xlu0
    %v5730 = vpop.trf.xlu0
    %v5731 = vpop.trf.xlu0
    %v5732 = vpop.trf.xlu0
    %v5733 = vpop.trf.xlu0
    %v5734 = vpop.trf.xlu0
    %v5735 = vpop.trf.xlu0
    %v5737 = vsel %vm5224, %v5720, 0
    %v5740 = vsel %vm5224, %v5721, 0
    %v5743 = vsel %vm5224, %v5722, 0
    %v5746 = vsel %vm5224, %v5723, 0
    %5748 = vmatpush.msra.mxu0 0.0
    %5749 = vmatpush.msra.mxu0 0.0
    %5750 = vmatpush.msra.mxu0 0.0
    %5751 = vmatpush.msra.mxu0 0.0
    %5752 = vmatpush.msra.mxu0 0.0
    %5753 = vmatpush.msra.mxu0 0.0
    %5754 = vmatpush.msra.mxu0 0.0
    %5755 = vmatpush.msra.mxu0 0.0
    %5756 = vmatpush.msra.mxu0 0.0
    %5757 = vmatpush.msra.mxu0 0.0
    %5758 = vmatpush.msra.mxu0 0.0
    %5759 = vmatpush.msra.mxu0 0.0
    %5760 = vmatpush.msra.mxu0 %v2055
    %5761 = vmatpush.msra.mxu0 %v1943
    %5762 = vmatpush.msra.mxu0 %v1831
    %5763 = vmatpush.msra.mxu0 %v1719
    %5764 = vmatmul.f32.gmra.mxu0 %v5737
    %v5765 = vpop.f32.mrf.mxu0
    %v5766 = vadd.f32 0.0, %v5765
    %5767 = vmatmul.f32.gmra.mxu0 %v5740
    %v5768 = vpop.f32.mrf.mxu0
    %v5769 = vadd.f32 0.0, %v5768
    %5770 = vmatmul.f32.gmra.mxu0 %v5743
    %v5771 = vpop.f32.mrf.mxu0
    %v5772 = vadd.f32 0.0, %v5771
    %5773 = vmatmul.f32.gmra.mxu0 %v5746
    %v5774 = vpop.f32.mrf.mxu0
    %v5775 = vadd.f32 0.0, %v5774
    %5776 = vdwg.mxu0
    %5777 = vxpose.xlu0.b32.start [1/16] %v87, 128
    %5778 = vxpose.xlu0.b32.cont [2/16] %v88, 128
    %5779 = vxpose.xlu0.b32.cont [3/16] %v89, 128
    %5780 = vxpose.xlu0.b32.cont [4/16] %v90, 128
    %5781 = vxpose.xlu0.b32.cont [5/16] 0.0, 128
    %5782 = vxpose.xlu0.b32.cont [6/16] 0.0, 128
    %5783 = vxpose.xlu0.b32.cont [7/16] 0.0, 128
    %5784 = vxpose.xlu0.b32.cont [8/16] 0.0, 128
    %5785 = vxpose.xlu0.b32.cont [9/16] 0.0, 128
    %5786 = vxpose.xlu0.b32.cont [10/16] 0.0, 128
    %5787 = vxpose.xlu0.b32.cont [11/16] 0.0, 128
    %5788 = vxpose.xlu0.b32.cont [12/16] 0.0, 128
    %5789 = vxpose.xlu0.b32.cont [13/16] 0.0, 128
    %5790 = vxpose.xlu0.b32.cont [14/16] 0.0, 128
    %5791 = vxpose.xlu0.b32.cont [15/16] 0.0, 128
    %5792 = vxpose.xlu0.b32.end [16/16] 0.0, 128
    %v5793 = vpop.trf.xlu0
    %v5794 = vpop.trf.xlu0
    %v5795 = vpop.trf.xlu0
    %v5796 = vpop.trf.xlu0
    %v5797 = vpop.trf.xlu0
    %v5798 = vpop.trf.xlu0
    %v5799 = vpop.trf.xlu0
    %v5800 = vpop.trf.xlu0
    %v5801 = vpop.trf.xlu0
    %v5802 = vpop.trf.xlu0
    %v5803 = vpop.trf.xlu0
    %v5804 = vpop.trf.xlu0
    %v5805 = vpop.trf.xlu0
    %v5806 = vpop.trf.xlu0
    %v5807 = vpop.trf.xlu0
    %v5808 = vpop.trf.xlu0
    %v5810 = vsel %vm5224, %v5793, 0
    %v5813 = vsel %vm5224, %v5794, 0
    %v5816 = vsel %vm5224, %v5795, 0
    %v5819 = vsel %vm5224, %v5796, 0
    %5821 = vmatpush.msra.mxu0 0.0
    %5822 = vmatpush.msra.mxu0 0.0
    %5823 = vmatpush.msra.mxu0 0.0
    %5824 = vmatpush.msra.mxu0 0.0
    %5825 = vmatpush.msra.mxu0 0.0
    %5826 = vmatpush.msra.mxu0 0.0
    %5827 = vmatpush.msra.mxu0 0.0
    %5828 = vmatpush.msra.mxu0 0.0
    %5829 = vmatpush.msra.mxu0 0.0
    %5830 = vmatpush.msra.mxu0 0.0
    %5831 = vmatpush.msra.mxu0 0.0
    %5832 = vmatpush.msra.mxu0 0.0
    %5833 = vmatpush.msra.mxu0 %v2489
    %5834 = vmatpush.msra.mxu0 %v2377
    %5835 = vmatpush.msra.mxu0 %v2265
    %5836 = vmatpush.msra.mxu0 %v2153
    %5837 = vmatmul.f32.gmra.mxu0 %v5810
    %v5838 = vpop.f32.mrf.mxu0
    %v5839 = vadd.f32 0.0, %v5838
    %5840 = vmatmul.f32.gmra.mxu0 %v5813
    %v5841 = vpop.f32.mrf.mxu0
    %v5842 = vadd.f32 0.0, %v5841
    %5843 = vmatmul.f32.gmra.mxu0 %v5816
    %v5844 = vpop.f32.mrf.mxu0
    %v5845 = vadd.f32 0.0, %v5844
    %5846 = vmatmul.f32.gmra.mxu0 %v5819
    %v5847 = vpop.f32.mrf.mxu0
    %v5848 = vadd.f32 0.0, %v5847
    %5849 = vdwg.mxu0
    %5850 = vxpose.xlu0.b32.start [1/16] %v91, 128
    %5851 = vxpose.xlu0.b32.cont [2/16] %v92, 128
    %5852 = vxpose.xlu0.b32.cont [3/16] %v93, 128
    %5853 = vxpose.xlu0.b32.cont [4/16] %v94, 128
    %5854 = vxpose.xlu0.b32.cont [5/16] 0.0, 128
    %5855 = vxpose.xlu0.b32.cont [6/16] 0.0, 128
    %5856 = vxpose.xlu0.b32.cont [7/16] 0.0, 128
    %5857 = vxpose.xlu0.b32.cont [8/16] 0.0, 128
    %5858 = vxpose.xlu0.b32.cont [9/16] 0.0, 128
    %5859 = vxpose.xlu0.b32.cont [10/16] 0.0, 128
    %5860 = vxpose.xlu0.b32.cont [11/16] 0.0, 128
    %5861 = vxpose.xlu0.b32.cont [12/16] 0.0, 128
    %5862 = vxpose.xlu0.b32.cont [13/16] 0.0, 128
    %5863 = vxpose.xlu0.b32.cont [14/16] 0.0, 128
    %5864 = vxpose.xlu0.b32.cont [15/16] 0.0, 128
    %5865 = vxpose.xlu0.b32.end [16/16] 0.0, 128
    %v5866 = vpop.trf.xlu0
    %v5867 = vpop.trf.xlu0
    %v5868 = vpop.trf.xlu0
    %v5869 = vpop.trf.xlu0
    %v5870 = vpop.trf.xlu0
    %v5871 = vpop.trf.xlu0
    %v5872 = vpop.trf.xlu0
    %v5873 = vpop.trf.xlu0
    %v5874 = vpop.trf.xlu0
    %v5875 = vpop.trf.xlu0
    %v5876 = vpop.trf.xlu0
    %v5877 = vpop.trf.xlu0
    %v5878 = vpop.trf.xlu0
    %v5879 = vpop.trf.xlu0
    %v5880 = vpop.trf.xlu0
    %v5881 = vpop.trf.xlu0
    %v5883 = vsel %vm5224, %v5866, 0
    %v5886 = vsel %vm5224, %v5867, 0
    %v5889 = vsel %vm5224, %v5868, 0
    %v5892 = vsel %vm5224, %v5869, 0
    %5894 = vmatpush.msra.mxu0 0.0
    %5895 = vmatpush.msra.mxu0 0.0
    %5896 = vmatpush.msra.mxu0 0.0
    %5897 = vmatpush.msra.mxu0 0.0
    %5898 = vmatpush.msra.mxu0 0.0
    %5899 = vmatpush.msra.mxu0 0.0
    %5900 = vmatpush.msra.mxu0 0.0
    %5901 = vmatpush.msra.mxu0 0.0
    %5902 = vmatpush.msra.mxu0 0.0
    %5903 = vmatpush.msra.mxu0 0.0
    %5904 = vmatpush.msra.mxu0 0.0
    %5905 = vmatpush.msra.mxu0 0.0
    %5906 = vmatpush.msra.mxu0 %v2491
    %5907 = vmatpush.msra.mxu0 %v2379
    %5908 = vmatpush.msra.mxu0 %v2267
    %5909 = vmatpush.msra.mxu0 %v2155
    %5910 = vmatmul.f32.gmra.mxu0 %v5883
    %v5911 = vpop.f32.mrf.mxu0
    %v5912 = vadd.f32 0.0, %v5911
    %5913 = vmatmul.f32.gmra.mxu0 %v5886
    %v5914 = vpop.f32.mrf.mxu0
    %v5915 = vadd.f32 0.0, %v5914
    %5916 = vmatmul.f32.gmra.mxu0 %v5889
    %v5917 = vpop.f32.mrf.mxu0
    %v5918 = vadd.f32 0.0, %v5917
    %5919 = vmatmul.f32.gmra.mxu0 %v5892
    %v5920 = vpop.f32.mrf.mxu0
    %v5921 = vadd.f32 0.0, %v5920
    %5922 = vdwg.mxu0
    %5923 = vxpose.xlu0.b32.start [1/16] %v95, 128
    %5924 = vxpose.xlu0.b32.cont [2/16] %v96, 128
    %5925 = vxpose.xlu0.b32.cont [3/16] %v97, 128
    %5926 = vxpose.xlu0.b32.cont [4/16] %v98, 128
    %5927 = vxpose.xlu0.b32.cont [5/16] 0.0, 128
    %5928 = vxpose.xlu0.b32.cont [6/16] 0.0, 128
    %5929 = vxpose.xlu0.b32.cont [7/16] 0.0, 128
    %5930 = vxpose.xlu0.b32.cont [8/16] 0.0, 128
    %5931 = vxpose.xlu0.b32.cont [9/16] 0.0, 128
    %5932 = vxpose.xlu0.b32.cont [10/16] 0.0, 128
    %5933 = vxpose.xlu0.b32.cont [11/16] 0.0, 128
    %5934 = vxpose.xlu0.b32.cont [12/16] 0.0, 128
    %5935 = vxpose.xlu0.b32.cont [13/16] 0.0, 128
    %5936 = vxpose.xlu0.b32.cont [14/16] 0.0, 128
    %5937 = vxpose.xlu0.b32.cont [15/16] 0.0, 128
    %5938 = vxpose.xlu0.b32.end [16/16] 0.0, 128
    %v5939 = vpop.trf.xlu0
    %v5940 = vpop.trf.xlu0
    %v5941 = vpop.trf.xlu0
    %v5942 = vpop.trf.xlu0
    %v5943 = vpop.trf.xlu0
    %v5944 = vpop.trf.xlu0
    %v5945 = vpop.trf.xlu0
    %v5946 = vpop.trf.xlu0
    %v5947 = vpop.trf.xlu0
    %v5948 = vpop.trf.xlu0
    %v5949 = vpop.trf.xlu0
    %v5950 = vpop.trf.xlu0
    %v5951 = vpop.trf.xlu0
    %v5952 = vpop.trf.xlu0
    %v5953 = vpop.trf.xlu0
    %v5954 = vpop.trf.xlu0
    %v5956 = vsel %vm5224, %v5939, 0
    %v5959 = vsel %vm5224, %v5940, 0
    %v5962 = vsel %vm5224, %v5941, 0
    %v5965 = vsel %vm5224, %v5942, 0
    %5967 = vmatpush.msra.mxu0 0.0
    %5968 = vmatpush.msra.mxu0 0.0
    %5969 = vmatpush.msra.mxu0 0.0
    %5970 = vmatpush.msra.mxu0 0.0
    %5971 = vmatpush.msra.mxu0 0.0
    %5972 = vmatpush.msra.mxu0 0.0
    %5973 = vmatpush.msra.mxu0 0.0
    %5974 = vmatpush.msra.mxu0 0.0
    %5975 = vmatpush.msra.mxu0 0.0
    %5976 = vmatpush.msra.mxu0 0.0
    %5977 = vmatpush.msra.mxu0 0.0
    %5978 = vmatpush.msra.mxu0 0.0
    %5979 = vmatpush.msra.mxu0 %v2493
    %5980 = vmatpush.msra.mxu0 %v2381
    %5981 = vmatpush.msra.mxu0 %v2269
    %5982 = vmatpush.msra.mxu0 %v2157
    %5983 = vmatmul.f32.gmra.mxu0 %v5956
    %v5984 = vpop.f32.mrf.mxu0
    %v5985 = vadd.f32 0.0, %v5984
    %5986 = vmatmul.f32.gmra.mxu0 %v5959
    %v5987 = vpop.f32.mrf.mxu0
    %v5988 = vadd.f32 0.0, %v5987
    %5989 = vmatmul.f32.gmra.mxu0 %v5962
    %v5990 = vpop.f32.mrf.mxu0
    %v5991 = vadd.f32 0.0, %v5990
    %5992 = vmatmul.f32.gmra.mxu0 %v5965
    %v5993 = vpop.f32.mrf.mxu0
    %v5994 = vadd.f32 0.0, %v5993
    %5995 = vdwg.mxu0
    %5996 = vxpose.xlu0.b32.start [1/16] %v99, 128
    %5997 = vxpose.xlu0.b32.cont [2/16] %v100, 128
    %5998 = vxpose.xlu0.b32.cont [3/16] %v101, 128
    %5999 = vxpose.xlu0.b32.cont [4/16] %v102, 128
    %6000 = vxpose.xlu0.b32.cont [5/16] 0.0, 128
    %6001 = vxpose.xlu0.b32.cont [6/16] 0.0, 128
    %6002 = vxpose.xlu0.b32.cont [7/16] 0.0, 128
    %6003 = vxpose.xlu0.b32.cont [8/16] 0.0, 128
    %6004 = vxpose.xlu0.b32.cont [9/16] 0.0, 128
    %6005 = vxpose.xlu0.b32.cont [10/16] 0.0, 128
    %6006 = vxpose.xlu0.b32.cont [11/16] 0.0, 128
    %6007 = vxpose.xlu0.b32.cont [12/16] 0.0, 128
    %6008 = vxpose.xlu0.b32.cont [13/16] 0.0, 128
    %6009 = vxpose.xlu0.b32.cont [14/16] 0.0, 128
    %6010 = vxpose.xlu0.b32.cont [15/16] 0.0, 128
    %6011 = vxpose.xlu0.b32.end [16/16] 0.0, 128
    %v6012 = vpop.trf.xlu0
    %v6013 = vpop.trf.xlu0
    %v6014 = vpop.trf.xlu0
    %v6015 = vpop.trf.xlu0
    %v6016 = vpop.trf.xlu0
    %v6017 = vpop.trf.xlu0
    %v6018 = vpop.trf.xlu0
    %v6019 = vpop.trf.xlu0
    %v6020 = vpop.trf.xlu0
    %v6021 = vpop.trf.xlu0
    %v6022 = vpop.trf.xlu0
    %v6023 = vpop.trf.xlu0
    %v6024 = vpop.trf.xlu0
    %v6025 = vpop.trf.xlu0
    %v6026 = vpop.trf.xlu0
    %v6027 = vpop.trf.xlu0
    %v6029 = vsel %vm5224, %v6012, 0
    %v6032 = vsel %vm5224, %v6013, 0
    %v6035 = vsel %vm5224, %v6014, 0
    %v6038 = vsel %vm5224, %v6015, 0
    %6040 = vmatpush.msra.mxu0 0.0
    %6041 = vmatpush.msra.mxu0 0.0
    %6042 = vmatpush.msra.mxu0 0.0
    %6043 = vmatpush.msra.mxu0 0.0
    %6044 = vmatpush.msra.mxu0 0.0
    %6045 = vmatpush.msra.mxu0 0.0
    %6046 = vmatpush.msra.mxu0 0.0
    %6047 = vmatpush.msra.mxu0 0.0
    %6048 = vmatpush.msra.mxu0 0.0
    %6049 = vmatpush.msra.mxu0 0.0
    %6050 = vmatpush.msra.mxu0 0.0
    %6051 = vmatpush.msra.mxu0 0.0
    %6052 = vmatpush.msra.mxu0 %v2495
    %6053 = vmatpush.msra.mxu0 %v2383
    %6054 = vmatpush.msra.mxu0 %v2271
    %6055 = vmatpush.msra.mxu0 %v2159
    %6056 = vmatmul.f32.gmra.mxu0 %v6029
    %v6057 = vpop.f32.mrf.mxu0
    %v6058 = vadd.f32 0.0, %v6057
    %6059 = vmatmul.f32.gmra.mxu0 %v6032
    %v6060 = vpop.f32.mrf.mxu0
    %v6061 = vadd.f32 0.0, %v6060
    %6062 = vmatmul.f32.gmra.mxu0 %v6035
    %v6063 = vpop.f32.mrf.mxu0
    %v6064 = vadd.f32 0.0, %v6063
    %6065 = vmatmul.f32.gmra.mxu0 %v6038
    %v6066 = vpop.f32.mrf.mxu0
    %v6067 = vadd.f32 0.0, %v6066
    %6068 = vdwg.mxu0
    %6069 = vxpose.xlu0.b32.start [1/16] %v103, 128
    %6070 = vxpose.xlu0.b32.cont [2/16] %v104, 128
    %6071 = vxpose.xlu0.b32.cont [3/16] %v105, 128
    %6072 = vxpose.xlu0.b32.cont [4/16] %v106, 128
    %6073 = vxpose.xlu0.b32.cont [5/16] 0.0, 128
    %6074 = vxpose.xlu0.b32.cont [6/16] 0.0, 128
    %6075 = vxpose.xlu0.b32.cont [7/16] 0.0, 128
    %6076 = vxpose.xlu0.b32.cont [8/16] 0.0, 128
    %6077 = vxpose.xlu0.b32.cont [9/16] 0.0, 128
    %6078 = vxpose.xlu0.b32.cont [10/16] 0.0, 128
    %6079 = vxpose.xlu0.b32.cont [11/16] 0.0, 128
    %6080 = vxpose.xlu0.b32.cont [12/16] 0.0, 128
    %6081 = vxpose.xlu0.b32.cont [13/16] 0.0, 128
    %6082 = vxpose.xlu0.b32.cont [14/16] 0.0, 128
    %6083 = vxpose.xlu0.b32.cont [15/16] 0.0, 128
    %6084 = vxpose.xlu0.b32.end [16/16] 0.0, 128
    %v6085 = vpop.trf.xlu0
    %v6086 = vpop.trf.xlu0
    %v6087 = vpop.trf.xlu0
    %v6088 = vpop.trf.xlu0
    %v6089 = vpop.trf.xlu0
    %v6090 = vpop.trf.xlu0
    %v6091 = vpop.trf.xlu0
    %v6092 = vpop.trf.xlu0
    %v6093 = vpop.trf.xlu0
    %v6094 = vpop.trf.xlu0
    %v6095 = vpop.trf.xlu0
    %v6096 = vpop.trf.xlu0
    %v6097 = vpop.trf.xlu0
    %v6098 = vpop.trf.xlu0
    %v6099 = vpop.trf.xlu0
    %v6100 = vpop.trf.xlu0
    %v6102 = vsel %vm5224, %v6085, 0
    %v6105 = vsel %vm5224, %v6086, 0
    %v6108 = vsel %vm5224, %v6087, 0
    %v6111 = vsel %vm5224, %v6088, 0
    %6113 = vmatpush.msra.mxu0 0.0
    %6114 = vmatpush.msra.mxu0 0.0
    %6115 = vmatpush.msra.mxu0 0.0
    %6116 = vmatpush.msra.mxu0 0.0
    %6117 = vmatpush.msra.mxu0 0.0
    %6118 = vmatpush.msra.mxu0 0.0
    %6119 = vmatpush.msra.mxu0 0.0
    %6120 = vmatpush.msra.mxu0 0.0
    %6121 = vmatpush.msra.mxu0 0.0
    %6122 = vmatpush.msra.mxu0 0.0
    %6123 = vmatpush.msra.mxu0 0.0
    %6124 = vmatpush.msra.mxu0 0.0
    %6125 = vmatpush.msra.mxu0 %v2497
    %6126 = vmatpush.msra.mxu0 %v2385
    %6127 = vmatpush.msra.mxu0 %v2273
    %6128 = vmatpush.msra.mxu0 %v2161
    %6129 = vmatmul.f32.gmra.mxu0 %v6102
    %v6130 = vpop.f32.mrf.mxu0
    %v6131 = vadd.f32 0.0, %v6130
    %6132 = vmatmul.f32.gmra.mxu0 %v6105
    %v6133 = vpop.f32.mrf.mxu0
    %v6134 = vadd.f32 0.0, %v6133
    %6135 = vmatmul.f32.gmra.mxu0 %v6108
    %v6136 = vpop.f32.mrf.mxu0
    %v6137 = vadd.f32 0.0, %v6136
    %6138 = vmatmul.f32.gmra.mxu0 %v6111
    %v6139 = vpop.f32.mrf.mxu0
    %v6140 = vadd.f32 0.0, %v6139
    %6141 = vdwg.mxu0
    %6142 = vxpose.xlu0.b32.start [1/16] %v107, 128
    %6143 = vxpose.xlu0.b32.cont [2/16] %v108, 128
    %6144 = vxpose.xlu0.b32.cont [3/16] %v109, 128
    %6145 = vxpose.xlu0.b32.cont [4/16] %v110, 128
    %6146 = vxpose.xlu0.b32.cont [5/16] 0.0, 128
    %6147 = vxpose.xlu0.b32.cont [6/16] 0.0, 128
    %6148 = vxpose.xlu0.b32.cont [7/16] 0.0, 128
    %6149 = vxpose.xlu0.b32.cont [8/16] 0.0, 128
    %6150 = vxpose.xlu0.b32.cont [9/16] 0.0, 128
    %6151 = vxpose.xlu0.b32.cont [10/16] 0.0, 128
    %6152 = vxpose.xlu0.b32.cont [11/16] 0.0, 128
    %6153 = vxpose.xlu0.b32.cont [12/16] 0.0, 128
    %6154 = vxpose.xlu0.b32.cont [13/16] 0.0, 128
    %6155 = vxpose.xlu0.b32.cont [14/16] 0.0, 128
    %6156 = vxpose.xlu0.b32.cont [15/16] 0.0, 128
    %6157 = vxpose.xlu0.b32.end [16/16] 0.0, 128
    %v6158 = vpop.trf.xlu0
    %v6159 = vpop.trf.xlu0
    %v6160 = vpop.trf.xlu0
    %v6161 = vpop.trf.xlu0
    %v6162 = vpop.trf.xlu0
    %v6163 = vpop.trf.xlu0
    %v6164 = vpop.trf.xlu0
    %v6165 = vpop.trf.xlu0
    %v6166 = vpop.trf.xlu0
    %v6167 = vpop.trf.xlu0
    %v6168 = vpop.trf.xlu0
    %v6169 = vpop.trf.xlu0
    %v6170 = vpop.trf.xlu0
    %v6171 = vpop.trf.xlu0
    %v6172 = vpop.trf.xlu0
    %v6173 = vpop.trf.xlu0
    %v6175 = vsel %vm5224, %v6158, 0
    %v6178 = vsel %vm5224, %v6159, 0
    %v6181 = vsel %vm5224, %v6160, 0
    %v6184 = vsel %vm5224, %v6161, 0
    %6186 = vmatpush.msra.mxu0 0.0
    %6187 = vmatpush.msra.mxu0 0.0
    %6188 = vmatpush.msra.mxu0 0.0
    %6189 = vmatpush.msra.mxu0 0.0
    %6190 = vmatpush.msra.mxu0 0.0
    %6191 = vmatpush.msra.mxu0 0.0
    %6192 = vmatpush.msra.mxu0 0.0
    %6193 = vmatpush.msra.mxu0 0.0
    %6194 = vmatpush.msra.mxu0 0.0
    %6195 = vmatpush.msra.mxu0 0.0
    %6196 = vmatpush.msra.mxu0 0.0
    %6197 = vmatpush.msra.mxu0 0.0
    %6198 = vmatpush.msra.mxu0 %v2499
    %6199 = vmatpush.msra.mxu0 %v2387
    %6200 = vmatpush.msra.mxu0 %v2275
    %6201 = vmatpush.msra.mxu0 %v2163
    %6202 = vmatmul.f32.gmra.mxu0 %v6175
    %v6203 = vpop.f32.mrf.mxu0
    %v6204 = vadd.f32 0.0, %v6203
    %6205 = vmatmul.f32.gmra.mxu0 %v6178
    %v6206 = vpop.f32.mrf.mxu0
    %v6207 = vadd.f32 0.0, %v6206
    %6208 = vmatmul.f32.gmra.mxu0 %v6181
    %v6209 = vpop.f32.mrf.mxu0
    %v6210 = vadd.f32 0.0, %v6209
    %6211 = vmatmul.f32.gmra.mxu0 %v6184
    %v6212 = vpop.f32.mrf.mxu0
    %v6213 = vadd.f32 0.0, %v6212
    %6214 = vdwg.mxu0
    %6215 = vxpose.xlu0.b32.start [1/16] %v111, 128
    %6216 = vxpose.xlu0.b32.cont [2/16] %v112, 128
    %6217 = vxpose.xlu0.b32.cont [3/16] %v113, 128
    %6218 = vxpose.xlu0.b32.cont [4/16] %v114, 128
    %6219 = vxpose.xlu0.b32.cont [5/16] 0.0, 128
    %6220 = vxpose.xlu0.b32.cont [6/16] 0.0, 128
    %6221 = vxpose.xlu0.b32.cont [7/16] 0.0, 128
    %6222 = vxpose.xlu0.b32.cont [8/16] 0.0, 128
    %6223 = vxpose.xlu0.b32.cont [9/16] 0.0, 128
    %6224 = vxpose.xlu0.b32.cont [10/16] 0.0, 128
    %6225 = vxpose.xlu0.b32.cont [11/16] 0.0, 128
    %6226 = vxpose.xlu0.b32.cont [12/16] 0.0, 128
    %6227 = vxpose.xlu0.b32.cont [13/16] 0.0, 128
    %6228 = vxpose.xlu0.b32.cont [14/16] 0.0, 128
    %6229 = vxpose.xlu0.b32.cont [15/16] 0.0, 128
    %6230 = vxpose.xlu0.b32.end [16/16] 0.0, 128
    %v6231 = vpop.trf.xlu0
    %v6232 = vpop.trf.xlu0
    %v6233 = vpop.trf.xlu0
    %v6234 = vpop.trf.xlu0
    %v6235 = vpop.trf.xlu0
    %v6236 = vpop.trf.xlu0
    %v6237 = vpop.trf.xlu0
    %v6238 = vpop.trf.xlu0
    %v6239 = vpop.trf.xlu0
    %v6240 = vpop.trf.xlu0
    %v6241 = vpop.trf.xlu0
    %v6242 = vpop.trf.xlu0
    %v6243 = vpop.trf.xlu0
    %v6244 = vpop.trf.xlu0
    %v6245 = vpop.trf.xlu0
    %v6246 = vpop.trf.xlu0
    %v6248 = vsel %vm5224, %v6231, 0
    %v6251 = vsel %vm5224, %v6232, 0
    %v6254 = vsel %vm5224, %v6233, 0
    %v6257 = vsel %vm5224, %v6234, 0
    %6259 = vmatpush.msra.mxu0 0.0
    %6260 = vmatpush.msra.mxu0 0.0
    %6261 = vmatpush.msra.mxu0 0.0
    %6262 = vmatpush.msra.mxu0 0.0
    %6263 = vmatpush.msra.mxu0 0.0
    %6264 = vmatpush.msra.mxu0 0.0
    %6265 = vmatpush.msra.mxu0 0.0
    %6266 = vmatpush.msra.mxu0 0.0
    %6267 = vmatpush.msra.mxu0 0.0
    %6268 = vmatpush.msra.mxu0 0.0
    %6269 = vmatpush.msra.mxu0 0.0
    %6270 = vmatpush.msra.mxu0 0.0
    %6271 = vmatpush.msra.mxu0 %v2501
    %6272 = vmatpush.msra.mxu0 %v2389
    %6273 = vmatpush.msra.mxu0 %v2277
    %6274 = vmatpush.msra.mxu0 %v2165
    %6275 = vmatmul.f32.gmra.mxu0 %v6248
    %v6276 = vpop.f32.mrf.mxu0
    %v6277 = vadd.f32 0.0, %v6276
    %6278 = vmatmul.f32.gmra.mxu0 %v6251
    %v6279 = vpop.f32.mrf.mxu0
    %v6280 = vadd.f32 0.0, %v6279
    %6281 = vmatmul.f32.gmra.mxu0 %v6254
    %v6282 = vpop.f32.mrf.mxu0
    %v6283 = vadd.f32 0.0, %v6282
    %6284 = vmatmul.f32.gmra.mxu0 %v6257
    %v6285 = vpop.f32.mrf.mxu0
    %v6286 = vadd.f32 0.0, %v6285
    %6287 = vdwg.mxu0
    %6288 = vxpose.xlu0.b32.start [1/16] %v115, 128
    %6289 = vxpose.xlu0.b32.cont [2/16] %v116, 128
    %6290 = vxpose.xlu0.b32.cont [3/16] %v117, 128
    %6291 = vxpose.xlu0.b32.cont [4/16] %v118, 128
    %6292 = vxpose.xlu0.b32.cont [5/16] 0.0, 128
    %6293 = vxpose.xlu0.b32.cont [6/16] 0.0, 128
    %6294 = vxpose.xlu0.b32.cont [7/16] 0.0, 128
    %6295 = vxpose.xlu0.b32.cont [8/16] 0.0, 128
    %6296 = vxpose.xlu0.b32.cont [9/16] 0.0, 128
    %6297 = vxpose.xlu0.b32.cont [10/16] 0.0, 128
    %6298 = vxpose.xlu0.b32.cont [11/16] 0.0, 128
    %6299 = vxpose.xlu0.b32.cont [12/16] 0.0, 128
    %6300 = vxpose.xlu0.b32.cont [13/16] 0.0, 128
    %6301 = vxpose.xlu0.b32.cont [14/16] 0.0, 128
    %6302 = vxpose.xlu0.b32.cont [15/16] 0.0, 128
    %6303 = vxpose.xlu0.b32.end [16/16] 0.0, 128
    %v6304 = vpop.trf.xlu0
    %v6305 = vpop.trf.xlu0
    %v6306 = vpop.trf.xlu0
    %v6307 = vpop.trf.xlu0
    %v6308 = vpop.trf.xlu0
    %v6309 = vpop.trf.xlu0
    %v6310 = vpop.trf.xlu0
    %v6311 = vpop.trf.xlu0
    %v6312 = vpop.trf.xlu0
    %v6313 = vpop.trf.xlu0
    %v6314 = vpop.trf.xlu0
    %v6315 = vpop.trf.xlu0
    %v6316 = vpop.trf.xlu0
    %v6317 = vpop.trf.xlu0
    %v6318 = vpop.trf.xlu0
    %v6319 = vpop.trf.xlu0
    %v6321 = vsel %vm5224, %v6304, 0
    %v6324 = vsel %vm5224, %v6305, 0
    %v6327 = vsel %vm5224, %v6306, 0
    %v6330 = vsel %vm5224, %v6307, 0
    %6332 = vmatpush.msra.mxu0 0.0
    %6333 = vmatpush.msra.mxu0 0.0
    %6334 = vmatpush.msra.mxu0 0.0
    %6335 = vmatpush.msra.mxu0 0.0
    %6336 = vmatpush.msra.mxu0 0.0
    %6337 = vmatpush.msra.mxu0 0.0
    %6338 = vmatpush.msra.mxu0 0.0
    %6339 = vmatpush.msra.mxu0 0.0
    %6340 = vmatpush.msra.mxu0 0.0
    %6341 = vmatpush.msra.mxu0 0.0
    %6342 = vmatpush.msra.mxu0 0.0
    %6343 = vmatpush.msra.mxu0 0.0
    %6344 = vmatpush.msra.mxu0 %v2503
    %6345 = vmatpush.msra.mxu0 %v2391
    %6346 = vmatpush.msra.mxu0 %v2279
    %6347 = vmatpush.msra.mxu0 %v2167
    %6348 = vmatmul.f32.gmra.mxu0 %v6321
    %v6349 = vpop.f32.mrf.mxu0
    %v6350 = vadd.f32 0.0, %v6349
    %6351 = vmatmul.f32.gmra.mxu0 %v6324
    %v6352 = vpop.f32.mrf.mxu0
    %v6353 = vadd.f32 0.0, %v6352
    %6354 = vmatmul.f32.gmra.mxu0 %v6327
    %v6355 = vpop.f32.mrf.mxu0
    %v6356 = vadd.f32 0.0, %v6355
    %6357 = vmatmul.f32.gmra.mxu0 %v6330
    %v6358 = vpop.f32.mrf.mxu0
    %v6359 = vadd.f32 0.0, %v6358
    %6360 = vdwg.mxu0
    %6361 = vxpose.xlu0.b32.start [1/16] %v119, 128
    %6362 = vxpose.xlu0.b32.cont [2/16] %v120, 128
    %6363 = vxpose.xlu0.b32.cont [3/16] %v121, 128
    %6364 = vxpose.xlu0.b32.cont [4/16] %v122, 128
    %6365 = vxpose.xlu0.b32.cont [5/16] 0.0, 128
    %6366 = vxpose.xlu0.b32.cont [6/16] 0.0, 128
    %6367 = vxpose.xlu0.b32.cont [7/16] 0.0, 128
    %6368 = vxpose.xlu0.b32.cont [8/16] 0.0, 128
    %6369 = vxpose.xlu0.b32.cont [9/16] 0.0, 128
    %6370 = vxpose.xlu0.b32.cont [10/16] 0.0, 128
    %6371 = vxpose.xlu0.b32.cont [11/16] 0.0, 128
    %6372 = vxpose.xlu0.b32.cont [12/16] 0.0, 128
    %6373 = vxpose.xlu0.b32.cont [13/16] 0.0, 128
    %6374 = vxpose.xlu0.b32.cont [14/16] 0.0, 128
    %6375 = vxpose.xlu0.b32.cont [15/16] 0.0, 128
    %6376 = vxpose.xlu0.b32.end [16/16] 0.0, 128
    %v6377 = vpop.trf.xlu0
    %v6378 = vpop.trf.xlu0
    %v6379 = vpop.trf.xlu0
    %v6380 = vpop.trf.xlu0
    %v6381 = vpop.trf.xlu0
    %v6382 = vpop.trf.xlu0
    %v6383 = vpop.trf.xlu0
    %v6384 = vpop.trf.xlu0
    %v6385 = vpop.trf.xlu0
    %v6386 = vpop.trf.xlu0
    %v6387 = vpop.trf.xlu0
    %v6388 = vpop.trf.xlu0
    %v6389 = vpop.trf.xlu0
    %v6390 = vpop.trf.xlu0
    %v6391 = vpop.trf.xlu0
    %v6392 = vpop.trf.xlu0
    %v6394 = vsel %vm5224, %v6377, 0
    %v6397 = vsel %vm5224, %v6378, 0
    %v6400 = vsel %vm5224, %v6379, 0
    %v6403 = vsel %vm5224, %v6380, 0
    %6405 = vmatpush.msra.mxu0 0.0
    %6406 = vmatpush.msra.mxu0 0.0
    %6407 = vmatpush.msra.mxu0 0.0
    %6408 = vmatpush.msra.mxu0 0.0
    %6409 = vmatpush.msra.mxu0 0.0
    %6410 = vmatpush.msra.mxu0 0.0
    %6411 = vmatpush.msra.mxu0 0.0
    %6412 = vmatpush.msra.mxu0 0.0
    %6413 = vmatpush.msra.mxu0 0.0
    %6414 = vmatpush.msra.mxu0 0.0
    %6415 = vmatpush.msra.mxu0 0.0
    %6416 = vmatpush.msra.mxu0 0.0
    %6417 = vmatpush.msra.mxu0 %v2937
    %6418 = vmatpush.msra.mxu0 %v2825
    %6419 = vmatpush.msra.mxu0 %v2713
    %6420 = vmatpush.msra.mxu0 %v2601
    %6421 = vmatmul.f32.gmra.mxu0 %v6394
    %v6422 = vpop.f32.mrf.mxu0
    %v6423 = vadd.f32 0.0, %v6422
    %6424 = vmatmul.f32.gmra.mxu0 %v6397
    %v6425 = vpop.f32.mrf.mxu0
    %v6426 = vadd.f32 0.0, %v6425
    %6427 = vmatmul.f32.gmra.mxu0 %v6400
    %v6428 = vpop.f32.mrf.mxu0
    %v6429 = vadd.f32 0.0, %v6428
    %6430 = vmatmul.f32.gmra.mxu0 %v6403
    %v6431 = vpop.f32.mrf.mxu0
    %v6432 = vadd.f32 0.0, %v6431
    %6433 = vdwg.mxu0
    %6434 = vxpose.xlu0.b32.start [1/16] %v123, 128
    %6435 = vxpose.xlu0.b32.cont [2/16] %v124, 128
    %6436 = vxpose.xlu0.b32.cont [3/16] %v125, 128
    %6437 = vxpose.xlu0.b32.cont [4/16] %v126, 128
    %6438 = vxpose.xlu0.b32.cont [5/16] 0.0, 128
    %6439 = vxpose.xlu0.b32.cont [6/16] 0.0, 128
    %6440 = vxpose.xlu0.b32.cont [7/16] 0.0, 128
    %6441 = vxpose.xlu0.b32.cont [8/16] 0.0, 128
    %6442 = vxpose.xlu0.b32.cont [9/16] 0.0, 128
    %6443 = vxpose.xlu0.b32.cont [10/16] 0.0, 128
    %6444 = vxpose.xlu0.b32.cont [11/16] 0.0, 128
    %6445 = vxpose.xlu0.b32.cont [12/16] 0.0, 128
    %6446 = vxpose.xlu0.b32.cont [13/16] 0.0, 128
    %6447 = vxpose.xlu0.b32.cont [14/16] 0.0, 128
    %6448 = vxpose.xlu0.b32.cont [15/16] 0.0, 128
    %6449 = vxpose.xlu0.b32.end [16/16] 0.0, 128
    %v6450 = vpop.trf.xlu0
    %v6451 = vpop.trf.xlu0
    %v6452 = vpop.trf.xlu0
    %v6453 = vpop.trf.xlu0
    %v6454 = vpop.trf.xlu0
    %v6455 = vpop.trf.xlu0
    %v6456 = vpop.trf.xlu0
    %v6457 = vpop.trf.xlu0
    %v6458 = vpop.trf.xlu0
    %v6459 = vpop.trf.xlu0
    %v6460 = vpop.trf.xlu0
    %v6461 = vpop.trf.xlu0
    %v6462 = vpop.trf.xlu0
    %v6463 = vpop.trf.xlu0
    %v6464 = vpop.trf.xlu0
    %v6465 = vpop.trf.xlu0
    %v6467 = vsel %vm5224, %v6450, 0
    %v6470 = vsel %vm5224, %v6451, 0
    %v6473 = vsel %vm5224, %v6452, 0
    %v6476 = vsel %vm5224, %v6453, 0
    %6478 = vmatpush.msra.mxu0 0.0
    %6479 = vmatpush.msra.mxu0 0.0
    %6480 = vmatpush.msra.mxu0 0.0
    %6481 = vmatpush.msra.mxu0 0.0
    %6482 = vmatpush.msra.mxu0 0.0
    %6483 = vmatpush.msra.mxu0 0.0
    %6484 = vmatpush.msra.mxu0 0.0
    %6485 = vmatpush.msra.mxu0 0.0
    %6486 = vmatpush.msra.mxu0 0.0
    %6487 = vmatpush.msra.mxu0 0.0
    %6488 = vmatpush.msra.mxu0 0.0
    %6489 = vmatpush.msra.mxu0 0.0
    %6490 = vmatpush.msra.mxu0 %v2939
    %6491 = vmatpush.msra.mxu0 %v2827
    %6492 = vmatpush.msra.mxu0 %v2715
    %6493 = vmatpush.msra.mxu0 %v2603
    %6494 = vmatmul.f32.gmra.mxu0 %v6467
    %v6495 = vpop.f32.mrf.mxu0
    %v6496 = vadd.f32 0.0, %v6495
    %6497 = vmatmul.f32.gmra.mxu0 %v6470
    %v6498 = vpop.f32.mrf.mxu0
    %v6499 = vadd.f32 0.0, %v6498
    %6500 = vmatmul.f32.gmra.mxu0 %v6473
    %v6501 = vpop.f32.mrf.mxu0
    %v6502 = vadd.f32 0.0, %v6501
    %6503 = vmatmul.f32.gmra.mxu0 %v6476
    %v6504 = vpop.f32.mrf.mxu0
    %v6505 = vadd.f32 0.0, %v6504
    %6506 = vdwg.mxu0
    %6507 = vxpose.xlu0.b32.start [1/16] %v127, 128
    %6508 = vxpose.xlu0.b32.cont [2/16] %v128, 128
    %6509 = vxpose.xlu0.b32.cont [3/16] %v129, 128
    %6510 = vxpose.xlu0.b32.cont [4/16] %v130, 128
    %6511 = vxpose.xlu0.b32.cont [5/16] 0.0, 128
    %6512 = vxpose.xlu0.b32.cont [6/16] 0.0, 128
    %6513 = vxpose.xlu0.b32.cont [7/16] 0.0, 128
    %6514 = vxpose.xlu0.b32.cont [8/16] 0.0, 128
    %6515 = vxpose.xlu0.b32.cont [9/16] 0.0, 128
    %6516 = vxpose.xlu0.b32.cont [10/16] 0.0, 128
    %6517 = vxpose.xlu0.b32.cont [11/16] 0.0, 128
    %6518 = vxpose.xlu0.b32.cont [12/16] 0.0, 128
    %6519 = vxpose.xlu0.b32.cont [13/16] 0.0, 128
    %6520 = vxpose.xlu0.b32.cont [14/16] 0.0, 128
    %6521 = vxpose.xlu0.b32.cont [15/16] 0.0, 128
    %6522 = vxpose.xlu0.b32.end [16/16] 0.0, 128
    %v6523 = vpop.trf.xlu0
    %v6524 = vpop.trf.xlu0
    %v6525 = vpop.trf.xlu0
    %v6526 = vpop.trf.xlu0
    %v6527 = vpop.trf.xlu0
    %v6528 = vpop.trf.xlu0
    %v6529 = vpop.trf.xlu0
    %v6530 = vpop.trf.xlu0
    %v6531 = vpop.trf.xlu0
    %v6532 = vpop.trf.xlu0
    %v6533 = vpop.trf.xlu0
    %v6534 = vpop.trf.xlu0
    %v6535 = vpop.trf.xlu0
    %v6536 = vpop.trf.xlu0
    %v6537 = vpop.trf.xlu0
    %v6538 = vpop.trf.xlu0
    %v6540 = vsel %vm5224, %v6523, 0
    %v6543 = vsel %vm5224, %v6524, 0
    %v6546 = vsel %vm5224, %v6525, 0
    %v6549 = vsel %vm5224, %v6526, 0
    %6551 = vmatpush.msra.mxu0 0.0
    %6552 = vmatpush.msra.mxu0 0.0
    %6553 = vmatpush.msra.mxu0 0.0
    %6554 = vmatpush.msra.mxu0 0.0
    %6555 = vmatpush.msra.mxu0 0.0
    %6556 = vmatpush.msra.mxu0 0.0
    %6557 = vmatpush.msra.mxu0 0.0
    %6558 = vmatpush.msra.mxu0 0.0
    %6559 = vmatpush.msra.mxu0 0.0
    %6560 = vmatpush.msra.mxu0 0.0
    %6561 = vmatpush.msra.mxu0 0.0
    %6562 = vmatpush.msra.mxu0 0.0
    %6563 = vmatpush.msra.mxu0 %v2941
    %6564 = vmatpush.msra.mxu0 %v2829
    %6565 = vmatpush.msra.mxu0 %v2717
    %6566 = vmatpush.msra.mxu0 %v2605
    %6567 = vmatmul.f32.gmra.mxu0 %v6540
    %v6568 = vpop.f32.mrf.mxu0
    %v6569 = vadd.f32 0.0, %v6568
    %6570 = vmatmul.f32.gmra.mxu0 %v6543
    %v6571 = vpop.f32.mrf.mxu0
    %v6572 = vadd.f32 0.0, %v6571
    %6573 = vmatmul.f32.gmra.mxu0 %v6546
    %v6574 = vpop.f32.mrf.mxu0
    %v6575 = vadd.f32 0.0, %v6574
    %6576 = vmatmul.f32.gmra.mxu0 %v6549
    %v6577 = vpop.f32.mrf.mxu0
    %v6578 = vadd.f32 0.0, %v6577
    %6579 = vdwg.mxu0
    %6580 = vxpose.xlu0.b32.start [1/16] %v131, 128
    %6581 = vxpose.xlu0.b32.cont [2/16] %v132, 128
    %6582 = vxpose.xlu0.b32.cont [3/16] %v133, 128
    %6583 = vxpose.xlu0.b32.cont [4/16] %v134, 128
    %6584 = vxpose.xlu0.b32.cont [5/16] 0.0, 128
    %6585 = vxpose.xlu0.b32.cont [6/16] 0.0, 128
    %6586 = vxpose.xlu0.b32.cont [7/16] 0.0, 128
    %6587 = vxpose.xlu0.b32.cont [8/16] 0.0, 128
    %6588 = vxpose.xlu0.b32.cont [9/16] 0.0, 128
    %6589 = vxpose.xlu0.b32.cont [10/16] 0.0, 128
    %6590 = vxpose.xlu0.b32.cont [11/16] 0.0, 128
    %6591 = vxpose.xlu0.b32.cont [12/16] 0.0, 128
    %6592 = vxpose.xlu0.b32.cont [13/16] 0.0, 128
    %6593 = vxpose.xlu0.b32.cont [14/16] 0.0, 128
    %6594 = vxpose.xlu0.b32.cont [15/16] 0.0, 128
    %6595 = vxpose.xlu0.b32.end [16/16] 0.0, 128
    %v6596 = vpop.trf.xlu0
    %v6597 = vpop.trf.xlu0
    %v6598 = vpop.trf.xlu0
    %v6599 = vpop.trf.xlu0
    %v6600 = vpop.trf.xlu0
    %v6601 = vpop.trf.xlu0
    %v6602 = vpop.trf.xlu0
    %v6603 = vpop.trf.xlu0
    %v6604 = vpop.trf.xlu0
    %v6605 = vpop.trf.xlu0
    %v6606 = vpop.trf.xlu0
    %v6607 = vpop.trf.xlu0
    %v6608 = vpop.trf.xlu0
    %v6609 = vpop.trf.xlu0
    %v6610 = vpop.trf.xlu0
    %v6611 = vpop.trf.xlu0
    %v6613 = vsel %vm5224, %v6596, 0
    %v6616 = vsel %vm5224, %v6597, 0
    %v6619 = vsel %vm5224, %v6598, 0
    %v6622 = vsel %vm5224, %v6599, 0
    %6624 = vmatpush.msra.mxu0 0.0
    %6625 = vmatpush.msra.mxu0 0.0
    %6626 = vmatpush.msra.mxu0 0.0
    %6627 = vmatpush.msra.mxu0 0.0
    %6628 = vmatpush.msra.mxu0 0.0
    %6629 = vmatpush.msra.mxu0 0.0
    %6630 = vmatpush.msra.mxu0 0.0
    %6631 = vmatpush.msra.mxu0 0.0
    %6632 = vmatpush.msra.mxu0 0.0
    %6633 = vmatpush.msra.mxu0 0.0
    %6634 = vmatpush.msra.mxu0 0.0
    %6635 = vmatpush.msra.mxu0 0.0
    %6636 = vmatpush.msra.mxu0 %v2943
    %6637 = vmatpush.msra.mxu0 %v2831
    %6638 = vmatpush.msra.mxu0 %v2719
    %6639 = vmatpush.msra.mxu0 %v2607
    %6640 = vmatmul.f32.gmra.mxu0 %v6613
    %v6641 = vpop.f32.mrf.mxu0
    %v6642 = vadd.f32 0.0, %v6641
    %6643 = vmatmul.f32.gmra.mxu0 %v6616
    %v6644 = vpop.f32.mrf.mxu0
    %v6645 = vadd.f32 0.0, %v6644
    %6646 = vmatmul.f32.gmra.mxu0 %v6619
    %v6647 = vpop.f32.mrf.mxu0
    %v6648 = vadd.f32 0.0, %v6647
    %6649 = vmatmul.f32.gmra.mxu0 %v6622
    %v6650 = vpop.f32.mrf.mxu0
    %v6651 = vadd.f32 0.0, %v6650
    %6652 = vdwg.mxu0
    %6653 = vxpose.xlu0.b32.start [1/16] %v135, 128
    %6654 = vxpose.xlu0.b32.cont [2/16] %v136, 128
    %6655 = vxpose.xlu0.b32.cont [3/16] %v137, 128
    %6656 = vxpose.xlu0.b32.cont [4/16] %v138, 128
    %6657 = vxpose.xlu0.b32.cont [5/16] 0.0, 128
    %6658 = vxpose.xlu0.b32.cont [6/16] 0.0, 128
    %6659 = vxpose.xlu0.b32.cont [7/16] 0.0, 128
    %6660 = vxpose.xlu0.b32.cont [8/16] 0.0, 128
    %6661 = vxpose.xlu0.b32.cont [9/16] 0.0, 128
    %6662 = vxpose.xlu0.b32.cont [10/16] 0.0, 128
    %6663 = vxpose.xlu0.b32.cont [11/16] 0.0, 128
    %6664 = vxpose.xlu0.b32.cont [12/16] 0.0, 128
    %6665 = vxpose.xlu0.b32.cont [13/16] 0.0, 128
    %6666 = vxpose.xlu0.b32.cont [14/16] 0.0, 128
    %6667 = vxpose.xlu0.b32.cont [15/16] 0.0, 128
    %6668 = vxpose.xlu0.b32.end [16/16] 0.0, 128
    %v6669 = vpop.trf.xlu0
    %v6670 = vpop.trf.xlu0
    %v6671 = vpop.trf.xlu0
    %v6672 = vpop.trf.xlu0
    %v6673 = vpop.trf.xlu0
    %v6674 = vpop.trf.xlu0
    %v6675 = vpop.trf.xlu0
    %v6676 = vpop.trf.xlu0
    %v6677 = vpop.trf.xlu0
    %v6678 = vpop.trf.xlu0
    %v6679 = vpop.trf.xlu0
    %v6680 = vpop.trf.xlu0
    %v6681 = vpop.trf.xlu0
    %v6682 = vpop.trf.xlu0
    %v6683 = vpop.trf.xlu0
    %v6684 = vpop.trf.xlu0
    %v6686 = vsel %vm5224, %v6669, 0
    %v6689 = vsel %vm5224, %v6670, 0
    %v6692 = vsel %vm5224, %v6671, 0
    %v6695 = vsel %vm5224, %v6672, 0
    %6697 = vmatpush.msra.mxu0 0.0
    %6698 = vmatpush.msra.mxu0 0.0
    %6699 = vmatpush.msra.mxu0 0.0
    %6700 = vmatpush.msra.mxu0 0.0
    %6701 = vmatpush.msra.mxu0 0.0
    %6702 = vmatpush.msra.mxu0 0.0
    %6703 = vmatpush.msra.mxu0 0.0
    %6704 = vmatpush.msra.mxu0 0.0
    %6705 = vmatpush.msra.mxu0 0.0
    %6706 = vmatpush.msra.mxu0 0.0
    %6707 = vmatpush.msra.mxu0 0.0
    %6708 = vmatpush.msra.mxu0 0.0
    %6709 = vmatpush.msra.mxu0 %v2945
    %6710 = vmatpush.msra.mxu0 %v2833
    %6711 = vmatpush.msra.mxu0 %v2721
    %6712 = vmatpush.msra.mxu0 %v2609
    %6713 = vmatmul.f32.gmra.mxu0 %v6686
    %v6714 = vpop.f32.mrf.mxu0
    %v6715 = vadd.f32 0.0, %v6714
    %6716 = vmatmul.f32.gmra.mxu0 %v6689
    %v6717 = vpop.f32.mrf.mxu0
    %v6718 = vadd.f32 0.0, %v6717
    %6719 = vmatmul.f32.gmra.mxu0 %v6692
    %v6720 = vpop.f32.mrf.mxu0
    %v6721 = vadd.f32 0.0, %v6720
    %6722 = vmatmul.f32.gmra.mxu0 %v6695
    %v6723 = vpop.f32.mrf.mxu0
    %v6724 = vadd.f32 0.0, %v6723
    %6725 = vdwg.mxu0
    %6726 = vxpose.xlu0.b32.start [1/16] %v139, 128
    %6727 = vxpose.xlu0.b32.cont [2/16] %v140, 128
    %6728 = vxpose.xlu0.b32.cont [3/16] %v141, 128
    %6729 = vxpose.xlu0.b32.cont [4/16] %v142, 128
    %6730 = vxpose.xlu0.b32.cont [5/16] 0.0, 128
    %6731 = vxpose.xlu0.b32.cont [6/16] 0.0, 128
    %6732 = vxpose.xlu0.b32.cont [7/16] 0.0, 128
    %6733 = vxpose.xlu0.b32.cont [8/16] 0.0, 128
    %6734 = vxpose.xlu0.b32.cont [9/16] 0.0, 128
    %6735 = vxpose.xlu0.b32.cont [10/16] 0.0, 128
    %6736 = vxpose.xlu0.b32.cont [11/16] 0.0, 128
    %6737 = vxpose.xlu0.b32.cont [12/16] 0.0, 128
    %6738 = vxpose.xlu0.b32.cont [13/16] 0.0, 128
    %6739 = vxpose.xlu0.b32.cont [14/16] 0.0, 128
    %6740 = vxpose.xlu0.b32.cont [15/16] 0.0, 128
    %6741 = vxpose.xlu0.b32.end [16/16] 0.0, 128
    %v6742 = vpop.trf.xlu0
    %v6743 = vpop.trf.xlu0
    %v6744 = vpop.trf.xlu0
    %v6745 = vpop.trf.xlu0
    %v6746 = vpop.trf.xlu0
    %v6747 = vpop.trf.xlu0
    %v6748 = vpop.trf.xlu0
    %v6749 = vpop.trf.xlu0
    %v6750 = vpop.trf.xlu0
    %v6751 = vpop.trf.xlu0
    %v6752 = vpop.trf.xlu0
    %v6753 = vpop.trf.xlu0
    %v6754 = vpop.trf.xlu0
    %v6755 = vpop.trf.xlu0
    %v6756 = vpop.trf.xlu0
    %v6757 = vpop.trf.xlu0
    %v6759 = vsel %vm5224, %v6742, 0
    %v6762 = vsel %vm5224, %v6743, 0
    %v6765 = vsel %vm5224, %v6744, 0
    %v6768 = vsel %vm5224, %v6745, 0
    %6770 = vmatpush.msra.mxu0 0.0
    %6771 = vmatpush.msra.mxu0 0.0
    %6772 = vmatpush.msra.mxu0 0.0
    %6773 = vmatpush.msra.mxu0 0.0
    %6774 = vmatpush.msra.mxu0 0.0
    %6775 = vmatpush.msra.mxu0 0.0
    %6776 = vmatpush.msra.mxu0 0.0
    %6777 = vmatpush.msra.mxu0 0.0
    %6778 = vmatpush.msra.mxu0 0.0
    %6779 = vmatpush.msra.mxu0 0.0
    %6780 = vmatpush.msra.mxu0 0.0
    %6781 = vmatpush.msra.mxu0 0.0
    %6782 = vmatpush.msra.mxu0 %v2947
    %6783 = vmatpush.msra.mxu0 %v2835
    %6784 = vmatpush.msra.mxu0 %v2723
    %6785 = vmatpush.msra.mxu0 %v2611
    %6786 = vmatmul.f32.gmra.mxu0 %v6759
    %v6787 = vpop.f32.mrf.mxu0
    %v6788 = vadd.f32 0.0, %v6787
    %6789 = vmatmul.f32.gmra.mxu0 %v6762
    %v6790 = vpop.f32.mrf.mxu0
    %v6791 = vadd.f32 0.0, %v6790
    %6792 = vmatmul.f32.gmra.mxu0 %v6765
    %v6793 = vpop.f32.mrf.mxu0
    %v6794 = vadd.f32 0.0, %v6793
    %6795 = vmatmul.f32.gmra.mxu0 %v6768
    %v6796 = vpop.f32.mrf.mxu0
    %v6797 = vadd.f32 0.0, %v6796
    %6798 = vdwg.mxu0
    %6799 = vxpose.xlu0.b32.start [1/16] %v143, 128
    %6800 = vxpose.xlu0.b32.cont [2/16] %v144, 128
    %6801 = vxpose.xlu0.b32.cont [3/16] %v145, 128
    %6802 = vxpose.xlu0.b32.cont [4/16] %v146, 128
    %6803 = vxpose.xlu0.b32.cont [5/16] 0.0, 128
    %6804 = vxpose.xlu0.b32.cont [6/16] 0.0, 128
    %6805 = vxpose.xlu0.b32.cont [7/16] 0.0, 128
    %6806 = vxpose.xlu0.b32.cont [8/16] 0.0, 128
    %6807 = vxpose.xlu0.b32.cont [9/16] 0.0, 128
    %6808 = vxpose.xlu0.b32.cont [10/16] 0.0, 128
    %6809 = vxpose.xlu0.b32.cont [11/16] 0.0, 128
    %6810 = vxpose.xlu0.b32.cont [12/16] 0.0, 128
    %6811 = vxpose.xlu0.b32.cont [13/16] 0.0, 128
    %6812 = vxpose.xlu0.b32.cont [14/16] 0.0, 128
    %6813 = vxpose.xlu0.b32.cont [15/16] 0.0, 128
    %6814 = vxpose.xlu0.b32.end [16/16] 0.0, 128
    %v6815 = vpop.trf.xlu0
    %v6816 = vpop.trf.xlu0
    %v6817 = vpop.trf.xlu0
    %v6818 = vpop.trf.xlu0
    %v6819 = vpop.trf.xlu0
    %v6820 = vpop.trf.xlu0
    %v6821 = vpop.trf.xlu0
    %v6822 = vpop.trf.xlu0
    %v6823 = vpop.trf.xlu0
    %v6824 = vpop.trf.xlu0
    %v6825 = vpop.trf.xlu0
    %v6826 = vpop.trf.xlu0
    %v6827 = vpop.trf.xlu0
    %v6828 = vpop.trf.xlu0
    %v6829 = vpop.trf.xlu0
    %v6830 = vpop.trf.xlu0
    %v6832 = vsel %vm5224, %v6815, 0
    %v6835 = vsel %vm5224, %v6816, 0
    %v6838 = vsel %vm5224, %v6817, 0
    %v6841 = vsel %vm5224, %v6818, 0
    %6843 = vmatpush.msra.mxu0 0.0
    %6844 = vmatpush.msra.mxu0 0.0
    %6845 = vmatpush.msra.mxu0 0.0
    %6846 = vmatpush.msra.mxu0 0.0
    %6847 = vmatpush.msra.mxu0 0.0
    %6848 = vmatpush.msra.mxu0 0.0
    %6849 = vmatpush.msra.mxu0 0.0
    %6850 = vmatpush.msra.mxu0 0.0
    %6851 = vmatpush.msra.mxu0 0.0
    %6852 = vmatpush.msra.mxu0 0.0
    %6853 = vmatpush.msra.mxu0 0.0
    %6854 = vmatpush.msra.mxu0 0.0
    %6855 = vmatpush.msra.mxu0 %v2949
    %6856 = vmatpush.msra.mxu0 %v2837
    %6857 = vmatpush.msra.mxu0 %v2725
    %6858 = vmatpush.msra.mxu0 %v2613
    %6859 = vmatmul.f32.gmra.mxu0 %v6832
    %v6860 = vpop.f32.mrf.mxu0
    %v6861 = vadd.f32 0.0, %v6860
    %6862 = vmatmul.f32.gmra.mxu0 %v6835
    %v6863 = vpop.f32.mrf.mxu0
    %v6864 = vadd.f32 0.0, %v6863
    %6865 = vmatmul.f32.gmra.mxu0 %v6838
    %v6866 = vpop.f32.mrf.mxu0
    %v6867 = vadd.f32 0.0, %v6866
    %6868 = vmatmul.f32.gmra.mxu0 %v6841
    %v6869 = vpop.f32.mrf.mxu0
    %v6870 = vadd.f32 0.0, %v6869
    %6871 = vdwg.mxu0
    %6872 = vxpose.xlu0.b32.start [1/16] %v147, 128
    %6873 = vxpose.xlu0.b32.cont [2/16] %v148, 128
    %6874 = vxpose.xlu0.b32.cont [3/16] %v149, 128
    %6875 = vxpose.xlu0.b32.cont [4/16] %v150, 128
    %6876 = vxpose.xlu0.b32.cont [5/16] 0.0, 128
    %6877 = vxpose.xlu0.b32.cont [6/16] 0.0, 128
    %6878 = vxpose.xlu0.b32.cont [7/16] 0.0, 128
    %6879 = vxpose.xlu0.b32.cont [8/16] 0.0, 128
    %6880 = vxpose.xlu0.b32.cont [9/16] 0.0, 128
    %6881 = vxpose.xlu0.b32.cont [10/16] 0.0, 128
    %6882 = vxpose.xlu0.b32.cont [11/16] 0.0, 128
    %6883 = vxpose.xlu0.b32.cont [12/16] 0.0, 128
    %6884 = vxpose.xlu0.b32.cont [13/16] 0.0, 128
    %6885 = vxpose.xlu0.b32.cont [14/16] 0.0, 128
    %6886 = vxpose.xlu0.b32.cont [15/16] 0.0, 128
    %6887 = vxpose.xlu0.b32.end [16/16] 0.0, 128
    %v6888 = vpop.trf.xlu0
    %v6889 = vpop.trf.xlu0
    %v6890 = vpop.trf.xlu0
    %v6891 = vpop.trf.xlu0
    %v6892 = vpop.trf.xlu0
    %v6893 = vpop.trf.xlu0
    %v6894 = vpop.trf.xlu0
    %v6895 = vpop.trf.xlu0
    %v6896 = vpop.trf.xlu0
    %v6897 = vpop.trf.xlu0
    %v6898 = vpop.trf.xlu0
    %v6899 = vpop.trf.xlu0
    %v6900 = vpop.trf.xlu0
    %v6901 = vpop.trf.xlu0
    %v6902 = vpop.trf.xlu0
    %v6903 = vpop.trf.xlu0
    %v6905 = vsel %vm5224, %v6888, 0
    %v6908 = vsel %vm5224, %v6889, 0
    %v6911 = vsel %vm5224, %v6890, 0
    %v6914 = vsel %vm5224, %v6891, 0
    %6916 = vmatpush.msra.mxu0 0.0
    %6917 = vmatpush.msra.mxu0 0.0
    %6918 = vmatpush.msra.mxu0 0.0
    %6919 = vmatpush.msra.mxu0 0.0
    %6920 = vmatpush.msra.mxu0 0.0
    %6921 = vmatpush.msra.mxu0 0.0
    %6922 = vmatpush.msra.mxu0 0.0
    %6923 = vmatpush.msra.mxu0 0.0
    %6924 = vmatpush.msra.mxu0 0.0
    %6925 = vmatpush.msra.mxu0 0.0
    %6926 = vmatpush.msra.mxu0 0.0
    %6927 = vmatpush.msra.mxu0 0.0
    %6928 = vmatpush.msra.mxu0 %v2951
    %6929 = vmatpush.msra.mxu0 %v2839
    %6930 = vmatpush.msra.mxu0 %v2727
    %6931 = vmatpush.msra.mxu0 %v2615
    %6932 = vmatmul.f32.gmra.mxu0 %v6905
    %v6933 = vpop.f32.mrf.mxu0
    %v6934 = vadd.f32 0.0, %v6933
    %6935 = vmatmul.f32.gmra.mxu0 %v6908
    %v6936 = vpop.f32.mrf.mxu0
    %v6937 = vadd.f32 0.0, %v6936
    %6938 = vmatmul.f32.gmra.mxu0 %v6911
    %v6939 = vpop.f32.mrf.mxu0
    %v6940 = vadd.f32 0.0, %v6939
    %6941 = vmatmul.f32.gmra.mxu0 %v6914
    %v6942 = vpop.f32.mrf.mxu0
    %v6943 = vadd.f32 0.0, %v6942
    %6944 = vdwg.mxu0
    %6945 = vxpose.xlu0.b32.start [1/16] %v151, 128
    %6946 = vxpose.xlu0.b32.cont [2/16] %v152, 128
    %6947 = vxpose.xlu0.b32.cont [3/16] %v153, 128
    %6948 = vxpose.xlu0.b32.cont [4/16] %v154, 128
    %6949 = vxpose.xlu0.b32.cont [5/16] 0.0, 128
    %6950 = vxpose.xlu0.b32.cont [6/16] 0.0, 128
    %6951 = vxpose.xlu0.b32.cont [7/16] 0.0, 128
    %6952 = vxpose.xlu0.b32.cont [8/16] 0.0, 128
    %6953 = vxpose.xlu0.b32.cont [9/16] 0.0, 128
    %6954 = vxpose.xlu0.b32.cont [10/16] 0.0, 128
    %6955 = vxpose.xlu0.b32.cont [11/16] 0.0, 128
    %6956 = vxpose.xlu0.b32.cont [12/16] 0.0, 128
    %6957 = vxpose.xlu0.b32.cont [13/16] 0.0, 128
    %6958 = vxpose.xlu0.b32.cont [14/16] 0.0, 128
    %6959 = vxpose.xlu0.b32.cont [15/16] 0.0, 128
    %6960 = vxpose.xlu0.b32.end [16/16] 0.0, 128
    %v6961 = vpop.trf.xlu0
    %v6962 = vpop.trf.xlu0
    %v6963 = vpop.trf.xlu0
    %v6964 = vpop.trf.xlu0
    %v6965 = vpop.trf.xlu0
    %v6966 = vpop.trf.xlu0
    %v6967 = vpop.trf.xlu0
    %v6968 = vpop.trf.xlu0
    %v6969 = vpop.trf.xlu0
    %v6970 = vpop.trf.xlu0
    %v6971 = vpop.trf.xlu0
    %v6972 = vpop.trf.xlu0
    %v6973 = vpop.trf.xlu0
    %v6974 = vpop.trf.xlu0
    %v6975 = vpop.trf.xlu0
    %v6976 = vpop.trf.xlu0
    %v6978 = vsel %vm5224, %v6961, 0
    %v6981 = vsel %vm5224, %v6962, 0
    %v6984 = vsel %vm5224, %v6963, 0
    %v6987 = vsel %vm5224, %v6964, 0
    %6989 = vmatpush.msra.mxu0 0.0
    %6990 = vmatpush.msra.mxu0 0.0
    %6991 = vmatpush.msra.mxu0 0.0
    %6992 = vmatpush.msra.mxu0 0.0
    %6993 = vmatpush.msra.mxu0 0.0
    %6994 = vmatpush.msra.mxu0 0.0
    %6995 = vmatpush.msra.mxu0 0.0
    %6996 = vmatpush.msra.mxu0 0.0
    %6997 = vmatpush.msra.mxu0 0.0
    %6998 = vmatpush.msra.mxu0 0.0
    %6999 = vmatpush.msra.mxu0 0.0
    %7000 = vmatpush.msra.mxu0 0.0
    %7001 = vmatpush.msra.mxu0 %v3385
    %7002 = vmatpush.msra.mxu0 %v3273
    %7003 = vmatpush.msra.mxu0 %v3161
    %7004 = vmatpush.msra.mxu0 %v3049
    %7005 = vmatmul.f32.gmra.mxu0 %v6978
    %v7006 = vpop.f32.mrf.mxu0
    %v7007 = vadd.f32 0.0, %v7006
    %7008 = vmatmul.f32.gmra.mxu0 %v6981
    %v7009 = vpop.f32.mrf.mxu0
    %v7010 = vadd.f32 0.0, %v7009
    %7011 = vmatmul.f32.gmra.mxu0 %v6984
    %v7012 = vpop.f32.mrf.mxu0
    %v7013 = vadd.f32 0.0, %v7012
    %7014 = vmatmul.f32.gmra.mxu0 %v6987
    %v7015 = vpop.f32.mrf.mxu0
    %v7016 = vadd.f32 0.0, %v7015
    %7017 = vdwg.mxu0
    %7018 = vxpose.xlu0.b32.start [1/16] %v155, 128
    %7019 = vxpose.xlu0.b32.cont [2/16] %v156, 128
    %7020 = vxpose.xlu0.b32.cont [3/16] %v157, 128
    %7021 = vxpose.xlu0.b32.cont [4/16] %v158, 128
    %7022 = vxpose.xlu0.b32.cont [5/16] 0.0, 128
    %7023 = vxpose.xlu0.b32.cont [6/16] 0.0, 128
    %7024 = vxpose.xlu0.b32.cont [7/16] 0.0, 128
    %7025 = vxpose.xlu0.b32.cont [8/16] 0.0, 128
    %7026 = vxpose.xlu0.b32.cont [9/16] 0.0, 128
    %7027 = vxpose.xlu0.b32.cont [10/16] 0.0, 128
    %7028 = vxpose.xlu0.b32.cont [11/16] 0.0, 128
    %7029 = vxpose.xlu0.b32.cont [12/16] 0.0, 128
    %7030 = vxpose.xlu0.b32.cont [13/16] 0.0, 128
    %7031 = vxpose.xlu0.b32.cont [14/16] 0.0, 128
    %7032 = vxpose.xlu0.b32.cont [15/16] 0.0, 128
    %7033 = vxpose.xlu0.b32.end [16/16] 0.0, 128
    %v7034 = vpop.trf.xlu0
    %v7035 = vpop.trf.xlu0
    %v7036 = vpop.trf.xlu0
    %v7037 = vpop.trf.xlu0
    %v7038 = vpop.trf.xlu0
    %v7039 = vpop.trf.xlu0
    %v7040 = vpop.trf.xlu0
    %v7041 = vpop.trf.xlu0
    %v7042 = vpop.trf.xlu0
    %v7043 = vpop.trf.xlu0
    %v7044 = vpop.trf.xlu0
    %v7045 = vpop.trf.xlu0
    %v7046 = vpop.trf.xlu0
    %v7047 = vpop.trf.xlu0
    %v7048 = vpop.trf.xlu0
    %v7049 = vpop.trf.xlu0
    %v7051 = vsel %vm5224, %v7034, 0
    %v7054 = vsel %vm5224, %v7035, 0
    %v7057 = vsel %vm5224, %v7036, 0
    %v7060 = vsel %vm5224, %v7037, 0
    %7062 = vmatpush.msra.mxu0 0.0
    %7063 = vmatpush.msra.mxu0 0.0
    %7064 = vmatpush.msra.mxu0 0.0
    %7065 = vmatpush.msra.mxu0 0.0
    %7066 = vmatpush.msra.mxu0 0.0
    %7067 = vmatpush.msra.mxu0 0.0
    %7068 = vmatpush.msra.mxu0 0.0
    %7069 = vmatpush.msra.mxu0 0.0
    %7070 = vmatpush.msra.mxu0 0.0
    %7071 = vmatpush.msra.mxu0 0.0
    %7072 = vmatpush.msra.mxu0 0.0
    %7073 = vmatpush.msra.mxu0 0.0
    %7074 = vmatpush.msra.mxu0 %v3387
    %7075 = vmatpush.msra.mxu0 %v3275
    %7076 = vmatpush.msra.mxu0 %v3163
    %7077 = vmatpush.msra.mxu0 %v3051
    %7078 = vmatmul.f32.gmra.mxu0 %v7051
    %v7079 = vpop.f32.mrf.mxu0
    %v7080 = vadd.f32 0.0, %v7079
    %7081 = vmatmul.f32.gmra.mxu0 %v7054
    %v7082 = vpop.f32.mrf.mxu0
    %v7083 = vadd.f32 0.0, %v7082
    %7084 = vmatmul.f32.gmra.mxu0 %v7057
    %v7085 = vpop.f32.mrf.mxu0
    %v7086 = vadd.f32 0.0, %v7085
    %7087 = vmatmul.f32.gmra.mxu0 %v7060
    %v7088 = vpop.f32.mrf.mxu0
    %v7089 = vadd.f32 0.0, %v7088
    %7090 = vdwg.mxu0
    %7091 = vxpose.xlu0.b32.start [1/16] %v159, 128
    %7092 = vxpose.xlu0.b32.cont [2/16] %v160, 128
    %7093 = vxpose.xlu0.b32.cont [3/16] %v161, 128
    %7094 = vxpose.xlu0.b32.cont [4/16] %v162, 128
    %7095 = vxpose.xlu0.b32.cont [5/16] 0.0, 128
    %7096 = vxpose.xlu0.b32.cont [6/16] 0.0, 128
    %7097 = vxpose.xlu0.b32.cont [7/16] 0.0, 128
    %7098 = vxpose.xlu0.b32.cont [8/16] 0.0, 128
    %7099 = vxpose.xlu0.b32.cont [9/16] 0.0, 128
    %7100 = vxpose.xlu0.b32.cont [10/16] 0.0, 128
    %7101 = vxpose.xlu0.b32.cont [11/16] 0.0, 128
    %7102 = vxpose.xlu0.b32.cont [12/16] 0.0, 128
    %7103 = vxpose.xlu0.b32.cont [13/16] 0.0, 128
    %7104 = vxpose.xlu0.b32.cont [14/16] 0.0, 128
    %7105 = vxpose.xlu0.b32.cont [15/16] 0.0, 128
    %7106 = vxpose.xlu0.b32.end [16/16] 0.0, 128
    %v7107 = vpop.trf.xlu0
    %v7108 = vpop.trf.xlu0
    %v7109 = vpop.trf.xlu0
    %v7110 = vpop.trf.xlu0
    %v7111 = vpop.trf.xlu0
    %v7112 = vpop.trf.xlu0
    %v7113 = vpop.trf.xlu0
    %v7114 = vpop.trf.xlu0
    %v7115 = vpop.trf.xlu0
    %v7116 = vpop.trf.xlu0
    %v7117 = vpop.trf.xlu0
    %v7118 = vpop.trf.xlu0
    %v7119 = vpop.trf.xlu0
    %v7120 = vpop.trf.xlu0
    %v7121 = vpop.trf.xlu0
    %v7122 = vpop.trf.xlu0
    %v7124 = vsel %vm5224, %v7107, 0
    %v7127 = vsel %vm5224, %v7108, 0
    %v7130 = vsel %vm5224, %v7109, 0
    %v7133 = vsel %vm5224, %v7110, 0
    %7135 = vmatpush.msra.mxu0 0.0
    %7136 = vmatpush.msra.mxu0 0.0
    %7137 = vmatpush.msra.mxu0 0.0
    %7138 = vmatpush.msra.mxu0 0.0
    %7139 = vmatpush.msra.mxu0 0.0
    %7140 = vmatpush.msra.mxu0 0.0
    %7141 = vmatpush.msra.mxu0 0.0
    %7142 = vmatpush.msra.mxu0 0.0
    %7143 = vmatpush.msra.mxu0 0.0
    %7144 = vmatpush.msra.mxu0 0.0
    %7145 = vmatpush.msra.mxu0 0.0
    %7146 = vmatpush.msra.mxu0 0.0
    %7147 = vmatpush.msra.mxu0 %v3389
    %7148 = vmatpush.msra.mxu0 %v3277
    %7149 = vmatpush.msra.mxu0 %v3165
    %7150 = vmatpush.msra.mxu0 %v3053
    %7151 = vmatmul.f32.gmra.mxu0 %v7124
    %v7152 = vpop.f32.mrf.mxu0
    %v7153 = vadd.f32 0.0, %v7152
    %7154 = vmatmul.f32.gmra.mxu0 %v7127
    %v7155 = vpop.f32.mrf.mxu0
    %v7156 = vadd.f32 0.0, %v7155
    %7157 = vmatmul.f32.gmra.mxu0 %v7130
    %v7158 = vpop.f32.mrf.mxu0
    %v7159 = vadd.f32 0.0, %v7158
    %7160 = vmatmul.f32.gmra.mxu0 %v7133
    %v7161 = vpop.f32.mrf.mxu0
    %v7162 = vadd.f32 0.0, %v7161
    %7163 = vdwg.mxu0
    %7164 = vxpose.xlu0.b32.start [1/16] %v163, 128
    %7165 = vxpose.xlu0.b32.cont [2/16] %v164, 128
    %7166 = vxpose.xlu0.b32.cont [3/16] %v165, 128
    %7167 = vxpose.xlu0.b32.cont [4/16] %v166, 128
    %7168 = vxpose.xlu0.b32.cont [5/16] 0.0, 128
    %7169 = vxpose.xlu0.b32.cont [6/16] 0.0, 128
    %7170 = vxpose.xlu0.b32.cont [7/16] 0.0, 128
    %7171 = vxpose.xlu0.b32.cont [8/16] 0.0, 128
    %7172 = vxpose.xlu0.b32.cont [9/16] 0.0, 128
    %7173 = vxpose.xlu0.b32.cont [10/16] 0.0, 128
    %7174 = vxpose.xlu0.b32.cont [11/16] 0.0, 128
    %7175 = vxpose.xlu0.b32.cont [12/16] 0.0, 128
    %7176 = vxpose.xlu0.b32.cont [13/16] 0.0, 128
    %7177 = vxpose.xlu0.b32.cont [14/16] 0.0, 128
    %7178 = vxpose.xlu0.b32.cont [15/16] 0.0, 128
    %7179 = vxpose.xlu0.b32.end [16/16] 0.0, 128
    %v7180 = vpop.trf.xlu0
    %v7181 = vpop.trf.xlu0
    %v7182 = vpop.trf.xlu0
    %v7183 = vpop.trf.xlu0
    %v7184 = vpop.trf.xlu0
    %v7185 = vpop.trf.xlu0
    %v7186 = vpop.trf.xlu0
    %v7187 = vpop.trf.xlu0
    %v7188 = vpop.trf.xlu0
    %v7189 = vpop.trf.xlu0
    %v7190 = vpop.trf.xlu0
    %v7191 = vpop.trf.xlu0
    %v7192 = vpop.trf.xlu0
    %v7193 = vpop.trf.xlu0
    %v7194 = vpop.trf.xlu0
    %v7195 = vpop.trf.xlu0
    %v7197 = vsel %vm5224, %v7180, 0
    %v7200 = vsel %vm5224, %v7181, 0
    %v7203 = vsel %vm5224, %v7182, 0
    %v7206 = vsel %vm5224, %v7183, 0
    %7208 = vmatpush.msra.mxu0 0.0
    %7209 = vmatpush.msra.mxu0 0.0
    %7210 = vmatpush.msra.mxu0 0.0
    %7211 = vmatpush.msra.mxu0 0.0
    %7212 = vmatpush.msra.mxu0 0.0
    %7213 = vmatpush.msra.mxu0 0.0
    %7214 = vmatpush.msra.mxu0 0.0
    %7215 = vmatpush.msra.mxu0 0.0
    %7216 = vmatpush.msra.mxu0 0.0
    %7217 = vmatpush.msra.mxu0 0.0
    %7218 = vmatpush.msra.mxu0 0.0
    %7219 = vmatpush.msra.mxu0 0.0
    %7220 = vmatpush.msra.mxu0 %v3391
    %7221 = vmatpush.msra.mxu0 %v3279
    %7222 = vmatpush.msra.mxu0 %v3167
    %7223 = vmatpush.msra.mxu0 %v3055
    %7224 = vmatmul.f32.gmra.mxu0 %v7197
    %v7225 = vpop.f32.mrf.mxu0
    %v7226 = vadd.f32 0.0, %v7225
    %7227 = vmatmul.f32.gmra.mxu0 %v7200
    %v7228 = vpop.f32.mrf.mxu0
    %v7229 = vadd.f32 0.0, %v7228
    %7230 = vmatmul.f32.gmra.mxu0 %v7203
    %v7231 = vpop.f32.mrf.mxu0
    %v7232 = vadd.f32 0.0, %v7231
    %7233 = vmatmul.f32.gmra.mxu0 %v7206
    %v7234 = vpop.f32.mrf.mxu0
    %v7235 = vadd.f32 0.0, %v7234
    %7236 = vdwg.mxu0
    %7237 = vxpose.xlu0.b32.start [1/16] %v167, 128
    %7238 = vxpose.xlu0.b32.cont [2/16] %v168, 128
    %7239 = vxpose.xlu0.b32.cont [3/16] %v169, 128
    %7240 = vxpose.xlu0.b32.cont [4/16] %v170, 128
    %7241 = vxpose.xlu0.b32.cont [5/16] 0.0, 128
    %7242 = vxpose.xlu0.b32.cont [6/16] 0.0, 128
    %7243 = vxpose.xlu0.b32.cont [7/16] 0.0, 128
    %7244 = vxpose.xlu0.b32.cont [8/16] 0.0, 128
    %7245 = vxpose.xlu0.b32.cont [9/16] 0.0, 128
    %7246 = vxpose.xlu0.b32.cont [10/16] 0.0, 128
    %7247 = vxpose.xlu0.b32.cont [11/16] 0.0, 128
    %7248 = vxpose.xlu0.b32.cont [12/16] 0.0, 128
    %7249 = vxpose.xlu0.b32.cont [13/16] 0.0, 128
    %7250 = vxpose.xlu0.b32.cont [14/16] 0.0, 128
    %7251 = vxpose.xlu0.b32.cont [15/16] 0.0, 128
    %7252 = vxpose.xlu0.b32.end [16/16] 0.0, 128
    %v7253 = vpop.trf.xlu0
    %v7254 = vpop.trf.xlu0
    %v7255 = vpop.trf.xlu0
    %v7256 = vpop.trf.xlu0
    %v7257 = vpop.trf.xlu0
    %v7258 = vpop.trf.xlu0
    %v7259 = vpop.trf.xlu0
    %v7260 = vpop.trf.xlu0
    %v7261 = vpop.trf.xlu0
    %v7262 = vpop.trf.xlu0
    %v7263 = vpop.trf.xlu0
    %v7264 = vpop.trf.xlu0
    %v7265 = vpop.trf.xlu0
    %v7266 = vpop.trf.xlu0
    %v7267 = vpop.trf.xlu0
    %v7268 = vpop.trf.xlu0
    %v7270 = vsel %vm5224, %v7253, 0
    %v7273 = vsel %vm5224, %v7254, 0
    %v7276 = vsel %vm5224, %v7255, 0
    %v7279 = vsel %vm5224, %v7256, 0
    %7281 = vmatpush.msra.mxu0 0.0
    %7282 = vmatpush.msra.mxu0 0.0
    %7283 = vmatpush.msra.mxu0 0.0
    %7284 = vmatpush.msra.mxu0 0.0
    %7285 = vmatpush.msra.mxu0 0.0
    %7286 = vmatpush.msra.mxu0 0.0
    %7287 = vmatpush.msra.mxu0 0.0
    %7288 = vmatpush.msra.mxu0 0.0
    %7289 = vmatpush.msra.mxu0 0.0
    %7290 = vmatpush.msra.mxu0 0.0
    %7291 = vmatpush.msra.mxu0 0.0
    %7292 = vmatpush.msra.mxu0 0.0
    %7293 = vmatpush.msra.mxu0 %v3393
    %7294 = vmatpush.msra.mxu0 %v3281
    %7295 = vmatpush.msra.mxu0 %v3169
    %7296 = vmatpush.msra.mxu0 %v3057
    %7297 = vmatmul.f32.gmra.mxu0 %v7270
    %v7298 = vpop.f32.mrf.mxu0
    %v7299 = vadd.f32 0.0, %v7298
    %7300 = vmatmul.f32.gmra.mxu0 %v7273
    %v7301 = vpop.f32.mrf.mxu0
    %v7302 = vadd.f32 0.0, %v7301
    %7303 = vmatmul.f32.gmra.mxu0 %v7276
    %v7304 = vpop.f32.mrf.mxu0
    %v7305 = vadd.f32 0.0, %v7304
    %7306 = vmatmul.f32.gmra.mxu0 %v7279
    %v7307 = vpop.f32.mrf.mxu0
    %v7308 = vadd.f32 0.0, %v7307
    %7309 = vdwg.mxu0
    %7310 = vxpose.xlu0.b32.start [1/16] %v171, 128
    %7311 = vxpose.xlu0.b32.cont [2/16] %v172, 128
    %7312 = vxpose.xlu0.b32.cont [3/16] %v173, 128
    %7313 = vxpose.xlu0.b32.cont [4/16] %v174, 128
    %7314 = vxpose.xlu0.b32.cont [5/16] 0.0, 128
    %7315 = vxpose.xlu0.b32.cont [6/16] 0.0, 128
    %7316 = vxpose.xlu0.b32.cont [7/16] 0.0, 128
    %7317 = vxpose.xlu0.b32.cont [8/16] 0.0, 128
    %7318 = vxpose.xlu0.b32.cont [9/16] 0.0, 128
    %7319 = vxpose.xlu0.b32.cont [10/16] 0.0, 128
    %7320 = vxpose.xlu0.b32.cont [11/16] 0.0, 128
    %7321 = vxpose.xlu0.b32.cont [12/16] 0.0, 128
    %7322 = vxpose.xlu0.b32.cont [13/16] 0.0, 128
    %7323 = vxpose.xlu0.b32.cont [14/16] 0.0, 128
    %7324 = vxpose.xlu0.b32.cont [15/16] 0.0, 128
    %7325 = vxpose.xlu0.b32.end [16/16] 0.0, 128
    %v7326 = vpop.trf.xlu0
    %v7327 = vpop.trf.xlu0
    %v7328 = vpop.trf.xlu0
    %v7329 = vpop.trf.xlu0
    %v7330 = vpop.trf.xlu0
    %v7331 = vpop.trf.xlu0
    %v7332 = vpop.trf.xlu0
    %v7333 = vpop.trf.xlu0
    %v7334 = vpop.trf.xlu0
    %v7335 = vpop.trf.xlu0
    %v7336 = vpop.trf.xlu0
    %v7337 = vpop.trf.xlu0
    %v7338 = vpop.trf.xlu0
    %v7339 = vpop.trf.xlu0
    %v7340 = vpop.trf.xlu0
    %v7341 = vpop.trf.xlu0
    %v7343 = vsel %vm5224, %v7326, 0
    %v7346 = vsel %vm5224, %v7327, 0
    %v7349 = vsel %vm5224, %v7328, 0
    %v7352 = vsel %vm5224, %v7329, 0
    %7354 = vmatpush.msra.mxu0 0.0
    %7355 = vmatpush.msra.mxu0 0.0
    %7356 = vmatpush.msra.mxu0 0.0
    %7357 = vmatpush.msra.mxu0 0.0
    %7358 = vmatpush.msra.mxu0 0.0
    %7359 = vmatpush.msra.mxu0 0.0
    %7360 = vmatpush.msra.mxu0 0.0
    %7361 = vmatpush.msra.mxu0 0.0
    %7362 = vmatpush.msra.mxu0 0.0
    %7363 = vmatpush.msra.mxu0 0.0
    %7364 = vmatpush.msra.mxu0 0.0
    %7365 = vmatpush.msra.mxu0 0.0
    %7366 = vmatpush.msra.mxu0 %v3395
    %7367 = vmatpush.msra.mxu0 %v3283
    %7368 = vmatpush.msra.mxu0 %v3171
    %7369 = vmatpush.msra.mxu0 %v3059
    %7370 = vmatmul.f32.gmra.mxu0 %v7343
    %v7371 = vpop.f32.mrf.mxu0
    %v7372 = vadd.f32 0.0, %v7371
    %7373 = vmatmul.f32.gmra.mxu0 %v7346
    %v7374 = vpop.f32.mrf.mxu0
    %v7375 = vadd.f32 0.0, %v7374
    %7376 = vmatmul.f32.gmra.mxu0 %v7349
    %v7377 = vpop.f32.mrf.mxu0
    %v7378 = vadd.f32 0.0, %v7377
    %7379 = vmatmul.f32.gmra.mxu0 %v7352
    %v7380 = vpop.f32.mrf.mxu0
    %v7381 = vadd.f32 0.0, %v7380
    %7382 = vdwg.mxu0
    %7383 = vxpose.xlu0.b32.start [1/16] %v175, 128
    %7384 = vxpose.xlu0.b32.cont [2/16] %v176, 128
    %7385 = vxpose.xlu0.b32.cont [3/16] %v177, 128
    %7386 = vxpose.xlu0.b32.cont [4/16] %v178, 128
    %7387 = vxpose.xlu0.b32.cont [5/16] 0.0, 128
    %7388 = vxpose.xlu0.b32.cont [6/16] 0.0, 128
    %7389 = vxpose.xlu0.b32.cont [7/16] 0.0, 128
    %7390 = vxpose.xlu0.b32.cont [8/16] 0.0, 128
    %7391 = vxpose.xlu0.b32.cont [9/16] 0.0, 128
    %7392 = vxpose.xlu0.b32.cont [10/16] 0.0, 128
    %7393 = vxpose.xlu0.b32.cont [11/16] 0.0, 128
    %7394 = vxpose.xlu0.b32.cont [12/16] 0.0, 128
    %7395 = vxpose.xlu0.b32.cont [13/16] 0.0, 128
    %7396 = vxpose.xlu0.b32.cont [14/16] 0.0, 128
    %7397 = vxpose.xlu0.b32.cont [15/16] 0.0, 128
    %7398 = vxpose.xlu0.b32.end [16/16] 0.0, 128
    %v7399 = vpop.trf.xlu0
    %v7400 = vpop.trf.xlu0
    %v7401 = vpop.trf.xlu0
    %v7402 = vpop.trf.xlu0
    %v7403 = vpop.trf.xlu0
    %v7404 = vpop.trf.xlu0
    %v7405 = vpop.trf.xlu0
    %v7406 = vpop.trf.xlu0
    %v7407 = vpop.trf.xlu0
    %v7408 = vpop.trf.xlu0
    %v7409 = vpop.trf.xlu0
    %v7410 = vpop.trf.xlu0
    %v7411 = vpop.trf.xlu0
    %v7412 = vpop.trf.xlu0
    %v7413 = vpop.trf.xlu0
    %v7414 = vpop.trf.xlu0
    %v7416 = vsel %vm5224, %v7399, 0
    %v7419 = vsel %vm5224, %v7400, 0
    %v7422 = vsel %vm5224, %v7401, 0
    %v7425 = vsel %vm5224, %v7402, 0
    %7427 = vmatpush.msra.mxu0 0.0
    %7428 = vmatpush.msra.mxu0 0.0
    %7429 = vmatpush.msra.mxu0 0.0
    %7430 = vmatpush.msra.mxu0 0.0
    %7431 = vmatpush.msra.mxu0 0.0
    %7432 = vmatpush.msra.mxu0 0.0
    %7433 = vmatpush.msra.mxu0 0.0
    %7434 = vmatpush.msra.mxu0 0.0
    %7435 = vmatpush.msra.mxu0 0.0
    %7436 = vmatpush.msra.mxu0 0.0
    %7437 = vmatpush.msra.mxu0 0.0
    %7438 = vmatpush.msra.mxu0 0.0
    %7439 = vmatpush.msra.mxu0 %v3397
    %7440 = vmatpush.msra.mxu0 %v3285
    %7441 = vmatpush.msra.mxu0 %v3173
    %7442 = vmatpush.msra.mxu0 %v3061
    %7443 = vmatmul.f32.gmra.mxu0 %v7416
    %v7444 = vpop.f32.mrf.mxu0
    %v7445 = vadd.f32 0.0, %v7444
    %7446 = vmatmul.f32.gmra.mxu0 %v7419
    %v7447 = vpop.f32.mrf.mxu0
    %v7448 = vadd.f32 0.0, %v7447
    %7449 = vmatmul.f32.gmra.mxu0 %v7422
    %v7450 = vpop.f32.mrf.mxu0
    %v7451 = vadd.f32 0.0, %v7450
    %7452 = vmatmul.f32.gmra.mxu0 %v7425
    %v7453 = vpop.f32.mrf.mxu0
    %v7454 = vadd.f32 0.0, %v7453
    %7455 = vdwg.mxu0
    %7456 = vxpose.xlu0.b32.start [1/16] %v179, 128
    %7457 = vxpose.xlu0.b32.cont [2/16] %v180, 128
    %7458 = vxpose.xlu0.b32.cont [3/16] %v181, 128
    %7459 = vxpose.xlu0.b32.cont [4/16] %v182, 128
    %7460 = vxpose.xlu0.b32.cont [5/16] 0.0, 128
    %7461 = vxpose.xlu0.b32.cont [6/16] 0.0, 128
    %7462 = vxpose.xlu0.b32.cont [7/16] 0.0, 128
    %7463 = vxpose.xlu0.b32.cont [8/16] 0.0, 128
    %7464 = vxpose.xlu0.b32.cont [9/16] 0.0, 128
    %7465 = vxpose.xlu0.b32.cont [10/16] 0.0, 128
    %7466 = vxpose.xlu0.b32.cont [11/16] 0.0, 128
    %7467 = vxpose.xlu0.b32.cont [12/16] 0.0, 128
    %7468 = vxpose.xlu0.b32.cont [13/16] 0.0, 128
    %7469 = vxpose.xlu0.b32.cont [14/16] 0.0, 128
    %7470 = vxpose.xlu0.b32.cont [15/16] 0.0, 128
    %7471 = vxpose.xlu0.b32.end [16/16] 0.0, 128
    %v7472 = vpop.trf.xlu0
    %v7473 = vpop.trf.xlu0
    %v7474 = vpop.trf.xlu0
    %v7475 = vpop.trf.xlu0
    %v7476 = vpop.trf.xlu0
    %v7477 = vpop.trf.xlu0
    %v7478 = vpop.trf.xlu0
    %v7479 = vpop.trf.xlu0
    %v7480 = vpop.trf.xlu0
    %v7481 = vpop.trf.xlu0
    %v7482 = vpop.trf.xlu0
    %v7483 = vpop.trf.xlu0
    %v7484 = vpop.trf.xlu0
    %v7485 = vpop.trf.xlu0
    %v7486 = vpop.trf.xlu0
    %v7487 = vpop.trf.xlu0
    %v7489 = vsel %vm5224, %v7472, 0
    %v7492 = vsel %vm5224, %v7473, 0
    %v7495 = vsel %vm5224, %v7474, 0
    %v7498 = vsel %vm5224, %v7475, 0
    %7500 = vmatpush.msra.mxu0 0.0
    %7501 = vmatpush.msra.mxu0 0.0
    %7502 = vmatpush.msra.mxu0 0.0
    %7503 = vmatpush.msra.mxu0 0.0
    %7504 = vmatpush.msra.mxu0 0.0
    %7505 = vmatpush.msra.mxu0 0.0
    %7506 = vmatpush.msra.mxu0 0.0
    %7507 = vmatpush.msra.mxu0 0.0
    %7508 = vmatpush.msra.mxu0 0.0
    %7509 = vmatpush.msra.mxu0 0.0
    %7510 = vmatpush.msra.mxu0 0.0
    %7511 = vmatpush.msra.mxu0 0.0
    %7512 = vmatpush.msra.mxu0 %v3399
    %7513 = vmatpush.msra.mxu0 %v3287
    %7514 = vmatpush.msra.mxu0 %v3175
    %7515 = vmatpush.msra.mxu0 %v3063
    %7516 = vmatmul.f32.gmra.mxu0 %v7489
    %v7517 = vpop.f32.mrf.mxu0
    %v7518 = vadd.f32 0.0, %v7517
    %7519 = vmatmul.f32.gmra.mxu0 %v7492
    %v7520 = vpop.f32.mrf.mxu0
    %v7521 = vadd.f32 0.0, %v7520
    %7522 = vmatmul.f32.gmra.mxu0 %v7495
    %v7523 = vpop.f32.mrf.mxu0
    %v7524 = vadd.f32 0.0, %v7523
    %7525 = vmatmul.f32.gmra.mxu0 %v7498
    %v7526 = vpop.f32.mrf.mxu0
    %v7527 = vadd.f32 0.0, %v7526
    %7528 = vdwg.mxu0
    %7529 = vxpose.xlu0.b32.start [1/16] %v183, 128
    %7530 = vxpose.xlu0.b32.cont [2/16] %v184, 128
    %7531 = vxpose.xlu0.b32.cont [3/16] %v185, 128
    %7532 = vxpose.xlu0.b32.cont [4/16] %v186, 128
    %7533 = vxpose.xlu0.b32.cont [5/16] 0.0, 128
    %7534 = vxpose.xlu0.b32.cont [6/16] 0.0, 128
    %7535 = vxpose.xlu0.b32.cont [7/16] 0.0, 128
    %7536 = vxpose.xlu0.b32.cont [8/16] 0.0, 128
    %7537 = vxpose.xlu0.b32.cont [9/16] 0.0, 128
    %7538 = vxpose.xlu0.b32.cont [10/16] 0.0, 128
    %7539 = vxpose.xlu0.b32.cont [11/16] 0.0, 128
    %7540 = vxpose.xlu0.b32.cont [12/16] 0.0, 128
    %7541 = vxpose.xlu0.b32.cont [13/16] 0.0, 128
    %7542 = vxpose.xlu0.b32.cont [14/16] 0.0, 128
    %7543 = vxpose.xlu0.b32.cont [15/16] 0.0, 128
    %7544 = vxpose.xlu0.b32.end [16/16] 0.0, 128
    %v7545 = vpop.trf.xlu0
    %v7546 = vpop.trf.xlu0
    %v7547 = vpop.trf.xlu0
    %v7548 = vpop.trf.xlu0
    %v7549 = vpop.trf.xlu0
    %v7550 = vpop.trf.xlu0
    %v7551 = vpop.trf.xlu0
    %v7552 = vpop.trf.xlu0
    %v7553 = vpop.trf.xlu0
    %v7554 = vpop.trf.xlu0
    %v7555 = vpop.trf.xlu0
    %v7556 = vpop.trf.xlu0
    %v7557 = vpop.trf.xlu0
    %v7558 = vpop.trf.xlu0
    %v7559 = vpop.trf.xlu0
    %v7560 = vpop.trf.xlu0
    %v7562 = vsel %vm5224, %v7545, 0
    %v7565 = vsel %vm5224, %v7546, 0
    %v7568 = vsel %vm5224, %v7547, 0
    %v7571 = vsel %vm5224, %v7548, 0
    %7573 = vmatpush.msra.mxu0 0.0
    %7574 = vmatpush.msra.mxu0 0.0
    %7575 = vmatpush.msra.mxu0 0.0
    %7576 = vmatpush.msra.mxu0 0.0
    %7577 = vmatpush.msra.mxu0 0.0
    %7578 = vmatpush.msra.mxu0 0.0
    %7579 = vmatpush.msra.mxu0 0.0
    %7580 = vmatpush.msra.mxu0 0.0
    %7581 = vmatpush.msra.mxu0 0.0
    %7582 = vmatpush.msra.mxu0 0.0
    %7583 = vmatpush.msra.mxu0 0.0
    %7584 = vmatpush.msra.mxu0 0.0
    %7585 = vmatpush.msra.mxu0 %v3833
    %7586 = vmatpush.msra.mxu0 %v3721
    %7587 = vmatpush.msra.mxu0 %v3609
    %7588 = vmatpush.msra.mxu0 %v3497
    %7589 = vmatmul.f32.gmra.mxu0 %v7562
    %v7590 = vpop.f32.mrf.mxu0
    %v7591 = vadd.f32 0.0, %v7590
    %7592 = vmatmul.f32.gmra.mxu0 %v7565
    %v7593 = vpop.f32.mrf.mxu0
    %v7594 = vadd.f32 0.0, %v7593
    %7595 = vmatmul.f32.gmra.mxu0 %v7568
    %v7596 = vpop.f32.mrf.mxu0
    %v7597 = vadd.f32 0.0, %v7596
    %7598 = vmatmul.f32.gmra.mxu0 %v7571
    %v7599 = vpop.f32.mrf.mxu0
    %v7600 = vadd.f32 0.0, %v7599
    %7601 = vdwg.mxu0
    %7602 = vxpose.xlu0.b32.start [1/16] %v187, 128
    %7603 = vxpose.xlu0.b32.cont [2/16] %v188, 128
    %7604 = vxpose.xlu0.b32.cont [3/16] %v189, 128
    %7605 = vxpose.xlu0.b32.cont [4/16] %v190, 128
    %7606 = vxpose.xlu0.b32.cont [5/16] 0.0, 128
    %7607 = vxpose.xlu0.b32.cont [6/16] 0.0, 128
    %7608 = vxpose.xlu0.b32.cont [7/16] 0.0, 128
    %7609 = vxpose.xlu0.b32.cont [8/16] 0.0, 128
    %7610 = vxpose.xlu0.b32.cont [9/16] 0.0, 128
    %7611 = vxpose.xlu0.b32.cont [10/16] 0.0, 128
    %7612 = vxpose.xlu0.b32.cont [11/16] 0.0, 128
    %7613 = vxpose.xlu0.b32.cont [12/16] 0.0, 128
    %7614 = vxpose.xlu0.b32.cont [13/16] 0.0, 128
    %7615 = vxpose.xlu0.b32.cont [14/16] 0.0, 128
    %7616 = vxpose.xlu0.b32.cont [15/16] 0.0, 128
    %7617 = vxpose.xlu0.b32.end [16/16] 0.0, 128
    %v7618 = vpop.trf.xlu0
    %v7619 = vpop.trf.xlu0
    %v7620 = vpop.trf.xlu0
    %v7621 = vpop.trf.xlu0
    %v7622 = vpop.trf.xlu0
    %v7623 = vpop.trf.xlu0
    %v7624 = vpop.trf.xlu0
    %v7625 = vpop.trf.xlu0
    %v7626 = vpop.trf.xlu0
    %v7627 = vpop.trf.xlu0
    %v7628 = vpop.trf.xlu0
    %v7629 = vpop.trf.xlu0
    %v7630 = vpop.trf.xlu0
    %v7631 = vpop.trf.xlu0
    %v7632 = vpop.trf.xlu0
    %v7633 = vpop.trf.xlu0
    %v7635 = vsel %vm5224, %v7618, 0
    %v7638 = vsel %vm5224, %v7619, 0
    %v7641 = vsel %vm5224, %v7620, 0
    %v7644 = vsel %vm5224, %v7621, 0
    %7646 = vmatpush.msra.mxu0 0.0
    %7647 = vmatpush.msra.mxu0 0.0
    %7648 = vmatpush.msra.mxu0 0.0
    %7649 = vmatpush.msra.mxu0 0.0
    %7650 = vmatpush.msra.mxu0 0.0
    %7651 = vmatpush.msra.mxu0 0.0
    %7652 = vmatpush.msra.mxu0 0.0
    %7653 = vmatpush.msra.mxu0 0.0
    %7654 = vmatpush.msra.mxu0 0.0
    %7655 = vmatpush.msra.mxu0 0.0
    %7656 = vmatpush.msra.mxu0 0.0
    %7657 = vmatpush.msra.mxu0 0.0
    %7658 = vmatpush.msra.mxu0 %v3835
    %7659 = vmatpush.msra.mxu0 %v3723
    %7660 = vmatpush.msra.mxu0 %v3611
    %7661 = vmatpush.msra.mxu0 %v3499
    %7662 = vmatmul.f32.gmra.mxu0 %v7635
    %v7663 = vpop.f32.mrf.mxu0
    %v7664 = vadd.f32 0.0, %v7663
    %7665 = vmatmul.f32.gmra.mxu0 %v7638
    %v7666 = vpop.f32.mrf.mxu0
    %v7667 = vadd.f32 0.0, %v7666
    %7668 = vmatmul.f32.gmra.mxu0 %v7641
    %v7669 = vpop.f32.mrf.mxu0
    %v7670 = vadd.f32 0.0, %v7669
    %7671 = vmatmul.f32.gmra.mxu0 %v7644
    %v7672 = vpop.f32.mrf.mxu0
    %v7673 = vadd.f32 0.0, %v7672
    %7674 = vdwg.mxu0
    %7675 = vxpose.xlu0.b32.start [1/16] %v191, 128
    %7676 = vxpose.xlu0.b32.cont [2/16] %v192, 128
    %7677 = vxpose.xlu0.b32.cont [3/16] %v193, 128
    %7678 = vxpose.xlu0.b32.cont [4/16] %v194, 128
    %7679 = vxpose.xlu0.b32.cont [5/16] 0.0, 128
    %7680 = vxpose.xlu0.b32.cont [6/16] 0.0, 128
    %7681 = vxpose.xlu0.b32.cont [7/16] 0.0, 128
    %7682 = vxpose.xlu0.b32.cont [8/16] 0.0, 128
    %7683 = vxpose.xlu0.b32.cont [9/16] 0.0, 128
    %7684 = vxpose.xlu0.b32.cont [10/16] 0.0, 128
    %7685 = vxpose.xlu0.b32.cont [11/16] 0.0, 128
    %7686 = vxpose.xlu0.b32.cont [12/16] 0.0, 128
    %7687 = vxpose.xlu0.b32.cont [13/16] 0.0, 128
    %7688 = vxpose.xlu0.b32.cont [14/16] 0.0, 128
    %7689 = vxpose.xlu0.b32.cont [15/16] 0.0, 128
    %7690 = vxpose.xlu0.b32.end [16/16] 0.0, 128
    %v7691 = vpop.trf.xlu0
    %v7692 = vpop.trf.xlu0
    %v7693 = vpop.trf.xlu0
    %v7694 = vpop.trf.xlu0
    %v7695 = vpop.trf.xlu0
    %v7696 = vpop.trf.xlu0
    %v7697 = vpop.trf.xlu0
    %v7698 = vpop.trf.xlu0
    %v7699 = vpop.trf.xlu0
    %v7700 = vpop.trf.xlu0
    %v7701 = vpop.trf.xlu0
    %v7702 = vpop.trf.xlu0
    %v7703 = vpop.trf.xlu0
    %v7704 = vpop.trf.xlu0
    %v7705 = vpop.trf.xlu0
    %v7706 = vpop.trf.xlu0
    %v7708 = vsel %vm5224, %v7691, 0
    %v7711 = vsel %vm5224, %v7692, 0
    %v7714 = vsel %vm5224, %v7693, 0
    %v7717 = vsel %vm5224, %v7694, 0
    %7719 = vmatpush.msra.mxu0 0.0
    %7720 = vmatpush.msra.mxu0 0.0
    %7721 = vmatpush.msra.mxu0 0.0
    %7722 = vmatpush.msra.mxu0 0.0
    %7723 = vmatpush.msra.mxu0 0.0
    %7724 = vmatpush.msra.mxu0 0.0
    %7725 = vmatpush.msra.mxu0 0.0
    %7726 = vmatpush.msra.mxu0 0.0
    %7727 = vmatpush.msra.mxu0 0.0
    %7728 = vmatpush.msra.mxu0 0.0
    %7729 = vmatpush.msra.mxu0 0.0
    %7730 = vmatpush.msra.mxu0 0.0
    %7731 = vmatpush.msra.mxu0 %v3837
    %7732 = vmatpush.msra.mxu0 %v3725
    %7733 = vmatpush.msra.mxu0 %v3613
    %7734 = vmatpush.msra.mxu0 %v3501
    %7735 = vmatmul.f32.gmra.mxu0 %v7708
    %v7736 = vpop.f32.mrf.mxu0
    %v7737 = vadd.f32 0.0, %v7736
    %7738 = vmatmul.f32.gmra.mxu0 %v7711
    %v7739 = vpop.f32.mrf.mxu0
    %v7740 = vadd.f32 0.0, %v7739
    %7741 = vmatmul.f32.gmra.mxu0 %v7714
    %v7742 = vpop.f32.mrf.mxu0
    %v7743 = vadd.f32 0.0, %v7742
    %7744 = vmatmul.f32.gmra.mxu0 %v7717
    %v7745 = vpop.f32.mrf.mxu0
    %v7746 = vadd.f32 0.0, %v7745
    %7747 = vdwg.mxu0
    %7748 = vxpose.xlu0.b32.start [1/16] %v195, 128
    %7749 = vxpose.xlu0.b32.cont [2/16] %v196, 128
    %7750 = vxpose.xlu0.b32.cont [3/16] %v197, 128
    %7751 = vxpose.xlu0.b32.cont [4/16] %v198, 128
    %7752 = vxpose.xlu0.b32.cont [5/16] 0.0, 128
    %7753 = vxpose.xlu0.b32.cont [6/16] 0.0, 128
    %7754 = vxpose.xlu0.b32.cont [7/16] 0.0, 128
    %7755 = vxpose.xlu0.b32.cont [8/16] 0.0, 128
    %7756 = vxpose.xlu0.b32.cont [9/16] 0.0, 128
    %7757 = vxpose.xlu0.b32.cont [10/16] 0.0, 128
    %7758 = vxpose.xlu0.b32.cont [11/16] 0.0, 128
    %7759 = vxpose.xlu0.b32.cont [12/16] 0.0, 128
    %7760 = vxpose.xlu0.b32.cont [13/16] 0.0, 128
    %7761 = vxpose.xlu0.b32.cont [14/16] 0.0, 128
    %7762 = vxpose.xlu0.b32.cont [15/16] 0.0, 128
    %7763 = vxpose.xlu0.b32.end [16/16] 0.0, 128
    %v7764 = vpop.trf.xlu0
    %v7765 = vpop.trf.xlu0
    %v7766 = vpop.trf.xlu0
    %v7767 = vpop.trf.xlu0
    %v7768 = vpop.trf.xlu0
    %v7769 = vpop.trf.xlu0
    %v7770 = vpop.trf.xlu0
    %v7771 = vpop.trf.xlu0
    %v7772 = vpop.trf.xlu0
    %v7773 = vpop.trf.xlu0
    %v7774 = vpop.trf.xlu0
    %v7775 = vpop.trf.xlu0
    %v7776 = vpop.trf.xlu0
    %v7777 = vpop.trf.xlu0
    %v7778 = vpop.trf.xlu0
    %v7779 = vpop.trf.xlu0
    %v7781 = vsel %vm5224, %v7764, 0
    %v7784 = vsel %vm5224, %v7765, 0
    %v7787 = vsel %vm5224, %v7766, 0
    %v7790 = vsel %vm5224, %v7767, 0
    %7792 = vmatpush.msra.mxu0 0.0
    %7793 = vmatpush.msra.mxu0 0.0
    %7794 = vmatpush.msra.mxu0 0.0
    %7795 = vmatpush.msra.mxu0 0.0
    %7796 = vmatpush.msra.mxu0 0.0
    %7797 = vmatpush.msra.mxu0 0.0
    %7798 = vmatpush.msra.mxu0 0.0
    %7799 = vmatpush.msra.mxu0 0.0
    %7800 = vmatpush.msra.mxu0 0.0
    %7801 = vmatpush.msra.mxu0 0.0
    %7802 = vmatpush.msra.mxu0 0.0
    %7803 = vmatpush.msra.mxu0 0.0
    %7804 = vmatpush.msra.mxu0 %v3839
    %7805 = vmatpush.msra.mxu0 %v3727
    %7806 = vmatpush.msra.mxu0 %v3615
    %7807 = vmatpush.msra.mxu0 %v3503
    %7808 = vmatmul.f32.gmra.mxu0 %v7781
    %v7809 = vpop.f32.mrf.mxu0
    %v7810 = vadd.f32 0.0, %v7809
    %7811 = vmatmul.f32.gmra.mxu0 %v7784
    %v7812 = vpop.f32.mrf.mxu0
    %v7813 = vadd.f32 0.0, %v7812
    %7814 = vmatmul.f32.gmra.mxu0 %v7787
    %v7815 = vpop.f32.mrf.mxu0
    %v7816 = vadd.f32 0.0, %v7815
    %7817 = vmatmul.f32.gmra.mxu0 %v7790
    %v7818 = vpop.f32.mrf.mxu0
    %v7819 = vadd.f32 0.0, %v7818
    %7820 = vdwg.mxu0
    %7821 = vxpose.xlu0.b32.start [1/16] %v199, 128
    %7822 = vxpose.xlu0.b32.cont [2/16] %v200, 128
    %7823 = vxpose.xlu0.b32.cont [3/16] %v201, 128
    %7824 = vxpose.xlu0.b32.cont [4/16] %v202, 128
    %7825 = vxpose.xlu0.b32.cont [5/16] 0.0, 128
    %7826 = vxpose.xlu0.b32.cont [6/16] 0.0, 128
    %7827 = vxpose.xlu0.b32.cont [7/16] 0.0, 128
    %7828 = vxpose.xlu0.b32.cont [8/16] 0.0, 128
    %7829 = vxpose.xlu0.b32.cont [9/16] 0.0, 128
    %7830 = vxpose.xlu0.b32.cont [10/16] 0.0, 128
    %7831 = vxpose.xlu0.b32.cont [11/16] 0.0, 128
    %7832 = vxpose.xlu0.b32.cont [12/16] 0.0, 128
    %7833 = vxpose.xlu0.b32.cont [13/16] 0.0, 128
    %7834 = vxpose.xlu0.b32.cont [14/16] 0.0, 128
    %7835 = vxpose.xlu0.b32.cont [15/16] 0.0, 128
    %7836 = vxpose.xlu0.b32.end [16/16] 0.0, 128
    %v7837 = vpop.trf.xlu0
    %v7838 = vpop.trf.xlu0
    %v7839 = vpop.trf.xlu0
    %v7840 = vpop.trf.xlu0
    %v7841 = vpop.trf.xlu0
    %v7842 = vpop.trf.xlu0
    %v7843 = vpop.trf.xlu0
    %v7844 = vpop.trf.xlu0
    %v7845 = vpop.trf.xlu0
    %v7846 = vpop.trf.xlu0
    %v7847 = vpop.trf.xlu0
    %v7848 = vpop.trf.xlu0
    %v7849 = vpop.trf.xlu0
    %v7850 = vpop.trf.xlu0
    %v7851 = vpop.trf.xlu0
    %v7852 = vpop.trf.xlu0
    %v7854 = vsel %vm5224, %v7837, 0
    %v7857 = vsel %vm5224, %v7838, 0
    %v7860 = vsel %vm5224, %v7839, 0
    %v7863 = vsel %vm5224, %v7840, 0
    %7865 = vmatpush.msra.mxu0 0.0
    %7866 = vmatpush.msra.mxu0 0.0
    %7867 = vmatpush.msra.mxu0 0.0
    %7868 = vmatpush.msra.mxu0 0.0
    %7869 = vmatpush.msra.mxu0 0.0
    %7870 = vmatpush.msra.mxu0 0.0
    %7871 = vmatpush.msra.mxu0 0.0
    %7872 = vmatpush.msra.mxu0 0.0
    %7873 = vmatpush.msra.mxu0 0.0
    %7874 = vmatpush.msra.mxu0 0.0
    %7875 = vmatpush.msra.mxu0 0.0
    %7876 = vmatpush.msra.mxu0 0.0
    %7877 = vmatpush.msra.mxu0 %v3841
    %7878 = vmatpush.msra.mxu0 %v3729
    %7879 = vmatpush.msra.mxu0 %v3617
    %7880 = vmatpush.msra.mxu0 %v3505
    %7881 = vmatmul.f32.gmra.mxu0 %v7854
    %v7882 = vpop.f32.mrf.mxu0
    %v7883 = vadd.f32 0.0, %v7882
    %7884 = vmatmul.f32.gmra.mxu0 %v7857
    %v7885 = vpop.f32.mrf.mxu0
    %v7886 = vadd.f32 0.0, %v7885
    %7887 = vmatmul.f32.gmra.mxu0 %v7860
    %v7888 = vpop.f32.mrf.mxu0
    %v7889 = vadd.f32 0.0, %v7888
    %7890 = vmatmul.f32.gmra.mxu0 %v7863
    %v7891 = vpop.f32.mrf.mxu0
    %v7892 = vadd.f32 0.0, %v7891
    %7893 = vdwg.mxu0
    %7894 = vxpose.xlu0.b32.start [1/16] %v203, 128
    %7895 = vxpose.xlu0.b32.cont [2/16] %v204, 128
    %7896 = vxpose.xlu0.b32.cont [3/16] %v205, 128
    %7897 = vxpose.xlu0.b32.cont [4/16] %v206, 128
    %7898 = vxpose.xlu0.b32.cont [5/16] 0.0, 128
    %7899 = vxpose.xlu0.b32.cont [6/16] 0.0, 128
    %7900 = vxpose.xlu0.b32.cont [7/16] 0.0, 128
    %7901 = vxpose.xlu0.b32.cont [8/16] 0.0, 128
    %7902 = vxpose.xlu0.b32.cont [9/16] 0.0, 128
    %7903 = vxpose.xlu0.b32.cont [10/16] 0.0, 128
    %7904 = vxpose.xlu0.b32.cont [11/16] 0.0, 128
    %7905 = vxpose.xlu0.b32.cont [12/16] 0.0, 128
    %7906 = vxpose.xlu0.b32.cont [13/16] 0.0, 128
    %7907 = vxpose.xlu0.b32.cont [14/16] 0.0, 128
    %7908 = vxpose.xlu0.b32.cont [15/16] 0.0, 128
    %7909 = vxpose.xlu0.b32.end [16/16] 0.0, 128
    %v7910 = vpop.trf.xlu0
    %v7911 = vpop.trf.xlu0
    %v7912 = vpop.trf.xlu0
    %v7913 = vpop.trf.xlu0
    %v7914 = vpop.trf.xlu0
    %v7915 = vpop.trf.xlu0
    %v7916 = vpop.trf.xlu0
    %v7917 = vpop.trf.xlu0
    %v7918 = vpop.trf.xlu0
    %v7919 = vpop.trf.xlu0
    %v7920 = vpop.trf.xlu0
    %v7921 = vpop.trf.xlu0
    %v7922 = vpop.trf.xlu0
    %v7923 = vpop.trf.xlu0
    %v7924 = vpop.trf.xlu0
    %v7925 = vpop.trf.xlu0
    %v7927 = vsel %vm5224, %v7910, 0
    %v7930 = vsel %vm5224, %v7911, 0
    %v7933 = vsel %vm5224, %v7912, 0
    %v7936 = vsel %vm5224, %v7913, 0
    %7938 = vmatpush.msra.mxu0 0.0
    %7939 = vmatpush.msra.mxu0 0.0
    %7940 = vmatpush.msra.mxu0 0.0
    %7941 = vmatpush.msra.mxu0 0.0
    %7942 = vmatpush.msra.mxu0 0.0
    %7943 = vmatpush.msra.mxu0 0.0
    %7944 = vmatpush.msra.mxu0 0.0
    %7945 = vmatpush.msra.mxu0 0.0
    %7946 = vmatpush.msra.mxu0 0.0
    %7947 = vmatpush.msra.mxu0 0.0
    %7948 = vmatpush.msra.mxu0 0.0
    %7949 = vmatpush.msra.mxu0 0.0
    %7950 = vmatpush.msra.mxu0 %v3843
    %7951 = vmatpush.msra.mxu0 %v3731
    %7952 = vmatpush.msra.mxu0 %v3619
    %7953 = vmatpush.msra.mxu0 %v3507
    %7954 = vmatmul.f32.gmra.mxu0 %v7927
    %v7955 = vpop.f32.mrf.mxu0
    %v7956 = vadd.f32 0.0, %v7955
    %7957 = vmatmul.f32.gmra.mxu0 %v7930
    %v7958 = vpop.f32.mrf.mxu0
    %v7959 = vadd.f32 0.0, %v7958
    %7960 = vmatmul.f32.gmra.mxu0 %v7933
    %v7961 = vpop.f32.mrf.mxu0
    %v7962 = vadd.f32 0.0, %v7961
    %7963 = vmatmul.f32.gmra.mxu0 %v7936
    %v7964 = vpop.f32.mrf.mxu0
    %v7965 = vadd.f32 0.0, %v7964
    %7966 = vdwg.mxu0
    %7967 = vxpose.xlu0.b32.start [1/16] %v207, 128
    %7968 = vxpose.xlu0.b32.cont [2/16] %v208, 128
    %7969 = vxpose.xlu0.b32.cont [3/16] %v209, 128
    %7970 = vxpose.xlu0.b32.cont [4/16] %v210, 128
    %7971 = vxpose.xlu0.b32.cont [5/16] 0.0, 128
    %7972 = vxpose.xlu0.b32.cont [6/16] 0.0, 128
    %7973 = vxpose.xlu0.b32.cont [7/16] 0.0, 128
    %7974 = vxpose.xlu0.b32.cont [8/16] 0.0, 128
    %7975 = vxpose.xlu0.b32.cont [9/16] 0.0, 128
    %7976 = vxpose.xlu0.b32.cont [10/16] 0.0, 128
    %7977 = vxpose.xlu0.b32.cont [11/16] 0.0, 128
    %7978 = vxpose.xlu0.b32.cont [12/16] 0.0, 128
    %7979 = vxpose.xlu0.b32.cont [13/16] 0.0, 128
    %7980 = vxpose.xlu0.b32.cont [14/16] 0.0, 128
    %7981 = vxpose.xlu0.b32.cont [15/16] 0.0, 128
    %7982 = vxpose.xlu0.b32.end [16/16] 0.0, 128
    %v7983 = vpop.trf.xlu0
    %v7984 = vpop.trf.xlu0
    %v7985 = vpop.trf.xlu0
    %v7986 = vpop.trf.xlu0
    %v7987 = vpop.trf.xlu0
    %v7988 = vpop.trf.xlu0
    %v7989 = vpop.trf.xlu0
    %v7990 = vpop.trf.xlu0
    %v7991 = vpop.trf.xlu0
    %v7992 = vpop.trf.xlu0
    %v7993 = vpop.trf.xlu0
    %v7994 = vpop.trf.xlu0
    %v7995 = vpop.trf.xlu0
    %v7996 = vpop.trf.xlu0
    %v7997 = vpop.trf.xlu0
    %v7998 = vpop.trf.xlu0
    %v8000 = vsel %vm5224, %v7983, 0
    %v8003 = vsel %vm5224, %v7984, 0
    %v8006 = vsel %vm5224, %v7985, 0
    %v8009 = vsel %vm5224, %v7986, 0
    %8011 = vmatpush.msra.mxu0 0.0
    %8012 = vmatpush.msra.mxu0 0.0
    %8013 = vmatpush.msra.mxu0 0.0
    %8014 = vmatpush.msra.mxu0 0.0
    %8015 = vmatpush.msra.mxu0 0.0
    %8016 = vmatpush.msra.mxu0 0.0
    %8017 = vmatpush.msra.mxu0 0.0
    %8018 = vmatpush.msra.mxu0 0.0
    %8019 = vmatpush.msra.mxu0 0.0
    %8020 = vmatpush.msra.mxu0 0.0
    %8021 = vmatpush.msra.mxu0 0.0
    %8022 = vmatpush.msra.mxu0 0.0
    %8023 = vmatpush.msra.mxu0 %v3845
    %8024 = vmatpush.msra.mxu0 %v3733
    %8025 = vmatpush.msra.mxu0 %v3621
    %8026 = vmatpush.msra.mxu0 %v3509
    %8027 = vmatmul.f32.gmra.mxu0 %v8000
    %v8028 = vpop.f32.mrf.mxu0
    %v8029 = vadd.f32 0.0, %v8028
    %8030 = vmatmul.f32.gmra.mxu0 %v8003
    %v8031 = vpop.f32.mrf.mxu0
    %v8032 = vadd.f32 0.0, %v8031
    %8033 = vmatmul.f32.gmra.mxu0 %v8006
    %v8034 = vpop.f32.mrf.mxu0
    %v8035 = vadd.f32 0.0, %v8034
    %8036 = vmatmul.f32.gmra.mxu0 %v8009
    %v8037 = vpop.f32.mrf.mxu0
    %v8038 = vadd.f32 0.0, %v8037
    %8039 = vdwg.mxu0
    %8040 = vxpose.xlu0.b32.start [1/16] %v211, 128
    %8041 = vxpose.xlu0.b32.cont [2/16] %v212, 128
    %8042 = vxpose.xlu0.b32.cont [3/16] %v213, 128
    %8043 = vxpose.xlu0.b32.cont [4/16] %v214, 128
    %8044 = vxpose.xlu0.b32.cont [5/16] 0.0, 128
    %8045 = vxpose.xlu0.b32.cont [6/16] 0.0, 128
    %8046 = vxpose.xlu0.b32.cont [7/16] 0.0, 128
    %8047 = vxpose.xlu0.b32.cont [8/16] 0.0, 128
    %8048 = vxpose.xlu0.b32.cont [9/16] 0.0, 128
    %8049 = vxpose.xlu0.b32.cont [10/16] 0.0, 128
    %8050 = vxpose.xlu0.b32.cont [11/16] 0.0, 128
    %8051 = vxpose.xlu0.b32.cont [12/16] 0.0, 128
    %8052 = vxpose.xlu0.b32.cont [13/16] 0.0, 128
    %8053 = vxpose.xlu0.b32.cont [14/16] 0.0, 128
    %8054 = vxpose.xlu0.b32.cont [15/16] 0.0, 128
    %8055 = vxpose.xlu0.b32.end [16/16] 0.0, 128
    %v8056 = vpop.trf.xlu0
    %v8057 = vpop.trf.xlu0
    %v8058 = vpop.trf.xlu0
    %v8059 = vpop.trf.xlu0
    %v8060 = vpop.trf.xlu0
    %v8061 = vpop.trf.xlu0
    %v8062 = vpop.trf.xlu0
    %v8063 = vpop.trf.xlu0
    %v8064 = vpop.trf.xlu0
    %v8065 = vpop.trf.xlu0
    %v8066 = vpop.trf.xlu0
    %v8067 = vpop.trf.xlu0
    %v8068 = vpop.trf.xlu0
    %v8069 = vpop.trf.xlu0
    %v8070 = vpop.trf.xlu0
    %v8071 = vpop.trf.xlu0
    %v8073 = vsel %vm5224, %v8056, 0
    %v8076 = vsel %vm5224, %v8057, 0
    %v8079 = vsel %vm5224, %v8058, 0
    %v8082 = vsel %vm5224, %v8059, 0
    %8084 = vmatpush.msra.mxu0 0.0
    %8085 = vmatpush.msra.mxu0 0.0
    %8086 = vmatpush.msra.mxu0 0.0
    %8087 = vmatpush.msra.mxu0 0.0
    %8088 = vmatpush.msra.mxu0 0.0
    %8089 = vmatpush.msra.mxu0 0.0
    %8090 = vmatpush.msra.mxu0 0.0
    %8091 = vmatpush.msra.mxu0 0.0
    %8092 = vmatpush.msra.mxu0 0.0
    %8093 = vmatpush.msra.mxu0 0.0
    %8094 = vmatpush.msra.mxu0 0.0
    %8095 = vmatpush.msra.mxu0 0.0
    %8096 = vmatpush.msra.mxu0 %v3847
    %8097 = vmatpush.msra.mxu0 %v3735
    %8098 = vmatpush.msra.mxu0 %v3623
    %8099 = vmatpush.msra.mxu0 %v3511
    %8100 = vmatmul.f32.gmra.mxu0 %v8073
    %v8101 = vpop.f32.mrf.mxu0
    %v8102 = vadd.f32 0.0, %v8101
    %8103 = vmatmul.f32.gmra.mxu0 %v8076
    %v8104 = vpop.f32.mrf.mxu0
    %v8105 = vadd.f32 0.0, %v8104
    %8106 = vmatmul.f32.gmra.mxu0 %v8079
    %v8107 = vpop.f32.mrf.mxu0
    %v8108 = vadd.f32 0.0, %v8107
    %8109 = vmatmul.f32.gmra.mxu0 %v8082
    %v8110 = vpop.f32.mrf.mxu0
    %v8111 = vadd.f32 0.0, %v8110
    %8112 = vdwg.mxu0
    %8113 = vxpose.xlu0.b32.start [1/16] %v215, 128
    %8114 = vxpose.xlu0.b32.cont [2/16] %v216, 128
    %8115 = vxpose.xlu0.b32.cont [3/16] %v217, 128
    %8116 = vxpose.xlu0.b32.cont [4/16] %v218, 128
    %8117 = vxpose.xlu0.b32.cont [5/16] 0.0, 128
    %8118 = vxpose.xlu0.b32.cont [6/16] 0.0, 128
    %8119 = vxpose.xlu0.b32.cont [7/16] 0.0, 128
    %8120 = vxpose.xlu0.b32.cont [8/16] 0.0, 128
    %8121 = vxpose.xlu0.b32.cont [9/16] 0.0, 128
    %8122 = vxpose.xlu0.b32.cont [10/16] 0.0, 128
    %8123 = vxpose.xlu0.b32.cont [11/16] 0.0, 128
    %8124 = vxpose.xlu0.b32.cont [12/16] 0.0, 128
    %8125 = vxpose.xlu0.b32.cont [13/16] 0.0, 128
    %8126 = vxpose.xlu0.b32.cont [14/16] 0.0, 128
    %8127 = vxpose.xlu0.b32.cont [15/16] 0.0, 128
    %8128 = vxpose.xlu0.b32.end [16/16] 0.0, 128
    %v8129 = vpop.trf.xlu0
    %v8130 = vpop.trf.xlu0
    %v8131 = vpop.trf.xlu0
    %v8132 = vpop.trf.xlu0
    %v8133 = vpop.trf.xlu0
    %v8134 = vpop.trf.xlu0
    %v8135 = vpop.trf.xlu0
    %v8136 = vpop.trf.xlu0
    %v8137 = vpop.trf.xlu0
    %v8138 = vpop.trf.xlu0
    %v8139 = vpop.trf.xlu0
    %v8140 = vpop.trf.xlu0
    %v8141 = vpop.trf.xlu0
    %v8142 = vpop.trf.xlu0
    %v8143 = vpop.trf.xlu0
    %v8144 = vpop.trf.xlu0
    %v8146 = vsel %vm5224, %v8129, 0
    %v8149 = vsel %vm5224, %v8130, 0
    %v8152 = vsel %vm5224, %v8131, 0
    %v8155 = vsel %vm5224, %v8132, 0
    %8157 = vmatpush.msra.mxu0 0.0
    %8158 = vmatpush.msra.mxu0 0.0
    %8159 = vmatpush.msra.mxu0 0.0
    %8160 = vmatpush.msra.mxu0 0.0
    %8161 = vmatpush.msra.mxu0 0.0
    %8162 = vmatpush.msra.mxu0 0.0
    %8163 = vmatpush.msra.mxu0 0.0
    %8164 = vmatpush.msra.mxu0 0.0
    %8165 = vmatpush.msra.mxu0 0.0
    %8166 = vmatpush.msra.mxu0 0.0
    %8167 = vmatpush.msra.mxu0 0.0
    %8168 = vmatpush.msra.mxu0 0.0
    %8169 = vmatpush.msra.mxu0 %v4281
    %8170 = vmatpush.msra.mxu0 %v4169
    %8171 = vmatpush.msra.mxu0 %v4057
    %8172 = vmatpush.msra.mxu0 %v3945
    %8173 = vmatmul.f32.gmra.mxu0 %v8146
    %v8174 = vpop.f32.mrf.mxu0
    %v8175 = vadd.f32 0.0, %v8174
    %8176 = vmatmul.f32.gmra.mxu0 %v8149
    %v8177 = vpop.f32.mrf.mxu0
    %v8178 = vadd.f32 0.0, %v8177
    %8179 = vmatmul.f32.gmra.mxu0 %v8152
    %v8180 = vpop.f32.mrf.mxu0
    %v8181 = vadd.f32 0.0, %v8180
    %8182 = vmatmul.f32.gmra.mxu0 %v8155
    %v8183 = vpop.f32.mrf.mxu0
    %v8184 = vadd.f32 0.0, %v8183
    %8185 = vdwg.mxu0
    %8186 = vxpose.xlu0.b32.start [1/16] %v219, 128
    %8187 = vxpose.xlu0.b32.cont [2/16] %v220, 128
    %8188 = vxpose.xlu0.b32.cont [3/16] %v221, 128
    %8189 = vxpose.xlu0.b32.cont [4/16] %v222, 128
    %8190 = vxpose.xlu0.b32.cont [5/16] 0.0, 128
    %8191 = vxpose.xlu0.b32.cont [6/16] 0.0, 128
    %8192 = vxpose.xlu0.b32.cont [7/16] 0.0, 128
    %8193 = vxpose.xlu0.b32.cont [8/16] 0.0, 128
    %8194 = vxpose.xlu0.b32.cont [9/16] 0.0, 128
    %8195 = vxpose.xlu0.b32.cont [10/16] 0.0, 128
    %8196 = vxpose.xlu0.b32.cont [11/16] 0.0, 128
    %8197 = vxpose.xlu0.b32.cont [12/16] 0.0, 128
    %8198 = vxpose.xlu0.b32.cont [13/16] 0.0, 128
    %8199 = vxpose.xlu0.b32.cont [14/16] 0.0, 128
    %8200 = vxpose.xlu0.b32.cont [15/16] 0.0, 128
    %8201 = vxpose.xlu0.b32.end [16/16] 0.0, 128
    %v8202 = vpop.trf.xlu0
    %v8203 = vpop.trf.xlu0
    %v8204 = vpop.trf.xlu0
    %v8205 = vpop.trf.xlu0
    %v8206 = vpop.trf.xlu0
    %v8207 = vpop.trf.xlu0
    %v8208 = vpop.trf.xlu0
    %v8209 = vpop.trf.xlu0
    %v8210 = vpop.trf.xlu0
    %v8211 = vpop.trf.xlu0
    %v8212 = vpop.trf.xlu0
    %v8213 = vpop.trf.xlu0
    %v8214 = vpop.trf.xlu0
    %v8215 = vpop.trf.xlu0
    %v8216 = vpop.trf.xlu0
    %v8217 = vpop.trf.xlu0
    %v8219 = vsel %vm5224, %v8202, 0
    %v8222 = vsel %vm5224, %v8203, 0
    %v8225 = vsel %vm5224, %v8204, 0
    %v8228 = vsel %vm5224, %v8205, 0
    %8230 = vmatpush.msra.mxu0 0.0
    %8231 = vmatpush.msra.mxu0 0.0
    %8232 = vmatpush.msra.mxu0 0.0
    %8233 = vmatpush.msra.mxu0 0.0
    %8234 = vmatpush.msra.mxu0 0.0
    %8235 = vmatpush.msra.mxu0 0.0
    %8236 = vmatpush.msra.mxu0 0.0
    %8237 = vmatpush.msra.mxu0 0.0
    %8238 = vmatpush.msra.mxu0 0.0
    %8239 = vmatpush.msra.mxu0 0.0
    %8240 = vmatpush.msra.mxu0 0.0
    %8241 = vmatpush.msra.mxu0 0.0
    %8242 = vmatpush.msra.mxu0 %v4283
    %8243 = vmatpush.msra.mxu0 %v4171
    %8244 = vmatpush.msra.mxu0 %v4059
    %8245 = vmatpush.msra.mxu0 %v3947
    %8246 = vmatmul.f32.gmra.mxu0 %v8219
    %v8247 = vpop.f32.mrf.mxu0
    %v8248 = vadd.f32 0.0, %v8247
    %8249 = vmatmul.f32.gmra.mxu0 %v8222
    %v8250 = vpop.f32.mrf.mxu0
    %v8251 = vadd.f32 0.0, %v8250
    %8252 = vmatmul.f32.gmra.mxu0 %v8225
    %v8253 = vpop.f32.mrf.mxu0
    %v8254 = vadd.f32 0.0, %v8253
    %8255 = vmatmul.f32.gmra.mxu0 %v8228
    %v8256 = vpop.f32.mrf.mxu0
    %v8257 = vadd.f32 0.0, %v8256
    %8258 = vdwg.mxu0
    %8259 = vxpose.xlu0.b32.start [1/16] %v223, 128
    %8260 = vxpose.xlu0.b32.cont [2/16] %v224, 128
    %8261 = vxpose.xlu0.b32.cont [3/16] %v225, 128
    %8262 = vxpose.xlu0.b32.cont [4/16] %v226, 128
    %8263 = vxpose.xlu0.b32.cont [5/16] 0.0, 128
    %8264 = vxpose.xlu0.b32.cont [6/16] 0.0, 128
    %8265 = vxpose.xlu0.b32.cont [7/16] 0.0, 128
    %8266 = vxpose.xlu0.b32.cont [8/16] 0.0, 128
    %8267 = vxpose.xlu0.b32.cont [9/16] 0.0, 128
    %8268 = vxpose.xlu0.b32.cont [10/16] 0.0, 128
    %8269 = vxpose.xlu0.b32.cont [11/16] 0.0, 128
    %8270 = vxpose.xlu0.b32.cont [12/16] 0.0, 128
    %8271 = vxpose.xlu0.b32.cont [13/16] 0.0, 128
    %8272 = vxpose.xlu0.b32.cont [14/16] 0.0, 128
    %8273 = vxpose.xlu0.b32.cont [15/16] 0.0, 128
    %8274 = vxpose.xlu0.b32.end [16/16] 0.0, 128
    %v8275 = vpop.trf.xlu0
    %v8276 = vpop.trf.xlu0
    %v8277 = vpop.trf.xlu0
    %v8278 = vpop.trf.xlu0
    %v8279 = vpop.trf.xlu0
    %v8280 = vpop.trf.xlu0
    %v8281 = vpop.trf.xlu0
    %v8282 = vpop.trf.xlu0
    %v8283 = vpop.trf.xlu0
    %v8284 = vpop.trf.xlu0
    %v8285 = vpop.trf.xlu0
    %v8286 = vpop.trf.xlu0
    %v8287 = vpop.trf.xlu0
    %v8288 = vpop.trf.xlu0
    %v8289 = vpop.trf.xlu0
    %v8290 = vpop.trf.xlu0
    %v8292 = vsel %vm5224, %v8275, 0
    %v8295 = vsel %vm5224, %v8276, 0
    %v8298 = vsel %vm5224, %v8277, 0
    %v8301 = vsel %vm5224, %v8278, 0
    %8303 = vmatpush.msra.mxu0 0.0
    %8304 = vmatpush.msra.mxu0 0.0
    %8305 = vmatpush.msra.mxu0 0.0
    %8306 = vmatpush.msra.mxu0 0.0
    %8307 = vmatpush.msra.mxu0 0.0
    %8308 = vmatpush.msra.mxu0 0.0
    %8309 = vmatpush.msra.mxu0 0.0
    %8310 = vmatpush.msra.mxu0 0.0
    %8311 = vmatpush.msra.mxu0 0.0
    %8312 = vmatpush.msra.mxu0 0.0
    %8313 = vmatpush.msra.mxu0 0.0
    %8314 = vmatpush.msra.mxu0 0.0
    %8315 = vmatpush.msra.mxu0 %v4285
    %8316 = vmatpush.msra.mxu0 %v4173
    %8317 = vmatpush.msra.mxu0 %v4061
    %8318 = vmatpush.msra.mxu0 %v3949
    %8319 = vmatmul.f32.gmra.mxu0 %v8292
    %v8320 = vpop.f32.mrf.mxu0
    %v8321 = vadd.f32 0.0, %v8320
    %8322 = vmatmul.f32.gmra.mxu0 %v8295
    %v8323 = vpop.f32.mrf.mxu0
    %v8324 = vadd.f32 0.0, %v8323
    %8325 = vmatmul.f32.gmra.mxu0 %v8298
    %v8326 = vpop.f32.mrf.mxu0
    %v8327 = vadd.f32 0.0, %v8326
    %8328 = vmatmul.f32.gmra.mxu0 %v8301
    %v8329 = vpop.f32.mrf.mxu0
    %v8330 = vadd.f32 0.0, %v8329
    %8331 = vdwg.mxu0
    %8332 = vxpose.xlu0.b32.start [1/16] %v227, 128
    %8333 = vxpose.xlu0.b32.cont [2/16] %v228, 128
    %8334 = vxpose.xlu0.b32.cont [3/16] %v229, 128
    %8335 = vxpose.xlu0.b32.cont [4/16] %v230, 128
    %8336 = vxpose.xlu0.b32.cont [5/16] 0.0, 128
    %8337 = vxpose.xlu0.b32.cont [6/16] 0.0, 128
    %8338 = vxpose.xlu0.b32.cont [7/16] 0.0, 128
    %8339 = vxpose.xlu0.b32.cont [8/16] 0.0, 128
    %8340 = vxpose.xlu0.b32.cont [9/16] 0.0, 128
    %8341 = vxpose.xlu0.b32.cont [10/16] 0.0, 128
    %8342 = vxpose.xlu0.b32.cont [11/16] 0.0, 128
    %8343 = vxpose.xlu0.b32.cont [12/16] 0.0, 128
    %8344 = vxpose.xlu0.b32.cont [13/16] 0.0, 128
    %8345 = vxpose.xlu0.b32.cont [14/16] 0.0, 128
    %8346 = vxpose.xlu0.b32.cont [15/16] 0.0, 128
    %8347 = vxpose.xlu0.b32.end [16/16] 0.0, 128
    %v8348 = vpop.trf.xlu0
    %v8349 = vpop.trf.xlu0
    %v8350 = vpop.trf.xlu0
    %v8351 = vpop.trf.xlu0
    %v8352 = vpop.trf.xlu0
    %v8353 = vpop.trf.xlu0
    %v8354 = vpop.trf.xlu0
    %v8355 = vpop.trf.xlu0
    %v8356 = vpop.trf.xlu0
    %v8357 = vpop.trf.xlu0
    %v8358 = vpop.trf.xlu0
    %v8359 = vpop.trf.xlu0
    %v8360 = vpop.trf.xlu0
    %v8361 = vpop.trf.xlu0
    %v8362 = vpop.trf.xlu0
    %v8363 = vpop.trf.xlu0
    %v8365 = vsel %vm5224, %v8348, 0
    %v8368 = vsel %vm5224, %v8349, 0
    %v8371 = vsel %vm5224, %v8350, 0
    %v8374 = vsel %vm5224, %v8351, 0
    %8376 = vmatpush.msra.mxu0 0.0
    %8377 = vmatpush.msra.mxu0 0.0
    %8378 = vmatpush.msra.mxu0 0.0
    %8379 = vmatpush.msra.mxu0 0.0
    %8380 = vmatpush.msra.mxu0 0.0
    %8381 = vmatpush.msra.mxu0 0.0
    %8382 = vmatpush.msra.mxu0 0.0
    %8383 = vmatpush.msra.mxu0 0.0
    %8384 = vmatpush.msra.mxu0 0.0
    %8385 = vmatpush.msra.mxu0 0.0
    %8386 = vmatpush.msra.mxu0 0.0
    %8387 = vmatpush.msra.mxu0 0.0
    %8388 = vmatpush.msra.mxu0 %v4287
    %8389 = vmatpush.msra.mxu0 %v4175
    %8390 = vmatpush.msra.mxu0 %v4063
    %8391 = vmatpush.msra.mxu0 %v3951
    %8392 = vmatmul.f32.gmra.mxu0 %v8365
    %v8393 = vpop.f32.mrf.mxu0
    %v8394 = vadd.f32 0.0, %v8393
    %8395 = vmatmul.f32.gmra.mxu0 %v8368
    %v8396 = vpop.f32.mrf.mxu0
    %v8397 = vadd.f32 0.0, %v8396
    %8398 = vmatmul.f32.gmra.mxu0 %v8371
    %v8399 = vpop.f32.mrf.mxu0
    %v8400 = vadd.f32 0.0, %v8399
    %8401 = vmatmul.f32.gmra.mxu0 %v8374
    %v8402 = vpop.f32.mrf.mxu0
    %v8403 = vadd.f32 0.0, %v8402
    %8404 = vdwg.mxu0
    %8405 = vxpose.xlu0.b32.start [1/16] %v231, 128
    %8406 = vxpose.xlu0.b32.cont [2/16] %v232, 128
    %8407 = vxpose.xlu0.b32.cont [3/16] %v233, 128
    %8408 = vxpose.xlu0.b32.cont [4/16] %v234, 128
    %8409 = vxpose.xlu0.b32.cont [5/16] 0.0, 128
    %8410 = vxpose.xlu0.b32.cont [6/16] 0.0, 128
    %8411 = vxpose.xlu0.b32.cont [7/16] 0.0, 128
    %8412 = vxpose.xlu0.b32.cont [8/16] 0.0, 128
    %8413 = vxpose.xlu0.b32.cont [9/16] 0.0, 128
    %8414 = vxpose.xlu0.b32.cont [10/16] 0.0, 128
    %8415 = vxpose.xlu0.b32.cont [11/16] 0.0, 128
    %8416 = vxpose.xlu0.b32.cont [12/16] 0.0, 128
    %8417 = vxpose.xlu0.b32.cont [13/16] 0.0, 128
    %8418 = vxpose.xlu0.b32.cont [14/16] 0.0, 128
    %8419 = vxpose.xlu0.b32.cont [15/16] 0.0, 128
    %8420 = vxpose.xlu0.b32.end [16/16] 0.0, 128
    %v8421 = vpop.trf.xlu0
    %v8422 = vpop.trf.xlu0
    %v8423 = vpop.trf.xlu0
    %v8424 = vpop.trf.xlu0
    %v8425 = vpop.trf.xlu0
    %v8426 = vpop.trf.xlu0
    %v8427 = vpop.trf.xlu0
    %v8428 = vpop.trf.xlu0
    %v8429 = vpop.trf.xlu0
    %v8430 = vpop.trf.xlu0
    %v8431 = vpop.trf.xlu0
    %v8432 = vpop.trf.xlu0
    %v8433 = vpop.trf.xlu0
    %v8434 = vpop.trf.xlu0
    %v8435 = vpop.trf.xlu0
    %v8436 = vpop.trf.xlu0
    %v8438 = vsel %vm5224, %v8421, 0
    %v8441 = vsel %vm5224, %v8422, 0
    %v8444 = vsel %vm5224, %v8423, 0
    %v8447 = vsel %vm5224, %v8424, 0
    %8449 = vmatpush.msra.mxu0 0.0
    %8450 = vmatpush.msra.mxu0 0.0
    %8451 = vmatpush.msra.mxu0 0.0
    %8452 = vmatpush.msra.mxu0 0.0
    %8453 = vmatpush.msra.mxu0 0.0
    %8454 = vmatpush.msra.mxu0 0.0
    %8455 = vmatpush.msra.mxu0 0.0
    %8456 = vmatpush.msra.mxu0 0.0
    %8457 = vmatpush.msra.mxu0 0.0
    %8458 = vmatpush.msra.mxu0 0.0
    %8459 = vmatpush.msra.mxu0 0.0
    %8460 = vmatpush.msra.mxu0 0.0
    %8461 = vmatpush.msra.mxu0 %v4289
    %8462 = vmatpush.msra.mxu0 %v4177
    %8463 = vmatpush.msra.mxu0 %v4065
    %8464 = vmatpush.msra.mxu0 %v3953
    %8465 = vmatmul.f32.gmra.mxu0 %v8438
    %v8466 = vpop.f32.mrf.mxu0
    %v8467 = vadd.f32 0.0, %v8466
    %8468 = vmatmul.f32.gmra.mxu0 %v8441
    %v8469 = vpop.f32.mrf.mxu0
    %v8470 = vadd.f32 0.0, %v8469
    %8471 = vmatmul.f32.gmra.mxu0 %v8444
    %v8472 = vpop.f32.mrf.mxu0
    %v8473 = vadd.f32 0.0, %v8472
    %8474 = vmatmul.f32.gmra.mxu0 %v8447
    %v8475 = vpop.f32.mrf.mxu0
    %v8476 = vadd.f32 0.0, %v8475
    %8477 = vdwg.mxu0
    %8478 = vxpose.xlu0.b32.start [1/16] %v235, 128
    %8479 = vxpose.xlu0.b32.cont [2/16] %v236, 128
    %8480 = vxpose.xlu0.b32.cont [3/16] %v237, 128
    %8481 = vxpose.xlu0.b32.cont [4/16] %v238, 128
    %8482 = vxpose.xlu0.b32.cont [5/16] 0.0, 128
    %8483 = vxpose.xlu0.b32.cont [6/16] 0.0, 128
    %8484 = vxpose.xlu0.b32.cont [7/16] 0.0, 128
    %8485 = vxpose.xlu0.b32.cont [8/16] 0.0, 128
    %8486 = vxpose.xlu0.b32.cont [9/16] 0.0, 128
    %8487 = vxpose.xlu0.b32.cont [10/16] 0.0, 128
    %8488 = vxpose.xlu0.b32.cont [11/16] 0.0, 128
    %8489 = vxpose.xlu0.b32.cont [12/16] 0.0, 128
    %8490 = vxpose.xlu0.b32.cont [13/16] 0.0, 128
    %8491 = vxpose.xlu0.b32.cont [14/16] 0.0, 128
    %8492 = vxpose.xlu0.b32.cont [15/16] 0.0, 128
    %8493 = vxpose.xlu0.b32.end [16/16] 0.0, 128
    %v8494 = vpop.trf.xlu0
    %v8495 = vpop.trf.xlu0
    %v8496 = vpop.trf.xlu0
    %v8497 = vpop.trf.xlu0
    %v8498 = vpop.trf.xlu0
    %v8499 = vpop.trf.xlu0
    %v8500 = vpop.trf.xlu0
    %v8501 = vpop.trf.xlu0
    %v8502 = vpop.trf.xlu0
    %v8503 = vpop.trf.xlu0
    %v8504 = vpop.trf.xlu0
    %v8505 = vpop.trf.xlu0
    %v8506 = vpop.trf.xlu0
    %v8507 = vpop.trf.xlu0
    %v8508 = vpop.trf.xlu0
    %v8509 = vpop.trf.xlu0
    %v8511 = vsel %vm5224, %v8494, 0
    %v8514 = vsel %vm5224, %v8495, 0
    %v8517 = vsel %vm5224, %v8496, 0
    %v8520 = vsel %vm5224, %v8497, 0
    %8522 = vmatpush.msra.mxu0 0.0
    %8523 = vmatpush.msra.mxu0 0.0
    %8524 = vmatpush.msra.mxu0 0.0
    %8525 = vmatpush.msra.mxu0 0.0
    %8526 = vmatpush.msra.mxu0 0.0
    %8527 = vmatpush.msra.mxu0 0.0
    %8528 = vmatpush.msra.mxu0 0.0
    %8529 = vmatpush.msra.mxu0 0.0
    %8530 = vmatpush.msra.mxu0 0.0
    %8531 = vmatpush.msra.mxu0 0.0
    %8532 = vmatpush.msra.mxu0 0.0
    %8533 = vmatpush.msra.mxu0 0.0
    %8534 = vmatpush.msra.mxu0 %v4291
    %8535 = vmatpush.msra.mxu0 %v4179
    %8536 = vmatpush.msra.mxu0 %v4067
    %8537 = vmatpush.msra.mxu0 %v3955
    %8538 = vmatmul.f32.gmra.mxu0 %v8511
    %v8539 = vpop.f32.mrf.mxu0
    %v8540 = vadd.f32 0.0, %v8539
    %8541 = vmatmul.f32.gmra.mxu0 %v8514
    %v8542 = vpop.f32.mrf.mxu0
    %v8543 = vadd.f32 0.0, %v8542
    %8544 = vmatmul.f32.gmra.mxu0 %v8517
    %v8545 = vpop.f32.mrf.mxu0
    %v8546 = vadd.f32 0.0, %v8545
    %8547 = vmatmul.f32.gmra.mxu0 %v8520
    %v8548 = vpop.f32.mrf.mxu0
    %v8549 = vadd.f32 0.0, %v8548
    %8550 = vdwg.mxu0
    %8551 = vxpose.xlu0.b32.start [1/16] %v239, 128
    %8552 = vxpose.xlu0.b32.cont [2/16] %v240, 128
    %8553 = vxpose.xlu0.b32.cont [3/16] %v241, 128
    %8554 = vxpose.xlu0.b32.cont [4/16] %v242, 128
    %8555 = vxpose.xlu0.b32.cont [5/16] 0.0, 128
    %8556 = vxpose.xlu0.b32.cont [6/16] 0.0, 128
    %8557 = vxpose.xlu0.b32.cont [7/16] 0.0, 128
    %8558 = vxpose.xlu0.b32.cont [8/16] 0.0, 128
    %8559 = vxpose.xlu0.b32.cont [9/16] 0.0, 128
    %8560 = vxpose.xlu0.b32.cont [10/16] 0.0, 128
    %8561 = vxpose.xlu0.b32.cont [11/16] 0.0, 128
    %8562 = vxpose.xlu0.b32.cont [12/16] 0.0, 128
    %8563 = vxpose.xlu0.b32.cont [13/16] 0.0, 128
    %8564 = vxpose.xlu0.b32.cont [14/16] 0.0, 128
    %8565 = vxpose.xlu0.b32.cont [15/16] 0.0, 128
    %8566 = vxpose.xlu0.b32.end [16/16] 0.0, 128
    %v8567 = vpop.trf.xlu0
    %v8568 = vpop.trf.xlu0
    %v8569 = vpop.trf.xlu0
    %v8570 = vpop.trf.xlu0
    %v8571 = vpop.trf.xlu0
    %v8572 = vpop.trf.xlu0
    %v8573 = vpop.trf.xlu0
    %v8574 = vpop.trf.xlu0
    %v8575 = vpop.trf.xlu0
    %v8576 = vpop.trf.xlu0
    %v8577 = vpop.trf.xlu0
    %v8578 = vpop.trf.xlu0
    %v8579 = vpop.trf.xlu0
    %v8580 = vpop.trf.xlu0
    %v8581 = vpop.trf.xlu0
    %v8582 = vpop.trf.xlu0
    %v8584 = vsel %vm5224, %v8567, 0
    %v8587 = vsel %vm5224, %v8568, 0
    %v8590 = vsel %vm5224, %v8569, 0
    %v8593 = vsel %vm5224, %v8570, 0
    %8595 = vmatpush.msra.mxu0 0.0
    %8596 = vmatpush.msra.mxu0 0.0
    %8597 = vmatpush.msra.mxu0 0.0
    %8598 = vmatpush.msra.mxu0 0.0
    %8599 = vmatpush.msra.mxu0 0.0
    %8600 = vmatpush.msra.mxu0 0.0
    %8601 = vmatpush.msra.mxu0 0.0
    %8602 = vmatpush.msra.mxu0 0.0
    %8603 = vmatpush.msra.mxu0 0.0
    %8604 = vmatpush.msra.mxu0 0.0
    %8605 = vmatpush.msra.mxu0 0.0
    %8606 = vmatpush.msra.mxu0 0.0
    %8607 = vmatpush.msra.mxu0 %v4293
    %8608 = vmatpush.msra.mxu0 %v4181
    %8609 = vmatpush.msra.mxu0 %v4069
    %8610 = vmatpush.msra.mxu0 %v3957
    %8611 = vmatmul.f32.gmra.mxu0 %v8584
    %v8612 = vpop.f32.mrf.mxu0
    %v8613 = vadd.f32 0.0, %v8612
    %8614 = vmatmul.f32.gmra.mxu0 %v8587
    %v8615 = vpop.f32.mrf.mxu0
    %v8616 = vadd.f32 0.0, %v8615
    %8617 = vmatmul.f32.gmra.mxu0 %v8590
    %v8618 = vpop.f32.mrf.mxu0
    %v8619 = vadd.f32 0.0, %v8618
    %8620 = vmatmul.f32.gmra.mxu0 %v8593
    %v8621 = vpop.f32.mrf.mxu0
    %v8622 = vadd.f32 0.0, %v8621
    %8623 = vdwg.mxu0
    %8624 = vxpose.xlu0.b32.start [1/16] %v243, 128
    %8625 = vxpose.xlu0.b32.cont [2/16] %v244, 128
    %8626 = vxpose.xlu0.b32.cont [3/16] %v245, 128
    %8627 = vxpose.xlu0.b32.cont [4/16] %v246, 128
    %8628 = vxpose.xlu0.b32.cont [5/16] 0.0, 128
    %8629 = vxpose.xlu0.b32.cont [6/16] 0.0, 128
    %8630 = vxpose.xlu0.b32.cont [7/16] 0.0, 128
    %8631 = vxpose.xlu0.b32.cont [8/16] 0.0, 128
    %8632 = vxpose.xlu0.b32.cont [9/16] 0.0, 128
    %8633 = vxpose.xlu0.b32.cont [10/16] 0.0, 128
    %8634 = vxpose.xlu0.b32.cont [11/16] 0.0, 128
    %8635 = vxpose.xlu0.b32.cont [12/16] 0.0, 128
    %8636 = vxpose.xlu0.b32.cont [13/16] 0.0, 128
    %8637 = vxpose.xlu0.b32.cont [14/16] 0.0, 128
    %8638 = vxpose.xlu0.b32.cont [15/16] 0.0, 128
    %8639 = vxpose.xlu0.b32.end [16/16] 0.0, 128
    %v8640 = vpop.trf.xlu0
    %v8641 = vpop.trf.xlu0
    %v8642 = vpop.trf.xlu0
    %v8643 = vpop.trf.xlu0
    %v8644 = vpop.trf.xlu0
    %v8645 = vpop.trf.xlu0
    %v8646 = vpop.trf.xlu0
    %v8647 = vpop.trf.xlu0
    %v8648 = vpop.trf.xlu0
    %v8649 = vpop.trf.xlu0
    %v8650 = vpop.trf.xlu0
    %v8651 = vpop.trf.xlu0
    %v8652 = vpop.trf.xlu0
    %v8653 = vpop.trf.xlu0
    %v8654 = vpop.trf.xlu0
    %v8655 = vpop.trf.xlu0
    %v8657 = vsel %vm5224, %v8640, 0
    %v8660 = vsel %vm5224, %v8641, 0
    %v8663 = vsel %vm5224, %v8642, 0
    %v8666 = vsel %vm5224, %v8643, 0
    %8668 = vmatpush.msra.mxu0 0.0
    %8669 = vmatpush.msra.mxu0 0.0
    %8670 = vmatpush.msra.mxu0 0.0
    %8671 = vmatpush.msra.mxu0 0.0
    %8672 = vmatpush.msra.mxu0 0.0
    %8673 = vmatpush.msra.mxu0 0.0
    %8674 = vmatpush.msra.mxu0 0.0
    %8675 = vmatpush.msra.mxu0 0.0
    %8676 = vmatpush.msra.mxu0 0.0
    %8677 = vmatpush.msra.mxu0 0.0
    %8678 = vmatpush.msra.mxu0 0.0
    %8679 = vmatpush.msra.mxu0 0.0
    %8680 = vmatpush.msra.mxu0 %v4295
    %8681 = vmatpush.msra.mxu0 %v4183
    %8682 = vmatpush.msra.mxu0 %v4071
    %8683 = vmatpush.msra.mxu0 %v3959
    %8684 = vmatmul.f32.gmra.mxu0 %v8657
    %v8685 = vpop.f32.mrf.mxu0
    %v8686 = vadd.f32 0.0, %v8685
    %8687 = vmatmul.f32.gmra.mxu0 %v8660
    %v8688 = vpop.f32.mrf.mxu0
    %v8689 = vadd.f32 0.0, %v8688
    %8690 = vmatmul.f32.gmra.mxu0 %v8663
    %v8691 = vpop.f32.mrf.mxu0
    %v8692 = vadd.f32 0.0, %v8691
    %8693 = vmatmul.f32.gmra.mxu0 %v8666
    %v8694 = vpop.f32.mrf.mxu0
    %v8695 = vadd.f32 0.0, %v8694
    %8696 = vdwg.mxu0
    %8697 = vxpose.xlu0.b32.start [1/16] %v247, 128
    %8698 = vxpose.xlu0.b32.cont [2/16] %v248, 128
    %8699 = vxpose.xlu0.b32.cont [3/16] %v249, 128
    %8700 = vxpose.xlu0.b32.cont [4/16] %v250, 128
    %8701 = vxpose.xlu0.b32.cont [5/16] 0.0, 128
    %8702 = vxpose.xlu0.b32.cont [6/16] 0.0, 128
    %8703 = vxpose.xlu0.b32.cont [7/16] 0.0, 128
    %8704 = vxpose.xlu0.b32.cont [8/16] 0.0, 128
    %8705 = vxpose.xlu0.b32.cont [9/16] 0.0, 128
    %8706 = vxpose.xlu0.b32.cont [10/16] 0.0, 128
    %8707 = vxpose.xlu0.b32.cont [11/16] 0.0, 128
    %8708 = vxpose.xlu0.b32.cont [12/16] 0.0, 128
    %8709 = vxpose.xlu0.b32.cont [13/16] 0.0, 128
    %8710 = vxpose.xlu0.b32.cont [14/16] 0.0, 128
    %8711 = vxpose.xlu0.b32.cont [15/16] 0.0, 128
    %8712 = vxpose.xlu0.b32.end [16/16] 0.0, 128
    %v8713 = vpop.trf.xlu0
    %v8714 = vpop.trf.xlu0
    %v8715 = vpop.trf.xlu0
    %v8716 = vpop.trf.xlu0
    %v8717 = vpop.trf.xlu0
    %v8718 = vpop.trf.xlu0
    %v8719 = vpop.trf.xlu0
    %v8720 = vpop.trf.xlu0
    %v8721 = vpop.trf.xlu0
    %v8722 = vpop.trf.xlu0
    %v8723 = vpop.trf.xlu0
    %v8724 = vpop.trf.xlu0
    %v8725 = vpop.trf.xlu0
    %v8726 = vpop.trf.xlu0
    %v8727 = vpop.trf.xlu0
    %v8728 = vpop.trf.xlu0
    %v8730 = vsel %vm5224, %v8713, 0
    %v8733 = vsel %vm5224, %v8714, 0
    %v8736 = vsel %vm5224, %v8715, 0
    %v8739 = vsel %vm5224, %v8716, 0
    %8741 = vmatpush.msra.mxu0 0.0
    %8742 = vmatpush.msra.mxu0 0.0
    %8743 = vmatpush.msra.mxu0 0.0
    %8744 = vmatpush.msra.mxu0 0.0
    %8745 = vmatpush.msra.mxu0 0.0
    %8746 = vmatpush.msra.mxu0 0.0
    %8747 = vmatpush.msra.mxu0 0.0
    %8748 = vmatpush.msra.mxu0 0.0
    %8749 = vmatpush.msra.mxu0 0.0
    %8750 = vmatpush.msra.mxu0 0.0
    %8751 = vmatpush.msra.mxu0 0.0
    %8752 = vmatpush.msra.mxu0 0.0
    %8753 = vmatpush.msra.mxu0 %v4729
    %8754 = vmatpush.msra.mxu0 %v4617
    %8755 = vmatpush.msra.mxu0 %v4505
    %8756 = vmatpush.msra.mxu0 %v4393
    %8757 = vmatmul.f32.gmra.mxu0 %v8730
    %v8758 = vpop.f32.mrf.mxu0
    %v8759 = vadd.f32 0.0, %v8758
    %8760 = vmatmul.f32.gmra.mxu0 %v8733
    %v8761 = vpop.f32.mrf.mxu0
    %v8762 = vadd.f32 0.0, %v8761
    %8763 = vmatmul.f32.gmra.mxu0 %v8736
    %v8764 = vpop.f32.mrf.mxu0
    %v8765 = vadd.f32 0.0, %v8764
    %8766 = vmatmul.f32.gmra.mxu0 %v8739
    %v8767 = vpop.f32.mrf.mxu0
    %v8768 = vadd.f32 0.0, %v8767
    %8769 = vdwg.mxu0
    %8770 = vxpose.xlu0.b32.start [1/16] %v251, 128
    %8771 = vxpose.xlu0.b32.cont [2/16] %v252, 128
    %8772 = vxpose.xlu0.b32.cont [3/16] %v253, 128
    %8773 = vxpose.xlu0.b32.cont [4/16] %v254, 128
    %8774 = vxpose.xlu0.b32.cont [5/16] 0.0, 128
    %8775 = vxpose.xlu0.b32.cont [6/16] 0.0, 128
    %8776 = vxpose.xlu0.b32.cont [7/16] 0.0, 128
    %8777 = vxpose.xlu0.b32.cont [8/16] 0.0, 128
    %8778 = vxpose.xlu0.b32.cont [9/16] 0.0, 128
    %8779 = vxpose.xlu0.b32.cont [10/16] 0.0, 128
    %8780 = vxpose.xlu0.b32.cont [11/16] 0.0, 128
    %8781 = vxpose.xlu0.b32.cont [12/16] 0.0, 128
    %8782 = vxpose.xlu0.b32.cont [13/16] 0.0, 128
    %8783 = vxpose.xlu0.b32.cont [14/16] 0.0, 128
    %8784 = vxpose.xlu0.b32.cont [15/16] 0.0, 128
    %8785 = vxpose.xlu0.b32.end [16/16] 0.0, 128
    %v8786 = vpop.trf.xlu0
    %v8787 = vpop.trf.xlu0
    %v8788 = vpop.trf.xlu0
    %v8789 = vpop.trf.xlu0
    %v8790 = vpop.trf.xlu0
    %v8791 = vpop.trf.xlu0
    %v8792 = vpop.trf.xlu0
    %v8793 = vpop.trf.xlu0
    %v8794 = vpop.trf.xlu0
    %v8795 = vpop.trf.xlu0
    %v8796 = vpop.trf.xlu0
    %v8797 = vpop.trf.xlu0
    %v8798 = vpop.trf.xlu0
    %v8799 = vpop.trf.xlu0
    %v8800 = vpop.trf.xlu0
    %v8801 = vpop.trf.xlu0
    %v8803 = vsel %vm5224, %v8786, 0
    %v8806 = vsel %vm5224, %v8787, 0
    %v8809 = vsel %vm5224, %v8788, 0
    %v8812 = vsel %vm5224, %v8789, 0
    %8814 = vmatpush.msra.mxu0 0.0
    %8815 = vmatpush.msra.mxu0 0.0
    %8816 = vmatpush.msra.mxu0 0.0
    %8817 = vmatpush.msra.mxu0 0.0
    %8818 = vmatpush.msra.mxu0 0.0
    %8819 = vmatpush.msra.mxu0 0.0
    %8820 = vmatpush.msra.mxu0 0.0
    %8821 = vmatpush.msra.mxu0 0.0
    %8822 = vmatpush.msra.mxu0 0.0
    %8823 = vmatpush.msra.mxu0 0.0
    %8824 = vmatpush.msra.mxu0 0.0
    %8825 = vmatpush.msra.mxu0 0.0
    %8826 = vmatpush.msra.mxu0 %v4731
    %8827 = vmatpush.msra.mxu0 %v4619
    %8828 = vmatpush.msra.mxu0 %v4507
    %8829 = vmatpush.msra.mxu0 %v4395
    %8830 = vmatmul.f32.gmra.mxu0 %v8803
    %v8831 = vpop.f32.mrf.mxu0
    %v8832 = vadd.f32 0.0, %v8831
    %8833 = vmatmul.f32.gmra.mxu0 %v8806
    %v8834 = vpop.f32.mrf.mxu0
    %v8835 = vadd.f32 0.0, %v8834
    %8836 = vmatmul.f32.gmra.mxu0 %v8809
    %v8837 = vpop.f32.mrf.mxu0
    %v8838 = vadd.f32 0.0, %v8837
    %8839 = vmatmul.f32.gmra.mxu0 %v8812
    %v8840 = vpop.f32.mrf.mxu0
    %v8841 = vadd.f32 0.0, %v8840
    %8842 = vdwg.mxu0
    %8843 = vxpose.xlu0.b32.start [1/16] %v255, 128
    %8844 = vxpose.xlu0.b32.cont [2/16] %v256, 128
    %8845 = vxpose.xlu0.b32.cont [3/16] %v257, 128
    %8846 = vxpose.xlu0.b32.cont [4/16] %v258, 128
    %8847 = vxpose.xlu0.b32.cont [5/16] 0.0, 128
    %8848 = vxpose.xlu0.b32.cont [6/16] 0.0, 128
    %8849 = vxpose.xlu0.b32.cont [7/16] 0.0, 128
    %8850 = vxpose.xlu0.b32.cont [8/16] 0.0, 128
    %8851 = vxpose.xlu0.b32.cont [9/16] 0.0, 128
    %8852 = vxpose.xlu0.b32.cont [10/16] 0.0, 128
    %8853 = vxpose.xlu0.b32.cont [11/16] 0.0, 128
    %8854 = vxpose.xlu0.b32.cont [12/16] 0.0, 128
    %8855 = vxpose.xlu0.b32.cont [13/16] 0.0, 128
    %8856 = vxpose.xlu0.b32.cont [14/16] 0.0, 128
    %8857 = vxpose.xlu0.b32.cont [15/16] 0.0, 128
    %8858 = vxpose.xlu0.b32.end [16/16] 0.0, 128
    %v8859 = vpop.trf.xlu0
    %v8860 = vpop.trf.xlu0
    %v8861 = vpop.trf.xlu0
    %v8862 = vpop.trf.xlu0
    %v8863 = vpop.trf.xlu0
    %v8864 = vpop.trf.xlu0
    %v8865 = vpop.trf.xlu0
    %v8866 = vpop.trf.xlu0
    %v8867 = vpop.trf.xlu0
    %v8868 = vpop.trf.xlu0
    %v8869 = vpop.trf.xlu0
    %v8870 = vpop.trf.xlu0
    %v8871 = vpop.trf.xlu0
    %v8872 = vpop.trf.xlu0
    %v8873 = vpop.trf.xlu0
    %v8874 = vpop.trf.xlu0
    %v8876 = vsel %vm5224, %v8859, 0
    %v8879 = vsel %vm5224, %v8860, 0
    %v8882 = vsel %vm5224, %v8861, 0
    %v8885 = vsel %vm5224, %v8862, 0
    %8887 = vmatpush.msra.mxu0 0.0
    %8888 = vmatpush.msra.mxu0 0.0
    %8889 = vmatpush.msra.mxu0 0.0
    %8890 = vmatpush.msra.mxu0 0.0
    %8891 = vmatpush.msra.mxu0 0.0
    %8892 = vmatpush.msra.mxu0 0.0
    %8893 = vmatpush.msra.mxu0 0.0
    %8894 = vmatpush.msra.mxu0 0.0
    %8895 = vmatpush.msra.mxu0 0.0
    %8896 = vmatpush.msra.mxu0 0.0
    %8897 = vmatpush.msra.mxu0 0.0
    %8898 = vmatpush.msra.mxu0 0.0
    %8899 = vmatpush.msra.mxu0 %v4733
    %8900 = vmatpush.msra.mxu0 %v4621
    %8901 = vmatpush.msra.mxu0 %v4509
    %8902 = vmatpush.msra.mxu0 %v4397
    %8903 = vmatmul.f32.gmra.mxu0 %v8876
    %v8904 = vpop.f32.mrf.mxu0
    %v8905 = vadd.f32 0.0, %v8904
    %8906 = vmatmul.f32.gmra.mxu0 %v8879
    %v8907 = vpop.f32.mrf.mxu0
    %v8908 = vadd.f32 0.0, %v8907
    %8909 = vmatmul.f32.gmra.mxu0 %v8882
    %v8910 = vpop.f32.mrf.mxu0
    %v8911 = vadd.f32 0.0, %v8910
    %8912 = vmatmul.f32.gmra.mxu0 %v8885
    %v8913 = vpop.f32.mrf.mxu0
    %v8914 = vadd.f32 0.0, %v8913
    %8915 = vdwg.mxu0
    %8916 = vxpose.xlu0.b32.start [1/16] %v259, 128
    %8917 = vxpose.xlu0.b32.cont [2/16] %v260, 128
    %8918 = vxpose.xlu0.b32.cont [3/16] %v261, 128
    %8919 = vxpose.xlu0.b32.cont [4/16] %v262, 128
    %8920 = vxpose.xlu0.b32.cont [5/16] 0.0, 128
    %8921 = vxpose.xlu0.b32.cont [6/16] 0.0, 128
    %8922 = vxpose.xlu0.b32.cont [7/16] 0.0, 128
    %8923 = vxpose.xlu0.b32.cont [8/16] 0.0, 128
    %8924 = vxpose.xlu0.b32.cont [9/16] 0.0, 128
    %8925 = vxpose.xlu0.b32.cont [10/16] 0.0, 128
    %8926 = vxpose.xlu0.b32.cont [11/16] 0.0, 128
    %8927 = vxpose.xlu0.b32.cont [12/16] 0.0, 128
    %8928 = vxpose.xlu0.b32.cont [13/16] 0.0, 128
    %8929 = vxpose.xlu0.b32.cont [14/16] 0.0, 128
    %8930 = vxpose.xlu0.b32.cont [15/16] 0.0, 128
    %8931 = vxpose.xlu0.b32.end [16/16] 0.0, 128
    %v8932 = vpop.trf.xlu0
    %v8933 = vpop.trf.xlu0
    %v8934 = vpop.trf.xlu0
    %v8935 = vpop.trf.xlu0
    %v8936 = vpop.trf.xlu0
    %v8937 = vpop.trf.xlu0
    %v8938 = vpop.trf.xlu0
    %v8939 = vpop.trf.xlu0
    %v8940 = vpop.trf.xlu0
    %v8941 = vpop.trf.xlu0
    %v8942 = vpop.trf.xlu0
    %v8943 = vpop.trf.xlu0
    %v8944 = vpop.trf.xlu0
    %v8945 = vpop.trf.xlu0
    %v8946 = vpop.trf.xlu0
    %v8947 = vpop.trf.xlu0
    %v8949 = vsel %vm5224, %v8932, 0
    %v8952 = vsel %vm5224, %v8933, 0
    %v8955 = vsel %vm5224, %v8934, 0
    %v8958 = vsel %vm5224, %v8935, 0
    %8960 = vmatpush.msra.mxu0 0.0
    %8961 = vmatpush.msra.mxu0 0.0
    %8962 = vmatpush.msra.mxu0 0.0
    %8963 = vmatpush.msra.mxu0 0.0
    %8964 = vmatpush.msra.mxu0 0.0
    %8965 = vmatpush.msra.mxu0 0.0
    %8966 = vmatpush.msra.mxu0 0.0
    %8967 = vmatpush.msra.mxu0 0.0
    %8968 = vmatpush.msra.mxu0 0.0
    %8969 = vmatpush.msra.mxu0 0.0
    %8970 = vmatpush.msra.mxu0 0.0
    %8971 = vmatpush.msra.mxu0 0.0
    %8972 = vmatpush.msra.mxu0 %v4735
    %8973 = vmatpush.msra.mxu0 %v4623
    %8974 = vmatpush.msra.mxu0 %v4511
    %8975 = vmatpush.msra.mxu0 %v4399
    %8976 = vmatmul.f32.gmra.mxu0 %v8949
    %v8977 = vpop.f32.mrf.mxu0
    %v8978 = vadd.f32 0.0, %v8977
    %8979 = vmatmul.f32.gmra.mxu0 %v8952
    %v8980 = vpop.f32.mrf.mxu0
    %v8981 = vadd.f32 0.0, %v8980
    %8982 = vmatmul.f32.gmra.mxu0 %v8955
    %v8983 = vpop.f32.mrf.mxu0
    %v8984 = vadd.f32 0.0, %v8983
    %8985 = vmatmul.f32.gmra.mxu0 %v8958
    %v8986 = vpop.f32.mrf.mxu0
    %v8987 = vadd.f32 0.0, %v8986
    %8988 = vdwg.mxu0
    %8989 = vxpose.xlu0.b32.start [1/16] %v263, 128
    %8990 = vxpose.xlu0.b32.cont [2/16] %v264, 128
    %8991 = vxpose.xlu0.b32.cont [3/16] %v265, 128
    %8992 = vxpose.xlu0.b32.cont [4/16] %v266, 128
    %8993 = vxpose.xlu0.b32.cont [5/16] 0.0, 128
    %8994 = vxpose.xlu0.b32.cont [6/16] 0.0, 128
    %8995 = vxpose.xlu0.b32.cont [7/16] 0.0, 128
    %8996 = vxpose.xlu0.b32.cont [8/16] 0.0, 128
    %8997 = vxpose.xlu0.b32.cont [9/16] 0.0, 128
    %8998 = vxpose.xlu0.b32.cont [10/16] 0.0, 128
    %8999 = vxpose.xlu0.b32.cont [11/16] 0.0, 128
    %9000 = vxpose.xlu0.b32.cont [12/16] 0.0, 128
    %9001 = vxpose.xlu0.b32.cont [13/16] 0.0, 128
    %9002 = vxpose.xlu0.b32.cont [14/16] 0.0, 128
    %9003 = vxpose.xlu0.b32.cont [15/16] 0.0, 128
    %9004 = vxpose.xlu0.b32.end [16/16] 0.0, 128
    %v9005 = vpop.trf.xlu0
    %v9006 = vpop.trf.xlu0
    %v9007 = vpop.trf.xlu0
    %v9008 = vpop.trf.xlu0
    %v9009 = vpop.trf.xlu0
    %v9010 = vpop.trf.xlu0
    %v9011 = vpop.trf.xlu0
    %v9012 = vpop.trf.xlu0
    %v9013 = vpop.trf.xlu0
    %v9014 = vpop.trf.xlu0
    %v9015 = vpop.trf.xlu0
    %v9016 = vpop.trf.xlu0
    %v9017 = vpop.trf.xlu0
    %v9018 = vpop.trf.xlu0
    %v9019 = vpop.trf.xlu0
    %v9020 = vpop.trf.xlu0
    %v9022 = vsel %vm5224, %v9005, 0
    %v9025 = vsel %vm5224, %v9006, 0
    %v9028 = vsel %vm5224, %v9007, 0
    %v9031 = vsel %vm5224, %v9008, 0
    %9033 = vmatpush.msra.mxu0 0.0
    %9034 = vmatpush.msra.mxu0 0.0
    %9035 = vmatpush.msra.mxu0 0.0
    %9036 = vmatpush.msra.mxu0 0.0
    %9037 = vmatpush.msra.mxu0 0.0
    %9038 = vmatpush.msra.mxu0 0.0
    %9039 = vmatpush.msra.mxu0 0.0
    %9040 = vmatpush.msra.mxu0 0.0
    %9041 = vmatpush.msra.mxu0 0.0
    %9042 = vmatpush.msra.mxu0 0.0
    %9043 = vmatpush.msra.mxu0 0.0
    %9044 = vmatpush.msra.mxu0 0.0
    %9045 = vmatpush.msra.mxu0 %v4737
    %9046 = vmatpush.msra.mxu0 %v4625
    %9047 = vmatpush.msra.mxu0 %v4513
    %9048 = vmatpush.msra.mxu0 %v4401
    %9049 = vmatmul.f32.gmra.mxu0 %v9022
    %v9050 = vpop.f32.mrf.mxu0
    %v9051 = vadd.f32 0.0, %v9050
    %9052 = vmatmul.f32.gmra.mxu0 %v9025
    %v9053 = vpop.f32.mrf.mxu0
    %v9054 = vadd.f32 0.0, %v9053
    %9055 = vmatmul.f32.gmra.mxu0 %v9028
    %v9056 = vpop.f32.mrf.mxu0
    %v9057 = vadd.f32 0.0, %v9056
    %9058 = vmatmul.f32.gmra.mxu0 %v9031
    %v9059 = vpop.f32.mrf.mxu0
    %v9060 = vadd.f32 0.0, %v9059
    %9061 = vdwg.mxu0
    %9062 = vxpose.xlu0.b32.start [1/16] %v267, 128
    %9063 = vxpose.xlu0.b32.cont [2/16] %v268, 128
    %9064 = vxpose.xlu0.b32.cont [3/16] %v269, 128
    %9065 = vxpose.xlu0.b32.cont [4/16] %v270, 128
    %9066 = vxpose.xlu0.b32.cont [5/16] 0.0, 128
    %9067 = vxpose.xlu0.b32.cont [6/16] 0.0, 128
    %9068 = vxpose.xlu0.b32.cont [7/16] 0.0, 128
    %9069 = vxpose.xlu0.b32.cont [8/16] 0.0, 128
    %9070 = vxpose.xlu0.b32.cont [9/16] 0.0, 128
    %9071 = vxpose.xlu0.b32.cont [10/16] 0.0, 128
    %9072 = vxpose.xlu0.b32.cont [11/16] 0.0, 128
    %9073 = vxpose.xlu0.b32.cont [12/16] 0.0, 128
    %9074 = vxpose.xlu0.b32.cont [13/16] 0.0, 128
    %9075 = vxpose.xlu0.b32.cont [14/16] 0.0, 128
    %9076 = vxpose.xlu0.b32.cont [15/16] 0.0, 128
    %9077 = vxpose.xlu0.b32.end [16/16] 0.0, 128
    %v9078 = vpop.trf.xlu0
    %v9079 = vpop.trf.xlu0
    %v9080 = vpop.trf.xlu0
    %v9081 = vpop.trf.xlu0
    %v9082 = vpop.trf.xlu0
    %v9083 = vpop.trf.xlu0
    %v9084 = vpop.trf.xlu0
    %v9085 = vpop.trf.xlu0
    %v9086 = vpop.trf.xlu0
    %v9087 = vpop.trf.xlu0
    %v9088 = vpop.trf.xlu0
    %v9089 = vpop.trf.xlu0
    %v9090 = vpop.trf.xlu0
    %v9091 = vpop.trf.xlu0
    %v9092 = vpop.trf.xlu0
    %v9093 = vpop.trf.xlu0
    %v9095 = vsel %vm5224, %v9078, 0
    %v9098 = vsel %vm5224, %v9079, 0
    %v9101 = vsel %vm5224, %v9080, 0
    %v9104 = vsel %vm5224, %v9081, 0
    %9106 = vmatpush.msra.mxu0 0.0
    %9107 = vmatpush.msra.mxu0 0.0
    %9108 = vmatpush.msra.mxu0 0.0
    %9109 = vmatpush.msra.mxu0 0.0
    %9110 = vmatpush.msra.mxu0 0.0
    %9111 = vmatpush.msra.mxu0 0.0
    %9112 = vmatpush.msra.mxu0 0.0
    %9113 = vmatpush.msra.mxu0 0.0
    %9114 = vmatpush.msra.mxu0 0.0
    %9115 = vmatpush.msra.mxu0 0.0
    %9116 = vmatpush.msra.mxu0 0.0
    %9117 = vmatpush.msra.mxu0 0.0
    %9118 = vmatpush.msra.mxu0 %v4739
    %9119 = vmatpush.msra.mxu0 %v4627
    %9120 = vmatpush.msra.mxu0 %v4515
    %9121 = vmatpush.msra.mxu0 %v4403
    %9122 = vmatmul.f32.gmra.mxu0 %v9095
    %v9123 = vpop.f32.mrf.mxu0
    %v9124 = vadd.f32 0.0, %v9123
    %9125 = vmatmul.f32.gmra.mxu0 %v9098
    %v9126 = vpop.f32.mrf.mxu0
    %v9127 = vadd.f32 0.0, %v9126
    %9128 = vmatmul.f32.gmra.mxu0 %v9101
    %v9129 = vpop.f32.mrf.mxu0
    %v9130 = vadd.f32 0.0, %v9129
    %9131 = vmatmul.f32.gmra.mxu0 %v9104
    %v9132 = vpop.f32.mrf.mxu0
    %v9133 = vadd.f32 0.0, %v9132
    %9134 = vdwg.mxu0
    %9135 = vxpose.xlu0.b32.start [1/16] %v271, 128
    %9136 = vxpose.xlu0.b32.cont [2/16] %v272, 128
    %9137 = vxpose.xlu0.b32.cont [3/16] %v273, 128
    %9138 = vxpose.xlu0.b32.cont [4/16] %v274, 128
    %9139 = vxpose.xlu0.b32.cont [5/16] 0.0, 128
    %9140 = vxpose.xlu0.b32.cont [6/16] 0.0, 128
    %9141 = vxpose.xlu0.b32.cont [7/16] 0.0, 128
    %9142 = vxpose.xlu0.b32.cont [8/16] 0.0, 128
    %9143 = vxpose.xlu0.b32.cont [9/16] 0.0, 128
    %9144 = vxpose.xlu0.b32.cont [10/16] 0.0, 128
    %9145 = vxpose.xlu0.b32.cont [11/16] 0.0, 128
    %9146 = vxpose.xlu0.b32.cont [12/16] 0.0, 128
    %9147 = vxpose.xlu0.b32.cont [13/16] 0.0, 128
    %9148 = vxpose.xlu0.b32.cont [14/16] 0.0, 128
    %9149 = vxpose.xlu0.b32.cont [15/16] 0.0, 128
    %9150 = vxpose.xlu0.b32.end [16/16] 0.0, 128
    %v9151 = vpop.trf.xlu0
    %v9152 = vpop.trf.xlu0
    %v9153 = vpop.trf.xlu0
    %v9154 = vpop.trf.xlu0
    %v9155 = vpop.trf.xlu0
    %v9156 = vpop.trf.xlu0
    %v9157 = vpop.trf.xlu0
    %v9158 = vpop.trf.xlu0
    %v9159 = vpop.trf.xlu0
    %v9160 = vpop.trf.xlu0
    %v9161 = vpop.trf.xlu0
    %v9162 = vpop.trf.xlu0
    %v9163 = vpop.trf.xlu0
    %v9164 = vpop.trf.xlu0
    %v9165 = vpop.trf.xlu0
    %v9166 = vpop.trf.xlu0
    %v9168 = vsel %vm5224, %v9151, 0
    %v9171 = vsel %vm5224, %v9152, 0
    %v9174 = vsel %vm5224, %v9153, 0
    %v9177 = vsel %vm5224, %v9154, 0
    %9179 = vmatpush.msra.mxu0 0.0
    %9180 = vmatpush.msra.mxu0 0.0
    %9181 = vmatpush.msra.mxu0 0.0
    %9182 = vmatpush.msra.mxu0 0.0
    %9183 = vmatpush.msra.mxu0 0.0
    %9184 = vmatpush.msra.mxu0 0.0
    %9185 = vmatpush.msra.mxu0 0.0
    %9186 = vmatpush.msra.mxu0 0.0
    %9187 = vmatpush.msra.mxu0 0.0
    %9188 = vmatpush.msra.mxu0 0.0
    %9189 = vmatpush.msra.mxu0 0.0
    %9190 = vmatpush.msra.mxu0 0.0
    %9191 = vmatpush.msra.mxu0 %v4741
    %9192 = vmatpush.msra.mxu0 %v4629
    %9193 = vmatpush.msra.mxu0 %v4517
    %9194 = vmatpush.msra.mxu0 %v4405
    %9195 = vmatmul.f32.gmra.mxu0 %v9168
    %v9196 = vpop.f32.mrf.mxu0
    %v9197 = vadd.f32 0.0, %v9196
    %9198 = vmatmul.f32.gmra.mxu0 %v9171
    %v9199 = vpop.f32.mrf.mxu0
    %v9200 = vadd.f32 0.0, %v9199
    %9201 = vmatmul.f32.gmra.mxu0 %v9174
    %v9202 = vpop.f32.mrf.mxu0
    %v9203 = vadd.f32 0.0, %v9202
    %9204 = vmatmul.f32.gmra.mxu0 %v9177
    %v9205 = vpop.f32.mrf.mxu0
    %v9206 = vadd.f32 0.0, %v9205
    %9207 = vdwg.mxu0
    %9208 = vxpose.xlu0.b32.start [1/16] %v275, 128
    %9209 = vxpose.xlu0.b32.cont [2/16] %v276, 128
    %9210 = vxpose.xlu0.b32.cont [3/16] %v277, 128
    %9211 = vxpose.xlu0.b32.cont [4/16] %v278, 128
    %9212 = vxpose.xlu0.b32.cont [5/16] 0.0, 128
    %9213 = vxpose.xlu0.b32.cont [6/16] 0.0, 128
    %9214 = vxpose.xlu0.b32.cont [7/16] 0.0, 128
    %9215 = vxpose.xlu0.b32.cont [8/16] 0.0, 128
    %9216 = vxpose.xlu0.b32.cont [9/16] 0.0, 128
    %9217 = vxpose.xlu0.b32.cont [10/16] 0.0, 128
    %9218 = vxpose.xlu0.b32.cont [11/16] 0.0, 128
    %9219 = vxpose.xlu0.b32.cont [12/16] 0.0, 128
    %9220 = vxpose.xlu0.b32.cont [13/16] 0.0, 128
    %9221 = vxpose.xlu0.b32.cont [14/16] 0.0, 128
    %9222 = vxpose.xlu0.b32.cont [15/16] 0.0, 128
    %9223 = vxpose.xlu0.b32.end [16/16] 0.0, 128
    %v9224 = vpop.trf.xlu0
    %v9225 = vpop.trf.xlu0
    %v9226 = vpop.trf.xlu0
    %v9227 = vpop.trf.xlu0
    %v9228 = vpop.trf.xlu0
    %v9229 = vpop.trf.xlu0
    %v9230 = vpop.trf.xlu0
    %v9231 = vpop.trf.xlu0
    %v9232 = vpop.trf.xlu0
    %v9233 = vpop.trf.xlu0
    %v9234 = vpop.trf.xlu0
    %v9235 = vpop.trf.xlu0
    %v9236 = vpop.trf.xlu0
    %v9237 = vpop.trf.xlu0
    %v9238 = vpop.trf.xlu0
    %v9239 = vpop.trf.xlu0
    %v9241 = vsel %vm5224, %v9224, 0
    %v9244 = vsel %vm5224, %v9225, 0
    %v9247 = vsel %vm5224, %v9226, 0
    %v9250 = vsel %vm5224, %v9227, 0
    %9252 = vmatpush.msra.mxu0 0.0
    %9253 = vmatpush.msra.mxu0 0.0
    %9254 = vmatpush.msra.mxu0 0.0
    %9255 = vmatpush.msra.mxu0 0.0
    %9256 = vmatpush.msra.mxu0 0.0
    %9257 = vmatpush.msra.mxu0 0.0
    %9258 = vmatpush.msra.mxu0 0.0
    %9259 = vmatpush.msra.mxu0 0.0
    %9260 = vmatpush.msra.mxu0 0.0
    %9261 = vmatpush.msra.mxu0 0.0
    %9262 = vmatpush.msra.mxu0 0.0
    %9263 = vmatpush.msra.mxu0 0.0
    %9264 = vmatpush.msra.mxu0 %v4743
    %9265 = vmatpush.msra.mxu0 %v4631
    %9266 = vmatpush.msra.mxu0 %v4519
    %9267 = vmatpush.msra.mxu0 %v4407
    %9268 = vmatmul.f32.gmra.mxu0 %v9241
    %v9269 = vpop.f32.mrf.mxu0
    %v9270 = vadd.f32 0.0, %v9269
    %9271 = vmatmul.f32.gmra.mxu0 %v9244
    %v9272 = vpop.f32.mrf.mxu0
    %v9273 = vadd.f32 0.0, %v9272
    %9274 = vmatmul.f32.gmra.mxu0 %v9247
    %v9275 = vpop.f32.mrf.mxu0
    %v9276 = vadd.f32 0.0, %v9275
    %9277 = vmatmul.f32.gmra.mxu0 %v9250
    %v9278 = vpop.f32.mrf.mxu0
    %v9279 = vadd.f32 0.0, %v9278
    %9280 = vdwg.mxu0
    %9281 = vxpose.xlu0.b32.start [1/16] %v279, 128
    %9282 = vxpose.xlu0.b32.cont [2/16] %v280, 128
    %9283 = vxpose.xlu0.b32.cont [3/16] %v281, 128
    %9284 = vxpose.xlu0.b32.cont [4/16] %v282, 128
    %9285 = vxpose.xlu0.b32.cont [5/16] 0.0, 128
    %9286 = vxpose.xlu0.b32.cont [6/16] 0.0, 128
    %9287 = vxpose.xlu0.b32.cont [7/16] 0.0, 128
    %9288 = vxpose.xlu0.b32.cont [8/16] 0.0, 128
    %9289 = vxpose.xlu0.b32.cont [9/16] 0.0, 128
    %9290 = vxpose.xlu0.b32.cont [10/16] 0.0, 128
    %9291 = vxpose.xlu0.b32.cont [11/16] 0.0, 128
    %9292 = vxpose.xlu0.b32.cont [12/16] 0.0, 128
    %9293 = vxpose.xlu0.b32.cont [13/16] 0.0, 128
    %9294 = vxpose.xlu0.b32.cont [14/16] 0.0, 128
    %9295 = vxpose.xlu0.b32.cont [15/16] 0.0, 128
    %9296 = vxpose.xlu0.b32.end [16/16] 0.0, 128
    %v9297 = vpop.trf.xlu0
    %v9298 = vpop.trf.xlu0
    %v9299 = vpop.trf.xlu0
    %v9300 = vpop.trf.xlu0
    %v9301 = vpop.trf.xlu0
    %v9302 = vpop.trf.xlu0
    %v9303 = vpop.trf.xlu0
    %v9304 = vpop.trf.xlu0
    %v9305 = vpop.trf.xlu0
    %v9306 = vpop.trf.xlu0
    %v9307 = vpop.trf.xlu0
    %v9308 = vpop.trf.xlu0
    %v9309 = vpop.trf.xlu0
    %v9310 = vpop.trf.xlu0
    %v9311 = vpop.trf.xlu0
    %v9312 = vpop.trf.xlu0
    %v9314 = vsel %vm5224, %v9297, 0
    %v9317 = vsel %vm5224, %v9298, 0
    %v9320 = vsel %vm5224, %v9299, 0
    %v9323 = vsel %vm5224, %v9300, 0
    %9325 = vmatpush.msra.mxu0 0.0
    %9326 = vmatpush.msra.mxu0 0.0
    %9327 = vmatpush.msra.mxu0 0.0
    %9328 = vmatpush.msra.mxu0 0.0
    %9329 = vmatpush.msra.mxu0 0.0
    %9330 = vmatpush.msra.mxu0 0.0
    %9331 = vmatpush.msra.mxu0 0.0
    %9332 = vmatpush.msra.mxu0 0.0
    %9333 = vmatpush.msra.mxu0 0.0
    %9334 = vmatpush.msra.mxu0 0.0
    %9335 = vmatpush.msra.mxu0 0.0
    %9336 = vmatpush.msra.mxu0 0.0
    %9337 = vmatpush.msra.mxu0 %v5177
    %9338 = vmatpush.msra.mxu0 %v5065
    %9339 = vmatpush.msra.mxu0 %v4953
    %9340 = vmatpush.msra.mxu0 %v4841
    %9341 = vmatmul.f32.gmra.mxu0 %v9314
    %v9342 = vpop.f32.mrf.mxu0
    %v9343 = vadd.f32 0.0, %v9342
    %9344 = vmatmul.f32.gmra.mxu0 %v9317
    %v9345 = vpop.f32.mrf.mxu0
    %v9346 = vadd.f32 0.0, %v9345
    %9347 = vmatmul.f32.gmra.mxu0 %v9320
    %v9348 = vpop.f32.mrf.mxu0
    %v9349 = vadd.f32 0.0, %v9348
    %9350 = vmatmul.f32.gmra.mxu0 %v9323
    %v9351 = vpop.f32.mrf.mxu0
    %v9352 = vadd.f32 0.0, %v9351
    %9353 = vdwg.mxu0
    %9354 = vxpose.xlu0.b32.start [1/16] %v283, 128
    %9355 = vxpose.xlu0.b32.cont [2/16] %v284, 128
    %9356 = vxpose.xlu0.b32.cont [3/16] %v285, 128
    %9357 = vxpose.xlu0.b32.cont [4/16] %v286, 128
    %9358 = vxpose.xlu0.b32.cont [5/16] 0.0, 128
    %9359 = vxpose.xlu0.b32.cont [6/16] 0.0, 128
    %9360 = vxpose.xlu0.b32.cont [7/16] 0.0, 128
    %9361 = vxpose.xlu0.b32.cont [8/16] 0.0, 128
    %9362 = vxpose.xlu0.b32.cont [9/16] 0.0, 128
    %9363 = vxpose.xlu0.b32.cont [10/16] 0.0, 128
    %9364 = vxpose.xlu0.b32.cont [11/16] 0.0, 128
    %9365 = vxpose.xlu0.b32.cont [12/16] 0.0, 128
    %9366 = vxpose.xlu0.b32.cont [13/16] 0.0, 128
    %9367 = vxpose.xlu0.b32.cont [14/16] 0.0, 128
    %9368 = vxpose.xlu0.b32.cont [15/16] 0.0, 128
    %9369 = vxpose.xlu0.b32.end [16/16] 0.0, 128
    %v9370 = vpop.trf.xlu0
    %v9371 = vpop.trf.xlu0
    %v9372 = vpop.trf.xlu0
    %v9373 = vpop.trf.xlu0
    %v9374 = vpop.trf.xlu0
    %v9375 = vpop.trf.xlu0
    %v9376 = vpop.trf.xlu0
    %v9377 = vpop.trf.xlu0
    %v9378 = vpop.trf.xlu0
    %v9379 = vpop.trf.xlu0
    %v9380 = vpop.trf.xlu0
    %v9381 = vpop.trf.xlu0
    %v9382 = vpop.trf.xlu0
    %v9383 = vpop.trf.xlu0
    %v9384 = vpop.trf.xlu0
    %v9385 = vpop.trf.xlu0
    %v9387 = vsel %vm5224, %v9370, 0
    %v9390 = vsel %vm5224, %v9371, 0
    %v9393 = vsel %vm5224, %v9372, 0
    %v9396 = vsel %vm5224, %v9373, 0
    %9398 = vmatpush.msra.mxu0 0.0
    %9399 = vmatpush.msra.mxu0 0.0
    %9400 = vmatpush.msra.mxu0 0.0
    %9401 = vmatpush.msra.mxu0 0.0
    %9402 = vmatpush.msra.mxu0 0.0
    %9403 = vmatpush.msra.mxu0 0.0
    %9404 = vmatpush.msra.mxu0 0.0
    %9405 = vmatpush.msra.mxu0 0.0
    %9406 = vmatpush.msra.mxu0 0.0
    %9407 = vmatpush.msra.mxu0 0.0
    %9408 = vmatpush.msra.mxu0 0.0
    %9409 = vmatpush.msra.mxu0 0.0
    %9410 = vmatpush.msra.mxu0 %v5179
    %9411 = vmatpush.msra.mxu0 %v5067
    %9412 = vmatpush.msra.mxu0 %v4955
    %9413 = vmatpush.msra.mxu0 %v4843
    %9414 = vmatmul.f32.gmra.mxu0 %v9387
    %v9415 = vpop.f32.mrf.mxu0
    %v9416 = vadd.f32 0.0, %v9415
    %9417 = vmatmul.f32.gmra.mxu0 %v9390
    %v9418 = vpop.f32.mrf.mxu0
    %v9419 = vadd.f32 0.0, %v9418
    %9420 = vmatmul.f32.gmra.mxu0 %v9393
    %v9421 = vpop.f32.mrf.mxu0
    %v9422 = vadd.f32 0.0, %v9421
    %9423 = vmatmul.f32.gmra.mxu0 %v9396
    %v9424 = vpop.f32.mrf.mxu0
    %v9425 = vadd.f32 0.0, %v9424
    %9426 = vdwg.mxu0
    %9427 = vxpose.xlu0.b32.start [1/16] %v287, 128
    %9428 = vxpose.xlu0.b32.cont [2/16] %v288, 128
    %9429 = vxpose.xlu0.b32.cont [3/16] %v289, 128
    %9430 = vxpose.xlu0.b32.cont [4/16] %v290, 128
    %9431 = vxpose.xlu0.b32.cont [5/16] 0.0, 128
    %9432 = vxpose.xlu0.b32.cont [6/16] 0.0, 128
    %9433 = vxpose.xlu0.b32.cont [7/16] 0.0, 128
    %9434 = vxpose.xlu0.b32.cont [8/16] 0.0, 128
    %9435 = vxpose.xlu0.b32.cont [9/16] 0.0, 128
    %9436 = vxpose.xlu0.b32.cont [10/16] 0.0, 128
    %9437 = vxpose.xlu0.b32.cont [11/16] 0.0, 128
    %9438 = vxpose.xlu0.b32.cont [12/16] 0.0, 128
    %9439 = vxpose.xlu0.b32.cont [13/16] 0.0, 128
    %9440 = vxpose.xlu0.b32.cont [14/16] 0.0, 128
    %9441 = vxpose.xlu0.b32.cont [15/16] 0.0, 128
    %9442 = vxpose.xlu0.b32.end [16/16] 0.0, 128
    %v9443 = vpop.trf.xlu0
    %v9444 = vpop.trf.xlu0
    %v9445 = vpop.trf.xlu0
    %v9446 = vpop.trf.xlu0
    %v9447 = vpop.trf.xlu0
    %v9448 = vpop.trf.xlu0
    %v9449 = vpop.trf.xlu0
    %v9450 = vpop.trf.xlu0
    %v9451 = vpop.trf.xlu0
    %v9452 = vpop.trf.xlu0
    %v9453 = vpop.trf.xlu0
    %v9454 = vpop.trf.xlu0
    %v9455 = vpop.trf.xlu0
    %v9456 = vpop.trf.xlu0
    %v9457 = vpop.trf.xlu0
    %v9458 = vpop.trf.xlu0
    %v9460 = vsel %vm5224, %v9443, 0
    %v9463 = vsel %vm5224, %v9444, 0
    %v9466 = vsel %vm5224, %v9445, 0
    %v9469 = vsel %vm5224, %v9446, 0
    %9471 = vmatpush.msra.mxu0 0.0
    %9472 = vmatpush.msra.mxu0 0.0
    %9473 = vmatpush.msra.mxu0 0.0
    %9474 = vmatpush.msra.mxu0 0.0
    %9475 = vmatpush.msra.mxu0 0.0
    %9476 = vmatpush.msra.mxu0 0.0
    %9477 = vmatpush.msra.mxu0 0.0
    %9478 = vmatpush.msra.mxu0 0.0
    %9479 = vmatpush.msra.mxu0 0.0
    %9480 = vmatpush.msra.mxu0 0.0
    %9481 = vmatpush.msra.mxu0 0.0
    %9482 = vmatpush.msra.mxu0 0.0
    %9483 = vmatpush.msra.mxu0 %v5181
    %9484 = vmatpush.msra.mxu0 %v5069
    %9485 = vmatpush.msra.mxu0 %v4957
    %9486 = vmatpush.msra.mxu0 %v4845
    %9487 = vmatmul.f32.gmra.mxu0 %v9460
    %v9488 = vpop.f32.mrf.mxu0
    %v9489 = vadd.f32 0.0, %v9488
    %9490 = vmatmul.f32.gmra.mxu0 %v9463
    %v9491 = vpop.f32.mrf.mxu0
    %v9492 = vadd.f32 0.0, %v9491
    %9493 = vmatmul.f32.gmra.mxu0 %v9466
    %v9494 = vpop.f32.mrf.mxu0
    %v9495 = vadd.f32 0.0, %v9494
    %9496 = vmatmul.f32.gmra.mxu0 %v9469
    %v9497 = vpop.f32.mrf.mxu0
    %v9498 = vadd.f32 0.0, %v9497
    %9499 = vdwg.mxu0
    %9500 = vxpose.xlu0.b32.start [1/16] %v291, 128
    %9501 = vxpose.xlu0.b32.cont [2/16] %v292, 128
    %9502 = vxpose.xlu0.b32.cont [3/16] %v293, 128
    %9503 = vxpose.xlu0.b32.cont [4/16] %v294, 128
    %9504 = vxpose.xlu0.b32.cont [5/16] 0.0, 128
    %9505 = vxpose.xlu0.b32.cont [6/16] 0.0, 128
    %9506 = vxpose.xlu0.b32.cont [7/16] 0.0, 128
    %9507 = vxpose.xlu0.b32.cont [8/16] 0.0, 128
    %9508 = vxpose.xlu0.b32.cont [9/16] 0.0, 128
    %9509 = vxpose.xlu0.b32.cont [10/16] 0.0, 128
    %9510 = vxpose.xlu0.b32.cont [11/16] 0.0, 128
    %9511 = vxpose.xlu0.b32.cont [12/16] 0.0, 128
    %9512 = vxpose.xlu0.b32.cont [13/16] 0.0, 128
    %9513 = vxpose.xlu0.b32.cont [14/16] 0.0, 128
    %9514 = vxpose.xlu0.b32.cont [15/16] 0.0, 128
    %9515 = vxpose.xlu0.b32.end [16/16] 0.0, 128
    %v9516 = vpop.trf.xlu0
    %v9517 = vpop.trf.xlu0
    %v9518 = vpop.trf.xlu0
    %v9519 = vpop.trf.xlu0
    %v9520 = vpop.trf.xlu0
    %v9521 = vpop.trf.xlu0
    %v9522 = vpop.trf.xlu0
    %v9523 = vpop.trf.xlu0
    %v9524 = vpop.trf.xlu0
    %v9525 = vpop.trf.xlu0
    %v9526 = vpop.trf.xlu0
    %v9527 = vpop.trf.xlu0
    %v9528 = vpop.trf.xlu0
    %v9529 = vpop.trf.xlu0
    %v9530 = vpop.trf.xlu0
    %v9531 = vpop.trf.xlu0
    %v9533 = vsel %vm5224, %v9516, 0
    %v9536 = vsel %vm5224, %v9517, 0
    %v9539 = vsel %vm5224, %v9518, 0
    %v9542 = vsel %vm5224, %v9519, 0
    %9544 = vmatpush.msra.mxu0 0.0
    %9545 = vmatpush.msra.mxu0 0.0
    %9546 = vmatpush.msra.mxu0 0.0
    %9547 = vmatpush.msra.mxu0 0.0
    %9548 = vmatpush.msra.mxu0 0.0
    %9549 = vmatpush.msra.mxu0 0.0
    %9550 = vmatpush.msra.mxu0 0.0
    %9551 = vmatpush.msra.mxu0 0.0
    %9552 = vmatpush.msra.mxu0 0.0
    %9553 = vmatpush.msra.mxu0 0.0
    %9554 = vmatpush.msra.mxu0 0.0
    %9555 = vmatpush.msra.mxu0 0.0
    %9556 = vmatpush.msra.mxu0 %v5183
    %9557 = vmatpush.msra.mxu0 %v5071
    %9558 = vmatpush.msra.mxu0 %v4959
    %9559 = vmatpush.msra.mxu0 %v4847
    %9560 = vmatmul.f32.gmra.mxu0 %v9533
    %v9561 = vpop.f32.mrf.mxu0
    %v9562 = vadd.f32 0.0, %v9561
    %9563 = vmatmul.f32.gmra.mxu0 %v9536
    %v9564 = vpop.f32.mrf.mxu0
    %v9565 = vadd.f32 0.0, %v9564
    %9566 = vmatmul.f32.gmra.mxu0 %v9539
    %v9567 = vpop.f32.mrf.mxu0
    %v9568 = vadd.f32 0.0, %v9567
    %9569 = vmatmul.f32.gmra.mxu0 %v9542
    %v9570 = vpop.f32.mrf.mxu0
    %v9571 = vadd.f32 0.0, %v9570
    %9572 = vdwg.mxu0
    %9573 = vxpose.xlu0.b32.start [1/16] %v295, 128
    %9574 = vxpose.xlu0.b32.cont [2/16] %v296, 128
    %9575 = vxpose.xlu0.b32.cont [3/16] %v297, 128
    %9576 = vxpose.xlu0.b32.cont [4/16] %v298, 128
    %9577 = vxpose.xlu0.b32.cont [5/16] 0.0, 128
    %9578 = vxpose.xlu0.b32.cont [6/16] 0.0, 128
    %9579 = vxpose.xlu0.b32.cont [7/16] 0.0, 128
    %9580 = vxpose.xlu0.b32.cont [8/16] 0.0, 128
    %9581 = vxpose.xlu0.b32.cont [9/16] 0.0, 128
    %9582 = vxpose.xlu0.b32.cont [10/16] 0.0, 128
    %9583 = vxpose.xlu0.b32.cont [11/16] 0.0, 128
    %9584 = vxpose.xlu0.b32.cont [12/16] 0.0, 128
    %9585 = vxpose.xlu0.b32.cont [13/16] 0.0, 128
    %9586 = vxpose.xlu0.b32.cont [14/16] 0.0, 128
    %9587 = vxpose.xlu0.b32.cont [15/16] 0.0, 128
    %9588 = vxpose.xlu0.b32.end [16/16] 0.0, 128
    %v9589 = vpop.trf.xlu0
    %v9590 = vpop.trf.xlu0
    %v9591 = vpop.trf.xlu0
    %v9592 = vpop.trf.xlu0
    %v9593 = vpop.trf.xlu0
    %v9594 = vpop.trf.xlu0
    %v9595 = vpop.trf.xlu0
    %v9596 = vpop.trf.xlu0
    %v9597 = vpop.trf.xlu0
    %v9598 = vpop.trf.xlu0
    %v9599 = vpop.trf.xlu0
    %v9600 = vpop.trf.xlu0
    %v9601 = vpop.trf.xlu0
    %v9602 = vpop.trf.xlu0
    %v9603 = vpop.trf.xlu0
    %v9604 = vpop.trf.xlu0
    %v9606 = vsel %vm5224, %v9589, 0
    %v9609 = vsel %vm5224, %v9590, 0
    %v9612 = vsel %vm5224, %v9591, 0
    %v9615 = vsel %vm5224, %v9592, 0
    %9617 = vmatpush.msra.mxu0 0.0
    %9618 = vmatpush.msra.mxu0 0.0
    %9619 = vmatpush.msra.mxu0 0.0
    %9620 = vmatpush.msra.mxu0 0.0
    %9621 = vmatpush.msra.mxu0 0.0
    %9622 = vmatpush.msra.mxu0 0.0
    %9623 = vmatpush.msra.mxu0 0.0
    %9624 = vmatpush.msra.mxu0 0.0
    %9625 = vmatpush.msra.mxu0 0.0
    %9626 = vmatpush.msra.mxu0 0.0
    %9627 = vmatpush.msra.mxu0 0.0
    %9628 = vmatpush.msra.mxu0 0.0
    %9629 = vmatpush.msra.mxu0 %v5185
    %9630 = vmatpush.msra.mxu0 %v5073
    %9631 = vmatpush.msra.mxu0 %v4961
    %9632 = vmatpush.msra.mxu0 %v4849
    %9633 = vmatmul.f32.gmra.mxu0 %v9606
    %v9634 = vpop.f32.mrf.mxu0
    %v9635 = vadd.f32 0.0, %v9634
    %9636 = vmatmul.f32.gmra.mxu0 %v9609
    %v9637 = vpop.f32.mrf.mxu0
    %v9638 = vadd.f32 0.0, %v9637
    %9639 = vmatmul.f32.gmra.mxu0 %v9612
    %v9640 = vpop.f32.mrf.mxu0
    %v9641 = vadd.f32 0.0, %v9640
    %9642 = vmatmul.f32.gmra.mxu0 %v9615
    %v9643 = vpop.f32.mrf.mxu0
    %v9644 = vadd.f32 0.0, %v9643
    %9645 = vdwg.mxu0
    %9646 = vxpose.xlu0.b32.start [1/16] %v299, 128
    %9647 = vxpose.xlu0.b32.cont [2/16] %v300, 128
    %9648 = vxpose.xlu0.b32.cont [3/16] %v301, 128
    %9649 = vxpose.xlu0.b32.cont [4/16] %v302, 128
    %9650 = vxpose.xlu0.b32.cont [5/16] 0.0, 128
    %9651 = vxpose.xlu0.b32.cont [6/16] 0.0, 128
    %9652 = vxpose.xlu0.b32.cont [7/16] 0.0, 128
    %9653 = vxpose.xlu0.b32.cont [8/16] 0.0, 128
    %9654 = vxpose.xlu0.b32.cont [9/16] 0.0, 128
    %9655 = vxpose.xlu0.b32.cont [10/16] 0.0, 128
    %9656 = vxpose.xlu0.b32.cont [11/16] 0.0, 128
    %9657 = vxpose.xlu0.b32.cont [12/16] 0.0, 128
    %9658 = vxpose.xlu0.b32.cont [13/16] 0.0, 128
    %9659 = vxpose.xlu0.b32.cont [14/16] 0.0, 128
    %9660 = vxpose.xlu0.b32.cont [15/16] 0.0, 128
    %9661 = vxpose.xlu0.b32.end [16/16] 0.0, 128
    %v9662 = vpop.trf.xlu0
    %v9663 = vpop.trf.xlu0
    %v9664 = vpop.trf.xlu0
    %v9665 = vpop.trf.xlu0
    %v9666 = vpop.trf.xlu0
    %v9667 = vpop.trf.xlu0
    %v9668 = vpop.trf.xlu0
    %v9669 = vpop.trf.xlu0
    %v9670 = vpop.trf.xlu0
    %v9671 = vpop.trf.xlu0
    %v9672 = vpop.trf.xlu0
    %v9673 = vpop.trf.xlu0
    %v9674 = vpop.trf.xlu0
    %v9675 = vpop.trf.xlu0
    %v9676 = vpop.trf.xlu0
    %v9677 = vpop.trf.xlu0
    %v9679 = vsel %vm5224, %v9662, 0
    %v9682 = vsel %vm5224, %v9663, 0
    %v9685 = vsel %vm5224, %v9664, 0
    %v9688 = vsel %vm5224, %v9665, 0
    %9690 = vmatpush.msra.mxu0 0.0
    %9691 = vmatpush.msra.mxu0 0.0
    %9692 = vmatpush.msra.mxu0 0.0
    %9693 = vmatpush.msra.mxu0 0.0
    %9694 = vmatpush.msra.mxu0 0.0
    %9695 = vmatpush.msra.mxu0 0.0
    %9696 = vmatpush.msra.mxu0 0.0
    %9697 = vmatpush.msra.mxu0 0.0
    %9698 = vmatpush.msra.mxu0 0.0
    %9699 = vmatpush.msra.mxu0 0.0
    %9700 = vmatpush.msra.mxu0 0.0
    %9701 = vmatpush.msra.mxu0 0.0
    %9702 = vmatpush.msra.mxu0 %v5187
    %9703 = vmatpush.msra.mxu0 %v5075
    %9704 = vmatpush.msra.mxu0 %v4963
    %9705 = vmatpush.msra.mxu0 %v4851
    %9706 = vmatmul.f32.gmra.mxu0 %v9679
    %v9707 = vpop.f32.mrf.mxu0
    %v9708 = vadd.f32 0.0, %v9707
    %9709 = vmatmul.f32.gmra.mxu0 %v9682
    %v9710 = vpop.f32.mrf.mxu0
    %v9711 = vadd.f32 0.0, %v9710
    %9712 = vmatmul.f32.gmra.mxu0 %v9685
    %v9713 = vpop.f32.mrf.mxu0
    %v9714 = vadd.f32 0.0, %v9713
    %9715 = vmatmul.f32.gmra.mxu0 %v9688
    %v9716 = vpop.f32.mrf.mxu0
    %v9717 = vadd.f32 0.0, %v9716
    %9718 = vdwg.mxu0
    %9719 = vxpose.xlu0.b32.start [1/16] %v303, 128
    %9720 = vxpose.xlu0.b32.cont [2/16] %v304, 128
    %9721 = vxpose.xlu0.b32.cont [3/16] %v305, 128
    %9722 = vxpose.xlu0.b32.cont [4/16] %v306, 128
    %9723 = vxpose.xlu0.b32.cont [5/16] 0.0, 128
    %9724 = vxpose.xlu0.b32.cont [6/16] 0.0, 128
    %9725 = vxpose.xlu0.b32.cont [7/16] 0.0, 128
    %9726 = vxpose.xlu0.b32.cont [8/16] 0.0, 128
    %9727 = vxpose.xlu0.b32.cont [9/16] 0.0, 128
    %9728 = vxpose.xlu0.b32.cont [10/16] 0.0, 128
    %9729 = vxpose.xlu0.b32.cont [11/16] 0.0, 128
    %9730 = vxpose.xlu0.b32.cont [12/16] 0.0, 128
    %9731 = vxpose.xlu0.b32.cont [13/16] 0.0, 128
    %9732 = vxpose.xlu0.b32.cont [14/16] 0.0, 128
    %9733 = vxpose.xlu0.b32.cont [15/16] 0.0, 128
    %9734 = vxpose.xlu0.b32.end [16/16] 0.0, 128
    %v9735 = vpop.trf.xlu0
    %v9736 = vpop.trf.xlu0
    %v9737 = vpop.trf.xlu0
    %v9738 = vpop.trf.xlu0
    %v9739 = vpop.trf.xlu0
    %v9740 = vpop.trf.xlu0
    %v9741 = vpop.trf.xlu0
    %v9742 = vpop.trf.xlu0
    %v9743 = vpop.trf.xlu0
    %v9744 = vpop.trf.xlu0
    %v9745 = vpop.trf.xlu0
    %v9746 = vpop.trf.xlu0
    %v9747 = vpop.trf.xlu0
    %v9748 = vpop.trf.xlu0
    %v9749 = vpop.trf.xlu0
    %v9750 = vpop.trf.xlu0
    %v9752 = vsel %vm5224, %v9735, 0
    %v9755 = vsel %vm5224, %v9736, 0
    %v9758 = vsel %vm5224, %v9737, 0
    %v9761 = vsel %vm5224, %v9738, 0
    %9763 = vmatpush.msra.mxu0 0.0
    %9764 = vmatpush.msra.mxu0 0.0
    %9765 = vmatpush.msra.mxu0 0.0
    %9766 = vmatpush.msra.mxu0 0.0
    %9767 = vmatpush.msra.mxu0 0.0
    %9768 = vmatpush.msra.mxu0 0.0
    %9769 = vmatpush.msra.mxu0 0.0
    %9770 = vmatpush.msra.mxu0 0.0
    %9771 = vmatpush.msra.mxu0 0.0
    %9772 = vmatpush.msra.mxu0 0.0
    %9773 = vmatpush.msra.mxu0 0.0
    %9774 = vmatpush.msra.mxu0 0.0
    %9775 = vmatpush.msra.mxu0 %v5189
    %9776 = vmatpush.msra.mxu0 %v5077
    %9777 = vmatpush.msra.mxu0 %v4965
    %9778 = vmatpush.msra.mxu0 %v4853
    %9779 = vmatmul.f32.gmra.mxu0 %v9752
    %v9780 = vpop.f32.mrf.mxu0
    %v9781 = vadd.f32 0.0, %v9780
    %9782 = vmatmul.f32.gmra.mxu0 %v9755
    %v9783 = vpop.f32.mrf.mxu0
    %v9784 = vadd.f32 0.0, %v9783
    %9785 = vmatmul.f32.gmra.mxu0 %v9758
    %v9786 = vpop.f32.mrf.mxu0
    %v9787 = vadd.f32 0.0, %v9786
    %9788 = vmatmul.f32.gmra.mxu0 %v9761
    %v9789 = vpop.f32.mrf.mxu0
    %v9790 = vadd.f32 0.0, %v9789
    %9791 = vdwg.mxu0
    %9792 = vxpose.xlu0.b32.start [1/16] %v307, 128
    %9793 = vxpose.xlu0.b32.cont [2/16] %v308, 128
    %9794 = vxpose.xlu0.b32.cont [3/16] %v309, 128
    %9795 = vxpose.xlu0.b32.cont [4/16] %v310, 128
    %9796 = vxpose.xlu0.b32.cont [5/16] 0.0, 128
    %9797 = vxpose.xlu0.b32.cont [6/16] 0.0, 128
    %9798 = vxpose.xlu0.b32.cont [7/16] 0.0, 128
    %9799 = vxpose.xlu0.b32.cont [8/16] 0.0, 128
    %9800 = vxpose.xlu0.b32.cont [9/16] 0.0, 128
    %9801 = vxpose.xlu0.b32.cont [10/16] 0.0, 128
    %9802 = vxpose.xlu0.b32.cont [11/16] 0.0, 128
    %9803 = vxpose.xlu0.b32.cont [12/16] 0.0, 128
    %9804 = vxpose.xlu0.b32.cont [13/16] 0.0, 128
    %9805 = vxpose.xlu0.b32.cont [14/16] 0.0, 128
    %9806 = vxpose.xlu0.b32.cont [15/16] 0.0, 128
    %9807 = vxpose.xlu0.b32.end [16/16] 0.0, 128
    %v9808 = vpop.trf.xlu0
    %v9809 = vpop.trf.xlu0
    %v9810 = vpop.trf.xlu0
    %v9811 = vpop.trf.xlu0
    %v9812 = vpop.trf.xlu0
    %v9813 = vpop.trf.xlu0
    %v9814 = vpop.trf.xlu0
    %v9815 = vpop.trf.xlu0
    %v9816 = vpop.trf.xlu0
    %v9817 = vpop.trf.xlu0
    %v9818 = vpop.trf.xlu0
    %v9819 = vpop.trf.xlu0
    %v9820 = vpop.trf.xlu0
    %v9821 = vpop.trf.xlu0
    %v9822 = vpop.trf.xlu0
    %v9823 = vpop.trf.xlu0
    %v9825 = vsel %vm5224, %v9808, 0
    %v9828 = vsel %vm5224, %v9809, 0
    %v9831 = vsel %vm5224, %v9810, 0
    %v9834 = vsel %vm5224, %v9811, 0
    %9836 = vmatpush.msra.mxu0 0.0
    %9837 = vmatpush.msra.mxu0 0.0
    %9838 = vmatpush.msra.mxu0 0.0
    %9839 = vmatpush.msra.mxu0 0.0
    %9840 = vmatpush.msra.mxu0 0.0
    %9841 = vmatpush.msra.mxu0 0.0
    %9842 = vmatpush.msra.mxu0 0.0
    %9843 = vmatpush.msra.mxu0 0.0
    %9844 = vmatpush.msra.mxu0 0.0
    %9845 = vmatpush.msra.mxu0 0.0
    %9846 = vmatpush.msra.mxu0 0.0
    %9847 = vmatpush.msra.mxu0 0.0
    %9848 = vmatpush.msra.mxu0 %v5191
    %9849 = vmatpush.msra.mxu0 %v5079
    %9850 = vmatpush.msra.mxu0 %v4967
    %9851 = vmatpush.msra.mxu0 %v4855
    %9852 = vmatmul.f32.gmra.mxu0 %v9825
    %v9853 = vpop.f32.mrf.mxu0
    %v9854 = vadd.f32 0.0, %v9853
    %9855 = vmatmul.f32.gmra.mxu0 %v9828
    %v9856 = vpop.f32.mrf.mxu0
    %v9857 = vadd.f32 0.0, %v9856
    %9858 = vmatmul.f32.gmra.mxu0 %v9831
    %v9859 = vpop.f32.mrf.mxu0
    %v9860 = vadd.f32 0.0, %v9859
    %9861 = vmatmul.f32.gmra.mxu0 %v9834
    %v9862 = vpop.f32.mrf.mxu0
    %v9863 = vadd.f32 0.0, %v9862
    %9864 = vdwg.mxu0
    %9865 = vxpose.xlu0.b32.start [1/16] %v5255, 128
    %9866 = vxpose.xlu0.b32.cont [2/16] %v5258, 128
    %9867 = vxpose.xlu0.b32.cont [3/16] %v5261, 128
    %9868 = vxpose.xlu0.b32.cont [4/16] %v5264, 128
    %9869 = vxpose.xlu0.b32.cont [5/16] 0.0, 128
    %9870 = vxpose.xlu0.b32.cont [6/16] 0.0, 128
    %9871 = vxpose.xlu0.b32.cont [7/16] 0.0, 128
    %9872 = vxpose.xlu0.b32.cont [8/16] 0.0, 128
    %9873 = vxpose.xlu0.b32.cont [9/16] 0.0, 128
    %9874 = vxpose.xlu0.b32.cont [10/16] 0.0, 128
    %9875 = vxpose.xlu0.b32.cont [11/16] 0.0, 128
    %9876 = vxpose.xlu0.b32.cont [12/16] 0.0, 128
    %9877 = vxpose.xlu0.b32.cont [13/16] 0.0, 128
    %9878 = vxpose.xlu0.b32.cont [14/16] 0.0, 128
    %9879 = vxpose.xlu0.b32.cont [15/16] 0.0, 128
    %9880 = vxpose.xlu0.b32.end [16/16] 0.0, 128
    %v9881 = vpop.trf.xlu0
    %v9882 = vpop.trf.xlu0
    %v9883 = vpop.trf.xlu0
    %v9884 = vpop.trf.xlu0
    %v9885 = vpop.trf.xlu0
    %v9886 = vpop.trf.xlu0
    %v9887 = vpop.trf.xlu0
    %v9888 = vpop.trf.xlu0
    %v9889 = vpop.trf.xlu0
    %v9890 = vpop.trf.xlu0
    %v9891 = vpop.trf.xlu0
    %v9892 = vpop.trf.xlu0
    %v9893 = vpop.trf.xlu0
    %v9894 = vpop.trf.xlu0
    %v9895 = vpop.trf.xlu0
    %v9896 = vpop.trf.xlu0
    %9897 = vxpose.xlu0.b32.start [1/16] %v5328, 128
    %9898 = vxpose.xlu0.b32.cont [2/16] %v5331, 128
    %9899 = vxpose.xlu0.b32.cont [3/16] %v5334, 128
    %9900 = vxpose.xlu0.b32.cont [4/16] %v5337, 128
    %9901 = vxpose.xlu0.b32.cont [5/16] 0.0, 128
    %9902 = vxpose.xlu0.b32.cont [6/16] 0.0, 128
    %9903 = vxpose.xlu0.b32.cont [7/16] 0.0, 128
    %9904 = vxpose.xlu0.b32.cont [8/16] 0.0, 128
    %9905 = vxpose.xlu0.b32.cont [9/16] 0.0, 128
    %9906 = vxpose.xlu0.b32.cont [10/16] 0.0, 128
    %9907 = vxpose.xlu0.b32.cont [11/16] 0.0, 128
    %9908 = vxpose.xlu0.b32.cont [12/16] 0.0, 128
    %9909 = vxpose.xlu0.b32.cont [13/16] 0.0, 128
    %9910 = vxpose.xlu0.b32.cont [14/16] 0.0, 128
    %9911 = vxpose.xlu0.b32.cont [15/16] 0.0, 128
    %9912 = vxpose.xlu0.b32.end [16/16] 0.0, 128
    %v9913 = vpop.trf.xlu0
    %v9914 = vpop.trf.xlu0
    %v9915 = vpop.trf.xlu0
    %v9916 = vpop.trf.xlu0
    %v9917 = vpop.trf.xlu0
    %v9918 = vpop.trf.xlu0
    %v9919 = vpop.trf.xlu0
    %v9920 = vpop.trf.xlu0
    %v9921 = vpop.trf.xlu0
    %v9922 = vpop.trf.xlu0
    %v9923 = vpop.trf.xlu0
    %v9924 = vpop.trf.xlu0
    %v9925 = vpop.trf.xlu0
    %v9926 = vpop.trf.xlu0
    %v9927 = vpop.trf.xlu0
    %v9928 = vpop.trf.xlu0
    %9929 = vxpose.xlu0.b32.start [1/16] %v5401, 128
    %9930 = vxpose.xlu0.b32.cont [2/16] %v5404, 128
    %9931 = vxpose.xlu0.b32.cont [3/16] %v5407, 128
    %9932 = vxpose.xlu0.b32.cont [4/16] %v5410, 128
    %9933 = vxpose.xlu0.b32.cont [5/16] 0.0, 128
    %9934 = vxpose.xlu0.b32.cont [6/16] 0.0, 128
    %9935 = vxpose.xlu0.b32.cont [7/16] 0.0, 128
    %9936 = vxpose.xlu0.b32.cont [8/16] 0.0, 128
    %9937 = vxpose.xlu0.b32.cont [9/16] 0.0, 128
    %9938 = vxpose.xlu0.b32.cont [10/16] 0.0, 128
    %9939 = vxpose.xlu0.b32.cont [11/16] 0.0, 128
    %9940 = vxpose.xlu0.b32.cont [12/16] 0.0, 128
    %9941 = vxpose.xlu0.b32.cont [13/16] 0.0, 128
    %9942 = vxpose.xlu0.b32.cont [14/16] 0.0, 128
    %9943 = vxpose.xlu0.b32.cont [15/16] 0.0, 128
    %9944 = vxpose.xlu0.b32.end [16/16] 0.0, 128
    %v9945 = vpop.trf.xlu0
    %v9946 = vpop.trf.xlu0
    %v9947 = vpop.trf.xlu0
    %v9948 = vpop.trf.xlu0
    %v9949 = vpop.trf.xlu0
    %v9950 = vpop.trf.xlu0
    %v9951 = vpop.trf.xlu0
    %v9952 = vpop.trf.xlu0
    %v9953 = vpop.trf.xlu0
    %v9954 = vpop.trf.xlu0
    %v9955 = vpop.trf.xlu0
    %v9956 = vpop.trf.xlu0
    %v9957 = vpop.trf.xlu0
    %v9958 = vpop.trf.xlu0
    %v9959 = vpop.trf.xlu0
    %v9960 = vpop.trf.xlu0
    %9961 = vxpose.xlu0.b32.start [1/16] %v5474, 128
    %9962 = vxpose.xlu0.b32.cont [2/16] %v5477, 128
    %9963 = vxpose.xlu0.b32.cont [3/16] %v5480, 128
    %9964 = vxpose.xlu0.b32.cont [4/16] %v5483, 128
    %9965 = vxpose.xlu0.b32.cont [5/16] 0.0, 128
    %9966 = vxpose.xlu0.b32.cont [6/16] 0.0, 128
    %9967 = vxpose.xlu0.b32.cont [7/16] 0.0, 128
    %9968 = vxpose.xlu0.b32.cont [8/16] 0.0, 128
    %9969 = vxpose.xlu0.b32.cont [9/16] 0.0, 128
    %9970 = vxpose.xlu0.b32.cont [10/16] 0.0, 128
    %9971 = vxpose.xlu0.b32.cont [11/16] 0.0, 128
    %9972 = vxpose.xlu0.b32.cont [12/16] 0.0, 128
    %9973 = vxpose.xlu0.b32.cont [13/16] 0.0, 128
    %9974 = vxpose.xlu0.b32.cont [14/16] 0.0, 128
    %9975 = vxpose.xlu0.b32.cont [15/16] 0.0, 128
    %9976 = vxpose.xlu0.b32.end [16/16] 0.0, 128
    %v9977 = vpop.trf.xlu0
    %v9978 = vpop.trf.xlu0
    %v9979 = vpop.trf.xlu0
    %v9980 = vpop.trf.xlu0
    %v9981 = vpop.trf.xlu0
    %v9982 = vpop.trf.xlu0
    %v9983 = vpop.trf.xlu0
    %v9984 = vpop.trf.xlu0
    %v9985 = vpop.trf.xlu0
    %v9986 = vpop.trf.xlu0
    %v9987 = vpop.trf.xlu0
    %v9988 = vpop.trf.xlu0
    %v9989 = vpop.trf.xlu0
    %v9990 = vpop.trf.xlu0
    %v9991 = vpop.trf.xlu0
    %v9992 = vpop.trf.xlu0
    %9993 = vxpose.xlu0.b32.start [1/16] %v5547, 128
    %9994 = vxpose.xlu0.b32.cont [2/16] %v5550, 128
    %9995 = vxpose.xlu0.b32.cont [3/16] %v5553, 128
    %9996 = vxpose.xlu0.b32.cont [4/16] %v5556, 128
    %9997 = vxpose.xlu0.b32.cont [5/16] 0.0, 128
    %9998 = vxpose.xlu0.b32.cont [6/16] 0.0, 128
    %9999 = vxpose.xlu0.b32.cont [7/16] 0.0, 128
    %10000 = vxpose.xlu0.b32.cont [8/16] 0.0, 128
    %10001 = vxpose.xlu0.b32.cont [9/16] 0.0, 128
    %10002 = vxpose.xlu0.b32.cont [10/16] 0.0, 128
    %10003 = vxpose.xlu0.b32.cont [11/16] 0.0, 128
    %10004 = vxpose.xlu0.b32.cont [12/16] 0.0, 128
    %10005 = vxpose.xlu0.b32.cont [13/16] 0.0, 128
    %10006 = vxpose.xlu0.b32.cont [14/16] 0.0, 128
    %10007 = vxpose.xlu0.b32.cont [15/16] 0.0, 128
    %10008 = vxpose.xlu0.b32.end [16/16] 0.0, 128
    %v10009 = vpop.trf.xlu0
    %v10010 = vpop.trf.xlu0
    %v10011 = vpop.trf.xlu0
    %v10012 = vpop.trf.xlu0
    %v10013 = vpop.trf.xlu0
    %v10014 = vpop.trf.xlu0
    %v10015 = vpop.trf.xlu0
    %v10016 = vpop.trf.xlu0
    %v10017 = vpop.trf.xlu0
    %v10018 = vpop.trf.xlu0
    %v10019 = vpop.trf.xlu0
    %v10020 = vpop.trf.xlu0
    %v10021 = vpop.trf.xlu0
    %v10022 = vpop.trf.xlu0
    %v10023 = vpop.trf.xlu0
    %v10024 = vpop.trf.xlu0
    %10025 = vxpose.xlu0.b32.start [1/16] %v5620, 128
    %10026 = vxpose.xlu0.b32.cont [2/16] %v5623, 128
    %10027 = vxpose.xlu0.b32.cont [3/16] %v5626, 128
    %10028 = vxpose.xlu0.b32.cont [4/16] %v5629, 128
    %10029 = vxpose.xlu0.b32.cont [5/16] 0.0, 128
    %10030 = vxpose.xlu0.b32.cont [6/16] 0.0, 128
    %10031 = vxpose.xlu0.b32.cont [7/16] 0.0, 128
    %10032 = vxpose.xlu0.b32.cont [8/16] 0.0, 128
    %10033 = vxpose.xlu0.b32.cont [9/16] 0.0, 128
    %10034 = vxpose.xlu0.b32.cont [10/16] 0.0, 128
    %10035 = vxpose.xlu0.b32.cont [11/16] 0.0, 128
    %10036 = vxpose.xlu0.b32.cont [12/16] 0.0, 128
    %10037 = vxpose.xlu0.b32.cont [13/16] 0.0, 128
    %10038 = vxpose.xlu0.b32.cont [14/16] 0.0, 128
    %10039 = vxpose.xlu0.b32.cont [15/16] 0.0, 128
    %10040 = vxpose.xlu0.b32.end [16/16] 0.0, 128
    %v10041 = vpop.trf.xlu0
    %v10042 = vpop.trf.xlu0
    %v10043 = vpop.trf.xlu0
    %v10044 = vpop.trf.xlu0
    %v10045 = vpop.trf.xlu0
    %v10046 = vpop.trf.xlu0
    %v10047 = vpop.trf.xlu0
    %v10048 = vpop.trf.xlu0
    %v10049 = vpop.trf.xlu0
    %v10050 = vpop.trf.xlu0
    %v10051 = vpop.trf.xlu0
    %v10052 = vpop.trf.xlu0
    %v10053 = vpop.trf.xlu0
    %v10054 = vpop.trf.xlu0
    %v10055 = vpop.trf.xlu0
    %v10056 = vpop.trf.xlu0
    %10057 = vxpose.xlu0.b32.start [1/16] %v5693, 128
    %10058 = vxpose.xlu0.b32.cont [2/16] %v5696, 128
    %10059 = vxpose.xlu0.b32.cont [3/16] %v5699, 128
    %10060 = vxpose.xlu0.b32.cont [4/16] %v5702, 128
    %10061 = vxpose.xlu0.b32.cont [5/16] 0.0, 128
    %10062 = vxpose.xlu0.b32.cont [6/16] 0.0, 128
    %10063 = vxpose.xlu0.b32.cont [7/16] 0.0, 128
    %10064 = vxpose.xlu0.b32.cont [8/16] 0.0, 128
    %10065 = vxpose.xlu0.b32.cont [9/16] 0.0, 128
    %10066 = vxpose.xlu0.b32.cont [10/16] 0.0, 128
    %10067 = vxpose.xlu0.b32.cont [11/16] 0.0, 128
    %10068 = vxpose.xlu0.b32.cont [12/16] 0.0, 128
    %10069 = vxpose.xlu0.b32.cont [13/16] 0.0, 128
    %10070 = vxpose.xlu0.b32.cont [14/16] 0.0, 128
    %10071 = vxpose.xlu0.b32.cont [15/16] 0.0, 128
    %10072 = vxpose.xlu0.b32.end [16/16] 0.0, 128
    %v10073 = vpop.trf.xlu0
    %v10074 = vpop.trf.xlu0
    %v10075 = vpop.trf.xlu0
    %v10076 = vpop.trf.xlu0
    %v10077 = vpop.trf.xlu0
    %v10078 = vpop.trf.xlu0
    %v10079 = vpop.trf.xlu0
    %v10080 = vpop.trf.xlu0
    %v10081 = vpop.trf.xlu0
    %v10082 = vpop.trf.xlu0
    %v10083 = vpop.trf.xlu0
    %v10084 = vpop.trf.xlu0
    %v10085 = vpop.trf.xlu0
    %v10086 = vpop.trf.xlu0
    %v10087 = vpop.trf.xlu0
    %v10088 = vpop.trf.xlu0
    %10089 = vxpose.xlu0.b32.start [1/16] %v5766, 128
    %10090 = vxpose.xlu0.b32.cont [2/16] %v5769, 128
    %10091 = vxpose.xlu0.b32.cont [3/16] %v5772, 128
    %10092 = vxpose.xlu0.b32.cont [4/16] %v5775, 128
    %10093 = vxpose.xlu0.b32.cont [5/16] 0.0, 128
    %10094 = vxpose.xlu0.b32.cont [6/16] 0.0, 128
    %10095 = vxpose.xlu0.b32.cont [7/16] 0.0, 128
    %10096 = vxpose.xlu0.b32.cont [8/16] 0.0, 128
    %10097 = vxpose.xlu0.b32.cont [9/16] 0.0, 128
    %10098 = vxpose.xlu0.b32.cont [10/16] 0.0, 128
    %10099 = vxpose.xlu0.b32.cont [11/16] 0.0, 128
    %10100 = vxpose.xlu0.b32.cont [12/16] 0.0, 128
    %10101 = vxpose.xlu0.b32.cont [13/16] 0.0, 128
    %10102 = vxpose.xlu0.b32.cont [14/16] 0.0, 128
    %10103 = vxpose.xlu0.b32.cont [15/16] 0.0, 128
    %10104 = vxpose.xlu0.b32.end [16/16] 0.0, 128
    %v10105 = vpop.trf.xlu0
    %v10106 = vpop.trf.xlu0
    %v10107 = vpop.trf.xlu0
    %v10108 = vpop.trf.xlu0
    %v10109 = vpop.trf.xlu0
    %v10110 = vpop.trf.xlu0
    %v10111 = vpop.trf.xlu0
    %v10112 = vpop.trf.xlu0
    %v10113 = vpop.trf.xlu0
    %v10114 = vpop.trf.xlu0
    %v10115 = vpop.trf.xlu0
    %v10116 = vpop.trf.xlu0
    %v10117 = vpop.trf.xlu0
    %v10118 = vpop.trf.xlu0
    %v10119 = vpop.trf.xlu0
    %v10120 = vpop.trf.xlu0
    %10121 = vxpose.xlu0.b32.start [1/16] %v5839, 128
    %10122 = vxpose.xlu0.b32.cont [2/16] %v5842, 128
    %10123 = vxpose.xlu0.b32.cont [3/16] %v5845, 128
    %10124 = vxpose.xlu0.b32.cont [4/16] %v5848, 128
    %10125 = vxpose.xlu0.b32.cont [5/16] 0.0, 128
    %10126 = vxpose.xlu0.b32.cont [6/16] 0.0, 128
    %10127 = vxpose.xlu0.b32.cont [7/16] 0.0, 128
    %10128 = vxpose.xlu0.b32.cont [8/16] 0.0, 128
    %10129 = vxpose.xlu0.b32.cont [9/16] 0.0, 128
    %10130 = vxpose.xlu0.b32.cont [10/16] 0.0, 128
    %10131 = vxpose.xlu0.b32.cont [11/16] 0.0, 128
    %10132 = vxpose.xlu0.b32.cont [12/16] 0.0, 128
    %10133 = vxpose.xlu0.b32.cont [13/16] 0.0, 128
    %10134 = vxpose.xlu0.b32.cont [14/16] 0.0, 128
    %10135 = vxpose.xlu0.b32.cont [15/16] 0.0, 128
    %10136 = vxpose.xlu0.b32.end [16/16] 0.0, 128
    %v10137 = vpop.trf.xlu0
    %v10138 = vpop.trf.xlu0
    %v10139 = vpop.trf.xlu0
    %v10140 = vpop.trf.xlu0
    %v10141 = vpop.trf.xlu0
    %v10142 = vpop.trf.xlu0
    %v10143 = vpop.trf.xlu0
    %v10144 = vpop.trf.xlu0
    %v10145 = vpop.trf.xlu0
    %v10146 = vpop.trf.xlu0
    %v10147 = vpop.trf.xlu0
    %v10148 = vpop.trf.xlu0
    %v10149 = vpop.trf.xlu0
    %v10150 = vpop.trf.xlu0
    %v10151 = vpop.trf.xlu0
    %v10152 = vpop.trf.xlu0
    %10153 = vxpose.xlu0.b32.start [1/16] %v5912, 128
    %10154 = vxpose.xlu0.b32.cont [2/16] %v5915, 128
    %10155 = vxpose.xlu0.b32.cont [3/16] %v5918, 128
    %10156 = vxpose.xlu0.b32.cont [4/16] %v5921, 128
    %10157 = vxpose.xlu0.b32.cont [5/16] 0.0, 128
    %10158 = vxpose.xlu0.b32.cont [6/16] 0.0, 128
    %10159 = vxpose.xlu0.b32.cont [7/16] 0.0, 128
    %10160 = vxpose.xlu0.b32.cont [8/16] 0.0, 128
    %10161 = vxpose.xlu0.b32.cont [9/16] 0.0, 128
    %10162 = vxpose.xlu0.b32.cont [10/16] 0.0, 128
    %10163 = vxpose.xlu0.b32.cont [11/16] 0.0, 128
    %10164 = vxpose.xlu0.b32.cont [12/16] 0.0, 128
    %10165 = vxpose.xlu0.b32.cont [13/16] 0.0, 128
    %10166 = vxpose.xlu0.b32.cont [14/16] 0.0, 128
    %10167 = vxpose.xlu0.b32.cont [15/16] 0.0, 128
    %10168 = vxpose.xlu0.b32.end [16/16] 0.0, 128
    %v10169 = vpop.trf.xlu0
    %v10170 = vpop.trf.xlu0
    %v10171 = vpop.trf.xlu0
    %v10172 = vpop.trf.xlu0
    %v10173 = vpop.trf.xlu0
    %v10174 = vpop.trf.xlu0
    %v10175 = vpop.trf.xlu0
    %v10176 = vpop.trf.xlu0
    %v10177 = vpop.trf.xlu0
    %v10178 = vpop.trf.xlu0
    %v10179 = vpop.trf.xlu0
    %v10180 = vpop.trf.xlu0
    %v10181 = vpop.trf.xlu0
    %v10182 = vpop.trf.xlu0
    %v10183 = vpop.trf.xlu0
    %v10184 = vpop.trf.xlu0
    %10185 = vxpose.xlu0.b32.start [1/16] %v5985, 128
    %10186 = vxpose.xlu0.b32.cont [2/16] %v5988, 128
    %10187 = vxpose.xlu0.b32.cont [3/16] %v5991, 128
    %10188 = vxpose.xlu0.b32.cont [4/16] %v5994, 128
    %10189 = vxpose.xlu0.b32.cont [5/16] 0.0, 128
    %10190 = vxpose.xlu0.b32.cont [6/16] 0.0, 128
    %10191 = vxpose.xlu0.b32.cont [7/16] 0.0, 128
    %10192 = vxpose.xlu0.b32.cont [8/16] 0.0, 128
    %10193 = vxpose.xlu0.b32.cont [9/16] 0.0, 128
    %10194 = vxpose.xlu0.b32.cont [10/16] 0.0, 128
    %10195 = vxpose.xlu0.b32.cont [11/16] 0.0, 128
    %10196 = vxpose.xlu0.b32.cont [12/16] 0.0, 128
    %10197 = vxpose.xlu0.b32.cont [13/16] 0.0, 128
    %10198 = vxpose.xlu0.b32.cont [14/16] 0.0, 128
    %10199 = vxpose.xlu0.b32.cont [15/16] 0.0, 128
    %10200 = vxpose.xlu0.b32.end [16/16] 0.0, 128
    %v10201 = vpop.trf.xlu0
    %v10202 = vpop.trf.xlu0
    %v10203 = vpop.trf.xlu0
    %v10204 = vpop.trf.xlu0
    %v10205 = vpop.trf.xlu0
    %v10206 = vpop.trf.xlu0
    %v10207 = vpop.trf.xlu0
    %v10208 = vpop.trf.xlu0
    %v10209 = vpop.trf.xlu0
    %v10210 = vpop.trf.xlu0
    %v10211 = vpop.trf.xlu0
    %v10212 = vpop.trf.xlu0
    %v10213 = vpop.trf.xlu0
    %v10214 = vpop.trf.xlu0
    %v10215 = vpop.trf.xlu0
    %v10216 = vpop.trf.xlu0
    %10217 = vxpose.xlu0.b32.start [1/16] %v6058, 128
    %10218 = vxpose.xlu0.b32.cont [2/16] %v6061, 128
    %10219 = vxpose.xlu0.b32.cont [3/16] %v6064, 128
    %10220 = vxpose.xlu0.b32.cont [4/16] %v6067, 128
    %10221 = vxpose.xlu0.b32.cont [5/16] 0.0, 128
    %10222 = vxpose.xlu0.b32.cont [6/16] 0.0, 128
    %10223 = vxpose.xlu0.b32.cont [7/16] 0.0, 128
    %10224 = vxpose.xlu0.b32.cont [8/16] 0.0, 128
    %10225 = vxpose.xlu0.b32.cont [9/16] 0.0, 128
    %10226 = vxpose.xlu0.b32.cont [10/16] 0.0, 128
    %10227 = vxpose.xlu0.b32.cont [11/16] 0.0, 128
    %10228 = vxpose.xlu0.b32.cont [12/16] 0.0, 128
    %10229 = vxpose.xlu0.b32.cont [13/16] 0.0, 128
    %10230 = vxpose.xlu0.b32.cont [14/16] 0.0, 128
    %10231 = vxpose.xlu0.b32.cont [15/16] 0.0, 128
    %10232 = vxpose.xlu0.b32.end [16/16] 0.0, 128
    %v10233 = vpop.trf.xlu0
    %v10234 = vpop.trf.xlu0
    %v10235 = vpop.trf.xlu0
    %v10236 = vpop.trf.xlu0
    %v10237 = vpop.trf.xlu0
    %v10238 = vpop.trf.xlu0
    %v10239 = vpop.trf.xlu0
    %v10240 = vpop.trf.xlu0
    %v10241 = vpop.trf.xlu0
    %v10242 = vpop.trf.xlu0
    %v10243 = vpop.trf.xlu0
    %v10244 = vpop.trf.xlu0
    %v10245 = vpop.trf.xlu0
    %v10246 = vpop.trf.xlu0
    %v10247 = vpop.trf.xlu0
    %v10248 = vpop.trf.xlu0
    %10249 = vxpose.xlu0.b32.start [1/16] %v6131, 128
    %10250 = vxpose.xlu0.b32.cont [2/16] %v6134, 128
    %10251 = vxpose.xlu0.b32.cont [3/16] %v6137, 128
    %10252 = vxpose.xlu0.b32.cont [4/16] %v6140, 128
    %10253 = vxpose.xlu0.b32.cont [5/16] 0.0, 128
    %10254 = vxpose.xlu0.b32.cont [6/16] 0.0, 128
    %10255 = vxpose.xlu0.b32.cont [7/16] 0.0, 128
    %10256 = vxpose.xlu0.b32.cont [8/16] 0.0, 128
    %10257 = vxpose.xlu0.b32.cont [9/16] 0.0, 128
    %10258 = vxpose.xlu0.b32.cont [10/16] 0.0, 128
    %10259 = vxpose.xlu0.b32.cont [11/16] 0.0, 128
    %10260 = vxpose.xlu0.b32.cont [12/16] 0.0, 128
    %10261 = vxpose.xlu0.b32.cont [13/16] 0.0, 128
    %10262 = vxpose.xlu0.b32.cont [14/16] 0.0, 128
    %10263 = vxpose.xlu0.b32.cont [15/16] 0.0, 128
    %10264 = vxpose.xlu0.b32.end [16/16] 0.0, 128
    %v10265 = vpop.trf.xlu0
    %v10266 = vpop.trf.xlu0
    %v10267 = vpop.trf.xlu0
    %v10268 = vpop.trf.xlu0
    %v10269 = vpop.trf.xlu0
    %v10270 = vpop.trf.xlu0
    %v10271 = vpop.trf.xlu0
    %v10272 = vpop.trf.xlu0
    %v10273 = vpop.trf.xlu0
    %v10274 = vpop.trf.xlu0
    %v10275 = vpop.trf.xlu0
    %v10276 = vpop.trf.xlu0
    %v10277 = vpop.trf.xlu0
    %v10278 = vpop.trf.xlu0
    %v10279 = vpop.trf.xlu0
    %v10280 = vpop.trf.xlu0
    %10281 = vxpose.xlu0.b32.start [1/16] %v6204, 128
    %10282 = vxpose.xlu0.b32.cont [2/16] %v6207, 128
    %10283 = vxpose.xlu0.b32.cont [3/16] %v6210, 128
    %10284 = vxpose.xlu0.b32.cont [4/16] %v6213, 128
    %10285 = vxpose.xlu0.b32.cont [5/16] 0.0, 128
    %10286 = vxpose.xlu0.b32.cont [6/16] 0.0, 128
    %10287 = vxpose.xlu0.b32.cont [7/16] 0.0, 128
    %10288 = vxpose.xlu0.b32.cont [8/16] 0.0, 128
    %10289 = vxpose.xlu0.b32.cont [9/16] 0.0, 128
    %10290 = vxpose.xlu0.b32.cont [10/16] 0.0, 128
    %10291 = vxpose.xlu0.b32.cont [11/16] 0.0, 128
    %10292 = vxpose.xlu0.b32.cont [12/16] 0.0, 128
    %10293 = vxpose.xlu0.b32.cont [13/16] 0.0, 128
    %10294 = vxpose.xlu0.b32.cont [14/16] 0.0, 128
    %10295 = vxpose.xlu0.b32.cont [15/16] 0.0, 128
    %10296 = vxpose.xlu0.b32.end [16/16] 0.0, 128
    %v10297 = vpop.trf.xlu0
    %v10298 = vpop.trf.xlu0
    %v10299 = vpop.trf.xlu0
    %v10300 = vpop.trf.xlu0
    %v10301 = vpop.trf.xlu0
    %v10302 = vpop.trf.xlu0
    %v10303 = vpop.trf.xlu0
    %v10304 = vpop.trf.xlu0
    %v10305 = vpop.trf.xlu0
    %v10306 = vpop.trf.xlu0
    %v10307 = vpop.trf.xlu0
    %v10308 = vpop.trf.xlu0
    %v10309 = vpop.trf.xlu0
    %v10310 = vpop.trf.xlu0
    %v10311 = vpop.trf.xlu0
    %v10312 = vpop.trf.xlu0
    %10313 = vxpose.xlu0.b32.start [1/16] %v6277, 128
    %10314 = vxpose.xlu0.b32.cont [2/16] %v6280, 128
    %10315 = vxpose.xlu0.b32.cont [3/16] %v6283, 128
    %10316 = vxpose.xlu0.b32.cont [4/16] %v6286, 128
    %10317 = vxpose.xlu0.b32.cont [5/16] 0.0, 128
    %10318 = vxpose.xlu0.b32.cont [6/16] 0.0, 128
    %10319 = vxpose.xlu0.b32.cont [7/16] 0.0, 128
    %10320 = vxpose.xlu0.b32.cont [8/16] 0.0, 128
    %10321 = vxpose.xlu0.b32.cont [9/16] 0.0, 128
    %10322 = vxpose.xlu0.b32.cont [10/16] 0.0, 128
    %10323 = vxpose.xlu0.b32.cont [11/16] 0.0, 128
    %10324 = vxpose.xlu0.b32.cont [12/16] 0.0, 128
    %10325 = vxpose.xlu0.b32.cont [13/16] 0.0, 128
    %10326 = vxpose.xlu0.b32.cont [14/16] 0.0, 128
    %10327 = vxpose.xlu0.b32.cont [15/16] 0.0, 128
    %10328 = vxpose.xlu0.b32.end [16/16] 0.0, 128
    %v10329 = vpop.trf.xlu0
    %v10330 = vpop.trf.xlu0
    %v10331 = vpop.trf.xlu0
    %v10332 = vpop.trf.xlu0
    %v10333 = vpop.trf.xlu0
    %v10334 = vpop.trf.xlu0
    %v10335 = vpop.trf.xlu0
    %v10336 = vpop.trf.xlu0
    %v10337 = vpop.trf.xlu0
    %v10338 = vpop.trf.xlu0
    %v10339 = vpop.trf.xlu0
    %v10340 = vpop.trf.xlu0
    %v10341 = vpop.trf.xlu0
    %v10342 = vpop.trf.xlu0
    %v10343 = vpop.trf.xlu0
    %v10344 = vpop.trf.xlu0
    %10345 = vxpose.xlu0.b32.start [1/16] %v6350, 128
    %10346 = vxpose.xlu0.b32.cont [2/16] %v6353, 128
    %10347 = vxpose.xlu0.b32.cont [3/16] %v6356, 128
    %10348 = vxpose.xlu0.b32.cont [4/16] %v6359, 128
    %10349 = vxpose.xlu0.b32.cont [5/16] 0.0, 128
    %10350 = vxpose.xlu0.b32.cont [6/16] 0.0, 128
    %10351 = vxpose.xlu0.b32.cont [7/16] 0.0, 128
    %10352 = vxpose.xlu0.b32.cont [8/16] 0.0, 128
    %10353 = vxpose.xlu0.b32.cont [9/16] 0.0, 128
    %10354 = vxpose.xlu0.b32.cont [10/16] 0.0, 128
    %10355 = vxpose.xlu0.b32.cont [11/16] 0.0, 128
    %10356 = vxpose.xlu0.b32.cont [12/16] 0.0, 128
    %10357 = vxpose.xlu0.b32.cont [13/16] 0.0, 128
    %10358 = vxpose.xlu0.b32.cont [14/16] 0.0, 128
    %10359 = vxpose.xlu0.b32.cont [15/16] 0.0, 128
    %10360 = vxpose.xlu0.b32.end [16/16] 0.0, 128
    %v10361 = vpop.trf.xlu0
    %v10362 = vpop.trf.xlu0
    %v10363 = vpop.trf.xlu0
    %v10364 = vpop.trf.xlu0
    %v10365 = vpop.trf.xlu0
    %v10366 = vpop.trf.xlu0
    %v10367 = vpop.trf.xlu0
    %v10368 = vpop.trf.xlu0
    %v10369 = vpop.trf.xlu0
    %v10370 = vpop.trf.xlu0
    %v10371 = vpop.trf.xlu0
    %v10372 = vpop.trf.xlu0
    %v10373 = vpop.trf.xlu0
    %v10374 = vpop.trf.xlu0
    %v10375 = vpop.trf.xlu0
    %v10376 = vpop.trf.xlu0
    %10377 = vxpose.xlu0.b32.start [1/16] %v6423, 128
    %10378 = vxpose.xlu0.b32.cont [2/16] %v6426, 128
    %10379 = vxpose.xlu0.b32.cont [3/16] %v6429, 128
    %10380 = vxpose.xlu0.b32.cont [4/16] %v6432, 128
    %10381 = vxpose.xlu0.b32.cont [5/16] 0.0, 128
    %10382 = vxpose.xlu0.b32.cont [6/16] 0.0, 128
    %10383 = vxpose.xlu0.b32.cont [7/16] 0.0, 128
    %10384 = vxpose.xlu0.b32.cont [8/16] 0.0, 128
    %10385 = vxpose.xlu0.b32.cont [9/16] 0.0, 128
    %10386 = vxpose.xlu0.b32.cont [10/16] 0.0, 128
    %10387 = vxpose.xlu0.b32.cont [11/16] 0.0, 128
    %10388 = vxpose.xlu0.b32.cont [12/16] 0.0, 128
    %10389 = vxpose.xlu0.b32.cont [13/16] 0.0, 128
    %10390 = vxpose.xlu0.b32.cont [14/16] 0.0, 128
    %10391 = vxpose.xlu0.b32.cont [15/16] 0.0, 128
    %10392 = vxpose.xlu0.b32.end [16/16] 0.0, 128
    %v10393 = vpop.trf.xlu0
    %v10394 = vpop.trf.xlu0
    %v10395 = vpop.trf.xlu0
    %v10396 = vpop.trf.xlu0
    %v10397 = vpop.trf.xlu0
    %v10398 = vpop.trf.xlu0
    %v10399 = vpop.trf.xlu0
    %v10400 = vpop.trf.xlu0
    %v10401 = vpop.trf.xlu0
    %v10402 = vpop.trf.xlu0
    %v10403 = vpop.trf.xlu0
    %v10404 = vpop.trf.xlu0
    %v10405 = vpop.trf.xlu0
    %v10406 = vpop.trf.xlu0
    %v10407 = vpop.trf.xlu0
    %v10408 = vpop.trf.xlu0
    %10409 = vxpose.xlu0.b32.start [1/16] %v6496, 128
    %10410 = vxpose.xlu0.b32.cont [2/16] %v6499, 128
    %10411 = vxpose.xlu0.b32.cont [3/16] %v6502, 128
    %10412 = vxpose.xlu0.b32.cont [4/16] %v6505, 128
    %10413 = vxpose.xlu0.b32.cont [5/16] 0.0, 128
    %10414 = vxpose.xlu0.b32.cont [6/16] 0.0, 128
    %10415 = vxpose.xlu0.b32.cont [7/16] 0.0, 128
    %10416 = vxpose.xlu0.b32.cont [8/16] 0.0, 128
    %10417 = vxpose.xlu0.b32.cont [9/16] 0.0, 128
    %10418 = vxpose.xlu0.b32.cont [10/16] 0.0, 128
    %10419 = vxpose.xlu0.b32.cont [11/16] 0.0, 128
    %10420 = vxpose.xlu0.b32.cont [12/16] 0.0, 128
    %10421 = vxpose.xlu0.b32.cont [13/16] 0.0, 128
    %10422 = vxpose.xlu0.b32.cont [14/16] 0.0, 128
    %10423 = vxpose.xlu0.b32.cont [15/16] 0.0, 128
    %10424 = vxpose.xlu0.b32.end [16/16] 0.0, 128
    %v10425 = vpop.trf.xlu0
    %v10426 = vpop.trf.xlu0
    %v10427 = vpop.trf.xlu0
    %v10428 = vpop.trf.xlu0
    %v10429 = vpop.trf.xlu0
    %v10430 = vpop.trf.xlu0
    %v10431 = vpop.trf.xlu0
    %v10432 = vpop.trf.xlu0
    %v10433 = vpop.trf.xlu0
    %v10434 = vpop.trf.xlu0
    %v10435 = vpop.trf.xlu0
    %v10436 = vpop.trf.xlu0
    %v10437 = vpop.trf.xlu0
    %v10438 = vpop.trf.xlu0
    %v10439 = vpop.trf.xlu0
    %v10440 = vpop.trf.xlu0
    %10441 = vxpose.xlu0.b32.start [1/16] %v6569, 128
    %10442 = vxpose.xlu0.b32.cont [2/16] %v6572, 128
    %10443 = vxpose.xlu0.b32.cont [3/16] %v6575, 128
    %10444 = vxpose.xlu0.b32.cont [4/16] %v6578, 128
    %10445 = vxpose.xlu0.b32.cont [5/16] 0.0, 128
    %10446 = vxpose.xlu0.b32.cont [6/16] 0.0, 128
    %10447 = vxpose.xlu0.b32.cont [7/16] 0.0, 128
    %10448 = vxpose.xlu0.b32.cont [8/16] 0.0, 128
    %10449 = vxpose.xlu0.b32.cont [9/16] 0.0, 128
    %10450 = vxpose.xlu0.b32.cont [10/16] 0.0, 128
    %10451 = vxpose.xlu0.b32.cont [11/16] 0.0, 128
    %10452 = vxpose.xlu0.b32.cont [12/16] 0.0, 128
    %10453 = vxpose.xlu0.b32.cont [13/16] 0.0, 128
    %10454 = vxpose.xlu0.b32.cont [14/16] 0.0, 128
    %10455 = vxpose.xlu0.b32.cont [15/16] 0.0, 128
    %10456 = vxpose.xlu0.b32.end [16/16] 0.0, 128
    %v10457 = vpop.trf.xlu0
    %v10458 = vpop.trf.xlu0
    %v10459 = vpop.trf.xlu0
    %v10460 = vpop.trf.xlu0
    %v10461 = vpop.trf.xlu0
    %v10462 = vpop.trf.xlu0
    %v10463 = vpop.trf.xlu0
    %v10464 = vpop.trf.xlu0
    %v10465 = vpop.trf.xlu0
    %v10466 = vpop.trf.xlu0
    %v10467 = vpop.trf.xlu0
    %v10468 = vpop.trf.xlu0
    %v10469 = vpop.trf.xlu0
    %v10470 = vpop.trf.xlu0
    %v10471 = vpop.trf.xlu0
    %v10472 = vpop.trf.xlu0
    %10473 = vxpose.xlu0.b32.start [1/16] %v6642, 128
    %10474 = vxpose.xlu0.b32.cont [2/16] %v6645, 128
    %10475 = vxpose.xlu0.b32.cont [3/16] %v6648, 128
    %10476 = vxpose.xlu0.b32.cont [4/16] %v6651, 128
    %10477 = vxpose.xlu0.b32.cont [5/16] 0.0, 128
    %10478 = vxpose.xlu0.b32.cont [6/16] 0.0, 128
    %10479 = vxpose.xlu0.b32.cont [7/16] 0.0, 128
    %10480 = vxpose.xlu0.b32.cont [8/16] 0.0, 128
    %10481 = vxpose.xlu0.b32.cont [9/16] 0.0, 128
    %10482 = vxpose.xlu0.b32.cont [10/16] 0.0, 128
    %10483 = vxpose.xlu0.b32.cont [11/16] 0.0, 128
    %10484 = vxpose.xlu0.b32.cont [12/16] 0.0, 128
    %10485 = vxpose.xlu0.b32.cont [13/16] 0.0, 128
    %10486 = vxpose.xlu0.b32.cont [14/16] 0.0, 128
    %10487 = vxpose.xlu0.b32.cont [15/16] 0.0, 128
    %10488 = vxpose.xlu0.b32.end [16/16] 0.0, 128
    %v10489 = vpop.trf.xlu0
    %v10490 = vpop.trf.xlu0
    %v10491 = vpop.trf.xlu0
    %v10492 = vpop.trf.xlu0
    %v10493 = vpop.trf.xlu0
    %v10494 = vpop.trf.xlu0
    %v10495 = vpop.trf.xlu0
    %v10496 = vpop.trf.xlu0
    %v10497 = vpop.trf.xlu0
    %v10498 = vpop.trf.xlu0
    %v10499 = vpop.trf.xlu0
    %v10500 = vpop.trf.xlu0
    %v10501 = vpop.trf.xlu0
    %v10502 = vpop.trf.xlu0
    %v10503 = vpop.trf.xlu0
    %v10504 = vpop.trf.xlu0
    %10505 = vxpose.xlu0.b32.start [1/16] %v6715, 128
    %10506 = vxpose.xlu0.b32.cont [2/16] %v6718, 128
    %10507 = vxpose.xlu0.b32.cont [3/16] %v6721, 128
    %10508 = vxpose.xlu0.b32.cont [4/16] %v6724, 128
    %10509 = vxpose.xlu0.b32.cont [5/16] 0.0, 128
    %10510 = vxpose.xlu0.b32.cont [6/16] 0.0, 128
    %10511 = vxpose.xlu0.b32.cont [7/16] 0.0, 128
    %10512 = vxpose.xlu0.b32.cont [8/16] 0.0, 128
    %10513 = vxpose.xlu0.b32.cont [9/16] 0.0, 128
    %10514 = vxpose.xlu0.b32.cont [10/16] 0.0, 128
    %10515 = vxpose.xlu0.b32.cont [11/16] 0.0, 128
    %10516 = vxpose.xlu0.b32.cont [12/16] 0.0, 128
    %10517 = vxpose.xlu0.b32.cont [13/16] 0.0, 128
    %10518 = vxpose.xlu0.b32.cont [14/16] 0.0, 128
    %10519 = vxpose.xlu0.b32.cont [15/16] 0.0, 128
    %10520 = vxpose.xlu0.b32.end [16/16] 0.0, 128
    %v10521 = vpop.trf.xlu0
    %v10522 = vpop.trf.xlu0
    %v10523 = vpop.trf.xlu0
    %v10524 = vpop.trf.xlu0
    %v10525 = vpop.trf.xlu0
    %v10526 = vpop.trf.xlu0
    %v10527 = vpop.trf.xlu0
    %v10528 = vpop.trf.xlu0
    %v10529 = vpop.trf.xlu0
    %v10530 = vpop.trf.xlu0
    %v10531 = vpop.trf.xlu0
    %v10532 = vpop.trf.xlu0
    %v10533 = vpop.trf.xlu0
    %v10534 = vpop.trf.xlu0
    %v10535 = vpop.trf.xlu0
    %v10536 = vpop.trf.xlu0
    %10537 = vxpose.xlu0.b32.start [1/16] %v6788, 128
    %10538 = vxpose.xlu0.b32.cont [2/16] %v6791, 128
    %10539 = vxpose.xlu0.b32.cont [3/16] %v6794, 128
    %10540 = vxpose.xlu0.b32.cont [4/16] %v6797, 128
    %10541 = vxpose.xlu0.b32.cont [5/16] 0.0, 128
    %10542 = vxpose.xlu0.b32.cont [6/16] 0.0, 128
    %10543 = vxpose.xlu0.b32.cont [7/16] 0.0, 128
    %10544 = vxpose.xlu0.b32.cont [8/16] 0.0, 128
    %10545 = vxpose.xlu0.b32.cont [9/16] 0.0, 128
    %10546 = vxpose.xlu0.b32.cont [10/16] 0.0, 128
    %10547 = vxpose.xlu0.b32.cont [11/16] 0.0, 128
    %10548 = vxpose.xlu0.b32.cont [12/16] 0.0, 128
    %10549 = vxpose.xlu0.b32.cont [13/16] 0.0, 128
    %10550 = vxpose.xlu0.b32.cont [14/16] 0.0, 128
    %10551 = vxpose.xlu0.b32.cont [15/16] 0.0, 128
    %10552 = vxpose.xlu0.b32.end [16/16] 0.0, 128
    %v10553 = vpop.trf.xlu0
    %v10554 = vpop.trf.xlu0
    %v10555 = vpop.trf.xlu0
    %v10556 = vpop.trf.xlu0
    %v10557 = vpop.trf.xlu0
    %v10558 = vpop.trf.xlu0
    %v10559 = vpop.trf.xlu0
    %v10560 = vpop.trf.xlu0
    %v10561 = vpop.trf.xlu0
    %v10562 = vpop.trf.xlu0
    %v10563 = vpop.trf.xlu0
    %v10564 = vpop.trf.xlu0
    %v10565 = vpop.trf.xlu0
    %v10566 = vpop.trf.xlu0
    %v10567 = vpop.trf.xlu0
    %v10568 = vpop.trf.xlu0
    %10569 = vxpose.xlu0.b32.start [1/16] %v6861, 128
    %10570 = vxpose.xlu0.b32.cont [2/16] %v6864, 128
    %10571 = vxpose.xlu0.b32.cont [3/16] %v6867, 128
    %10572 = vxpose.xlu0.b32.cont [4/16] %v6870, 128
    %10573 = vxpose.xlu0.b32.cont [5/16] 0.0, 128
    %10574 = vxpose.xlu0.b32.cont [6/16] 0.0, 128
    %10575 = vxpose.xlu0.b32.cont [7/16] 0.0, 128
    %10576 = vxpose.xlu0.b32.cont [8/16] 0.0, 128
    %10577 = vxpose.xlu0.b32.cont [9/16] 0.0, 128
    %10578 = vxpose.xlu0.b32.cont [10/16] 0.0, 128
    %10579 = vxpose.xlu0.b32.cont [11/16] 0.0, 128
    %10580 = vxpose.xlu0.b32.cont [12/16] 0.0, 128
    %10581 = vxpose.xlu0.b32.cont [13/16] 0.0, 128
    %10582 = vxpose.xlu0.b32.cont [14/16] 0.0, 128
    %10583 = vxpose.xlu0.b32.cont [15/16] 0.0, 128
    %10584 = vxpose.xlu0.b32.end [16/16] 0.0, 128
    %v10585 = vpop.trf.xlu0
    %v10586 = vpop.trf.xlu0
    %v10587 = vpop.trf.xlu0
    %v10588 = vpop.trf.xlu0
    %v10589 = vpop.trf.xlu0
    %v10590 = vpop.trf.xlu0
    %v10591 = vpop.trf.xlu0
    %v10592 = vpop.trf.xlu0
    %v10593 = vpop.trf.xlu0
    %v10594 = vpop.trf.xlu0
    %v10595 = vpop.trf.xlu0
    %v10596 = vpop.trf.xlu0
    %v10597 = vpop.trf.xlu0
    %v10598 = vpop.trf.xlu0
    %v10599 = vpop.trf.xlu0
    %v10600 = vpop.trf.xlu0
    %10601 = vxpose.xlu0.b32.start [1/16] %v6934, 128
    %10602 = vxpose.xlu0.b32.cont [2/16] %v6937, 128
    %10603 = vxpose.xlu0.b32.cont [3/16] %v6940, 128
    %10604 = vxpose.xlu0.b32.cont [4/16] %v6943, 128
    %10605 = vxpose.xlu0.b32.cont [5/16] 0.0, 128
    %10606 = vxpose.xlu0.b32.cont [6/16] 0.0, 128
    %10607 = vxpose.xlu0.b32.cont [7/16] 0.0, 128
    %10608 = vxpose.xlu0.b32.cont [8/16] 0.0, 128
    %10609 = vxpose.xlu0.b32.cont [9/16] 0.0, 128
    %10610 = vxpose.xlu0.b32.cont [10/16] 0.0, 128
    %10611 = vxpose.xlu0.b32.cont [11/16] 0.0, 128
    %10612 = vxpose.xlu0.b32.cont [12/16] 0.0, 128
    %10613 = vxpose.xlu0.b32.cont [13/16] 0.0, 128
    %10614 = vxpose.xlu0.b32.cont [14/16] 0.0, 128
    %10615 = vxpose.xlu0.b32.cont [15/16] 0.0, 128
    %10616 = vxpose.xlu0.b32.end [16/16] 0.0, 128
    %v10617 = vpop.trf.xlu0
    %v10618 = vpop.trf.xlu0
    %v10619 = vpop.trf.xlu0
    %v10620 = vpop.trf.xlu0
    %v10621 = vpop.trf.xlu0
    %v10622 = vpop.trf.xlu0
    %v10623 = vpop.trf.xlu0
    %v10624 = vpop.trf.xlu0
    %v10625 = vpop.trf.xlu0
    %v10626 = vpop.trf.xlu0
    %v10627 = vpop.trf.xlu0
    %v10628 = vpop.trf.xlu0
    %v10629 = vpop.trf.xlu0
    %v10630 = vpop.trf.xlu0
    %v10631 = vpop.trf.xlu0
    %v10632 = vpop.trf.xlu0
    %10633 = vxpose.xlu0.b32.start [1/16] %v7007, 128
    %10634 = vxpose.xlu0.b32.cont [2/16] %v7010, 128
    %10635 = vxpose.xlu0.b32.cont [3/16] %v7013, 128
    %10636 = vxpose.xlu0.b32.cont [4/16] %v7016, 128
    %10637 = vxpose.xlu0.b32.cont [5/16] 0.0, 128
    %10638 = vxpose.xlu0.b32.cont [6/16] 0.0, 128
    %10639 = vxpose.xlu0.b32.cont [7/16] 0.0, 128
    %10640 = vxpose.xlu0.b32.cont [8/16] 0.0, 128
    %10641 = vxpose.xlu0.b32.cont [9/16] 0.0, 128
    %10642 = vxpose.xlu0.b32.cont [10/16] 0.0, 128
    %10643 = vxpose.xlu0.b32.cont [11/16] 0.0, 128
    %10644 = vxpose.xlu0.b32.cont [12/16] 0.0, 128
    %10645 = vxpose.xlu0.b32.cont [13/16] 0.0, 128
    %10646 = vxpose.xlu0.b32.cont [14/16] 0.0, 128
    %10647 = vxpose.xlu0.b32.cont [15/16] 0.0, 128
    %10648 = vxpose.xlu0.b32.end [16/16] 0.0, 128
    %v10649 = vpop.trf.xlu0
    %v10650 = vpop.trf.xlu0
    %v10651 = vpop.trf.xlu0
    %v10652 = vpop.trf.xlu0
    %v10653 = vpop.trf.xlu0
    %v10654 = vpop.trf.xlu0
    %v10655 = vpop.trf.xlu0
    %v10656 = vpop.trf.xlu0
    %v10657 = vpop.trf.xlu0
    %v10658 = vpop.trf.xlu0
    %v10659 = vpop.trf.xlu0
    %v10660 = vpop.trf.xlu0
    %v10661 = vpop.trf.xlu0
    %v10662 = vpop.trf.xlu0
    %v10663 = vpop.trf.xlu0
    %v10664 = vpop.trf.xlu0
    %10665 = vxpose.xlu0.b32.start [1/16] %v7080, 128
    %10666 = vxpose.xlu0.b32.cont [2/16] %v7083, 128
    %10667 = vxpose.xlu0.b32.cont [3/16] %v7086, 128
    %10668 = vxpose.xlu0.b32.cont [4/16] %v7089, 128
    %10669 = vxpose.xlu0.b32.cont [5/16] 0.0, 128
    %10670 = vxpose.xlu0.b32.cont [6/16] 0.0, 128
    %10671 = vxpose.xlu0.b32.cont [7/16] 0.0, 128
    %10672 = vxpose.xlu0.b32.cont [8/16] 0.0, 128
    %10673 = vxpose.xlu0.b32.cont [9/16] 0.0, 128
    %10674 = vxpose.xlu0.b32.cont [10/16] 0.0, 128
    %10675 = vxpose.xlu0.b32.cont [11/16] 0.0, 128
    %10676 = vxpose.xlu0.b32.cont [12/16] 0.0, 128
    %10677 = vxpose.xlu0.b32.cont [13/16] 0.0, 128
    %10678 = vxpose.xlu0.b32.cont [14/16] 0.0, 128
    %10679 = vxpose.xlu0.b32.cont [15/16] 0.0, 128
    %10680 = vxpose.xlu0.b32.end [16/16] 0.0, 128
    %v10681 = vpop.trf.xlu0
    %v10682 = vpop.trf.xlu0
    %v10683 = vpop.trf.xlu0
    %v10684 = vpop.trf.xlu0
    %v10685 = vpop.trf.xlu0
    %v10686 = vpop.trf.xlu0
    %v10687 = vpop.trf.xlu0
    %v10688 = vpop.trf.xlu0
    %v10689 = vpop.trf.xlu0
    %v10690 = vpop.trf.xlu0
    %v10691 = vpop.trf.xlu0
    %v10692 = vpop.trf.xlu0
    %v10693 = vpop.trf.xlu0
    %v10694 = vpop.trf.xlu0
    %v10695 = vpop.trf.xlu0
    %v10696 = vpop.trf.xlu0
    %10697 = vxpose.xlu0.b32.start [1/16] %v7153, 128
    %10698 = vxpose.xlu0.b32.cont [2/16] %v7156, 128
    %10699 = vxpose.xlu0.b32.cont [3/16] %v7159, 128
    %10700 = vxpose.xlu0.b32.cont [4/16] %v7162, 128
    %10701 = vxpose.xlu0.b32.cont [5/16] 0.0, 128
    %10702 = vxpose.xlu0.b32.cont [6/16] 0.0, 128
    %10703 = vxpose.xlu0.b32.cont [7/16] 0.0, 128
    %10704 = vxpose.xlu0.b32.cont [8/16] 0.0, 128
    %10705 = vxpose.xlu0.b32.cont [9/16] 0.0, 128
    %10706 = vxpose.xlu0.b32.cont [10/16] 0.0, 128
    %10707 = vxpose.xlu0.b32.cont [11/16] 0.0, 128
    %10708 = vxpose.xlu0.b32.cont [12/16] 0.0, 128
    %10709 = vxpose.xlu0.b32.cont [13/16] 0.0, 128
    %10710 = vxpose.xlu0.b32.cont [14/16] 0.0, 128
    %10711 = vxpose.xlu0.b32.cont [15/16] 0.0, 128
    %10712 = vxpose.xlu0.b32.end [16/16] 0.0, 128
    %v10713 = vpop.trf.xlu0
    %v10714 = vpop.trf.xlu0
    %v10715 = vpop.trf.xlu0
    %v10716 = vpop.trf.xlu0
    %v10717 = vpop.trf.xlu0
    %v10718 = vpop.trf.xlu0
    %v10719 = vpop.trf.xlu0
    %v10720 = vpop.trf.xlu0
    %v10721 = vpop.trf.xlu0
    %v10722 = vpop.trf.xlu0
    %v10723 = vpop.trf.xlu0
    %v10724 = vpop.trf.xlu0
    %v10725 = vpop.trf.xlu0
    %v10726 = vpop.trf.xlu0
    %v10727 = vpop.trf.xlu0
    %v10728 = vpop.trf.xlu0
    %10729 = vxpose.xlu0.b32.start [1/16] %v7226, 128
    %10730 = vxpose.xlu0.b32.cont [2/16] %v7229, 128
    %10731 = vxpose.xlu0.b32.cont [3/16] %v7232, 128
    %10732 = vxpose.xlu0.b32.cont [4/16] %v7235, 128
    %10733 = vxpose.xlu0.b32.cont [5/16] 0.0, 128
    %10734 = vxpose.xlu0.b32.cont [6/16] 0.0, 128
    %10735 = vxpose.xlu0.b32.cont [7/16] 0.0, 128
    %10736 = vxpose.xlu0.b32.cont [8/16] 0.0, 128
    %10737 = vxpose.xlu0.b32.cont [9/16] 0.0, 128
    %10738 = vxpose.xlu0.b32.cont [10/16] 0.0, 128
    %10739 = vxpose.xlu0.b32.cont [11/16] 0.0, 128
    %10740 = vxpose.xlu0.b32.cont [12/16] 0.0, 128
    %10741 = vxpose.xlu0.b32.cont [13/16] 0.0, 128
    %10742 = vxpose.xlu0.b32.cont [14/16] 0.0, 128
    %10743 = vxpose.xlu0.b32.cont [15/16] 0.0, 128
    %10744 = vxpose.xlu0.b32.end [16/16] 0.0, 128
    %v10745 = vpop.trf.xlu0
    %v10746 = vpop.trf.xlu0
    %v10747 = vpop.trf.xlu0
    %v10748 = vpop.trf.xlu0
    %v10749 = vpop.trf.xlu0
    %v10750 = vpop.trf.xlu0
    %v10751 = vpop.trf.xlu0
    %v10752 = vpop.trf.xlu0
    %v10753 = vpop.trf.xlu0
    %v10754 = vpop.trf.xlu0
    %v10755 = vpop.trf.xlu0
    %v10756 = vpop.trf.xlu0
    %v10757 = vpop.trf.xlu0
    %v10758 = vpop.trf.xlu0
    %v10759 = vpop.trf.xlu0
    %v10760 = vpop.trf.xlu0
    %10761 = vxpose.xlu0.b32.start [1/16] %v7299, 128
    %10762 = vxpose.xlu0.b32.cont [2/16] %v7302, 128
    %10763 = vxpose.xlu0.b32.cont [3/16] %v7305, 128
    %10764 = vxpose.xlu0.b32.cont [4/16] %v7308, 128
    %10765 = vxpose.xlu0.b32.cont [5/16] 0.0, 128
    %10766 = vxpose.xlu0.b32.cont [6/16] 0.0, 128
    %10767 = vxpose.xlu0.b32.cont [7/16] 0.0, 128
    %10768 = vxpose.xlu0.b32.cont [8/16] 0.0, 128
    %10769 = vxpose.xlu0.b32.cont [9/16] 0.0, 128
    %10770 = vxpose.xlu0.b32.cont [10/16] 0.0, 128
    %10771 = vxpose.xlu0.b32.cont [11/16] 0.0, 128
    %10772 = vxpose.xlu0.b32.cont [12/16] 0.0, 128
    %10773 = vxpose.xlu0.b32.cont [13/16] 0.0, 128
    %10774 = vxpose.xlu0.b32.cont [14/16] 0.0, 128
    %10775 = vxpose.xlu0.b32.cont [15/16] 0.0, 128
    %10776 = vxpose.xlu0.b32.end [16/16] 0.0, 128
    %v10777 = vpop.trf.xlu0
    %v10778 = vpop.trf.xlu0
    %v10779 = vpop.trf.xlu0
    %v10780 = vpop.trf.xlu0
    %v10781 = vpop.trf.xlu0
    %v10782 = vpop.trf.xlu0
    %v10783 = vpop.trf.xlu0
    %v10784 = vpop.trf.xlu0
    %v10785 = vpop.trf.xlu0
    %v10786 = vpop.trf.xlu0
    %v10787 = vpop.trf.xlu0
    %v10788 = vpop.trf.xlu0
    %v10789 = vpop.trf.xlu0
    %v10790 = vpop.trf.xlu0
    %v10791 = vpop.trf.xlu0
    %v10792 = vpop.trf.xlu0
    %10793 = vxpose.xlu0.b32.start [1/16] %v7372, 128
    %10794 = vxpose.xlu0.b32.cont [2/16] %v7375, 128
    %10795 = vxpose.xlu0.b32.cont [3/16] %v7378, 128
    %10796 = vxpose.xlu0.b32.cont [4/16] %v7381, 128
    %10797 = vxpose.xlu0.b32.cont [5/16] 0.0, 128
    %10798 = vxpose.xlu0.b32.cont [6/16] 0.0, 128
    %10799 = vxpose.xlu0.b32.cont [7/16] 0.0, 128
    %10800 = vxpose.xlu0.b32.cont [8/16] 0.0, 128
    %10801 = vxpose.xlu0.b32.cont [9/16] 0.0, 128
    %10802 = vxpose.xlu0.b32.cont [10/16] 0.0, 128
    %10803 = vxpose.xlu0.b32.cont [11/16] 0.0, 128
    %10804 = vxpose.xlu0.b32.cont [12/16] 0.0, 128
    %10805 = vxpose.xlu0.b32.cont [13/16] 0.0, 128
    %10806 = vxpose.xlu0.b32.cont [14/16] 0.0, 128
    %10807 = vxpose.xlu0.b32.cont [15/16] 0.0, 128
    %10808 = vxpose.xlu0.b32.end [16/16] 0.0, 128
    %v10809 = vpop.trf.xlu0
    %v10810 = vpop.trf.xlu0
    %v10811 = vpop.trf.xlu0
    %v10812 = vpop.trf.xlu0
    %v10813 = vpop.trf.xlu0
    %v10814 = vpop.trf.xlu0
    %v10815 = vpop.trf.xlu0
    %v10816 = vpop.trf.xlu0
    %v10817 = vpop.trf.xlu0
    %v10818 = vpop.trf.xlu0
    %v10819 = vpop.trf.xlu0
    %v10820 = vpop.trf.xlu0
    %v10821 = vpop.trf.xlu0
    %v10822 = vpop.trf.xlu0
    %v10823 = vpop.trf.xlu0
    %v10824 = vpop.trf.xlu0
    %10825 = vxpose.xlu0.b32.start [1/16] %v7445, 128
    %10826 = vxpose.xlu0.b32.cont [2/16] %v7448, 128
    %10827 = vxpose.xlu0.b32.cont [3/16] %v7451, 128
    %10828 = vxpose.xlu0.b32.cont [4/16] %v7454, 128
    %10829 = vxpose.xlu0.b32.cont [5/16] 0.0, 128
    %10830 = vxpose.xlu0.b32.cont [6/16] 0.0, 128
    %10831 = vxpose.xlu0.b32.cont [7/16] 0.0, 128
    %10832 = vxpose.xlu0.b32.cont [8/16] 0.0, 128
    %10833 = vxpose.xlu0.b32.cont [9/16] 0.0, 128
    %10834 = vxpose.xlu0.b32.cont [10/16] 0.0, 128
    %10835 = vxpose.xlu0.b32.cont [11/16] 0.0, 128
    %10836 = vxpose.xlu0.b32.cont [12/16] 0.0, 128
    %10837 = vxpose.xlu0.b32.cont [13/16] 0.0, 128
    %10838 = vxpose.xlu0.b32.cont [14/16] 0.0, 128
    %10839 = vxpose.xlu0.b32.cont [15/16] 0.0, 128
    %10840 = vxpose.xlu0.b32.end [16/16] 0.0, 128
    %v10841 = vpop.trf.xlu0
    %v10842 = vpop.trf.xlu0
    %v10843 = vpop.trf.xlu0
    %v10844 = vpop.trf.xlu0
    %v10845 = vpop.trf.xlu0
    %v10846 = vpop.trf.xlu0
    %v10847 = vpop.trf.xlu0
    %v10848 = vpop.trf.xlu0
    %v10849 = vpop.trf.xlu0
    %v10850 = vpop.trf.xlu0
    %v10851 = vpop.trf.xlu0
    %v10852 = vpop.trf.xlu0
    %v10853 = vpop.trf.xlu0
    %v10854 = vpop.trf.xlu0
    %v10855 = vpop.trf.xlu0
    %v10856 = vpop.trf.xlu0
    %10857 = vxpose.xlu0.b32.start [1/16] %v7518, 128
    %10858 = vxpose.xlu0.b32.cont [2/16] %v7521, 128
    %10859 = vxpose.xlu0.b32.cont [3/16] %v7524, 128
    %10860 = vxpose.xlu0.b32.cont [4/16] %v7527, 128
    %10861 = vxpose.xlu0.b32.cont [5/16] 0.0, 128
    %10862 = vxpose.xlu0.b32.cont [6/16] 0.0, 128
    %10863 = vxpose.xlu0.b32.cont [7/16] 0.0, 128
    %10864 = vxpose.xlu0.b32.cont [8/16] 0.0, 128
    %10865 = vxpose.xlu0.b32.cont [9/16] 0.0, 128
    %10866 = vxpose.xlu0.b32.cont [10/16] 0.0, 128
    %10867 = vxpose.xlu0.b32.cont [11/16] 0.0, 128
    %10868 = vxpose.xlu0.b32.cont [12/16] 0.0, 128
    %10869 = vxpose.xlu0.b32.cont [13/16] 0.0, 128
    %10870 = vxpose.xlu0.b32.cont [14/16] 0.0, 128
    %10871 = vxpose.xlu0.b32.cont [15/16] 0.0, 128
    %10872 = vxpose.xlu0.b32.end [16/16] 0.0, 128
    %v10873 = vpop.trf.xlu0
    %v10874 = vpop.trf.xlu0
    %v10875 = vpop.trf.xlu0
    %v10876 = vpop.trf.xlu0
    %v10877 = vpop.trf.xlu0
    %v10878 = vpop.trf.xlu0
    %v10879 = vpop.trf.xlu0
    %v10880 = vpop.trf.xlu0
    %v10881 = vpop.trf.xlu0
    %v10882 = vpop.trf.xlu0
    %v10883 = vpop.trf.xlu0
    %v10884 = vpop.trf.xlu0
    %v10885 = vpop.trf.xlu0
    %v10886 = vpop.trf.xlu0
    %v10887 = vpop.trf.xlu0
    %v10888 = vpop.trf.xlu0
    %10889 = vxpose.xlu0.b32.start [1/16] %v7591, 128
    %10890 = vxpose.xlu0.b32.cont [2/16] %v7594, 128
    %10891 = vxpose.xlu0.b32.cont [3/16] %v7597, 128
    %10892 = vxpose.xlu0.b32.cont [4/16] %v7600, 128
    %10893 = vxpose.xlu0.b32.cont [5/16] 0.0, 128
    %10894 = vxpose.xlu0.b32.cont [6/16] 0.0, 128
    %10895 = vxpose.xlu0.b32.cont [7/16] 0.0, 128
    %10896 = vxpose.xlu0.b32.cont [8/16] 0.0, 128
    %10897 = vxpose.xlu0.b32.cont [9/16] 0.0, 128
    %10898 = vxpose.xlu0.b32.cont [10/16] 0.0, 128
    %10899 = vxpose.xlu0.b32.cont [11/16] 0.0, 128
    %10900 = vxpose.xlu0.b32.cont [12/16] 0.0, 128
    %10901 = vxpose.xlu0.b32.cont [13/16] 0.0, 128
    %10902 = vxpose.xlu0.b32.cont [14/16] 0.0, 128
    %10903 = vxpose.xlu0.b32.cont [15/16] 0.0, 128
    %10904 = vxpose.xlu0.b32.end [16/16] 0.0, 128
    %v10905 = vpop.trf.xlu0
    %v10906 = vpop.trf.xlu0
    %v10907 = vpop.trf.xlu0
    %v10908 = vpop.trf.xlu0
    %v10909 = vpop.trf.xlu0
    %v10910 = vpop.trf.xlu0
    %v10911 = vpop.trf.xlu0
    %v10912 = vpop.trf.xlu0
    %v10913 = vpop.trf.xlu0
    %v10914 = vpop.trf.xlu0
    %v10915 = vpop.trf.xlu0
    %v10916 = vpop.trf.xlu0
    %v10917 = vpop.trf.xlu0
    %v10918 = vpop.trf.xlu0
    %v10919 = vpop.trf.xlu0
    %v10920 = vpop.trf.xlu0
    %10921 = vxpose.xlu0.b32.start [1/16] %v7664, 128
    %10922 = vxpose.xlu0.b32.cont [2/16] %v7667, 128
    %10923 = vxpose.xlu0.b32.cont [3/16] %v7670, 128
    %10924 = vxpose.xlu0.b32.cont [4/16] %v7673, 128
    %10925 = vxpose.xlu0.b32.cont [5/16] 0.0, 128
    %10926 = vxpose.xlu0.b32.cont [6/16] 0.0, 128
    %10927 = vxpose.xlu0.b32.cont [7/16] 0.0, 128
    %10928 = vxpose.xlu0.b32.cont [8/16] 0.0, 128
    %10929 = vxpose.xlu0.b32.cont [9/16] 0.0, 128
    %10930 = vxpose.xlu0.b32.cont [10/16] 0.0, 128
    %10931 = vxpose.xlu0.b32.cont [11/16] 0.0, 128
    %10932 = vxpose.xlu0.b32.cont [12/16] 0.0, 128
    %10933 = vxpose.xlu0.b32.cont [13/16] 0.0, 128
    %10934 = vxpose.xlu0.b32.cont [14/16] 0.0, 128
    %10935 = vxpose.xlu0.b32.cont [15/16] 0.0, 128
    %10936 = vxpose.xlu0.b32.end [16/16] 0.0, 128
    %v10937 = vpop.trf.xlu0
    %v10938 = vpop.trf.xlu0
    %v10939 = vpop.trf.xlu0
    %v10940 = vpop.trf.xlu0
    %v10941 = vpop.trf.xlu0
    %v10942 = vpop.trf.xlu0
    %v10943 = vpop.trf.xlu0
    %v10944 = vpop.trf.xlu0
    %v10945 = vpop.trf.xlu0
    %v10946 = vpop.trf.xlu0
    %v10947 = vpop.trf.xlu0
    %v10948 = vpop.trf.xlu0
    %v10949 = vpop.trf.xlu0
    %v10950 = vpop.trf.xlu0
    %v10951 = vpop.trf.xlu0
    %v10952 = vpop.trf.xlu0
    %10953 = vxpose.xlu0.b32.start [1/16] %v7737, 128
    %10954 = vxpose.xlu0.b32.cont [2/16] %v7740, 128
    %10955 = vxpose.xlu0.b32.cont [3/16] %v7743, 128
    %10956 = vxpose.xlu0.b32.cont [4/16] %v7746, 128
    %10957 = vxpose.xlu0.b32.cont [5/16] 0.0, 128
    %10958 = vxpose.xlu0.b32.cont [6/16] 0.0, 128
    %10959 = vxpose.xlu0.b32.cont [7/16] 0.0, 128
    %10960 = vxpose.xlu0.b32.cont [8/16] 0.0, 128
    %10961 = vxpose.xlu0.b32.cont [9/16] 0.0, 128
    %10962 = vxpose.xlu0.b32.cont [10/16] 0.0, 128
    %10963 = vxpose.xlu0.b32.cont [11/16] 0.0, 128
    %10964 = vxpose.xlu0.b32.cont [12/16] 0.0, 128
    %10965 = vxpose.xlu0.b32.cont [13/16] 0.0, 128
    %10966 = vxpose.xlu0.b32.cont [14/16] 0.0, 128
    %10967 = vxpose.xlu0.b32.cont [15/16] 0.0, 128
    %10968 = vxpose.xlu0.b32.end [16/16] 0.0, 128
    %v10969 = vpop.trf.xlu0
    %v10970 = vpop.trf.xlu0
    %v10971 = vpop.trf.xlu0
    %v10972 = vpop.trf.xlu0
    %v10973 = vpop.trf.xlu0
    %v10974 = vpop.trf.xlu0
    %v10975 = vpop.trf.xlu0
    %v10976 = vpop.trf.xlu0
    %v10977 = vpop.trf.xlu0
    %v10978 = vpop.trf.xlu0
    %v10979 = vpop.trf.xlu0
    %v10980 = vpop.trf.xlu0
    %v10981 = vpop.trf.xlu0
    %v10982 = vpop.trf.xlu0
    %v10983 = vpop.trf.xlu0
    %v10984 = vpop.trf.xlu0
    %10985 = vxpose.xlu0.b32.start [1/16] %v7810, 128
    %10986 = vxpose.xlu0.b32.cont [2/16] %v7813, 128
    %10987 = vxpose.xlu0.b32.cont [3/16] %v7816, 128
    %10988 = vxpose.xlu0.b32.cont [4/16] %v7819, 128
    %10989 = vxpose.xlu0.b32.cont [5/16] 0.0, 128
    %10990 = vxpose.xlu0.b32.cont [6/16] 0.0, 128
    %10991 = vxpose.xlu0.b32.cont [7/16] 0.0, 128
    %10992 = vxpose.xlu0.b32.cont [8/16] 0.0, 128
    %10993 = vxpose.xlu0.b32.cont [9/16] 0.0, 128
    %10994 = vxpose.xlu0.b32.cont [10/16] 0.0, 128
    %10995 = vxpose.xlu0.b32.cont [11/16] 0.0, 128
    %10996 = vxpose.xlu0.b32.cont [12/16] 0.0, 128
    %10997 = vxpose.xlu0.b32.cont [13/16] 0.0, 128
    %10998 = vxpose.xlu0.b32.cont [14/16] 0.0, 128
    %10999 = vxpose.xlu0.b32.cont [15/16] 0.0, 128
    %11000 = vxpose.xlu0.b32.end [16/16] 0.0, 128
    %v11001 = vpop.trf.xlu0
    %v11002 = vpop.trf.xlu0
    %v11003 = vpop.trf.xlu0
    %v11004 = vpop.trf.xlu0
    %v11005 = vpop.trf.xlu0
    %v11006 = vpop.trf.xlu0
    %v11007 = vpop.trf.xlu0
    %v11008 = vpop.trf.xlu0
    %v11009 = vpop.trf.xlu0
    %v11010 = vpop.trf.xlu0
    %v11011 = vpop.trf.xlu0
    %v11012 = vpop.trf.xlu0
    %v11013 = vpop.trf.xlu0
    %v11014 = vpop.trf.xlu0
    %v11015 = vpop.trf.xlu0
    %v11016 = vpop.trf.xlu0
    %11017 = vxpose.xlu0.b32.start [1/16] %v7883, 128
    %11018 = vxpose.xlu0.b32.cont [2/16] %v7886, 128
    %11019 = vxpose.xlu0.b32.cont [3/16] %v7889, 128
    %11020 = vxpose.xlu0.b32.cont [4/16] %v7892, 128
    %11021 = vxpose.xlu0.b32.cont [5/16] 0.0, 128
    %11022 = vxpose.xlu0.b32.cont [6/16] 0.0, 128
    %11023 = vxpose.xlu0.b32.cont [7/16] 0.0, 128
    %11024 = vxpose.xlu0.b32.cont [8/16] 0.0, 128
    %11025 = vxpose.xlu0.b32.cont [9/16] 0.0, 128
    %11026 = vxpose.xlu0.b32.cont [10/16] 0.0, 128
    %11027 = vxpose.xlu0.b32.cont [11/16] 0.0, 128
    %11028 = vxpose.xlu0.b32.cont [12/16] 0.0, 128
    %11029 = vxpose.xlu0.b32.cont [13/16] 0.0, 128
    %11030 = vxpose.xlu0.b32.cont [14/16] 0.0, 128
    %11031 = vxpose.xlu0.b32.cont [15/16] 0.0, 128
    %11032 = vxpose.xlu0.b32.end [16/16] 0.0, 128
    %v11033 = vpop.trf.xlu0
    %v11034 = vpop.trf.xlu0
    %v11035 = vpop.trf.xlu0
    %v11036 = vpop.trf.xlu0
    %v11037 = vpop.trf.xlu0
    %v11038 = vpop.trf.xlu0
    %v11039 = vpop.trf.xlu0
    %v11040 = vpop.trf.xlu0
    %v11041 = vpop.trf.xlu0
    %v11042 = vpop.trf.xlu0
    %v11043 = vpop.trf.xlu0
    %v11044 = vpop.trf.xlu0
    %v11045 = vpop.trf.xlu0
    %v11046 = vpop.trf.xlu0
    %v11047 = vpop.trf.xlu0
    %v11048 = vpop.trf.xlu0
    %11049 = vxpose.xlu0.b32.start [1/16] %v7956, 128
    %11050 = vxpose.xlu0.b32.cont [2/16] %v7959, 128
    %11051 = vxpose.xlu0.b32.cont [3/16] %v7962, 128
    %11052 = vxpose.xlu0.b32.cont [4/16] %v7965, 128
    %11053 = vxpose.xlu0.b32.cont [5/16] 0.0, 128
    %11054 = vxpose.xlu0.b32.cont [6/16] 0.0, 128
    %11055 = vxpose.xlu0.b32.cont [7/16] 0.0, 128
    %11056 = vxpose.xlu0.b32.cont [8/16] 0.0, 128
    %11057 = vxpose.xlu0.b32.cont [9/16] 0.0, 128
    %11058 = vxpose.xlu0.b32.cont [10/16] 0.0, 128
    %11059 = vxpose.xlu0.b32.cont [11/16] 0.0, 128
    %11060 = vxpose.xlu0.b32.cont [12/16] 0.0, 128
    %11061 = vxpose.xlu0.b32.cont [13/16] 0.0, 128
    %11062 = vxpose.xlu0.b32.cont [14/16] 0.0, 128
    %11063 = vxpose.xlu0.b32.cont [15/16] 0.0, 128
    %11064 = vxpose.xlu0.b32.end [16/16] 0.0, 128
    %v11065 = vpop.trf.xlu0
    %v11066 = vpop.trf.xlu0
    %v11067 = vpop.trf.xlu0
    %v11068 = vpop.trf.xlu0
    %v11069 = vpop.trf.xlu0
    %v11070 = vpop.trf.xlu0
    %v11071 = vpop.trf.xlu0
    %v11072 = vpop.trf.xlu0
    %v11073 = vpop.trf.xlu0
    %v11074 = vpop.trf.xlu0
    %v11075 = vpop.trf.xlu0
    %v11076 = vpop.trf.xlu0
    %v11077 = vpop.trf.xlu0
    %v11078 = vpop.trf.xlu0
    %v11079 = vpop.trf.xlu0
    %v11080 = vpop.trf.xlu0
    %11081 = vxpose.xlu0.b32.start [1/16] %v8029, 128
    %11082 = vxpose.xlu0.b32.cont [2/16] %v8032, 128
    %11083 = vxpose.xlu0.b32.cont [3/16] %v8035, 128
    %11084 = vxpose.xlu0.b32.cont [4/16] %v8038, 128
    %11085 = vxpose.xlu0.b32.cont [5/16] 0.0, 128
    %11086 = vxpose.xlu0.b32.cont [6/16] 0.0, 128
    %11087 = vxpose.xlu0.b32.cont [7/16] 0.0, 128
    %11088 = vxpose.xlu0.b32.cont [8/16] 0.0, 128
    %11089 = vxpose.xlu0.b32.cont [9/16] 0.0, 128
    %11090 = vxpose.xlu0.b32.cont [10/16] 0.0, 128
    %11091 = vxpose.xlu0.b32.cont [11/16] 0.0, 128
    %11092 = vxpose.xlu0.b32.cont [12/16] 0.0, 128
    %11093 = vxpose.xlu0.b32.cont [13/16] 0.0, 128
    %11094 = vxpose.xlu0.b32.cont [14/16] 0.0, 128
    %11095 = vxpose.xlu0.b32.cont [15/16] 0.0, 128
    %11096 = vxpose.xlu0.b32.end [16/16] 0.0, 128
    %v11097 = vpop.trf.xlu0
    %v11098 = vpop.trf.xlu0
    %v11099 = vpop.trf.xlu0
    %v11100 = vpop.trf.xlu0
    %v11101 = vpop.trf.xlu0
    %v11102 = vpop.trf.xlu0
    %v11103 = vpop.trf.xlu0
    %v11104 = vpop.trf.xlu0
    %v11105 = vpop.trf.xlu0
    %v11106 = vpop.trf.xlu0
    %v11107 = vpop.trf.xlu0
    %v11108 = vpop.trf.xlu0
    %v11109 = vpop.trf.xlu0
    %v11110 = vpop.trf.xlu0
    %v11111 = vpop.trf.xlu0
    %v11112 = vpop.trf.xlu0
    %11113 = vxpose.xlu0.b32.start [1/16] %v8102, 128
    %11114 = vxpose.xlu0.b32.cont [2/16] %v8105, 128
    %11115 = vxpose.xlu0.b32.cont [3/16] %v8108, 128
    %11116 = vxpose.xlu0.b32.cont [4/16] %v8111, 128
    %11117 = vxpose.xlu0.b32.cont [5/16] 0.0, 128
    %11118 = vxpose.xlu0.b32.cont [6/16] 0.0, 128
    %11119 = vxpose.xlu0.b32.cont [7/16] 0.0, 128
    %11120 = vxpose.xlu0.b32.cont [8/16] 0.0, 128
    %11121 = vxpose.xlu0.b32.cont [9/16] 0.0, 128
    %11122 = vxpose.xlu0.b32.cont [10/16] 0.0, 128
    %11123 = vxpose.xlu0.b32.cont [11/16] 0.0, 128
    %11124 = vxpose.xlu0.b32.cont [12/16] 0.0, 128
    %11125 = vxpose.xlu0.b32.cont [13/16] 0.0, 128
    %11126 = vxpose.xlu0.b32.cont [14/16] 0.0, 128
    %11127 = vxpose.xlu0.b32.cont [15/16] 0.0, 128
    %11128 = vxpose.xlu0.b32.end [16/16] 0.0, 128
    %v11129 = vpop.trf.xlu0
    %v11130 = vpop.trf.xlu0
    %v11131 = vpop.trf.xlu0
    %v11132 = vpop.trf.xlu0
    %v11133 = vpop.trf.xlu0
    %v11134 = vpop.trf.xlu0
    %v11135 = vpop.trf.xlu0
    %v11136 = vpop.trf.xlu0
    %v11137 = vpop.trf.xlu0
    %v11138 = vpop.trf.xlu0
    %v11139 = vpop.trf.xlu0
    %v11140 = vpop.trf.xlu0
    %v11141 = vpop.trf.xlu0
    %v11142 = vpop.trf.xlu0
    %v11143 = vpop.trf.xlu0
    %v11144 = vpop.trf.xlu0
    %11145 = vxpose.xlu0.b32.start [1/16] %v8175, 128
    %11146 = vxpose.xlu0.b32.cont [2/16] %v8178, 128
    %11147 = vxpose.xlu0.b32.cont [3/16] %v8181, 128
    %11148 = vxpose.xlu0.b32.cont [4/16] %v8184, 128
    %11149 = vxpose.xlu0.b32.cont [5/16] 0.0, 128
    %11150 = vxpose.xlu0.b32.cont [6/16] 0.0, 128
    %11151 = vxpose.xlu0.b32.cont [7/16] 0.0, 128
    %11152 = vxpose.xlu0.b32.cont [8/16] 0.0, 128
    %11153 = vxpose.xlu0.b32.cont [9/16] 0.0, 128
    %11154 = vxpose.xlu0.b32.cont [10/16] 0.0, 128
    %11155 = vxpose.xlu0.b32.cont [11/16] 0.0, 128
    %11156 = vxpose.xlu0.b32.cont [12/16] 0.0, 128
    %11157 = vxpose.xlu0.b32.cont [13/16] 0.0, 128
    %11158 = vxpose.xlu0.b32.cont [14/16] 0.0, 128
    %11159 = vxpose.xlu0.b32.cont [15/16] 0.0, 128
    %11160 = vxpose.xlu0.b32.end [16/16] 0.0, 128
    %v11161 = vpop.trf.xlu0
    %v11162 = vpop.trf.xlu0
    %v11163 = vpop.trf.xlu0
    %v11164 = vpop.trf.xlu0
    %v11165 = vpop.trf.xlu0
    %v11166 = vpop.trf.xlu0
    %v11167 = vpop.trf.xlu0
    %v11168 = vpop.trf.xlu0
    %v11169 = vpop.trf.xlu0
    %v11170 = vpop.trf.xlu0
    %v11171 = vpop.trf.xlu0
    %v11172 = vpop.trf.xlu0
    %v11173 = vpop.trf.xlu0
    %v11174 = vpop.trf.xlu0
    %v11175 = vpop.trf.xlu0
    %v11176 = vpop.trf.xlu0
    %11177 = vxpose.xlu0.b32.start [1/16] %v8248, 128
    %11178 = vxpose.xlu0.b32.cont [2/16] %v8251, 128
    %11179 = vxpose.xlu0.b32.cont [3/16] %v8254, 128
    %11180 = vxpose.xlu0.b32.cont [4/16] %v8257, 128
    %11181 = vxpose.xlu0.b32.cont [5/16] 0.0, 128
    %11182 = vxpose.xlu0.b32.cont [6/16] 0.0, 128
    %11183 = vxpose.xlu0.b32.cont [7/16] 0.0, 128
    %11184 = vxpose.xlu0.b32.cont [8/16] 0.0, 128
    %11185 = vxpose.xlu0.b32.cont [9/16] 0.0, 128
    %11186 = vxpose.xlu0.b32.cont [10/16] 0.0, 128
    %11187 = vxpose.xlu0.b32.cont [11/16] 0.0, 128
    %11188 = vxpose.xlu0.b32.cont [12/16] 0.0, 128
    %11189 = vxpose.xlu0.b32.cont [13/16] 0.0, 128
    %11190 = vxpose.xlu0.b32.cont [14/16] 0.0, 128
    %11191 = vxpose.xlu0.b32.cont [15/16] 0.0, 128
    %11192 = vxpose.xlu0.b32.end [16/16] 0.0, 128
    %v11193 = vpop.trf.xlu0
    %v11194 = vpop.trf.xlu0
    %v11195 = vpop.trf.xlu0
    %v11196 = vpop.trf.xlu0
    %v11197 = vpop.trf.xlu0
    %v11198 = vpop.trf.xlu0
    %v11199 = vpop.trf.xlu0
    %v11200 = vpop.trf.xlu0
    %v11201 = vpop.trf.xlu0
    %v11202 = vpop.trf.xlu0
    %v11203 = vpop.trf.xlu0
    %v11204 = vpop.trf.xlu0
    %v11205 = vpop.trf.xlu0
    %v11206 = vpop.trf.xlu0
    %v11207 = vpop.trf.xlu0
    %v11208 = vpop.trf.xlu0
    %11209 = vxpose.xlu0.b32.start [1/16] %v8321, 128
    %11210 = vxpose.xlu0.b32.cont [2/16] %v8324, 128
    %11211 = vxpose.xlu0.b32.cont [3/16] %v8327, 128
    %11212 = vxpose.xlu0.b32.cont [4/16] %v8330, 128
    %11213 = vxpose.xlu0.b32.cont [5/16] 0.0, 128
    %11214 = vxpose.xlu0.b32.cont [6/16] 0.0, 128
    %11215 = vxpose.xlu0.b32.cont [7/16] 0.0, 128
    %11216 = vxpose.xlu0.b32.cont [8/16] 0.0, 128
    %11217 = vxpose.xlu0.b32.cont [9/16] 0.0, 128
    %11218 = vxpose.xlu0.b32.cont [10/16] 0.0, 128
    %11219 = vxpose.xlu0.b32.cont [11/16] 0.0, 128
    %11220 = vxpose.xlu0.b32.cont [12/16] 0.0, 128
    %11221 = vxpose.xlu0.b32.cont [13/16] 0.0, 128
    %11222 = vxpose.xlu0.b32.cont [14/16] 0.0, 128
    %11223 = vxpose.xlu0.b32.cont [15/16] 0.0, 128
    %11224 = vxpose.xlu0.b32.end [16/16] 0.0, 128
    %v11225 = vpop.trf.xlu0
    %v11226 = vpop.trf.xlu0
    %v11227 = vpop.trf.xlu0
    %v11228 = vpop.trf.xlu0
    %v11229 = vpop.trf.xlu0
    %v11230 = vpop.trf.xlu0
    %v11231 = vpop.trf.xlu0
    %v11232 = vpop.trf.xlu0
    %v11233 = vpop.trf.xlu0
    %v11234 = vpop.trf.xlu0
    %v11235 = vpop.trf.xlu0
    %v11236 = vpop.trf.xlu0
    %v11237 = vpop.trf.xlu0
    %v11238 = vpop.trf.xlu0
    %v11239 = vpop.trf.xlu0
    %v11240 = vpop.trf.xlu0
    %11241 = vxpose.xlu0.b32.start [1/16] %v8394, 128
    %11242 = vxpose.xlu0.b32.cont [2/16] %v8397, 128
    %11243 = vxpose.xlu0.b32.cont [3/16] %v8400, 128
    %11244 = vxpose.xlu0.b32.cont [4/16] %v8403, 128
    %11245 = vxpose.xlu0.b32.cont [5/16] 0.0, 128
    %11246 = vxpose.xlu0.b32.cont [6/16] 0.0, 128
    %11247 = vxpose.xlu0.b32.cont [7/16] 0.0, 128
    %11248 = vxpose.xlu0.b32.cont [8/16] 0.0, 128
    %11249 = vxpose.xlu0.b32.cont [9/16] 0.0, 128
    %11250 = vxpose.xlu0.b32.cont [10/16] 0.0, 128
    %11251 = vxpose.xlu0.b32.cont [11/16] 0.0, 128
    %11252 = vxpose.xlu0.b32.cont [12/16] 0.0, 128
    %11253 = vxpose.xlu0.b32.cont [13/16] 0.0, 128
    %11254 = vxpose.xlu0.b32.cont [14/16] 0.0, 128
    %11255 = vxpose.xlu0.b32.cont [15/16] 0.0, 128
    %11256 = vxpose.xlu0.b32.end [16/16] 0.0, 128
    %v11257 = vpop.trf.xlu0
    %v11258 = vpop.trf.xlu0
    %v11259 = vpop.trf.xlu0
    %v11260 = vpop.trf.xlu0
    %v11261 = vpop.trf.xlu0
    %v11262 = vpop.trf.xlu0
    %v11263 = vpop.trf.xlu0
    %v11264 = vpop.trf.xlu0
    %v11265 = vpop.trf.xlu0
    %v11266 = vpop.trf.xlu0
    %v11267 = vpop.trf.xlu0
    %v11268 = vpop.trf.xlu0
    %v11269 = vpop.trf.xlu0
    %v11270 = vpop.trf.xlu0
    %v11271 = vpop.trf.xlu0
    %v11272 = vpop.trf.xlu0
    %11273 = vxpose.xlu0.b32.start [1/16] %v8467, 128
    %11274 = vxpose.xlu0.b32.cont [2/16] %v8470, 128
    %11275 = vxpose.xlu0.b32.cont [3/16] %v8473, 128
    %11276 = vxpose.xlu0.b32.cont [4/16] %v8476, 128
    %11277 = vxpose.xlu0.b32.cont [5/16] 0.0, 128
    %11278 = vxpose.xlu0.b32.cont [6/16] 0.0, 128
    %11279 = vxpose.xlu0.b32.cont [7/16] 0.0, 128
    %11280 = vxpose.xlu0.b32.cont [8/16] 0.0, 128
    %11281 = vxpose.xlu0.b32.cont [9/16] 0.0, 128
    %11282 = vxpose.xlu0.b32.cont [10/16] 0.0, 128
    %11283 = vxpose.xlu0.b32.cont [11/16] 0.0, 128
    %11284 = vxpose.xlu0.b32.cont [12/16] 0.0, 128
    %11285 = vxpose.xlu0.b32.cont [13/16] 0.0, 128
    %11286 = vxpose.xlu0.b32.cont [14/16] 0.0, 128
    %11287 = vxpose.xlu0.b32.cont [15/16] 0.0, 128
    %11288 = vxpose.xlu0.b32.end [16/16] 0.0, 128
    %v11289 = vpop.trf.xlu0
    %v11290 = vpop.trf.xlu0
    %v11291 = vpop.trf.xlu0
    %v11292 = vpop.trf.xlu0
    %v11293 = vpop.trf.xlu0
    %v11294 = vpop.trf.xlu0
    %v11295 = vpop.trf.xlu0
    %v11296 = vpop.trf.xlu0
    %v11297 = vpop.trf.xlu0
    %v11298 = vpop.trf.xlu0
    %v11299 = vpop.trf.xlu0
    %v11300 = vpop.trf.xlu0
    %v11301 = vpop.trf.xlu0
    %v11302 = vpop.trf.xlu0
    %v11303 = vpop.trf.xlu0
    %v11304 = vpop.trf.xlu0
    %11305 = vxpose.xlu0.b32.start [1/16] %v8540, 128
    %11306 = vxpose.xlu0.b32.cont [2/16] %v8543, 128
    %11307 = vxpose.xlu0.b32.cont [3/16] %v8546, 128
    %11308 = vxpose.xlu0.b32.cont [4/16] %v8549, 128
    %11309 = vxpose.xlu0.b32.cont [5/16] 0.0, 128
    %11310 = vxpose.xlu0.b32.cont [6/16] 0.0, 128
    %11311 = vxpose.xlu0.b32.cont [7/16] 0.0, 128
    %11312 = vxpose.xlu0.b32.cont [8/16] 0.0, 128
    %11313 = vxpose.xlu0.b32.cont [9/16] 0.0, 128
    %11314 = vxpose.xlu0.b32.cont [10/16] 0.0, 128
    %11315 = vxpose.xlu0.b32.cont [11/16] 0.0, 128
    %11316 = vxpose.xlu0.b32.cont [12/16] 0.0, 128
    %11317 = vxpose.xlu0.b32.cont [13/16] 0.0, 128
    %11318 = vxpose.xlu0.b32.cont [14/16] 0.0, 128
    %11319 = vxpose.xlu0.b32.cont [15/16] 0.0, 128
    %11320 = vxpose.xlu0.b32.end [16/16] 0.0, 128
    %v11321 = vpop.trf.xlu0
    %v11322 = vpop.trf.xlu0
    %v11323 = vpop.trf.xlu0
    %v11324 = vpop.trf.xlu0
    %v11325 = vpop.trf.xlu0
    %v11326 = vpop.trf.xlu0
    %v11327 = vpop.trf.xlu0
    %v11328 = vpop.trf.xlu0
    %v11329 = vpop.trf.xlu0
    %v11330 = vpop.trf.xlu0
    %v11331 = vpop.trf.xlu0
    %v11332 = vpop.trf.xlu0
    %v11333 = vpop.trf.xlu0
    %v11334 = vpop.trf.xlu0
    %v11335 = vpop.trf.xlu0
    %v11336 = vpop.trf.xlu0
    %11337 = vxpose.xlu0.b32.start [1/16] %v8613, 128
    %11338 = vxpose.xlu0.b32.cont [2/16] %v8616, 128
    %11339 = vxpose.xlu0.b32.cont [3/16] %v8619, 128
    %11340 = vxpose.xlu0.b32.cont [4/16] %v8622, 128
    %11341 = vxpose.xlu0.b32.cont [5/16] 0.0, 128
    %11342 = vxpose.xlu0.b32.cont [6/16] 0.0, 128
    %11343 = vxpose.xlu0.b32.cont [7/16] 0.0, 128
    %11344 = vxpose.xlu0.b32.cont [8/16] 0.0, 128
    %11345 = vxpose.xlu0.b32.cont [9/16] 0.0, 128
    %11346 = vxpose.xlu0.b32.cont [10/16] 0.0, 128
    %11347 = vxpose.xlu0.b32.cont [11/16] 0.0, 128
    %11348 = vxpose.xlu0.b32.cont [12/16] 0.0, 128
    %11349 = vxpose.xlu0.b32.cont [13/16] 0.0, 128
    %11350 = vxpose.xlu0.b32.cont [14/16] 0.0, 128
    %11351 = vxpose.xlu0.b32.cont [15/16] 0.0, 128
    %11352 = vxpose.xlu0.b32.end [16/16] 0.0, 128
    %v11353 = vpop.trf.xlu0
    %v11354 = vpop.trf.xlu0
    %v11355 = vpop.trf.xlu0
    %v11356 = vpop.trf.xlu0
    %v11357 = vpop.trf.xlu0
    %v11358 = vpop.trf.xlu0
    %v11359 = vpop.trf.xlu0
    %v11360 = vpop.trf.xlu0
    %v11361 = vpop.trf.xlu0
    %v11362 = vpop.trf.xlu0
    %v11363 = vpop.trf.xlu0
    %v11364 = vpop.trf.xlu0
    %v11365 = vpop.trf.xlu0
    %v11366 = vpop.trf.xlu0
    %v11367 = vpop.trf.xlu0
    %v11368 = vpop.trf.xlu0
    %11369 = vxpose.xlu0.b32.start [1/16] %v8686, 128
    %11370 = vxpose.xlu0.b32.cont [2/16] %v8689, 128
    %11371 = vxpose.xlu0.b32.cont [3/16] %v8692, 128
    %11372 = vxpose.xlu0.b32.cont [4/16] %v8695, 128
    %11373 = vxpose.xlu0.b32.cont [5/16] 0.0, 128
    %11374 = vxpose.xlu0.b32.cont [6/16] 0.0, 128
    %11375 = vxpose.xlu0.b32.cont [7/16] 0.0, 128
    %11376 = vxpose.xlu0.b32.cont [8/16] 0.0, 128
    %11377 = vxpose.xlu0.b32.cont [9/16] 0.0, 128
    %11378 = vxpose.xlu0.b32.cont [10/16] 0.0, 128
    %11379 = vxpose.xlu0.b32.cont [11/16] 0.0, 128
    %11380 = vxpose.xlu0.b32.cont [12/16] 0.0, 128
    %11381 = vxpose.xlu0.b32.cont [13/16] 0.0, 128
    %11382 = vxpose.xlu0.b32.cont [14/16] 0.0, 128
    %11383 = vxpose.xlu0.b32.cont [15/16] 0.0, 128
    %11384 = vxpose.xlu0.b32.end [16/16] 0.0, 128
    %v11385 = vpop.trf.xlu0
    %v11386 = vpop.trf.xlu0
    %v11387 = vpop.trf.xlu0
    %v11388 = vpop.trf.xlu0
    %v11389 = vpop.trf.xlu0
    %v11390 = vpop.trf.xlu0
    %v11391 = vpop.trf.xlu0
    %v11392 = vpop.trf.xlu0
    %v11393 = vpop.trf.xlu0
    %v11394 = vpop.trf.xlu0
    %v11395 = vpop.trf.xlu0
    %v11396 = vpop.trf.xlu0
    %v11397 = vpop.trf.xlu0
    %v11398 = vpop.trf.xlu0
    %v11399 = vpop.trf.xlu0
    %v11400 = vpop.trf.xlu0
    %11401 = vxpose.xlu0.b32.start [1/16] %v8759, 128
    %11402 = vxpose.xlu0.b32.cont [2/16] %v8762, 128
    %11403 = vxpose.xlu0.b32.cont [3/16] %v8765, 128
    %11404 = vxpose.xlu0.b32.cont [4/16] %v8768, 128
    %11405 = vxpose.xlu0.b32.cont [5/16] 0.0, 128
    %11406 = vxpose.xlu0.b32.cont [6/16] 0.0, 128
    %11407 = vxpose.xlu0.b32.cont [7/16] 0.0, 128
    %11408 = vxpose.xlu0.b32.cont [8/16] 0.0, 128
    %11409 = vxpose.xlu0.b32.cont [9/16] 0.0, 128
    %11410 = vxpose.xlu0.b32.cont [10/16] 0.0, 128
    %11411 = vxpose.xlu0.b32.cont [11/16] 0.0, 128
    %11412 = vxpose.xlu0.b32.cont [12/16] 0.0, 128
    %11413 = vxpose.xlu0.b32.cont [13/16] 0.0, 128
    %11414 = vxpose.xlu0.b32.cont [14/16] 0.0, 128
    %11415 = vxpose.xlu0.b32.cont [15/16] 0.0, 128
    %11416 = vxpose.xlu0.b32.end [16/16] 0.0, 128
    %v11417 = vpop.trf.xlu0
    %v11418 = vpop.trf.xlu0
    %v11419 = vpop.trf.xlu0
    %v11420 = vpop.trf.xlu0
    %v11421 = vpop.trf.xlu0
    %v11422 = vpop.trf.xlu0
    %v11423 = vpop.trf.xlu0
    %v11424 = vpop.trf.xlu0
    %v11425 = vpop.trf.xlu0
    %v11426 = vpop.trf.xlu0
    %v11427 = vpop.trf.xlu0
    %v11428 = vpop.trf.xlu0
    %v11429 = vpop.trf.xlu0
    %v11430 = vpop.trf.xlu0
    %v11431 = vpop.trf.xlu0
    %v11432 = vpop.trf.xlu0
    %11433 = vxpose.xlu0.b32.start [1/16] %v8832, 128
    %11434 = vxpose.xlu0.b32.cont [2/16] %v8835, 128
    %11435 = vxpose.xlu0.b32.cont [3/16] %v8838, 128
    %11436 = vxpose.xlu0.b32.cont [4/16] %v8841, 128
    %11437 = vxpose.xlu0.b32.cont [5/16] 0.0, 128
    %11438 = vxpose.xlu0.b32.cont [6/16] 0.0, 128
    %11439 = vxpose.xlu0.b32.cont [7/16] 0.0, 128
    %11440 = vxpose.xlu0.b32.cont [8/16] 0.0, 128
    %11441 = vxpose.xlu0.b32.cont [9/16] 0.0, 128
    %11442 = vxpose.xlu0.b32.cont [10/16] 0.0, 128
    %11443 = vxpose.xlu0.b32.cont [11/16] 0.0, 128
    %11444 = vxpose.xlu0.b32.cont [12/16] 0.0, 128
    %11445 = vxpose.xlu0.b32.cont [13/16] 0.0, 128
    %11446 = vxpose.xlu0.b32.cont [14/16] 0.0, 128
    %11447 = vxpose.xlu0.b32.cont [15/16] 0.0, 128
    %11448 = vxpose.xlu0.b32.end [16/16] 0.0, 128
    %v11449 = vpop.trf.xlu0
    %v11450 = vpop.trf.xlu0
    %v11451 = vpop.trf.xlu0
    %v11452 = vpop.trf.xlu0
    %v11453 = vpop.trf.xlu0
    %v11454 = vpop.trf.xlu0
    %v11455 = vpop.trf.xlu0
    %v11456 = vpop.trf.xlu0
    %v11457 = vpop.trf.xlu0
    %v11458 = vpop.trf.xlu0
    %v11459 = vpop.trf.xlu0
    %v11460 = vpop.trf.xlu0
    %v11461 = vpop.trf.xlu0
    %v11462 = vpop.trf.xlu0
    %v11463 = vpop.trf.xlu0
    %v11464 = vpop.trf.xlu0
    %11465 = vxpose.xlu0.b32.start [1/16] %v8905, 128
    %11466 = vxpose.xlu0.b32.cont [2/16] %v8908, 128
    %11467 = vxpose.xlu0.b32.cont [3/16] %v8911, 128
    %11468 = vxpose.xlu0.b32.cont [4/16] %v8914, 128
    %11469 = vxpose.xlu0.b32.cont [5/16] 0.0, 128
    %11470 = vxpose.xlu0.b32.cont [6/16] 0.0, 128
    %11471 = vxpose.xlu0.b32.cont [7/16] 0.0, 128
    %11472 = vxpose.xlu0.b32.cont [8/16] 0.0, 128
    %11473 = vxpose.xlu0.b32.cont [9/16] 0.0, 128
    %11474 = vxpose.xlu0.b32.cont [10/16] 0.0, 128
    %11475 = vxpose.xlu0.b32.cont [11/16] 0.0, 128
    %11476 = vxpose.xlu0.b32.cont [12/16] 0.0, 128
    %11477 = vxpose.xlu0.b32.cont [13/16] 0.0, 128
    %11478 = vxpose.xlu0.b32.cont [14/16] 0.0, 128
    %11479 = vxpose.xlu0.b32.cont [15/16] 0.0, 128
    %11480 = vxpose.xlu0.b32.end [16/16] 0.0, 128
    %v11481 = vpop.trf.xlu0
    %v11482 = vpop.trf.xlu0
    %v11483 = vpop.trf.xlu0
    %v11484 = vpop.trf.xlu0
    %v11485 = vpop.trf.xlu0
    %v11486 = vpop.trf.xlu0
    %v11487 = vpop.trf.xlu0
    %v11488 = vpop.trf.xlu0
    %v11489 = vpop.trf.xlu0
    %v11490 = vpop.trf.xlu0
    %v11491 = vpop.trf.xlu0
    %v11492 = vpop.trf.xlu0
    %v11493 = vpop.trf.xlu0
    %v11494 = vpop.trf.xlu0
    %v11495 = vpop.trf.xlu0
    %v11496 = vpop.trf.xlu0
    %11497 = vxpose.xlu0.b32.start [1/16] %v8978, 128
    %11498 = vxpose.xlu0.b32.cont [2/16] %v8981, 128
    %11499 = vxpose.xlu0.b32.cont [3/16] %v8984, 128
    %11500 = vxpose.xlu0.b32.cont [4/16] %v8987, 128
    %11501 = vxpose.xlu0.b32.cont [5/16] 0.0, 128
    %11502 = vxpose.xlu0.b32.cont [6/16] 0.0, 128
    %11503 = vxpose.xlu0.b32.cont [7/16] 0.0, 128
    %11504 = vxpose.xlu0.b32.cont [8/16] 0.0, 128
    %11505 = vxpose.xlu0.b32.cont [9/16] 0.0, 128
    %11506 = vxpose.xlu0.b32.cont [10/16] 0.0, 128
    %11507 = vxpose.xlu0.b32.cont [11/16] 0.0, 128
    %11508 = vxpose.xlu0.b32.cont [12/16] 0.0, 128
    %11509 = vxpose.xlu0.b32.cont [13/16] 0.0, 128
    %11510 = vxpose.xlu0.b32.cont [14/16] 0.0, 128
    %11511 = vxpose.xlu0.b32.cont [15/16] 0.0, 128
    %11512 = vxpose.xlu0.b32.end [16/16] 0.0, 128
    %v11513 = vpop.trf.xlu0
    %v11514 = vpop.trf.xlu0
    %v11515 = vpop.trf.xlu0
    %v11516 = vpop.trf.xlu0
    %v11517 = vpop.trf.xlu0
    %v11518 = vpop.trf.xlu0
    %v11519 = vpop.trf.xlu0
    %v11520 = vpop.trf.xlu0
    %v11521 = vpop.trf.xlu0
    %v11522 = vpop.trf.xlu0
    %v11523 = vpop.trf.xlu0
    %v11524 = vpop.trf.xlu0
    %v11525 = vpop.trf.xlu0
    %v11526 = vpop.trf.xlu0
    %v11527 = vpop.trf.xlu0
    %v11528 = vpop.trf.xlu0
    %11529 = vxpose.xlu0.b32.start [1/16] %v9051, 128
    %11530 = vxpose.xlu0.b32.cont [2/16] %v9054, 128
    %11531 = vxpose.xlu0.b32.cont [3/16] %v9057, 128
    %11532 = vxpose.xlu0.b32.cont [4/16] %v9060, 128
    %11533 = vxpose.xlu0.b32.cont [5/16] 0.0, 128
    %11534 = vxpose.xlu0.b32.cont [6/16] 0.0, 128
    %11535 = vxpose.xlu0.b32.cont [7/16] 0.0, 128
    %11536 = vxpose.xlu0.b32.cont [8/16] 0.0, 128
    %11537 = vxpose.xlu0.b32.cont [9/16] 0.0, 128
    %11538 = vxpose.xlu0.b32.cont [10/16] 0.0, 128
    %11539 = vxpose.xlu0.b32.cont [11/16] 0.0, 128
    %11540 = vxpose.xlu0.b32.cont [12/16] 0.0, 128
    %11541 = vxpose.xlu0.b32.cont [13/16] 0.0, 128
    %11542 = vxpose.xlu0.b32.cont [14/16] 0.0, 128
    %11543 = vxpose.xlu0.b32.cont [15/16] 0.0, 128
    %11544 = vxpose.xlu0.b32.end [16/16] 0.0, 128
    %v11545 = vpop.trf.xlu0
    %v11546 = vpop.trf.xlu0
    %v11547 = vpop.trf.xlu0
    %v11548 = vpop.trf.xlu0
    %v11549 = vpop.trf.xlu0
    %v11550 = vpop.trf.xlu0
    %v11551 = vpop.trf.xlu0
    %v11552 = vpop.trf.xlu0
    %v11553 = vpop.trf.xlu0
    %v11554 = vpop.trf.xlu0
    %v11555 = vpop.trf.xlu0
    %v11556 = vpop.trf.xlu0
    %v11557 = vpop.trf.xlu0
    %v11558 = vpop.trf.xlu0
    %v11559 = vpop.trf.xlu0
    %v11560 = vpop.trf.xlu0
    %11561 = vxpose.xlu0.b32.start [1/16] %v9124, 128
    %11562 = vxpose.xlu0.b32.cont [2/16] %v9127, 128
    %11563 = vxpose.xlu0.b32.cont [3/16] %v9130, 128
    %11564 = vxpose.xlu0.b32.cont [4/16] %v9133, 128
    %11565 = vxpose.xlu0.b32.cont [5/16] 0.0, 128
    %11566 = vxpose.xlu0.b32.cont [6/16] 0.0, 128
    %11567 = vxpose.xlu0.b32.cont [7/16] 0.0, 128
    %11568 = vxpose.xlu0.b32.cont [8/16] 0.0, 128
    %11569 = vxpose.xlu0.b32.cont [9/16] 0.0, 128
    %11570 = vxpose.xlu0.b32.cont [10/16] 0.0, 128
    %11571 = vxpose.xlu0.b32.cont [11/16] 0.0, 128
    %11572 = vxpose.xlu0.b32.cont [12/16] 0.0, 128
    %11573 = vxpose.xlu0.b32.cont [13/16] 0.0, 128
    %11574 = vxpose.xlu0.b32.cont [14/16] 0.0, 128
    %11575 = vxpose.xlu0.b32.cont [15/16] 0.0, 128
    %11576 = vxpose.xlu0.b32.end [16/16] 0.0, 128
    %v11577 = vpop.trf.xlu0
    %v11578 = vpop.trf.xlu0
    %v11579 = vpop.trf.xlu0
    %v11580 = vpop.trf.xlu0
    %v11581 = vpop.trf.xlu0
    %v11582 = vpop.trf.xlu0
    %v11583 = vpop.trf.xlu0
    %v11584 = vpop.trf.xlu0
    %v11585 = vpop.trf.xlu0
    %v11586 = vpop.trf.xlu0
    %v11587 = vpop.trf.xlu0
    %v11588 = vpop.trf.xlu0
    %v11589 = vpop.trf.xlu0
    %v11590 = vpop.trf.xlu0
    %v11591 = vpop.trf.xlu0
    %v11592 = vpop.trf.xlu0
    %11593 = vxpose.xlu0.b32.start [1/16] %v9197, 128
    %11594 = vxpose.xlu0.b32.cont [2/16] %v9200, 128
    %11595 = vxpose.xlu0.b32.cont [3/16] %v9203, 128
    %11596 = vxpose.xlu0.b32.cont [4/16] %v9206, 128
    %11597 = vxpose.xlu0.b32.cont [5/16] 0.0, 128
    %11598 = vxpose.xlu0.b32.cont [6/16] 0.0, 128
    %11599 = vxpose.xlu0.b32.cont [7/16] 0.0, 128
    %11600 = vxpose.xlu0.b32.cont [8/16] 0.0, 128
    %11601 = vxpose.xlu0.b32.cont [9/16] 0.0, 128
    %11602 = vxpose.xlu0.b32.cont [10/16] 0.0, 128
    %11603 = vxpose.xlu0.b32.cont [11/16] 0.0, 128
    %11604 = vxpose.xlu0.b32.cont [12/16] 0.0, 128
    %11605 = vxpose.xlu0.b32.cont [13/16] 0.0, 128
    %11606 = vxpose.xlu0.b32.cont [14/16] 0.0, 128
    %11607 = vxpose.xlu0.b32.cont [15/16] 0.0, 128
    %11608 = vxpose.xlu0.b32.end [16/16] 0.0, 128
    %v11609 = vpop.trf.xlu0
    %v11610 = vpop.trf.xlu0
    %v11611 = vpop.trf.xlu0
    %v11612 = vpop.trf.xlu0
    %v11613 = vpop.trf.xlu0
    %v11614 = vpop.trf.xlu0
    %v11615 = vpop.trf.xlu0
    %v11616 = vpop.trf.xlu0
    %v11617 = vpop.trf.xlu0
    %v11618 = vpop.trf.xlu0
    %v11619 = vpop.trf.xlu0
    %v11620 = vpop.trf.xlu0
    %v11621 = vpop.trf.xlu0
    %v11622 = vpop.trf.xlu0
    %v11623 = vpop.trf.xlu0
    %v11624 = vpop.trf.xlu0
    %11625 = vxpose.xlu0.b32.start [1/16] %v9270, 128
    %11626 = vxpose.xlu0.b32.cont [2/16] %v9273, 128
    %11627 = vxpose.xlu0.b32.cont [3/16] %v9276, 128
    %11628 = vxpose.xlu0.b32.cont [4/16] %v9279, 128
    %11629 = vxpose.xlu0.b32.cont [5/16] 0.0, 128
    %11630 = vxpose.xlu0.b32.cont [6/16] 0.0, 128
    %11631 = vxpose.xlu0.b32.cont [7/16] 0.0, 128
    %11632 = vxpose.xlu0.b32.cont [8/16] 0.0, 128
    %11633 = vxpose.xlu0.b32.cont [9/16] 0.0, 128
    %11634 = vxpose.xlu0.b32.cont [10/16] 0.0, 128
    %11635 = vxpose.xlu0.b32.cont [11/16] 0.0, 128
    %11636 = vxpose.xlu0.b32.cont [12/16] 0.0, 128
    %11637 = vxpose.xlu0.b32.cont [13/16] 0.0, 128
    %11638 = vxpose.xlu0.b32.cont [14/16] 0.0, 128
    %11639 = vxpose.xlu0.b32.cont [15/16] 0.0, 128
    %11640 = vxpose.xlu0.b32.end [16/16] 0.0, 128
    %v11641 = vpop.trf.xlu0
    %v11642 = vpop.trf.xlu0
    %v11643 = vpop.trf.xlu0
    %v11644 = vpop.trf.xlu0
    %v11645 = vpop.trf.xlu0
    %v11646 = vpop.trf.xlu0
    %v11647 = vpop.trf.xlu0
    %v11648 = vpop.trf.xlu0
    %v11649 = vpop.trf.xlu0
    %v11650 = vpop.trf.xlu0
    %v11651 = vpop.trf.xlu0
    %v11652 = vpop.trf.xlu0
    %v11653 = vpop.trf.xlu0
    %v11654 = vpop.trf.xlu0
    %v11655 = vpop.trf.xlu0
    %v11656 = vpop.trf.xlu0
    %11657 = vxpose.xlu0.b32.start [1/16] %v9343, 128
    %11658 = vxpose.xlu0.b32.cont [2/16] %v9346, 128
    %11659 = vxpose.xlu0.b32.cont [3/16] %v9349, 128
    %11660 = vxpose.xlu0.b32.cont [4/16] %v9352, 128
    %11661 = vxpose.xlu0.b32.cont [5/16] 0.0, 128
    %11662 = vxpose.xlu0.b32.cont [6/16] 0.0, 128
    %11663 = vxpose.xlu0.b32.cont [7/16] 0.0, 128
    %11664 = vxpose.xlu0.b32.cont [8/16] 0.0, 128
    %11665 = vxpose.xlu0.b32.cont [9/16] 0.0, 128
    %11666 = vxpose.xlu0.b32.cont [10/16] 0.0, 128
    %11667 = vxpose.xlu0.b32.cont [11/16] 0.0, 128
    %11668 = vxpose.xlu0.b32.cont [12/16] 0.0, 128
    %11669 = vxpose.xlu0.b32.cont [13/16] 0.0, 128
    %11670 = vxpose.xlu0.b32.cont [14/16] 0.0, 128
    %11671 = vxpose.xlu0.b32.cont [15/16] 0.0, 128
    %11672 = vxpose.xlu0.b32.end [16/16] 0.0, 128
    %v11673 = vpop.trf.xlu0
    %v11674 = vpop.trf.xlu0
    %v11675 = vpop.trf.xlu0
    %v11676 = vpop.trf.xlu0
    %v11677 = vpop.trf.xlu0
    %v11678 = vpop.trf.xlu0
    %v11679 = vpop.trf.xlu0
    %v11680 = vpop.trf.xlu0
    %v11681 = vpop.trf.xlu0
    %v11682 = vpop.trf.xlu0
    %v11683 = vpop.trf.xlu0
    %v11684 = vpop.trf.xlu0
    %v11685 = vpop.trf.xlu0
    %v11686 = vpop.trf.xlu0
    %v11687 = vpop.trf.xlu0
    %v11688 = vpop.trf.xlu0
    %11689 = vxpose.xlu0.b32.start [1/16] %v9416, 128
    %11690 = vxpose.xlu0.b32.cont [2/16] %v9419, 128
    %11691 = vxpose.xlu0.b32.cont [3/16] %v9422, 128
    %11692 = vxpose.xlu0.b32.cont [4/16] %v9425, 128
    %11693 = vxpose.xlu0.b32.cont [5/16] 0.0, 128
    %11694 = vxpose.xlu0.b32.cont [6/16] 0.0, 128
    %11695 = vxpose.xlu0.b32.cont [7/16] 0.0, 128
    %11696 = vxpose.xlu0.b32.cont [8/16] 0.0, 128
    %11697 = vxpose.xlu0.b32.cont [9/16] 0.0, 128
    %11698 = vxpose.xlu0.b32.cont [10/16] 0.0, 128
    %11699 = vxpose.xlu0.b32.cont [11/16] 0.0, 128
    %11700 = vxpose.xlu0.b32.cont [12/16] 0.0, 128
    %11701 = vxpose.xlu0.b32.cont [13/16] 0.0, 128
    %11702 = vxpose.xlu0.b32.cont [14/16] 0.0, 128
    %11703 = vxpose.xlu0.b32.cont [15/16] 0.0, 128
    %11704 = vxpose.xlu0.b32.end [16/16] 0.0, 128
    %v11705 = vpop.trf.xlu0
    %v11706 = vpop.trf.xlu0
    %v11707 = vpop.trf.xlu0
    %v11708 = vpop.trf.xlu0
    %v11709 = vpop.trf.xlu0
    %v11710 = vpop.trf.xlu0
    %v11711 = vpop.trf.xlu0
    %v11712 = vpop.trf.xlu0
    %v11713 = vpop.trf.xlu0
    %v11714 = vpop.trf.xlu0
    %v11715 = vpop.trf.xlu0
    %v11716 = vpop.trf.xlu0
    %v11717 = vpop.trf.xlu0
    %v11718 = vpop.trf.xlu0
    %v11719 = vpop.trf.xlu0
    %v11720 = vpop.trf.xlu0
    %11721 = vxpose.xlu0.b32.start [1/16] %v9489, 128
    %11722 = vxpose.xlu0.b32.cont [2/16] %v9492, 128
    %11723 = vxpose.xlu0.b32.cont [3/16] %v9495, 128
    %11724 = vxpose.xlu0.b32.cont [4/16] %v9498, 128
    %11725 = vxpose.xlu0.b32.cont [5/16] 0.0, 128
    %11726 = vxpose.xlu0.b32.cont [6/16] 0.0, 128
    %11727 = vxpose.xlu0.b32.cont [7/16] 0.0, 128
    %11728 = vxpose.xlu0.b32.cont [8/16] 0.0, 128
    %11729 = vxpose.xlu0.b32.cont [9/16] 0.0, 128
    %11730 = vxpose.xlu0.b32.cont [10/16] 0.0, 128
    %11731 = vxpose.xlu0.b32.cont [11/16] 0.0, 128
    %11732 = vxpose.xlu0.b32.cont [12/16] 0.0, 128
    %11733 = vxpose.xlu0.b32.cont [13/16] 0.0, 128
    %11734 = vxpose.xlu0.b32.cont [14/16] 0.0, 128
    %11735 = vxpose.xlu0.b32.cont [15/16] 0.0, 128
    %11736 = vxpose.xlu0.b32.end [16/16] 0.0, 128
    %v11737 = vpop.trf.xlu0
    %v11738 = vpop.trf.xlu0
    %v11739 = vpop.trf.xlu0
    %v11740 = vpop.trf.xlu0
    %v11741 = vpop.trf.xlu0
    %v11742 = vpop.trf.xlu0
    %v11743 = vpop.trf.xlu0
    %v11744 = vpop.trf.xlu0
    %v11745 = vpop.trf.xlu0
    %v11746 = vpop.trf.xlu0
    %v11747 = vpop.trf.xlu0
    %v11748 = vpop.trf.xlu0
    %v11749 = vpop.trf.xlu0
    %v11750 = vpop.trf.xlu0
    %v11751 = vpop.trf.xlu0
    %v11752 = vpop.trf.xlu0
    %11753 = vxpose.xlu0.b32.start [1/16] %v9562, 128
    %11754 = vxpose.xlu0.b32.cont [2/16] %v9565, 128
    %11755 = vxpose.xlu0.b32.cont [3/16] %v9568, 128
    %11756 = vxpose.xlu0.b32.cont [4/16] %v9571, 128
    %11757 = vxpose.xlu0.b32.cont [5/16] 0.0, 128
    %11758 = vxpose.xlu0.b32.cont [6/16] 0.0, 128
    %11759 = vxpose.xlu0.b32.cont [7/16] 0.0, 128
    %11760 = vxpose.xlu0.b32.cont [8/16] 0.0, 128
    %11761 = vxpose.xlu0.b32.cont [9/16] 0.0, 128
    %11762 = vxpose.xlu0.b32.cont [10/16] 0.0, 128
    %11763 = vxpose.xlu0.b32.cont [11/16] 0.0, 128
    %11764 = vxpose.xlu0.b32.cont [12/16] 0.0, 128
    %11765 = vxpose.xlu0.b32.cont [13/16] 0.0, 128
    %11766 = vxpose.xlu0.b32.cont [14/16] 0.0, 128
    %11767 = vxpose.xlu0.b32.cont [15/16] 0.0, 128
    %11768 = vxpose.xlu0.b32.end [16/16] 0.0, 128
    %v11769 = vpop.trf.xlu0
    %v11770 = vpop.trf.xlu0
    %v11771 = vpop.trf.xlu0
    %v11772 = vpop.trf.xlu0
    %v11773 = vpop.trf.xlu0
    %v11774 = vpop.trf.xlu0
    %v11775 = vpop.trf.xlu0
    %v11776 = vpop.trf.xlu0
    %v11777 = vpop.trf.xlu0
    %v11778 = vpop.trf.xlu0
    %v11779 = vpop.trf.xlu0
    %v11780 = vpop.trf.xlu0
    %v11781 = vpop.trf.xlu0
    %v11782 = vpop.trf.xlu0
    %v11783 = vpop.trf.xlu0
    %v11784 = vpop.trf.xlu0
    %11785 = vxpose.xlu0.b32.start [1/16] %v9635, 128
    %11786 = vxpose.xlu0.b32.cont [2/16] %v9638, 128
    %11787 = vxpose.xlu0.b32.cont [3/16] %v9641, 128
    %11788 = vxpose.xlu0.b32.cont [4/16] %v9644, 128
    %11789 = vxpose.xlu0.b32.cont [5/16] 0.0, 128
    %11790 = vxpose.xlu0.b32.cont [6/16] 0.0, 128
    %11791 = vxpose.xlu0.b32.cont [7/16] 0.0, 128
    %11792 = vxpose.xlu0.b32.cont [8/16] 0.0, 128
    %11793 = vxpose.xlu0.b32.cont [9/16] 0.0, 128
    %11794 = vxpose.xlu0.b32.cont [10/16] 0.0, 128
    %11795 = vxpose.xlu0.b32.cont [11/16] 0.0, 128
    %11796 = vxpose.xlu0.b32.cont [12/16] 0.0, 128
    %11797 = vxpose.xlu0.b32.cont [13/16] 0.0, 128
    %11798 = vxpose.xlu0.b32.cont [14/16] 0.0, 128
    %11799 = vxpose.xlu0.b32.cont [15/16] 0.0, 128
    %11800 = vxpose.xlu0.b32.end [16/16] 0.0, 128
    %v11801 = vpop.trf.xlu0
    %v11802 = vpop.trf.xlu0
    %v11803 = vpop.trf.xlu0
    %v11804 = vpop.trf.xlu0
    %v11805 = vpop.trf.xlu0
    %v11806 = vpop.trf.xlu0
    %v11807 = vpop.trf.xlu0
    %v11808 = vpop.trf.xlu0
    %v11809 = vpop.trf.xlu0
    %v11810 = vpop.trf.xlu0
    %v11811 = vpop.trf.xlu0
    %v11812 = vpop.trf.xlu0
    %v11813 = vpop.trf.xlu0
    %v11814 = vpop.trf.xlu0
    %v11815 = vpop.trf.xlu0
    %v11816 = vpop.trf.xlu0
    %11817 = vxpose.xlu0.b32.start [1/16] %v9708, 128
    %11818 = vxpose.xlu0.b32.cont [2/16] %v9711, 128
    %11819 = vxpose.xlu0.b32.cont [3/16] %v9714, 128
    %11820 = vxpose.xlu0.b32.cont [4/16] %v9717, 128
    %11821 = vxpose.xlu0.b32.cont [5/16] 0.0, 128
    %11822 = vxpose.xlu0.b32.cont [6/16] 0.0, 128
    %11823 = vxpose.xlu0.b32.cont [7/16] 0.0, 128
    %11824 = vxpose.xlu0.b32.cont [8/16] 0.0, 128
    %11825 = vxpose.xlu0.b32.cont [9/16] 0.0, 128
    %11826 = vxpose.xlu0.b32.cont [10/16] 0.0, 128
    %11827 = vxpose.xlu0.b32.cont [11/16] 0.0, 128
    %11828 = vxpose.xlu0.b32.cont [12/16] 0.0, 128
    %11829 = vxpose.xlu0.b32.cont [13/16] 0.0, 128
    %11830 = vxpose.xlu0.b32.cont [14/16] 0.0, 128
    %11831 = vxpose.xlu0.b32.cont [15/16] 0.0, 128
    %11832 = vxpose.xlu0.b32.end [16/16] 0.0, 128
    %v11833 = vpop.trf.xlu0
    %v11834 = vpop.trf.xlu0
    %v11835 = vpop.trf.xlu0
    %v11836 = vpop.trf.xlu0
    %v11837 = vpop.trf.xlu0
    %v11838 = vpop.trf.xlu0
    %v11839 = vpop.trf.xlu0
    %v11840 = vpop.trf.xlu0
    %v11841 = vpop.trf.xlu0
    %v11842 = vpop.trf.xlu0
    %v11843 = vpop.trf.xlu0
    %v11844 = vpop.trf.xlu0
    %v11845 = vpop.trf.xlu0
    %v11846 = vpop.trf.xlu0
    %v11847 = vpop.trf.xlu0
    %v11848 = vpop.trf.xlu0
    %11849 = vxpose.xlu0.b32.start [1/16] %v9781, 128
    %11850 = vxpose.xlu0.b32.cont [2/16] %v9784, 128
    %11851 = vxpose.xlu0.b32.cont [3/16] %v9787, 128
    %11852 = vxpose.xlu0.b32.cont [4/16] %v9790, 128
    %11853 = vxpose.xlu0.b32.cont [5/16] 0.0, 128
    %11854 = vxpose.xlu0.b32.cont [6/16] 0.0, 128
    %11855 = vxpose.xlu0.b32.cont [7/16] 0.0, 128
    %11856 = vxpose.xlu0.b32.cont [8/16] 0.0, 128
    %11857 = vxpose.xlu0.b32.cont [9/16] 0.0, 128
    %11858 = vxpose.xlu0.b32.cont [10/16] 0.0, 128
    %11859 = vxpose.xlu0.b32.cont [11/16] 0.0, 128
    %11860 = vxpose.xlu0.b32.cont [12/16] 0.0, 128
    %11861 = vxpose.xlu0.b32.cont [13/16] 0.0, 128
    %11862 = vxpose.xlu0.b32.cont [14/16] 0.0, 128
    %11863 = vxpose.xlu0.b32.cont [15/16] 0.0, 128
    %11864 = vxpose.xlu0.b32.end [16/16] 0.0, 128
    %v11865 = vpop.trf.xlu0
    %v11866 = vpop.trf.xlu0
    %v11867 = vpop.trf.xlu0
    %v11868 = vpop.trf.xlu0
    %v11869 = vpop.trf.xlu0
    %v11870 = vpop.trf.xlu0
    %v11871 = vpop.trf.xlu0
    %v11872 = vpop.trf.xlu0
    %v11873 = vpop.trf.xlu0
    %v11874 = vpop.trf.xlu0
    %v11875 = vpop.trf.xlu0
    %v11876 = vpop.trf.xlu0
    %v11877 = vpop.trf.xlu0
    %v11878 = vpop.trf.xlu0
    %v11879 = vpop.trf.xlu0
    %v11880 = vpop.trf.xlu0
    %11881 = vxpose.xlu0.b32.start [1/16] %v9854, 128
    %11882 = vxpose.xlu0.b32.cont [2/16] %v9857, 128
    %11883 = vxpose.xlu0.b32.cont [3/16] %v9860, 128
    %11884 = vxpose.xlu0.b32.cont [4/16] %v9863, 128
    %11885 = vxpose.xlu0.b32.cont [5/16] 0.0, 128
    %11886 = vxpose.xlu0.b32.cont [6/16] 0.0, 128
    %11887 = vxpose.xlu0.b32.cont [7/16] 0.0, 128
    %11888 = vxpose.xlu0.b32.cont [8/16] 0.0, 128
    %11889 = vxpose.xlu0.b32.cont [9/16] 0.0, 128
    %11890 = vxpose.xlu0.b32.cont [10/16] 0.0, 128
    %11891 = vxpose.xlu0.b32.cont [11/16] 0.0, 128
    %11892 = vxpose.xlu0.b32.cont [12/16] 0.0, 128
    %11893 = vxpose.xlu0.b32.cont [13/16] 0.0, 128
    %11894 = vxpose.xlu0.b32.cont [14/16] 0.0, 128
    %11895 = vxpose.xlu0.b32.cont [15/16] 0.0, 128
    %11896 = vxpose.xlu0.b32.end [16/16] 0.0, 128
    %v11897 = vpop.trf.xlu0
    %v11898 = vpop.trf.xlu0
    %v11899 = vpop.trf.xlu0
    %v11900 = vpop.trf.xlu0
    %v11901 = vpop.trf.xlu0
    %v11902 = vpop.trf.xlu0
    %v11903 = vpop.trf.xlu0
    %v11904 = vpop.trf.xlu0
    %v11905 = vpop.trf.xlu0
    %v11906 = vpop.trf.xlu0
    %v11907 = vpop.trf.xlu0
    %v11908 = vpop.trf.xlu0
    %v11909 = vpop.trf.xlu0
    %v11910 = vpop.trf.xlu0
    %v11911 = vpop.trf.xlu0
    %v11912 = vpop.trf.xlu0
    %v11913 = vrot.slane %v9945, 4
    %v11914 = vsel %vm376, %v11913, %v9881
    %v11916 = vunpack.c.l.s4 1983009808
    %v11917 = vunpack.c.0.s8 %v11916
    %v11918 = vperm.slane %v11914, %v11917
    %v11919 = vrot.slane %v9977, 4
    %v11920 = vsel %vm376, %v11919, %v9913
    %v11922 = vunpack.c.l.s4 1983009808
    %v11923 = vunpack.c.0.s8 %v11922
    %v11924 = vperm.slane %v11920, %v11923
    %v11925 = vrot.slane %v10073, 4
    %v11926 = vsel %vm376, %v11925, %v10009
    %v11928 = vunpack.c.l.s4 1983009808
    %v11929 = vunpack.c.0.s8 %v11928
    %v11930 = vperm.slane %v11926, %v11929
    %v11931 = vrot.slane %v10105, 4
    %v11932 = vsel %vm376, %v11931, %v10041
    %v11934 = vunpack.c.l.s4 1983009808
    %v11935 = vunpack.c.0.s8 %v11934
    %v11936 = vperm.slane %v11932, %v11935
    %v11937 = vrot.slane %v11924, 4
    %v11938 = vsel %vm376, %v11937, %v11918
    %v11940 = vunpack.c.l.s4 1934713408
    %v11941 = vunpack.c.0.s8 %v11940
    %v11942 = vperm.slane %v11938, %v11941
    %v11943 = vrot.slane %v11936, 4
    %v11944 = vsel %vm376, %v11943, %v11930
    %v11946 = vunpack.c.l.s4 1934713408
    %v11947 = vunpack.c.0.s8 %v11946
    %v11948 = vperm.slane %v11944, %v11947
    %v11949 = vrot.slane %v11948, 4
    %v11950 = vsel %vm376, %v11949, %v11942
    %v11951 = vrot.slane %v11942, 4
    %v11952 = vsel %vm376, %v11948, %v11951
    %v11953 = vrot.slane %v10201, 4
    %v11954 = vsel %vm376, %v11953, %v10137
    %v11956 = vunpack.c.l.s4 1983009808
    %v11957 = vunpack.c.0.s8 %v11956
    %v11958 = vperm.slane %v11954, %v11957
    %v11959 = vrot.slane %v10233, 4
    %v11960 = vsel %vm376, %v11959, %v10169
    %v11962 = vunpack.c.l.s4 1983009808
    %v11963 = vunpack.c.0.s8 %v11962
    %v11964 = vperm.slane %v11960, %v11963
    %v11965 = vrot.slane %v10329, 4
    %v11966 = vsel %vm376, %v11965, %v10265
    %v11968 = vunpack.c.l.s4 1983009808
    %v11969 = vunpack.c.0.s8 %v11968
    %v11970 = vperm.slane %v11966, %v11969
    %v11971 = vrot.slane %v10361, 4
    %v11972 = vsel %vm376, %v11971, %v10297
    %v11974 = vunpack.c.l.s4 1983009808
    %v11975 = vunpack.c.0.s8 %v11974
    %v11976 = vperm.slane %v11972, %v11975
    %v11977 = vrot.slane %v11964, 4
    %v11978 = vsel %vm376, %v11977, %v11958
    %v11980 = vunpack.c.l.s4 1934713408
    %v11981 = vunpack.c.0.s8 %v11980
    %v11982 = vperm.slane %v11978, %v11981
    %v11983 = vrot.slane %v11976, 4
    %v11984 = vsel %vm376, %v11983, %v11970
    %v11986 = vunpack.c.l.s4 1934713408
    %v11987 = vunpack.c.0.s8 %v11986
    %v11988 = vperm.slane %v11984, %v11987
    %v11989 = vrot.slane %v11988, 4
    %v11990 = vsel %vm376, %v11989, %v11982
    %v11991 = vrot.slane %v11982, 4
    %v11992 = vsel %vm376, %v11988, %v11991
    %v11993 = vrot.slane %v10457, 4
    %v11994 = vsel %vm376, %v11993, %v10393
    %v11996 = vunpack.c.l.s4 1983009808
    %v11997 = vunpack.c.0.s8 %v11996
    %v11998 = vperm.slane %v11994, %v11997
    %v11999 = vrot.slane %v10489, 4
    %v12000 = vsel %vm376, %v11999, %v10425
    %v12002 = vunpack.c.l.s4 1983009808
    %v12003 = vunpack.c.0.s8 %v12002
    %v12004 = vperm.slane %v12000, %v12003
    %v12005 = vrot.slane %v10585, 4
    %v12006 = vsel %vm376, %v12005, %v10521
    %v12008 = vunpack.c.l.s4 1983009808
    %v12009 = vunpack.c.0.s8 %v12008
    %v12010 = vperm.slane %v12006, %v12009
    %v12011 = vrot.slane %v10617, 4
    %v12012 = vsel %vm376, %v12011, %v10553
    %v12014 = vunpack.c.l.s4 1983009808
    %v12015 = vunpack.c.0.s8 %v12014
    %v12016 = vperm.slane %v12012, %v12015
    %v12017 = vrot.slane %v12004, 4
    %v12018 = vsel %vm376, %v12017, %v11998
    %v12020 = vunpack.c.l.s4 1934713408
    %v12021 = vunpack.c.0.s8 %v12020
    %v12022 = vperm.slane %v12018, %v12021
    %v12023 = vrot.slane %v12016, 4
    %v12024 = vsel %vm376, %v12023, %v12010
    %v12026 = vunpack.c.l.s4 1934713408
    %v12027 = vunpack.c.0.s8 %v12026
    %v12028 = vperm.slane %v12024, %v12027
    %v12029 = vrot.slane %v12028, 4
    %v12030 = vsel %vm376, %v12029, %v12022
    %v12031 = vrot.slane %v12022, 4
    %v12032 = vsel %vm376, %v12028, %v12031
    %v12033 = vrot.slane %v10713, 4
    %v12034 = vsel %vm376, %v12033, %v10649
    %v12036 = vunpack.c.l.s4 1983009808
    %v12037 = vunpack.c.0.s8 %v12036
    %v12038 = vperm.slane %v12034, %v12037
    %v12039 = vrot.slane %v10745, 4
    %v12040 = vsel %vm376, %v12039, %v10681
    %v12042 = vunpack.c.l.s4 1983009808
    %v12043 = vunpack.c.0.s8 %v12042
    %v12044 = vperm.slane %v12040, %v12043
    %v12045 = vrot.slane %v10841, 4
    %v12046 = vsel %vm376, %v12045, %v10777
    %v12048 = vunpack.c.l.s4 1983009808
    %v12049 = vunpack.c.0.s8 %v12048
    %v12050 = vperm.slane %v12046, %v12049
    %v12051 = vrot.slane %v10873, 4
    %v12052 = vsel %vm376, %v12051, %v10809
    %v12054 = vunpack.c.l.s4 1983009808
    %v12055 = vunpack.c.0.s8 %v12054
    %v12056 = vperm.slane %v12052, %v12055
    %v12057 = vrot.slane %v12044, 4
    %v12058 = vsel %vm376, %v12057, %v12038
    %v12060 = vunpack.c.l.s4 1934713408
    %v12061 = vunpack.c.0.s8 %v12060
    %v12062 = vperm.slane %v12058, %v12061
    %v12063 = vrot.slane %v12056, 4
    %v12064 = vsel %vm376, %v12063, %v12050
    %v12066 = vunpack.c.l.s4 1934713408
    %v12067 = vunpack.c.0.s8 %v12066
    %v12068 = vperm.slane %v12064, %v12067
    %v12069 = vrot.slane %v12068, 4
    %v12070 = vsel %vm376, %v12069, %v12062
    %v12071 = vrot.slane %v12062, 4
    %v12072 = vsel %vm376, %v12068, %v12071
    %v12073 = vrot.slane %v10969, 4
    %v12074 = vsel %vm376, %v12073, %v10905
    %v12076 = vunpack.c.l.s4 1983009808
    %v12077 = vunpack.c.0.s8 %v12076
    %v12078 = vperm.slane %v12074, %v12077
    %v12079 = vrot.slane %v11001, 4
    %v12080 = vsel %vm376, %v12079, %v10937
    %v12082 = vunpack.c.l.s4 1983009808
    %v12083 = vunpack.c.0.s8 %v12082
    %v12084 = vperm.slane %v12080, %v12083
    %v12085 = vrot.slane %v11097, 4
    %v12086 = vsel %vm376, %v12085, %v11033
    %v12088 = vunpack.c.l.s4 1983009808
    %v12089 = vunpack.c.0.s8 %v12088
    %v12090 = vperm.slane %v12086, %v12089
    %v12091 = vrot.slane %v11129, 4
    %v12092 = vsel %vm376, %v12091, %v11065
    %v12094 = vunpack.c.l.s4 1983009808
    %v12095 = vunpack.c.0.s8 %v12094
    %v12096 = vperm.slane %v12092, %v12095
    %v12097 = vrot.slane %v12084, 4
    %v12098 = vsel %vm376, %v12097, %v12078
    %v12100 = vunpack.c.l.s4 1934713408
    %v12101 = vunpack.c.0.s8 %v12100
    %v12102 = vperm.slane %v12098, %v12101
    %v12103 = vrot.slane %v12096, 4
    %v12104 = vsel %vm376, %v12103, %v12090
    %v12106 = vunpack.c.l.s4 1934713408
    %v12107 = vunpack.c.0.s8 %v12106
    %v12108 = vperm.slane %v12104, %v12107
    %v12109 = vrot.slane %v12108, 4
    %v12110 = vsel %vm376, %v12109, %v12102
    %v12111 = vrot.slane %v12102, 4
    %v12112 = vsel %vm376, %v12108, %v12111
    %v12113 = vrot.slane %v11225, 4
    %v12114 = vsel %vm376, %v12113, %v11161
    %v12116 = vunpack.c.l.s4 1983009808
    %v12117 = vunpack.c.0.s8 %v12116
    %v12118 = vperm.slane %v12114, %v12117
    %v12119 = vrot.slane %v11257, 4
    %v12120 = vsel %vm376, %v12119, %v11193
    %v12122 = vunpack.c.l.s4 1983009808
    %v12123 = vunpack.c.0.s8 %v12122
    %v12124 = vperm.slane %v12120, %v12123
    %v12125 = vrot.slane %v11353, 4
    %v12126 = vsel %vm376, %v12125, %v11289
    %v12128 = vunpack.c.l.s4 1983009808
    %v12129 = vunpack.c.0.s8 %v12128
    %v12130 = vperm.slane %v12126, %v12129
    %v12131 = vrot.slane %v11385, 4
    %v12132 = vsel %vm376, %v12131, %v11321
    %v12134 = vunpack.c.l.s4 1983009808
    %v12135 = vunpack.c.0.s8 %v12134
    %v12136 = vperm.slane %v12132, %v12135
    %v12137 = vrot.slane %v12124, 4
    %v12138 = vsel %vm376, %v12137, %v12118
    %v12140 = vunpack.c.l.s4 1934713408
    %v12141 = vunpack.c.0.s8 %v12140
    %v12142 = vperm.slane %v12138, %v12141
    %v12143 = vrot.slane %v12136, 4
    %v12144 = vsel %vm376, %v12143, %v12130
    %v12146 = vunpack.c.l.s4 1934713408
    %v12147 = vunpack.c.0.s8 %v12146
    %v12148 = vperm.slane %v12144, %v12147
    %v12149 = vrot.slane %v12148, 4
    %v12150 = vsel %vm376, %v12149, %v12142
    %v12151 = vrot.slane %v12142, 4
    %v12152 = vsel %vm376, %v12148, %v12151
    %v12153 = vrot.slane %v11481, 4
    %v12154 = vsel %vm376, %v12153, %v11417
    %v12156 = vunpack.c.l.s4 1983009808
    %v12157 = vunpack.c.0.s8 %v12156
    %v12158 = vperm.slane %v12154, %v12157
    %v12159 = vrot.slane %v11513, 4
    %v12160 = vsel %vm376, %v12159, %v11449
    %v12162 = vunpack.c.l.s4 1983009808
    %v12163 = vunpack.c.0.s8 %v12162
    %v12164 = vperm.slane %v12160, %v12163
    %v12165 = vrot.slane %v11609, 4
    %v12166 = vsel %vm376, %v12165, %v11545
    %v12168 = vunpack.c.l.s4 1983009808
    %v12169 = vunpack.c.0.s8 %v12168
    %v12170 = vperm.slane %v12166, %v12169
    %v12171 = vrot.slane %v11641, 4
    %v12172 = vsel %vm376, %v12171, %v11577
    %v12174 = vunpack.c.l.s4 1983009808
    %v12175 = vunpack.c.0.s8 %v12174
    %v12176 = vperm.slane %v12172, %v12175
    %v12177 = vrot.slane %v12164, 4
    %v12178 = vsel %vm376, %v12177, %v12158
    %v12180 = vunpack.c.l.s4 1934713408
    %v12181 = vunpack.c.0.s8 %v12180
    %v12182 = vperm.slane %v12178, %v12181
    %v12183 = vrot.slane %v12176, 4
    %v12184 = vsel %vm376, %v12183, %v12170
    %v12186 = vunpack.c.l.s4 1934713408
    %v12187 = vunpack.c.0.s8 %v12186
    %v12188 = vperm.slane %v12184, %v12187
    %v12189 = vrot.slane %v12188, 4
    %v12190 = vsel %vm376, %v12189, %v12182
    %v12191 = vrot.slane %v12182, 4
    %v12192 = vsel %vm376, %v12188, %v12191
    %v12193 = vrot.slane %v11737, 4
    %v12194 = vsel %vm376, %v12193, %v11673
    %v12196 = vunpack.c.l.s4 1983009808
    %v12197 = vunpack.c.0.s8 %v12196
    %v12198 = vperm.slane %v12194, %v12197
    %v12199 = vrot.slane %v11769, 4
    %v12200 = vsel %vm376, %v12199, %v11705
    %v12202 = vunpack.c.l.s4 1983009808
    %v12203 = vunpack.c.0.s8 %v12202
    %v12204 = vperm.slane %v12200, %v12203
    %v12205 = vrot.slane %v11865, 4
    %v12206 = vsel %vm376, %v12205, %v11801
    %v12208 = vunpack.c.l.s4 1983009808
    %v12209 = vunpack.c.0.s8 %v12208
    %v12210 = vperm.slane %v12206, %v12209
    %v12211 = vrot.slane %v11897, 4
    %v12212 = vsel %vm376, %v12211, %v11833
    %v12214 = vunpack.c.l.s4 1983009808
    %v12215 = vunpack.c.0.s8 %v12214
    %v12216 = vperm.slane %v12212, %v12215
    %v12217 = vrot.slane %v12204, 4
    %v12218 = vsel %vm376, %v12217, %v12198
    %v12220 = vunpack.c.l.s4 1934713408
    %v12221 = vunpack.c.0.s8 %v12220
    %v12222 = vperm.slane %v12218, %v12221
    %v12223 = vrot.slane %v12216, 4
    %v12224 = vsel %vm376, %v12223, %v12210
    %v12226 = vunpack.c.l.s4 1934713408
    %v12227 = vunpack.c.0.s8 %v12226
    %v12228 = vperm.slane %v12224, %v12227
    %v12229 = vrot.slane %v12228, 4
    %v12230 = vsel %vm376, %v12229, %v12222
    %v12231 = vrot.slane %v12222, 4
    %v12232 = vsel %vm376, %v12228, %v12231
    %v12233 = vmul.f32 %v11950, %v39
    %v12234 = vmul.f32 %v11990, %v40
    %v12235 = vmul.f32 %v12030, %v41
    %v12236 = vmul.f32 %v12070, %v42
    %v12237 = vmul.f32 %v12110, %v43
    %v12238 = vmul.f32 %v12150, %v44
    %v12239 = vmul.f32 %v12190, %v45
    %v12240 = vmul.f32 %v12230, %v46
    %v12241 = vmul.f32 %v11952, %v47
    %v12242 = vmul.f32 %v11992, %v48
    %v12243 = vmul.f32 %v12032, %v49
    %v12244 = vmul.f32 %v12072, %v50
    %v12245 = vmul.f32 %v12112, %v51
    %v12246 = vmul.f32 %v12152, %v52
    %v12247 = vmul.f32 %v12192, %v53
    %v12248 = vmul.f32 %v12232, %v54
    %v12249 = vsel %vm5224, %v12233, 0.0
    %12250 = vadd.xlane.f32.xlu0 %v12249
    %v12251 = vpop.xlane.xlu0 %12250
    %v12252 = vsel %vm5224, %v12234, 0.0
    %12253 = vadd.xlane.f32.xlu0 %v12252
    %v12254 = vpop.xlane.xlu0 %12253
    %v12255 = vsel %vm5224, %v12235, 0.0
    %12256 = vadd.xlane.f32.xlu0 %v12255
    %v12257 = vpop.xlane.xlu0 %12256
    %v12258 = vsel %vm5224, %v12236, 0.0
    %12259 = vadd.xlane.f32.xlu0 %v12258
    %v12260 = vpop.xlane.xlu0 %12259
    %v12261 = vsel %vm5224, %v12237, 0.0
    %12262 = vadd.xlane.f32.xlu0 %v12261
    %v12263 = vpop.xlane.xlu0 %12262
    %v12264 = vsel %vm5224, %v12238, 0.0
    %12265 = vadd.xlane.f32.xlu0 %v12264
    %v12266 = vpop.xlane.xlu0 %12265
    %v12267 = vsel %vm5224, %v12239, 0.0
    %12268 = vadd.xlane.f32.xlu0 %v12267
    %v12269 = vpop.xlane.xlu0 %12268
    %v12270 = vsel %vm5224, %v12240, 0.0
    %12271 = vadd.xlane.f32.xlu0 %v12270
    %v12272 = vpop.xlane.xlu0 %12271
    %v12273 = vsel %vm5224, %v12241, 0.0
    %12274 = vadd.xlane.f32.xlu0 %v12273
    %v12275 = vpop.xlane.xlu0 %12274
    %v12276 = vsel %vm5224, %v12242, 0.0
    %12277 = vadd.xlane.f32.xlu0 %v12276
    %v12278 = vpop.xlane.xlu0 %12277
    %v12279 = vsel %vm5224, %v12243, 0.0
    %12280 = vadd.xlane.f32.xlu0 %v12279
    %v12281 = vpop.xlane.xlu0 %12280
    %v12282 = vsel %vm5224, %v12244, 0.0
    %12283 = vadd.xlane.f32.xlu0 %v12282
    %v12284 = vpop.xlane.xlu0 %12283
    %v12285 = vsel %vm5224, %v12245, 0.0
    %12286 = vadd.xlane.f32.xlu0 %v12285
    %v12287 = vpop.xlane.xlu0 %12286
    %v12288 = vsel %vm5224, %v12246, 0.0
    %12289 = vadd.xlane.f32.xlu0 %v12288
    %v12290 = vpop.xlane.xlu0 %12289
    %v12291 = vsel %vm5224, %v12247, 0.0
    %12292 = vadd.xlane.f32.xlu0 %v12291
    %v12293 = vpop.xlane.xlu0 %12292
    %v12294 = vsel %vm5224, %v12248, 0.0
    %12295 = vadd.xlane.f32.xlu0 %v12294
    %v12296 = vpop.xlane.xlu0 %12295
    %v12297 = vmax.f32 %v12251, 0.0
    %v12298 = vmax.f32 %v12254, 0.0
    %v12299 = vmax.f32 %v12257, 0.0
    %v12300 = vmax.f32 %v12260, 0.0
    %v12301 = vmax.f32 %v12263, 0.0
    %v12302 = vmax.f32 %v12266, 0.0
    %v12303 = vmax.f32 %v12269, 0.0
    %v12304 = vmax.f32 %v12272, 0.0
    %v12305 = vmax.f32 %v12275, 0.0
    %v12306 = vmax.f32 %v12278, 0.0
    %v12307 = vmax.f32 %v12281, 0.0
    %v12308 = vmax.f32 %v12284, 0.0
    %v12309 = vmax.f32 %v12287, 0.0
    %v12310 = vmax.f32 %v12290, 0.0
    %v12311 = vmax.f32 %v12293, 0.0
    %v12312 = vmax.f32 %v12296, 0.0
    %v12313 = vrsqrt.pop %v12297
    %v12314 = vmul.f32 %v12313, %v12297
    %v12315 = vmul.f32 %v12314, %v12313
    %v12316 = vmul.f32 0.5, %v12315
    %v12317 = vsub.f32 1.5, %v12316
    %v12318 = vmul.f32 %v12313, %v12317
    %v12319 = vmul.f32 %v12297, %v12318
    %vm12320 = vcmp.eq.f32.partialorder %v12297, inf
    %v12321 = vsel %vm12320, %v12297, %v12319
    %vm12322 = vcmp.eq.f32.partialorder %v12297, 0.0
    %v12323 = vand.u32 %v12297, 2147483648
    %v12324 = vsel %vm12322, %v12323, %v12321
    %v12325 = vrsqrt.pop %v12298
    %v12326 = vmul.f32 %v12325, %v12298
    %v12327 = vmul.f32 %v12326, %v12325
    %v12328 = vmul.f32 0.5, %v12327
    %v12329 = vsub.f32 1.5, %v12328
    %v12330 = vmul.f32 %v12325, %v12329
    %v12331 = vmul.f32 %v12298, %v12330
    %vm12332 = vcmp.eq.f32.partialorder %v12298, inf
    %v12333 = vsel %vm12332, %v12298, %v12331
    %vm12334 = vcmp.eq.f32.partialorder %v12298, 0.0
    %v12335 = vand.u32 %v12298, 2147483648
    %v12336 = vsel %vm12334, %v12335, %v12333
    %v12337 = vrsqrt.pop %v12299
    %v12338 = vmul.f32 %v12337, %v12299
    %v12339 = vmul.f32 %v12338, %v12337
    %v12340 = vmul.f32 0.5, %v12339
    %v12341 = vsub.f32 1.5, %v12340
    %v12342 = vmul.f32 %v12337, %v12341
    %v12343 = vmul.f32 %v12299, %v12342
    %vm12344 = vcmp.eq.f32.partialorder %v12299, inf
    %v12345 = vsel %vm12344, %v12299, %v12343
    %vm12346 = vcmp.eq.f32.partialorder %v12299, 0.0
    %v12347 = vand.u32 %v12299, 2147483648
    %v12348 = vsel %vm12346, %v12347, %v12345
    %v12349 = vrsqrt.pop %v12300
    %v12350 = vmul.f32 %v12349, %v12300
    %v12351 = vmul.f32 %v12350, %v12349
    %v12352 = vmul.f32 0.5, %v12351
    %v12353 = vsub.f32 1.5, %v12352
    %v12354 = vmul.f32 %v12349, %v12353
    %v12355 = vmul.f32 %v12300, %v12354
    %vm12356 = vcmp.eq.f32.partialorder %v12300, inf
    %v12357 = vsel %vm12356, %v12300, %v12355
    %vm12358 = vcmp.eq.f32.partialorder %v12300, 0.0
    %v12359 = vand.u32 %v12300, 2147483648
    %v12360 = vsel %vm12358, %v12359, %v12357
    %v12361 = vrsqrt.pop %v12301
    %v12362 = vmul.f32 %v12361, %v12301
    %v12363 = vmul.f32 %v12362, %v12361
    %v12364 = vmul.f32 0.5, %v12363
    %v12365 = vsub.f32 1.5, %v12364
    %v12366 = vmul.f32 %v12361, %v12365
    %v12367 = vmul.f32 %v12301, %v12366
    %vm12368 = vcmp.eq.f32.partialorder %v12301, inf
    %v12369 = vsel %vm12368, %v12301, %v12367
    %vm12370 = vcmp.eq.f32.partialorder %v12301, 0.0
    %v12371 = vand.u32 %v12301, 2147483648
    %v12372 = vsel %vm12370, %v12371, %v12369
    %v12373 = vrsqrt.pop %v12302
    %v12374 = vmul.f32 %v12373, %v12302
    %v12375 = vmul.f32 %v12374, %v12373
    %v12376 = vmul.f32 0.5, %v12375
    %v12377 = vsub.f32 1.5, %v12376
    %v12378 = vmul.f32 %v12373, %v12377
    %v12379 = vmul.f32 %v12302, %v12378
    %vm12380 = vcmp.eq.f32.partialorder %v12302, inf
    %v12381 = vsel %vm12380, %v12302, %v12379
    %vm12382 = vcmp.eq.f32.partialorder %v12302, 0.0
    %v12383 = vand.u32 %v12302, 2147483648
    %v12384 = vsel %vm12382, %v12383, %v12381
    %v12385 = vrsqrt.pop %v12303
    %v12386 = vmul.f32 %v12385, %v12303
    %v12387 = vmul.f32 %v12386, %v12385
    %v12388 = vmul.f32 0.5, %v12387
    %v12389 = vsub.f32 1.5, %v12388
    %v12390 = vmul.f32 %v12385, %v12389
    %v12391 = vmul.f32 %v12303, %v12390
    %vm12392 = vcmp.eq.f32.partialorder %v12303, inf
    %v12393 = vsel %vm12392, %v12303, %v12391
    %vm12394 = vcmp.eq.f32.partialorder %v12303, 0.0
    %v12395 = vand.u32 %v12303, 2147483648
    %v12396 = vsel %vm12394, %v12395, %v12393
    %v12397 = vrsqrt.pop %v12304
    %v12398 = vmul.f32 %v12397, %v12304
    %v12399 = vmul.f32 %v12398, %v12397
    %v12400 = vmul.f32 0.5, %v12399
    %v12401 = vsub.f32 1.5, %v12400
    %v12402 = vmul.f32 %v12397, %v12401
    %v12403 = vmul.f32 %v12304, %v12402
    %vm12404 = vcmp.eq.f32.partialorder %v12304, inf
    %v12405 = vsel %vm12404, %v12304, %v12403
    %vm12406 = vcmp.eq.f32.partialorder %v12304, 0.0
    %v12407 = vand.u32 %v12304, 2147483648
    %v12408 = vsel %vm12406, %v12407, %v12405
    %v12409 = vrsqrt.pop %v12305
    %v12410 = vmul.f32 %v12409, %v12305
    %v12411 = vmul.f32 %v12410, %v12409
    %v12412 = vmul.f32 0.5, %v12411
    %v12413 = vsub.f32 1.5, %v12412
    %v12414 = vmul.f32 %v12409, %v12413
    %v12415 = vmul.f32 %v12305, %v12414
    %vm12416 = vcmp.eq.f32.partialorder %v12305, inf
    %v12417 = vsel %vm12416, %v12305, %v12415
    %vm12418 = vcmp.eq.f32.partialorder %v12305, 0.0
    %v12419 = vand.u32 %v12305, 2147483648
    %v12420 = vsel %vm12418, %v12419, %v12417
    %v12421 = vrsqrt.pop %v12306
    %v12422 = vmul.f32 %v12421, %v12306
    %v12423 = vmul.f32 %v12422, %v12421
    %v12424 = vmul.f32 0.5, %v12423
    %v12425 = vsub.f32 1.5, %v12424
    %v12426 = vmul.f32 %v12421, %v12425
    %v12427 = vmul.f32 %v12306, %v12426
    %vm12428 = vcmp.eq.f32.partialorder %v12306, inf
    %v12429 = vsel %vm12428, %v12306, %v12427
    %vm12430 = vcmp.eq.f32.partialorder %v12306, 0.0
    %v12431 = vand.u32 %v12306, 2147483648
    %v12432 = vsel %vm12430, %v12431, %v12429
    %v12433 = vrsqrt.pop %v12307
    %v12434 = vmul.f32 %v12433, %v12307
    %v12435 = vmul.f32 %v12434, %v12433
    %v12436 = vmul.f32 0.5, %v12435
    %v12437 = vsub.f32 1.5, %v12436
    %v12438 = vmul.f32 %v12433, %v12437
    %v12439 = vmul.f32 %v12307, %v12438
    %vm12440 = vcmp.eq.f32.partialorder %v12307, inf
    %v12441 = vsel %vm12440, %v12307, %v12439
    %vm12442 = vcmp.eq.f32.partialorder %v12307, 0.0
    %v12443 = vand.u32 %v12307, 2147483648
    %v12444 = vsel %vm12442, %v12443, %v12441
    %v12445 = vrsqrt.pop %v12308
    %v12446 = vmul.f32 %v12445, %v12308
    %v12447 = vmul.f32 %v12446, %v12445
    %v12448 = vmul.f32 0.5, %v12447
    %v12449 = vsub.f32 1.5, %v12448
    %v12450 = vmul.f32 %v12445, %v12449
    %v12451 = vmul.f32 %v12308, %v12450
    %vm12452 = vcmp.eq.f32.partialorder %v12308, inf
    %v12453 = vsel %vm12452, %v12308, %v12451
    %vm12454 = vcmp.eq.f32.partialorder %v12308, 0.0
    %v12455 = vand.u32 %v12308, 2147483648
    %v12456 = vsel %vm12454, %v12455, %v12453
    %v12457 = vrsqrt.pop %v12309
    %v12458 = vmul.f32 %v12457, %v12309
    %v12459 = vmul.f32 %v12458, %v12457
    %v12460 = vmul.f32 0.5, %v12459
    %v12461 = vsub.f32 1.5, %v12460
    %v12462 = vmul.f32 %v12457, %v12461
    %v12463 = vmul.f32 %v12309, %v12462
    %vm12464 = vcmp.eq.f32.partialorder %v12309, inf
    %v12465 = vsel %vm12464, %v12309, %v12463
    %vm12466 = vcmp.eq.f32.partialorder %v12309, 0.0
    %v12467 = vand.u32 %v12309, 2147483648
    %v12468 = vsel %vm12466, %v12467, %v12465
    %v12469 = vrsqrt.pop %v12310
    %v12470 = vmul.f32 %v12469, %v12310
    %v12471 = vmul.f32 %v12470, %v12469
    %v12472 = vmul.f32 0.5, %v12471
    %v12473 = vsub.f32 1.5, %v12472
    %v12474 = vmul.f32 %v12469, %v12473
    %v12475 = vmul.f32 %v12310, %v12474
    %vm12476 = vcmp.eq.f32.partialorder %v12310, inf
    %v12477 = vsel %vm12476, %v12310, %v12475
    %vm12478 = vcmp.eq.f32.partialorder %v12310, 0.0
    %v12479 = vand.u32 %v12310, 2147483648
    %v12480 = vsel %vm12478, %v12479, %v12477
    %v12481 = vrsqrt.pop %v12311
    %v12482 = vmul.f32 %v12481, %v12311
    %v12483 = vmul.f32 %v12482, %v12481
    %v12484 = vmul.f32 0.5, %v12483
    %v12485 = vsub.f32 1.5, %v12484
    %v12486 = vmul.f32 %v12481, %v12485
    %v12487 = vmul.f32 %v12311, %v12486
    %vm12488 = vcmp.eq.f32.partialorder %v12311, inf
    %v12489 = vsel %vm12488, %v12311, %v12487
    %vm12490 = vcmp.eq.f32.partialorder %v12311, 0.0
    %v12491 = vand.u32 %v12311, 2147483648
    %v12492 = vsel %vm12490, %v12491, %v12489
    %v12493 = vrsqrt.pop %v12312
    %v12494 = vmul.f32 %v12493, %v12312
    %v12495 = vmul.f32 %v12494, %v12493
    %v12496 = vmul.f32 0.5, %v12495
    %v12497 = vsub.f32 1.5, %v12496
    %v12498 = vmul.f32 %v12493, %v12497
    %v12499 = vmul.f32 %v12312, %v12498
    %vm12500 = vcmp.eq.f32.partialorder %v12312, inf
    %v12501 = vsel %vm12500, %v12312, %v12499
    %vm12502 = vcmp.eq.f32.partialorder %v12312, 0.0
    %v12503 = vand.u32 %v12312, 2147483648
    %v12504 = vsel %vm12502, %v12503, %v12501
    %v12521 = vlaneseq
    %v12522 = vand.u32 %v12521, 127
    %v12523 = vperm.slane %v12324, %v12522
    %v12524 = vadd.s32 %v12522, 4294967288
    %v12525 = vperm.slane %v12336, %v12524
    %vm12526 = vcmask 130112
    %v12527 = vsel %vm12526, %v12525, %v12523
    %v12528 = vadd.s32 %v12522, 4294967280
    %v12529 = vperm.slane %v12348, %v12528
    %vm12530 = vcmask 195712
    %v12531 = vsel %vm12530, %v12529, %v12527
    %v12532 = vadd.s32 %v12522, 4294967272
    %v12533 = vperm.slane %v12360, %v12532
    %vm12534 = vcmask 261312
    %v12535 = vsel %vm12534, %v12533, %v12531
    %v12536 = vadd.s32 %v12522, 4294967264
    %v12537 = vperm.slane %v12372, %v12536
    %vm12538 = vcmask 326912
    %v12539 = vsel %vm12538, %v12537, %v12535
    %v12540 = vadd.s32 %v12522, 4294967256
    %v12541 = vperm.slane %v12384, %v12540
    %vm12542 = vcmask 392512
    %v12543 = vsel %vm12542, %v12541, %v12539
    %v12544 = vadd.s32 %v12522, 4294967248
    %v12545 = vperm.slane %v12396, %v12544
    %vm12546 = vcmask 458112
    %v12547 = vsel %vm12546, %v12545, %v12543
    %v12548 = vadd.s32 %v12522, 4294967240
    %v12549 = vperm.slane %v12408, %v12548
    %vm12550 = vcmask 523712
    %v12551 = vsel %vm12550, %v12549, %v12547
    %v12552 = vperm.slane %v12420, %v12522
    %v12553 = vperm.slane %v12432, %v12524
    %v12554 = vsel %vm12526, %v12553, %v12552
    %v12555 = vperm.slane %v12444, %v12528
    %v12556 = vsel %vm12530, %v12555, %v12554
    %v12557 = vperm.slane %v12456, %v12532
    %v12558 = vsel %vm12534, %v12557, %v12556
    %v12559 = vperm.slane %v12468, %v12536
    %v12560 = vsel %vm12538, %v12559, %v12558
    %v12561 = vperm.slane %v12480, %v12540
    %v12562 = vsel %vm12542, %v12561, %v12560
    %v12563 = vperm.slane %v12492, %v12544
    %v12564 = vsel %vm12546, %v12563, %v12562
    %v12565 = vperm.slane %v12504, %v12548
    %v12566 = vsel %vm12550, %v12565, %v12564
    %vm12567 = vcmask 1041409
    %v12568 = vsel %vm12567, %v12566, %v12551
    %vm12570 = vcmask 517120
    %12571 = vst.msk [vmem:[#allocation2] sm:$0x3] %vm12570, %v12568
    // Predicated region
    $region14: #{tpu_custom_call.1} parent=1 // pred_check
      _
    $region15: #{tpu_custom_call.1} parent=1 // pred_check_branch
      %12573 = sbr.rel (0) target = $region17
    $region16: #{tpu_custom_call.1} parent=1 // pred_region
      %12575 = vsyncadd [#allocation3], 0
      %s12577 = sshll.u32 [#allocation2], 4
      %s12578 = int_to_ptr.vmem [resolvable:$true] %s12577
      %s12579 = sshll.u32 %s3, 4
      %s12580 = int_to_ptr.hbm [resolvable:$true] %s12579
      %12582 = dma.vmem_to_hbm [thread:$0]  %s12578, 32, %s12580, [#allocation3]
    $region17: #{tpu_custom_call.1} parent=1 // pred_fallthru
      _
    // Predicated region
    $region18: #{tpu_custom_call.1} parent=1 // pred_check
      _
    $region19: #{tpu_custom_call.1} parent=1 // pred_check_branch
      %12584 = sbr.rel (0) target = $region21
    $region20: #{tpu_custom_call.1} parent=1 // pred_region
      %12586 = dma.done [#allocation3], 32
    $region21: #{tpu_custom_call.1} parent=1 // pred_fallthru
      _
    %12587 = vsyncpa [#allocation3], 1

</llo_original>
